<compile_context>
chip_gen: v7x
topology: tpu7x:2x2x1
jax: 0.10.0
libtpu: 0.0.40
codegen_flags: <defaults>
</compile_context>

<pallas_src>
import jax
import jax.numpy as jnp
from jax.experimental import pallas as pl
from jax.experimental.pallas import tpu as pltpu

HIGHEST = jax.lax.Precision.HIGHEST


# --------------------------------------------------------------------------- #
# Parameter preprocessing (plain JAX in the wrapper, data-independent).
# Feature-map layout: one image row is a lane vector v[x*C + c] (channels
# fastest); rows of all N stacked samples sit along the sublane axis.
# --------------------------------------------------------------------------- #

def _band_same(w, width):
    """'same' (pad=1) 3x3 conv tap matrices, horizontal zero-pad folded in.

    w: torch OIHW (Cout, Cin, 3, 3).  Returns m (3, width*Cin, width*Cout) s.t.
    out_row[y] = sum_ky padded_in_row[y+ky] @ m[ky]  (only the vertical zero
    halo rows stay explicit)."""
    cout, cin, kh, kw = w.shape
    a = jnp.arange(width)[:, None, None]          # input column
    b = jnp.arange(width)[None, :, None]          # output column
    k = jnp.arange(kw)[None, None, :]
    sel = (a == b + k - 1).astype(jnp.float32)    # boundary taps are zero
    m = jnp.einsum('abk,oiyk->yaibo', sel, w.astype(jnp.float32), precision=HIGHEST)
    return m.reshape(kh, width * cin, width * cout)


def _band_valid(w, wi):
    """'valid' 3x3 conv tap matrices; output width wi-2."""
    cout, cin, kh, kw = w.shape
    wo = wi - kw + 1
    a = jnp.arange(wi)[:, None, None]
    b = jnp.arange(wo)[None, :, None]
    k = jnp.arange(kw)[None, None, :]
    sel = (a == b + k).astype(jnp.float32)
    m = jnp.einsum('abk,oiyk->yaibo', sel, w.astype(jnp.float32), precision=HIGHEST)
    return m.reshape(kh, wi * cin, wo * cout)


def _width_double(width, chans):
    """(width*chans, 2*width*chans) 0/1 matrix: nearest 2x width upsample."""
    a = jnp.arange(width)[:, None]
    u = jnp.arange(2 * width)[None, :]
    sel = (a == u // 2).astype(jnp.float32)
    m = jnp.einsum('au,cd->acud', sel, jnp.eye(chans, dtype=jnp.float32),
                   precision=HIGHEST)
    return m.reshape(width * chans, 2 * width * chans)


def _dup_place(n, rows_in_per, rows_in_total, rows_out_per, out_off, q_count, dup):
    """0/1 left-multiply matrix (n*rows_out_per, rows_in_total).

    For every stacked sample s it takes the q_count valid accumulator rows
    (row q//2 if dup else q, duplicating for the 2x height upsample), places
    them at offset out_off inside the sample's rows_out_per block and leaves
    every other row (top/bottom zero halo) zero.  Cross-sample garbage rows of
    the tap accumulator correspond to all-zero columns, so they are dropped."""
    s = jnp.arange(n)[:, None]
    q = jnp.arange(q_count)[None, :]
    rows = (s * rows_out_per + out_off + q).reshape(-1)
    src = (q // 2) if dup else q
    cols = (s * rows_in_per + src).reshape(-1)
    return jnp.zeros((n * rows_out_per, rows_in_total),
                     jnp.float32).at[rows, cols].set(1.0)


def _fc_rowwise(w, b):
    """fc1 weights permuted so the y-th row of the 4x4x8 map (channel-last,
    channel-fastest lanes) is  x @ fw[y] + fb[y].

    NOTE: `w` here is (latent, 128) consumed as x @ w; a real torch nn.Linear
    state_dict stores weight as (128, latent) -- transpose when importing."""
    latent = w.shape[0]
    yv, xv, cc = jnp.meshgrid(jnp.arange(4), jnp.arange(4), jnp.arange(8),
                              indexing='ij')
    src = (cc * 16 + yv * 4 + xv).reshape(4, 32)          # [y, x*8 + c]
    fw = jnp.transpose(w[:, src.reshape(-1)].reshape(latent, 4, 32), (1, 0, 2))
    fb = b[src].reshape(4, 1, 32)
    return fw, fb


def _fc_scatter(n):
    """(4, 6n, n) 0/1 matrices: e[y] drops the y-th fc row of every sample at
    padded-map row s*6 + 1 + y (halo rows stay zero)."""
    yy, ss = jnp.meshgrid(jnp.arange(4), jnp.arange(n), indexing='ij')
    e = jnp.zeros((4, n * 6, n), jnp.float32)
    return e.at[yy.reshape(-1), (ss * 6 + 1 + yy).reshape(-1),
                ss.reshape(-1)].set(1.0)


# --------------------------------------------------------------------------- #
# Fused Pallas kernel (one grid step per N stacked samples).
# --------------------------------------------------------------------------- #

def _decoder_kernel(x_ref, fw_ref, fb_ref, e_ref,
                    m1_ref, b1_ref, d1_ref,
                    m2_ref, b2_ref, d2_ref,
                    m3_ref, b3_ref, d3_ref,
                    m4_ref, b4_ref, s_ref,
                    o_ref,
                    p1_ref, p2_ref, q3_ref, p4_ref):
    f32 = jnp.float32

    def dot(a, b):
        return jnp.dot(a, b, preferred_element_type=f32)

    def banded_conv(src_ref, m_ref, bias_ref):
        # out[r] = bias + sum_ky src[r + ky] @ m[ky] over ALL stacked rows; the
        # 2 cross-sample garbage rows per sample are dropped by the D matrices.
        r = src_ref.shape[0]
        acc = dot(src_ref[0:r - 2, :], m_ref[0])
        acc = acc + dot(src_ref[1:r - 1, :], m_ref[1])
        acc = acc + dot(src_ref[2:r, :], m_ref[2])
        return acc + bias_ref[...]

    # ---- fc1 + ReLU for all N samples, scattered (with zero halo rows) ------
    x = x_ref[...]                                                  # (N, L)
    p1 = dot(e_ref[0], jnp.maximum(dot(x, fw_ref[0]) + fb_ref[0], 0.0))
    for y in range(1, 4):
        p1 = p1 + dot(e_ref[y], jnp.maximum(dot(x, fw_ref[y]) + fb_ref[y], 0.0))
    p1_ref[...] = p1                                                # (6N, 32)

    # conv1 (8->8, same) -> ReLU -> [2x rows + halo] -> p2 (up1 width folded into m2)
    p2_ref[...] = dot(d1_ref[...],
                      jnp.maximum(banded_conv(p1_ref, m1_ref, b1_ref), 0.0))
    # conv2 (8->8, same, up1 folded) -> ReLU -> [2x rows] -> q3 (up2 folded into m3)
    q3_ref[...] = dot(d2_ref[...],
                      jnp.maximum(banded_conv(p2_ref, m2_ref, b2_ref), 0.0))
    # conv3 (8->16, valid, up2 folded) -> ReLU -> [2x rows + halo] -> p4
    p4_ref[...] = dot(d3_ref[...],
                      jnp.maximum(banded_conv(q3_ref, m3_ref, b3_ref), 0.0))
    # conv4 (16->1, same, up3 folded, lanes zero-padded to 128) -> row select
    logits = dot(s_ref[...], banded_conv(p4_ref, m4_ref, b4_ref))   # (28N, 128)

    # exact, numerically stable sigmoid (no approx reciprocal)
    neg = logits < 0.0
    e = jnp.exp(jnp.where(neg, logits, -logits))
    o_ref[...] = jnp.where(neg, e / (1.0 + e), 1.0 / (1.0 + e))


# --------------------------------------------------------------------------- #
# Wrapper.
# --------------------------------------------------------------------------- #

def mnist_decoder_forward(params, x, samples_per_step=8):
    """x: (B, latent_dim) -> (B, 1, 28, 28) float32 in [0, 1] (torch NCHW)."""
    x = x.astype(jnp.float32)
    batch, latent = x.shape
    ns = samples_per_step                       # keep even so 28*ns % 8 == 0
    b_pad = ((batch + ns - 1) // ns) * ns
    if b_pad != batch:
        x = jnp.concatenate(
            [x, jnp.zeros((b_pad - batch, latent), jnp.float32)], axis=0)

    # --- weights / tables (all folded under jit) -----------------------------
    fw, fb = _fc_rowwise(params['fc1_w'], params['fc1_b'])        # (4,L,32),(4,1,32)
    e = _fc_scatter(ns)                                           # (4, 6ns, ns)

    def fold(u, m):   # fold a width-doubling matrix into the next conv's taps
        return jnp.einsum('ij,kjl->kil', u, m, precision=HIGHEST)

    m1 = _band_same(params['conv1_w'], 4)                                # (3, 32, 32)
    m2 = fold(_width_double(4, 8), _band_same(params['conv2_w'], 8))     # (3, 32, 64)
    m3 = fold(_width_double(8, 8), _band_valid(params['conv3_w'], 16))   # (3, 64, 224)
    m4 = fold(_width_double(14, 16), _band_same(params['conv4_w'], 28))  # (3, 224, 28)
    m4 = jnp.pad(m4, ((0, 0), (0, 0), (0, 100)))          # lane-dense 128-wide output
    b1 = jnp.tile(params['conv1_b'], 4)[None, :]                         # (1, 32)
    b2 = jnp.tile(params['conv2_b'], 8)[None, :]                         # (1, 64)
    b3 = jnp.tile(params['conv3_b'], 14)[None, :]                        # (1, 224)
    b4 = jnp.pad(jnp.tile(params['conv4_b'], 28), (0, 100))[None, :]     # (1, 128)

    # 0/1 row-doubling / halo-placement / row-selection matrices
    d1 = _dup_place(ns, 6, 6 * ns - 2, 10, 1, 8, True)     # (10ns, 6ns-2)
    d2 = _dup_place(ns, 10, 10 * ns - 2, 16, 0, 16, True)  # (16ns, 10ns-2)
    d3 = _dup_place(ns, 16, 16 * ns - 2, 30, 1, 28, True)  # (30ns, 16ns-2)
    s = _dup_place(ns, 30, 30 * ns - 2, 28, 0, 28, False)  # (28ns, 30ns-2)

    weights = (fw, fb, e, m1, b1, d1, m2, b2, d2, m3, b3, d3, m4, b4, s)

    def whole(a):
        nd = a.ndim
        return pl.BlockSpec(tuple(a.shape), lambda i, _n=nd: (0,) * _n)

    out = pl.pallas_call(
        _decoder_kernel,
        out_shape=jax.ShapeDtypeStruct((b_pad * 28, 128), jnp.float32),
        grid_spec=pltpu.PrefetchScalarGridSpec(
            num_scalar_prefetch=0,
            grid=(b_pad // ns,),
            in_specs=[pl.BlockSpec((ns, latent), lambda i: (i, 0))]
                     + [whole(a) for a in weights],
            out_specs=pl.BlockSpec((ns * 28, 128), lambda i: (i, 0)),
            scratch_shapes=[
                pltpu.VMEM((6 * ns, 32), jnp.float32),    # padded conv1 input (4x4x8)
                pltpu.VMEM((10 * ns, 32), jnp.float32),   # padded conv2 input (w4 repr)
                pltpu.VMEM((16 * ns, 64), jnp.float32),   # conv3 input (w8 repr, valid)
                pltpu.VMEM((30 * ns, 224), jnp.float32),  # padded conv4 input (w14 repr)
            ]),
        compiler_params=pltpu.CompilerParams(
            dimension_semantics=("parallel",)),
        # TODO(synk): on v7x, verify the batch axis shards across both
        # TensorCores; if not, switch to pltpu.CORE_PARALLEL / pl.core_map.
    )(x, *weights)

    img = out.reshape(b_pad, 28, 128)[:batch, :, :28]
    return img[:, None, :, :]


# --------------------------------------------------------------------------- #
# Parameters + pure-JAX reference (for correctness check only).
# --------------------------------------------------------------------------- #

def init_params(key, latent_dim):
    ks = jax.random.split(key, 10)

    def u(k, shape, fan_in):
        bound = 1.0 / (fan_in ** 0.5)
        return jax.random.uniform(k, shape, jnp.float32, -bound, bound)

    return {
        # Stored as (latent, 128), consumed as x @ W (torch stores (128, latent)).
        'fc1_w':   u(ks[0], (latent_dim, 128), latent_dim),
        'fc1_b':   u(ks[1], (128,), latent_dim),
        'conv1_w': u(ks[2], (8, 8, 3, 3),  8 * 9),   # torch OIHW
        'conv1_b': u(ks[3], (8,),          8 * 9),
        'conv2_w': u(ks[4], (8, 8, 3, 3),  8 * 9),
        'conv2_b': u(ks[5], (8,),          8 * 9),
        'conv3_w': u(ks[6], (16, 8, 3, 3), 8 * 9),
        'conv3_b': u(ks[7], (16,),         8 * 9),
        'conv4_w': u(ks[8], (1, 16, 3, 3), 16 * 9),
        'conv4_b': u(ks[9], (1,),          16 * 9),
    }


def mnist_decoder_reference(params, x):
    h = jnp.maximum(jnp.dot(x, params['fc1_w'], precision=HIGHEST)
                    + params['fc1_b'], 0.0)
    h = h.reshape(x.shape[0], 8, 4, 4)

    def conv(t, w, b, pad):
        out = jax.lax.conv_general_dilated(
            t, w, window_strides=(1, 1), padding=[(pad, pad), (pad, pad)],
            dimension_numbers=('NCHW', 'OIHW', 'NCHW'), precision=HIGHEST)
        return out + b[None, :, None, None]

    def up(t):
        return jnp.repeat(jnp.repeat(t, 2, axis=2), 2, axis=3)

    h = up(jnp.maximum(conv(h, params['conv1_w'], params['conv1_b'], 1), 0.0))
    h = up(jnp.maximum(conv(h, params['conv2_w'], params['conv2_b'], 1), 0.0))
    h = up(jnp.maximum(conv(h, params['conv3_w'], params['conv3_b'], 0), 0.0))
    return jax.nn.sigmoid(conv(h, params['conv4_w'], params['conv4_b'], 1))


if __name__ == '__main__':
    key = jax.random.PRNGKey(0)
    k_x, k_p = jax.random.split(key)
    batch, latent_dim = 10, 32                     # pads to 16 -> 2 grid steps
    x = jax.random.normal(k_x, (batch, latent_dim), jnp.float32)
    params = init_params(k_p, latent_dim)

    out = jax.block_until_ready(jax.jit(mnist_decoder_forward)(params, x))

    assert out.shape == (batch, 1, 28, 28), out.shape
    assert out.dtype == jnp.float32
    assert bool(jnp.all(jnp.isfinite(out)))
    assert bool(jnp.all((out >= 0.0) & (out <= 1.0)))

    ref = jax.block_until_ready(jax.jit(mnist_decoder_reference)(params, x))
    err = float(jnp.max(jnp.abs(out - ref)))
    assert err < 5e-3, f"max abs error vs reference: {err}"

    print("KERNEL_OK")
</pallas_src>

<mosaic_0001>
module attributes {stable_mosaic.version = 11 : i64} {
  func.func @_decoder_kernel(%arg0: i32, %arg1: memref<8x32xf32, #tpu.memory_space<vmem>>, %arg2: memref<4x32x32xf32, #tpu.memory_space<vmem>>, %arg3: memref<4x1x32xf32, #tpu.memory_space<vmem>>, %arg4: memref<4x48x8xf32, #tpu.memory_space<vmem>>, %arg5: memref<3x32x32xf32, #tpu.memory_space<vmem>>, %arg6: memref<1x32xf32, #tpu.memory_space<vmem>>, %arg7: memref<80x46xf32, #tpu.memory_space<vmem>>, %arg8: memref<3x32x64xf32, #tpu.memory_space<vmem>>, %arg9: memref<1x64xf32, #tpu.memory_space<vmem>>, %arg10: memref<128x78xf32, #tpu.memory_space<vmem>>, %arg11: memref<3x64x224xf32, #tpu.memory_space<vmem>>, %arg12: memref<1x224xf32, #tpu.memory_space<vmem>>, %arg13: memref<240x126xf32, #tpu.memory_space<vmem>>, %arg14: memref<3x224x128xf32, #tpu.memory_space<vmem>>, %arg15: memref<1x128xf32, #tpu.memory_space<vmem>>, %arg16: memref<224x238xf32, #tpu.memory_space<vmem>>, %arg17: memref<224x128xf32, #tpu.memory_space<vmem>>, %arg18: memref<48x32xf32, #tpu.memory_space<vmem>>, %arg19: memref<80x32xf32, #tpu.memory_space<vmem>>, %arg20: memref<128x64xf32, #tpu.memory_space<vmem>>, %arg21: memref<240x224xf32, #tpu.memory_space<vmem>>) attributes {dimension_semantics = [#tpu.dimension_semantics<parallel>], iteration_bounds = array<i64: 2>, scalar_prefetch = 0 : i64, scratch_operands = 4 : i64, tpu.core_type = #tpu.core_type<tc>, window_params = [{transform_indices = @transform_0, window_bounds = array<i64: 8, 32>}, {pipeline_mode = #tpu.pipeline_mode<synchronous>, transform_indices = @transform_1, window_bounds = array<i64: 4, 32, 32>}, {pipeline_mode = #tpu.pipeline_mode<synchronous>, transform_indices = @transform_2, window_bounds = array<i64: 4, 1, 32>}, {pipeline_mode = #tpu.pipeline_mode<synchronous>, transform_indices = @transform_3, window_bounds = array<i64: 4, 48, 8>}, {pipeline_mode = #tpu.pipeline_mode<synchronous>, transform_indices = @transform_4, window_bounds = array<i64: 3, 32, 32>}, {pipeline_mode = #tpu.pipeline_mode<synchronous>, transform_indices = @transform_5, window_bounds = array<i64: 1, 32>}, {pipeline_mode = #tpu.pipeline_mode<synchronous>, transform_indices = @transform_6, window_bounds = array<i64: 80, 46>}, {pipeline_mode = #tpu.pipeline_mode<synchronous>, transform_indices = @transform_7, window_bounds = array<i64: 3, 32, 64>}, {pipeline_mode = #tpu.pipeline_mode<synchronous>, transform_indices = @transform_8, window_bounds = array<i64: 1, 64>}, {pipeline_mode = #tpu.pipeline_mode<synchronous>, transform_indices = @transform_9, window_bounds = array<i64: 128, 78>}, {pipeline_mode = #tpu.pipeline_mode<synchronous>, transform_indices = @transform_10, window_bounds = array<i64: 3, 64, 224>}, {pipeline_mode = #tpu.pipeline_mode<synchronous>, transform_indices = @transform_11, window_bounds = array<i64: 1, 224>}, {pipeline_mode = #tpu.pipeline_mode<synchronous>, transform_indices = @transform_12, window_bounds = array<i64: 240, 126>}, {pipeline_mode = #tpu.pipeline_mode<synchronous>, transform_indices = @transform_13, window_bounds = array<i64: 3, 224, 128>}, {pipeline_mode = #tpu.pipeline_mode<synchronous>, transform_indices = @transform_14, window_bounds = array<i64: 1, 128>}, {pipeline_mode = #tpu.pipeline_mode<synchronous>, transform_indices = @transform_15, window_bounds = array<i64: 224, 238>}, {transform_indices = @transform_16, window_bounds = array<i64: 224, 128>}]} {
    %c0 = arith.constant 0 : index
    %c0_0 = arith.constant 0 : index
    %0 = vector.load %arg1[%c0, %c0_0] : memref<8x32xf32, #tpu.memory_space<vmem>>, vector<8x32xf32>
    %c0_1 = arith.constant 0 : index
    %c0_2 = arith.constant 0 : index
    %c0_3 = arith.constant 0 : index
    %1 = vector.load %arg4[%c0_1, %c0_2, %c0_3] : memref<4x48x8xf32, #tpu.memory_space<vmem>>, vector<1x48x8xf32>
    %2 = vector.shape_cast %1 : vector<1x48x8xf32> to vector<48x8xf32>
    %c0_4 = arith.constant 0 : index
    %c0_5 = arith.constant 0 : index
    %c0_6 = arith.constant 0 : index
    %3 = vector.load %arg2[%c0_4, %c0_5, %c0_6] : memref<4x32x32xf32, #tpu.memory_space<vmem>>, vector<1x32x32xf32>
    %4 = vector.shape_cast %3 : vector<1x32x32xf32> to vector<32x32xf32>
    %cst = arith.constant dense<0.000000e+00> : vector<8x32xf32>
    %5 = tpu.matmul %0, %4, %cst {dimension_numbers = #tpu.dot_dimension_numbers<[1], [0], [0], [1], [0, 0, 1, 1], [], []>} : vector<8x32xf32>, vector<32x32xf32>, vector<8x32xf32> -> vector<8x32xf32>
    %c0_7 = arith.constant 0 : index
    %c0_8 = arith.constant 0 : index
    %c0_9 = arith.constant 0 : index
    %6 = vector.load %arg3[%c0_7, %c0_8, %c0_9] : memref<4x1x32xf32, #tpu.memory_space<vmem>>, vector<1x1x32xf32>
    %7 = vector.shape_cast %6 : vector<1x1x32xf32> to vector<1x32xf32>
    %8 = vector.broadcast %7 : vector<1x32xf32> to vector<8x32xf32>
    %9 = arith.addf %5, %8 : vector<8x32xf32>
    %cst_10 = arith.constant 0.000000e+00 : f32
    %10 = vector.broadcast %cst_10 : f32 to vector<8x32xf32>
    %11 = arith.maximumf %9, %10 : vector<8x32xf32>
    %cst_11 = arith.constant dense<0.000000e+00> : vector<48x32xf32>
    %12 = tpu.matmul %2, %11, %cst_11 {dimension_numbers = #tpu.dot_dimension_numbers<[1], [0], [0], [1], [0, 0, 1, 1], [], []>} : vector<48x8xf32>, vector<8x32xf32>, vector<48x32xf32> -> vector<48x32xf32>
    %c1 = arith.constant 1 : index
    %c0_12 = arith.constant 0 : index
    %c0_13 = arith.constant 0 : index
    %13 = vector.load %arg4[%c1, %c0_12, %c0_13] : memref<4x48x8xf32, #tpu.memory_space<vmem>>, vector<1x48x8xf32>
    %14 = vector.shape_cast %13 : vector<1x48x8xf32> to vector<48x8xf32>
    %c1_14 = arith.constant 1 : index
    %c0_15 = arith.constant 0 : index
    %c0_16 = arith.constant 0 : index
    %15 = vector.load %arg2[%c1_14, %c0_15, %c0_16] : memref<4x32x32xf32, #tpu.memory_space<vmem>>, vector<1x32x32xf32>
    %16 = vector.shape_cast %15 : vector<1x32x32xf32> to vector<32x32xf32>
    %cst_17 = arith.constant dense<0.000000e+00> : vector<8x32xf32>
    %17 = tpu.matmul %0, %16, %cst_17 {dimension_numbers = #tpu.dot_dimension_numbers<[1], [0], [0], [1], [0, 0, 1, 1], [], []>} : vector<8x32xf32>, vector<32x32xf32>, vector<8x32xf32> -> vector<8x32xf32>
    %c1_18 = arith.constant 1 : index
    %c0_19 = arith.constant 0 : index
    %c0_20 = arith.constant 0 : index
    %18 = vector.load %arg3[%c1_18, %c0_19, %c0_20] : memref<4x1x32xf32, #tpu.memory_space<vmem>>, vector<1x1x32xf32>
    %19 = vector.shape_cast %18 : vector<1x1x32xf32> to vector<1x32xf32>
    %20 = vector.broadcast %19 : vector<1x32xf32> to vector<8x32xf32>
    %21 = arith.addf %17, %20 : vector<8x32xf32>
    %cst_21 = arith.constant 0.000000e+00 : f32
    %22 = vector.broadcast %cst_21 : f32 to vector<8x32xf32>
    %23 = arith.maximumf %21, %22 : vector<8x32xf32>
    %cst_22 = arith.constant dense<0.000000e+00> : vector<48x32xf32>
    %24 = tpu.matmul %14, %23, %cst_22 {dimension_numbers = #tpu.dot_dimension_numbers<[1], [0], [0], [1], [0, 0, 1, 1], [], []>} : vector<48x8xf32>, vector<8x32xf32>, vector<48x32xf32> -> vector<48x32xf32>
    %25 = arith.addf %12, %24 : vector<48x32xf32>
    %c2 = arith.constant 2 : index
    %c0_23 = arith.constant 0 : index
    %c0_24 = arith.constant 0 : index
    %26 = vector.load %arg4[%c2, %c0_23, %c0_24] : memref<4x48x8xf32, #tpu.memory_space<vmem>>, vector<1x48x8xf32>
    %27 = vector.shape_cast %26 : vector<1x48x8xf32> to vector<48x8xf32>
    %c2_25 = arith.constant 2 : index
    %c0_26 = arith.constant 0 : index
    %c0_27 = arith.constant 0 : index
    %28 = vector.load %arg2[%c2_25, %c0_26, %c0_27] : memref<4x32x32xf32, #tpu.memory_space<vmem>>, vector<1x32x32xf32>
    %29 = vector.shape_cast %28 : vector<1x32x32xf32> to vector<32x32xf32>
    %cst_28 = arith.constant dense<0.000000e+00> : vector<8x32xf32>
    %30 = tpu.matmul %0, %29, %cst_28 {dimension_numbers = #tpu.dot_dimension_numbers<[1], [0], [0], [1], [0, 0, 1, 1], [], []>} : vector<8x32xf32>, vector<32x32xf32>, vector<8x32xf32> -> vector<8x32xf32>
    %c2_29 = arith.constant 2 : index
    %c0_30 = arith.constant 0 : index
    %c0_31 = arith.constant 0 : index
    %31 = vector.load %arg3[%c2_29, %c0_30, %c0_31] : memref<4x1x32xf32, #tpu.memory_space<vmem>>, vector<1x1x32xf32>
    %32 = vector.shape_cast %31 : vector<1x1x32xf32> to vector<1x32xf32>
    %33 = vector.broadcast %32 : vector<1x32xf32> to vector<8x32xf32>
    %34 = arith.addf %30, %33 : vector<8x32xf32>
    %cst_32 = arith.constant 0.000000e+00 : f32
    %35 = vector.broadcast %cst_32 : f32 to vector<8x32xf32>
    %36 = arith.maximumf %34, %35 : vector<8x32xf32>
    %cst_33 = arith.constant dense<0.000000e+00> : vector<48x32xf32>
    %37 = tpu.matmul %27, %36, %cst_33 {dimension_numbers = #tpu.dot_dimension_numbers<[1], [0], [0], [1], [0, 0, 1, 1], [], []>} : vector<48x8xf32>, vector<8x32xf32>, vector<48x32xf32> -> vector<48x32xf32>
    %38 = arith.addf %25, %37 : vector<48x32xf32>
    %c3 = arith.constant 3 : index
    %c0_34 = arith.constant 0 : index
    %c0_35 = arith.constant 0 : index
    %39 = vector.load %arg4[%c3, %c0_34, %c0_35] : memref<4x48x8xf32, #tpu.memory_space<vmem>>, vector<1x48x8xf32>
    %40 = vector.shape_cast %39 : vector<1x48x8xf32> to vector<48x8xf32>
    %c3_36 = arith.constant 3 : index
    %c0_37 = arith.constant 0 : index
    %c0_38 = arith.constant 0 : index
    %41 = vector.load %arg2[%c3_36, %c0_37, %c0_38] : memref<4x32x32xf32, #tpu.memory_space<vmem>>, vector<1x32x32xf32>
    %42 = vector.shape_cast %41 : vector<1x32x32xf32> to vector<32x32xf32>
    %cst_39 = arith.constant dense<0.000000e+00> : vector<8x32xf32>
    %43 = tpu.matmul %0, %42, %cst_39 {dimension_numbers = #tpu.dot_dimension_numbers<[1], [0], [0], [1], [0, 0, 1, 1], [], []>} : vector<8x32xf32>, vector<32x32xf32>, vector<8x32xf32> -> vector<8x32xf32>
    %c3_40 = arith.constant 3 : index
    %c0_41 = arith.constant 0 : index
    %c0_42 = arith.constant 0 : index
    %44 = vector.load %arg3[%c3_40, %c0_41, %c0_42] : memref<4x1x32xf32, #tpu.memory_space<vmem>>, vector<1x1x32xf32>
    %45 = vector.shape_cast %44 : vector<1x1x32xf32> to vector<1x32xf32>
    %46 = vector.broadcast %45 : vector<1x32xf32> to vector<8x32xf32>
    %47 = arith.addf %43, %46 : vector<8x32xf32>
    %cst_43 = arith.constant 0.000000e+00 : f32
    %48 = vector.broadcast %cst_43 : f32 to vector<8x32xf32>
    %49 = arith.maximumf %47, %48 : vector<8x32xf32>
    %cst_44 = arith.constant dense<0.000000e+00> : vector<48x32xf32>
    %50 = tpu.matmul %40, %49, %cst_44 {dimension_numbers = #tpu.dot_dimension_numbers<[1], [0], [0], [1], [0, 0, 1, 1], [], []>} : vector<48x8xf32>, vector<8x32xf32>, vector<48x32xf32> -> vector<48x32xf32>
    %51 = arith.addf %38, %50 : vector<48x32xf32>
    %c0_45 = arith.constant 0 : index
    %c0_46 = arith.constant 0 : index
    %52 = vector.load %arg18[%c0_45, %c0_46] : memref<48x32xf32, #tpu.memory_space<vmem>>, vector<48x32xf32>
    tpu.vector_store %arg18[%c0_45, %c0_46], %51 {strides = array<i32>} : memref<48x32xf32, #tpu.memory_space<vmem>>, vector<48x32xf32>,
    %c0_47 = arith.constant 0 : index
    %c0_48 = arith.constant 0 : index
    %53 = vector.load %arg7[%c0_47, %c0_48] : memref<80x46xf32, #tpu.memory_space<vmem>>, vector<80x46xf32>
    %c0_49 = arith.constant 0 : index
    %c0_50 = arith.constant 0 : index
    %54 = vector.load %arg18[%c0_49, %c0_50] : memref<48x32xf32, #tpu.memory_space<vmem>>, vector<46x32xf32>
    %c0_51 = arith.constant 0 : index
    %c0_52 = arith.constant 0 : index
    %c0_53 = arith.constant 0 : index
    %55 = vector.load %arg5[%c0_51, %c0_52, %c0_53] : memref<3x32x32xf32, #tpu.memory_space<vmem>>, vector<1x32x32xf32>
    %56 = vector.shape_cast %55 : vector<1x32x32xf32> to vector<32x32xf32>
    %cst_54 = arith.constant dense<0.000000e+00> : vector<46x32xf32>
    %57 = tpu.matmul %54, %56, %cst_54 {dimension_numbers = #tpu.dot_dimension_numbers<[1], [0], [0], [1], [0, 0, 1, 1], [], []>} : vector<46x32xf32>, vector<32x32xf32>, vector<46x32xf32> -> vector<46x32xf32>
    %c1_55 = arith.constant 1 : index
    %c0_56 = arith.constant 0 : index
    %58 = vector.load %arg18[%c1_55, %c0_56] : memref<48x32xf32, #tpu.memory_space<vmem>>, vector<46x32xf32>
    %c1_57 = arith.constant 1 : index
    %c0_58 = arith.constant 0 : index
    %c0_59 = arith.constant 0 : index
    %59 = vector.load %arg5[%c1_57, %c0_58, %c0_59] : memref<3x32x32xf32, #tpu.memory_space<vmem>>, vector<1x32x32xf32>
    %60 = vector.shape_cast %59 : vector<1x32x32xf32> to vector<32x32xf32>
    %cst_60 = arith.constant dense<0.000000e+00> : vector<46x32xf32>
    %61 = tpu.matmul %58, %60, %cst_60 {dimension_numbers = #tpu.dot_dimension_numbers<[1], [0], [0], [1], [0, 0, 1, 1], [], []>} : vector<46x32xf32>, vector<32x32xf32>, vector<46x32xf32> -> vector<46x32xf32>
    %62 = arith.addf %57, %61 : vector<46x32xf32>
    %c2_61 = arith.constant 2 : index
    %c0_62 = arith.constant 0 : index
    %63 = vector.load %arg18[%c2_61, %c0_62] : memref<48x32xf32, #tpu.memory_space<vmem>>, vector<46x32xf32>
    %c2_63 = arith.constant 2 : index
    %c0_64 = arith.constant 0 : index
    %c0_65 = arith.constant 0 : index
    %64 = vector.load %arg5[%c2_63, %c0_64, %c0_65] : memref<3x32x32xf32, #tpu.memory_space<vmem>>, vector<1x32x32xf32>
    %65 = vector.shape_cast %64 : vector<1x32x32xf32> to vector<32x32xf32>
    %cst_66 = arith.constant dense<0.000000e+00> : vector<46x32xf32>
    %66 = tpu.matmul %63, %65, %cst_66 {dimension_numbers = #tpu.dot_dimension_numbers<[1], [0], [0], [1], [0, 0, 1, 1], [], []>} : vector<46x32xf32>, vector<32x32xf32>, vector<46x32xf32> -> vector<46x32xf32>
    %67 = arith.addf %62, %66 : vector<46x32xf32>
    %c0_67 = arith.constant 0 : index
    %c0_68 = arith.constant 0 : index
    %68 = vector.load %arg6[%c0_67, %c0_68] : memref<1x32xf32, #tpu.memory_space<vmem>>, vector<1x32xf32>
    %69 = vector.broadcast %68 : vector<1x32xf32> to vector<46x32xf32>
    %70 = arith.addf %67, %69 : vector<46x32xf32>
    %cst_69 = arith.constant 0.000000e+00 : f32
    %71 = vector.broadcast %cst_69 : f32 to vector<46x32xf32>
    %72 = arith.maximumf %70, %71 : vector<46x32xf32>
    %cst_70 = arith.constant dense<0.000000e+00> : vector<80x32xf32>
    %73 = tpu.matmul %53, %72, %cst_70 {dimension_numbers = #tpu.dot_dimension_numbers<[1], [0], [0], [1], [0, 0, 1, 1], [], []>} : vector<80x46xf32>, vector<46x32xf32>, vector<80x32xf32> -> vector<80x32xf32>
    %c0_71 = arith.constant 0 : index
    %c0_72 = arith.constant 0 : index
    %74 = vector.load %arg19[%c0_71, %c0_72] : memref<80x32xf32, #tpu.memory_space<vmem>>, vector<80x32xf32>
    tpu.vector_store %arg19[%c0_71, %c0_72], %73 {strides = array<i32>} : memref<80x32xf32, #tpu.memory_space<vmem>>, vector<80x32xf32>,
    %c0_73 = arith.constant 0 : index
    %c0_74 = arith.constant 0 : index
    %75 = vector.load %arg10[%c0_73, %c0_74] : memref<128x78xf32, #tpu.memory_space<vmem>>, vector<128x78xf32>
    %c0_75 = arith.constant 0 : index
    %c0_76 = arith.constant 0 : index
    %76 = vector.load %arg19[%c0_75, %c0_76] : memref<80x32xf32, #tpu.memory_space<vmem>>, vector<78x32xf32>
    %c0_77 = arith.constant 0 : index
    %c0_78 = arith.constant 0 : index
    %c0_79 = arith.constant 0 : index
    %77 = vector.load %arg8[%c0_77, %c0_78, %c0_79] : memref<3x32x64xf32, #tpu.memory_space<vmem>>, vector<1x32x64xf32>
    %78 = vector.shape_cast %77 : vector<1x32x64xf32> to vector<32x64xf32>
    %cst_80 = arith.constant dense<0.000000e+00> : vector<78x64xf32>
    %79 = tpu.matmul %76, %78, %cst_80 {dimension_numbers = #tpu.dot_dimension_numbers<[1], [0], [0], [1], [0, 0, 1, 1], [], []>} : vector<78x32xf32>, vector<32x64xf32>, vector<78x64xf32> -> vector<78x64xf32>
    %c1_81 = arith.constant 1 : index
    %c0_82 = arith.constant 0 : index
    %80 = vector.load %arg19[%c1_81, %c0_82] : memref<80x32xf32, #tpu.memory_space<vmem>>, vector<78x32xf32>
    %c1_83 = arith.constant 1 : index
    %c0_84 = arith.constant 0 : index
    %c0_85 = arith.constant 0 : index
    %81 = vector.load %arg8[%c1_83, %c0_84, %c0_85] : memref<3x32x64xf32, #tpu.memory_space<vmem>>, vector<1x32x64xf32>
    %82 = vector.shape_cast %81 : vector<1x32x64xf32> to vector<32x64xf32>
    %cst_86 = arith.constant dense<0.000000e+00> : vector<78x64xf32>
    %83 = tpu.matmul %80, %82, %cst_86 {dimension_numbers = #tpu.dot_dimension_numbers<[1], [0], [0], [1], [0, 0, 1, 1], [], []>} : vector<78x32xf32>, vector<32x64xf32>, vector<78x64xf32> -> vector<78x64xf32>
    %84 = arith.addf %79, %83 : vector<78x64xf32>
    %c2_87 = arith.constant 2 : index
    %c0_88 = arith.constant 0 : index
    %85 = vector.load %arg19[%c2_87, %c0_88] : memref<80x32xf32, #tpu.memory_space<vmem>>, vector<78x32xf32>
    %c2_89 = arith.constant 2 : index
    %c0_90 = arith.constant 0 : index
    %c0_91 = arith.constant 0 : index
    %86 = vector.load %arg8[%c2_89, %c0_90, %c0_91] : memref<3x32x64xf32, #tpu.memory_space<vmem>>, vector<1x32x64xf32>
    %87 = vector.shape_cast %86 : vector<1x32x64xf32> to vector<32x64xf32>
    %cst_92 = arith.constant dense<0.000000e+00> : vector<78x64xf32>
    %88 = tpu.matmul %85, %87, %cst_92 {dimension_numbers = #tpu.dot_dimension_numbers<[1], [0], [0], [1], [0, 0, 1, 1], [], []>} : vector<78x32xf32>, vector<32x64xf32>, vector<78x64xf32> -> vector<78x64xf32>
    %89 = arith.addf %84, %88 : vector<78x64xf32>
    %c0_93 = arith.constant 0 : index
    %c0_94 = arith.constant 0 : index
    %90 = vector.load %arg9[%c0_93, %c0_94] : memref<1x64xf32, #tpu.memory_space<vmem>>, vector<1x64xf32>
    %91 = vector.broadcast %90 : vector<1x64xf32> to vector<78x64xf32>
    %92 = arith.addf %89, %91 : vector<78x64xf32>
    %cst_95 = arith.constant 0.000000e+00 : f32
    %93 = vector.broadcast %cst_95 : f32 to vector<78x64xf32>
    %94 = arith.maximumf %92, %93 : vector<78x64xf32>
    %cst_96 = arith.constant dense<0.000000e+00> : vector<128x64xf32>
    %95 = tpu.matmul %75, %94, %cst_96 {dimension_numbers = #tpu.dot_dimension_numbers<[1], [0], [0], [1], [0, 0, 1, 1], [], []>} : vector<128x78xf32>, vector<78x64xf32>, vector<128x64xf32> -> vector<128x64xf32>
    %c0_97 = arith.constant 0 : index
    %c0_98 = arith.constant 0 : index
    %96 = vector.load %arg20[%c0_97, %c0_98] : memref<128x64xf32, #tpu.memory_space<vmem>>, vector<128x64xf32>
    tpu.vector_store %arg20[%c0_97, %c0_98], %95 {strides = array<i32>} : memref<128x64xf32, #tpu.memory_space<vmem>>, vector<128x64xf32>,
    %c0_99 = arith.constant 0 : index
    %c0_100 = arith.constant 0 : index
    %97 = vector.load %arg13[%c0_99, %c0_100] : memref<240x126xf32, #tpu.memory_space<vmem>>, vector<240x126xf32>
    %c0_101 = arith.constant 0 : index
    %c0_102 = arith.constant 0 : index
    %98 = vector.load %arg20[%c0_101, %c0_102] : memref<128x64xf32, #tpu.memory_space<vmem>>, vector<126x64xf32>
    %c0_103 = arith.constant 0 : index
    %c0_104 = arith.constant 0 : index
    %c0_105 = arith.constant 0 : index
    %99 = vector.load %arg11[%c0_103, %c0_104, %c0_105] : memref<3x64x224xf32, #tpu.memory_space<vmem>>, vector<1x64x224xf32>
    %100 = vector.shape_cast %99 : vector<1x64x224xf32> to vector<64x224xf32>
    %cst_106 = arith.constant dense<0.000000e+00> : vector<126x224xf32>
    %101 = tpu.matmul %98, %100, %cst_106 {dimension_numbers = #tpu.dot_dimension_numbers<[1], [0], [0], [1], [0, 0, 1, 1], [], []>} : vector<126x64xf32>, vector<64x224xf32>, vector<126x224xf32> -> vector<126x224xf32>
    %c1_107 = arith.constant 1 : index
    %c0_108 = arith.constant 0 : index
    %102 = vector.load %arg20[%c1_107, %c0_108] : memref<128x64xf32, #tpu.memory_space<vmem>>, vector<126x64xf32>
    %c1_109 = arith.constant 1 : index
    %c0_110 = arith.constant 0 : index
    %c0_111 = arith.constant 0 : index
    %103 = vector.load %arg11[%c1_109, %c0_110, %c0_111] : memref<3x64x224xf32, #tpu.memory_space<vmem>>, vector<1x64x224xf32>
    %104 = vector.shape_cast %103 : vector<1x64x224xf32> to vector<64x224xf32>
    %cst_112 = arith.constant dense<0.000000e+00> : vector<126x224xf32>
    %105 = tpu.matmul %102, %104, %cst_112 {dimension_numbers = #tpu.dot_dimension_numbers<[1], [0], [0], [1], [0, 0, 1, 1], [], []>} : vector<126x64xf32>, vector<64x224xf32>, vector<126x224xf32> -> vector<126x224xf32>
    %106 = arith.addf %101, %105 : vector<126x224xf32>
    %c2_113 = arith.constant 2 : index
    %c0_114 = arith.constant 0 : index
    %107 = vector.load %arg20[%c2_113, %c0_114] : memref<128x64xf32, #tpu.memory_space<vmem>>, vector<126x64xf32>
    %c2_115 = arith.constant 2 : index
    %c0_116 = arith.constant 0 : index
    %c0_117 = arith.constant 0 : index
    %108 = vector.load %arg11[%c2_115, %c0_116, %c0_117] : memref<3x64x224xf32, #tpu.memory_space<vmem>>, vector<1x64x224xf32>
    %109 = vector.shape_cast %108 : vector<1x64x224xf32> to vector<64x224xf32>
    %cst_118 = arith.constant dense<0.000000e+00> : vector<126x224xf32>
    %110 = tpu.matmul %107, %109, %cst_118 {dimension_numbers = #tpu.dot_dimension_numbers<[1], [0], [0], [1], [0, 0, 1, 1], [], []>} : vector<126x64xf32>, vector<64x224xf32>, vector<126x224xf32> -> vector<126x224xf32>
    %111 = arith.addf %106, %110 : vector<126x224xf32>
    %c0_119 = arith.constant 0 : index
    %c0_120 = arith.constant 0 : index
    %112 = vector.load %arg12[%c0_119, %c0_120] : memref<1x224xf32, #tpu.memory_space<vmem>>, vector<1x224xf32>
    %113 = vector.broadcast %112 : vector<1x224xf32> to vector<126x224xf32>
    %114 = arith.addf %111, %113 : vector<126x224xf32>
    %cst_121 = arith.constant 0.000000e+00 : f32
    %115 = vector.broadcast %cst_121 : f32 to vector<126x224xf32>
    %116 = arith.maximumf %114, %115 : vector<126x224xf32>
    %cst_122 = arith.constant dense<0.000000e+00> : vector<240x224xf32>
    %117 = tpu.matmul %97, %116, %cst_122 {dimension_numbers = #tpu.dot_dimension_numbers<[1], [0], [0], [1], [0, 0, 1, 1], [], []>} : vector<240x126xf32>, vector<126x224xf32>, vector<240x224xf32> -> vector<240x224xf32>
    %c0_123 = arith.constant 0 : index
    %c0_124 = arith.constant 0 : index
    %118 = vector.load %arg21[%c0_123, %c0_124] : memref<240x224xf32, #tpu.memory_space<vmem>>, vector<240x224xf32>
    tpu.vector_store %arg21[%c0_123, %c0_124], %117 {strides = array<i32>} : memref<240x224xf32, #tpu.memory_space<vmem>>, vector<240x224xf32>,
    %c0_125 = arith.constant 0 : index
    %c0_126 = arith.constant 0 : index
    %119 = vector.load %arg16[%c0_125, %c0_126] : memref<224x238xf32, #tpu.memory_space<vmem>>, vector<224x238xf32>
    %c0_127 = arith.constant 0 : index
    %c0_128 = arith.constant 0 : index
    %120 = vector.load %arg21[%c0_127, %c0_128] : memref<240x224xf32, #tpu.memory_space<vmem>>, vector<238x224xf32>
    %c0_129 = arith.constant 0 : index
    %c0_130 = arith.constant 0 : index
    %c0_131 = arith.constant 0 : index
    %121 = vector.load %arg14[%c0_129, %c0_130, %c0_131] : memref<3x224x128xf32, #tpu.memory_space<vmem>>, vector<1x224x128xf32>
    %122 = vector.shape_cast %121 : vector<1x224x128xf32> to vector<224x128xf32>
    %cst_132 = arith.constant dense<0.000000e+00> : vector<238x128xf32>
    %123 = tpu.matmul %120, %122, %cst_132 {dimension_numbers = #tpu.dot_dimension_numbers<[1], [0], [0], [1], [0, 0, 1, 1], [], []>} : vector<238x224xf32>, vector<224x128xf32>, vector<238x128xf32> -> vector<238x128xf32>
    %c1_133 = arith.constant 1 : index
    %c0_134 = arith.constant 0 : index
    %124 = vector.load %arg21[%c1_133, %c0_134] : memref<240x224xf32, #tpu.memory_space<vmem>>, vector<238x224xf32>
    %c1_135 = arith.constant 1 : index
    %c0_136 = arith.constant 0 : index
    %c0_137 = arith.constant 0 : index
    %125 = vector.load %arg14[%c1_135, %c0_136, %c0_137] : memref<3x224x128xf32, #tpu.memory_space<vmem>>, vector<1x224x128xf32>
    %126 = vector.shape_cast %125 : vector<1x224x128xf32> to vector<224x128xf32>
    %cst_138 = arith.constant dense<0.000000e+00> : vector<238x128xf32>
    %127 = tpu.matmul %124, %126, %cst_138 {dimension_numbers = #tpu.dot_dimension_numbers<[1], [0], [0], [1], [0, 0, 1, 1], [], []>} : vector<238x224xf32>, vector<224x128xf32>, vector<238x128xf32> -> vector<238x128xf32>
    %128 = arith.addf %123, %127 : vector<238x128xf32>
    %c2_139 = arith.constant 2 : index
    %c0_140 = arith.constant 0 : index
    %129 = vector.load %arg21[%c2_139, %c0_140] : memref<240x224xf32, #tpu.memory_space<vmem>>, vector<238x224xf32>
    %c2_141 = arith.constant 2 : index
    %c0_142 = arith.constant 0 : index
    %c0_143 = arith.constant 0 : index
    %130 = vector.load %arg14[%c2_141, %c0_142, %c0_143] : memref<3x224x128xf32, #tpu.memory_space<vmem>>, vector<1x224x128xf32>
    %131 = vector.shape_cast %130 : vector<1x224x128xf32> to vector<224x128xf32>
    %cst_144 = arith.constant dense<0.000000e+00> : vector<238x128xf32>
    %132 = tpu.matmul %129, %131, %cst_144 {dimension_numbers = #tpu.dot_dimension_numbers<[1], [0], [0], [1], [0, 0, 1, 1], [], []>} : vector<238x224xf32>, vector<224x128xf32>, vector<238x128xf32> -> vector<238x128xf32>
    %133 = arith.addf %128, %132 : vector<238x128xf32>
    %c0_145 = arith.constant 0 : index
    %c0_146 = arith.constant 0 : index
    %134 = vector.load %arg15[%c0_145, %c0_146] : memref<1x128xf32, #tpu.memory_space<vmem>>, vector<1x128xf32>
    %135 = vector.broadcast %134 : vector<1x128xf32> to vector<238x128xf32>
    %136 = arith.addf %133, %135 : vector<238x128xf32>
    %cst_147 = arith.constant dense<0.000000e+00> : vector<224x128xf32>
    %137 = tpu.matmul %119, %136, %cst_147 {dimension_numbers = #tpu.dot_dimension_numbers<[1], [0], [0], [1], [0, 0, 1, 1], [], []>} : vector<224x238xf32>, vector<238x128xf32>, vector<224x128xf32> -> vector<224x128xf32>
    %cst_148 = arith.constant 0.000000e+00 : f32
    %138 = vector.broadcast %cst_148 : f32 to vector<224x128xf32>
    %139 = arith.cmpf olt, %137, %138 : vector<224x128xf32>
    %cst_149 = arith.constant 0.000000e+00 : f32
    %140 = vector.broadcast %cst_149 : f32 to vector<224x128xf32>
    %141 = arith.subf %140, %137 : vector<224x128xf32>
    %142 = arith.select %139, %137, %141 : vector<224x128xi1>, vector<224x128xf32>
    %143 = math.exp %142 : vector<224x128xf32>
    %cst_150 = arith.constant 1.000000e+00 : f32
    %144 = vector.broadcast %cst_150 : f32 to vector<224x128xf32>
    %145 = arith.addf %144, %143 : vector<224x128xf32>
    %146 = arith.divf %143, %145 : vector<224x128xf32>
    %cst_151 = arith.constant 1.000000e+00 : f32
    %147 = vector.broadcast %cst_151 : f32 to vector<224x128xf32>
    %148 = arith.addf %147, %143 : vector<224x128xf32>
    %cst_152 = arith.constant 1.000000e+00 : f32
    %149 = vector.broadcast %cst_152 : f32 to vector<224x128xf32>
    %150 = arith.divf %149, %148 : vector<224x128xf32>
    %151 = arith.select %139, %146, %150 : vector<224x128xi1>, vector<224x128xf32>
    %c0_153 = arith.constant 0 : index
    %c0_154 = arith.constant 0 : index
    %152 = vector.load %arg17[%c0_153, %c0_154] : memref<224x128xf32, #tpu.memory_space<vmem>>, vector<224x128xf32>
    tpu.vector_store %arg17[%c0_153, %c0_154], %151 {strides = array<i32>} : memref<224x128xf32, #tpu.memory_space<vmem>>, vector<224x128xf32>,
    return
  }
  func.func @transform_0(%arg0: i32) -> (i32, i32) {
    %c0_i32 = arith.constant 0 : i32
    %c0_i32_0 = arith.constant 0 : i32
    return %arg0, %c0_i32 : i32, i32
  }
  func.func @transform_1(%arg0: i32) -> (i32, i32, i32) {
    %c0_i32 = arith.constant 0 : i32
    %c0_i32_0 = arith.constant 0 : i32
    %c0_i32_1 = arith.constant 0 : i32
    %c0_i32_2 = arith.constant 0 : i32
    return %c0_i32, %c0_i32_0, %c0_i32_1 : i32, i32, i32
  }
  func.func @transform_2(%arg0: i32) -> (i32, i32, i32) {
    %c0_i32 = arith.constant 0 : i32
    %c0_i32_0 = arith.constant 0 : i32
    %c0_i32_1 = arith.constant 0 : i32
    %c0_i32_2 = arith.constant 0 : i32
    return %c0_i32, %c0_i32_0, %c0_i32_1 : i32, i32, i32
  }
  func.func @transform_3(%arg0: i32) -> (i32, i32, i32) {
    %c0_i32 = arith.constant 0 : i32
    %c0_i32_0 = arith.constant 0 : i32
    %c0_i32_1 = arith.constant 0 : i32
    %c0_i32_2 = arith.constant 0 : i32
    return %c0_i32, %c0_i32_0, %c0_i32_1 : i32, i32, i32
  }
  func.func @transform_4(%arg0: i32) -> (i32, i32, i32) {
    %c0_i32 = arith.constant 0 : i32
    %c0_i32_0 = arith.constant 0 : i32
    %c0_i32_1 = arith.constant 0 : i32
    %c0_i32_2 = arith.constant 0 : i32
    return %c0_i32, %c0_i32_0, %c0_i32_1 : i32, i32, i32
  }
  func.func @transform_5(%arg0: i32) -> (i32, i32) {
    %c0_i32 = arith.constant 0 : i32
    %c0_i32_0 = arith.constant 0 : i32
    %c0_i32_1 = arith.constant 0 : i32
    return %c0_i32, %c0_i32_0 : i32, i32
  }
  func.func @transform_6(%arg0: i32) -> (i32, i32) {
    %c0_i32 = arith.constant 0 : i32
    %c0_i32_0 = arith.constant 0 : i32
    %c0_i32_1 = arith.constant 0 : i32
    return %c0_i32, %c0_i32_0 : i32, i32
  }
  func.func @transform_7(%arg0: i32) -> (i32, i32, i32) {
    %c0_i32 = arith.constant 0 : i32
    %c0_i32_0 = arith.constant 0 : i32
    %c0_i32_1 = arith.constant 0 : i32
    %c0_i32_2 = arith.constant 0 : i32
    return %c0_i32, %c0_i32_0, %c0_i32_1 : i32, i32, i32
  }
  func.func @transform_8(%arg0: i32) -> (i32, i32) {
    %c0_i32 = arith.constant 0 : i32
    %c0_i32_0 = arith.constant 0 : i32
    %c0_i32_1 = arith.constant 0 : i32
    return %c0_i32, %c0_i32_0 : i32, i32
  }
  func.func @transform_9(%arg0: i32) -> (i32, i32) {
    %c0_i32 = arith.constant 0 : i32
    %c0_i32_0 = arith.constant 0 : i32
    %c0_i32_1 = arith.constant 0 : i32
    return %c0_i32, %c0_i32_0 : i32, i32
  }
  func.func @transform_10(%arg0: i32) -> (i32, i32, i32) {
    %c0_i32 = arith.constant 0 : i32
    %c0_i32_0 = arith.constant 0 : i32
    %c0_i32_1 = arith.constant 0 : i32
    %c0_i32_2 = arith.constant 0 : i32
    return %c0_i32, %c0_i32_0, %c0_i32_1 : i32, i32, i32
  }
  func.func @transform_11(%arg0: i32) -> (i32, i32) {
    %c0_i32 = arith.constant 0 : i32
    %c0_i32_0 = arith.constant 0 : i32
    %c0_i32_1 = arith.constant 0 : i32
    return %c0_i32, %c0_i32_0 : i32, i32
  }
  func.func @transform_12(%arg0: i32) -> (i32, i32) {
    %c0_i32 = arith.constant 0 : i32
    %c0_i32_0 = arith.constant 0 : i32
    %c0_i32_1 = arith.constant 0 : i32
    return %c0_i32, %c0_i32_0 : i32, i32
  }
  func.func @transform_13(%arg0: i32) -> (i32, i32, i32) {
    %c0_i32 = arith.constant 0 : i32
    %c0_i32_0 = arith.constant 0 : i32
    %c0_i32_1 = arith.constant 0 : i32
    %c0_i32_2 = arith.constant 0 : i32
    return %c0_i32, %c0_i32_0, %c0_i32_1 : i32, i32, i32
  }
  func.func @transform_14(%arg0: i32) -> (i32, i32) {
    %c0_i32 = arith.constant 0 : i32
    %c0_i32_0 = arith.constant 0 : i32
    %c0_i32_1 = arith.constant 0 : i32
    return %c0_i32, %c0_i32_0 : i32, i32
  }
  func.func @transform_15(%arg0: i32) -> (i32, i32) {
    %c0_i32 = arith.constant 0 : i32
    %c0_i32_0 = arith.constant 0 : i32
    %c0_i32_1 = arith.constant 0 : i32
    return %c0_i32, %c0_i32_0 : i32, i32
  }
  func.func @transform_16(%arg0: i32) -> (i32, i32) {
    %c0_i32 = arith.constant 0 : i32
    %c0_i32_0 = arith.constant 0 : i32
    return %arg0, %c0_i32 : i32, i32
  }
}

</mosaic_0001>

<llo_original>
// kernel: tile.33
$region0: #{tile.33}
  #allocation0 [shape = 's32[1]{0}', space=sflag, size = 0x4, scoped, tag = 'scoped memory for tile.33']
  %s0 = inlined_call_operand.vmem [shape: f32[16], index: 0, kind: input, shape index: {}]
  %s1 = inlined_call_operand.vmem [shape: f32[14,16], index: 1, kind: output, shape index: {}]
  // Predicated region
  $region2: #{tile.33} parent=0 // pred_check
    _
  $region3: #{tile.33} parent=0 // pred_check_branch
    %3 = sbr.rel (0) target = $region5
  $region4: #{tile.33} parent=0 // pred_region
    _
  $region5: #{tile.33} parent=0 // pred_fallthru
    _
  %v4 = vld [vmem:[%s0] ss:$0 sm:$0xff]
  %5 = vst [vmem:[%s1] sm:$0xff] %v4
  %s6 = scalar_lea.vmem %s1, 8
  %7 = vst [vmem:[%s6] sm:$0xff] %v4

// kernel: tile.34
$region0: #{tile.34}
  %s0 = inlined_call_operand.vmem [shape: f32[14,16], index: 0, kind: input, shape index: {}]
  %s1 = inlined_call_operand.vmem [shape: f32[1,224], index: 1, kind: output, shape index: {}]
  $region1: #{tile.34} parent=0
    #allocation0 [shape = 'u8[8192]{0}', space=vmem, size = 0x2000, scoped, tag = 'scoped mem for output reshape']
    %s2 = smov 3
    %v3 = vld [vmem:[%s0] ss:$8 sm:%s2]
    %vm4 = vcmask 130048
    %5 = vst.msk [vmem:[#allocation0] ss:$8 sm:$0x3] %vm4, %v3
    %s6 = scalar_lea.vmem %s0, 7
    %v7 = vld [vmem:[%s6] sm:$0x1]
    %8 = vrot.lane.b32.xlu0 %v7, 112
    %v9 = vpop.permute.xlu0 %8
    %vm10 = vcmask 1048448
    %11 = vst.msk [vmem:[#allocation0] sm:$0x1] %vm10, %v9
    %s12 = scalar_lea.vmem %s0, 6
    %v13 = vld [vmem:[%s12] sm:$0x1]
    %14 = vrot.lane.b32.xlu0 %v13, 96
    %v15 = vpop.permute.xlu0 %14
    %vm16 = vcmask 917248
    %17 = vst.msk [vmem:[#allocation0] sm:$0x1] %vm16, %v15
    %s18 = scalar_lea.vmem %s0, 5
    %s19 = smov 3
    %v20 = vld [vmem:[%s18] ss:$8 sm:%s19]
    %21 = vrot.lane.b32.xlu0 %v20, 80
    %v22 = vpop.permute.xlu0 %21
    %vm23 = vcmask 786048
    %24 = vst.msk [vmem:[#allocation0] ss:$8 sm:$0x3] %vm23, %v22
    %s25 = scalar_lea.vmem %s0, 4
    %s26 = smov 3
    %v27 = vld [vmem:[%s25] ss:$8 sm:%s26]
    %28 = vrot.lane.b32.xlu0 %v27, 64
    %v29 = vpop.permute.xlu0 %28
    %vm30 = vcmask 654848
    %31 = vst.msk [vmem:[#allocation0] ss:$8 sm:$0x3] %vm30, %v29
    %s32 = scalar_lea.vmem %s0, 3
    %s33 = smov 3
    %v34 = vld [vmem:[%s32] ss:$8 sm:%s33]
    %35 = vrot.lane.b32.xlu0 %v34, 48
    %v36 = vpop.permute.xlu0 %35
    %vm37 = vcmask 523648
    %38 = vst.msk [vmem:[#allocation0] ss:$8 sm:$0x3] %vm37, %v36
    %s39 = scalar_lea.vmem %s0, 2
    %s40 = smov 3
    %v41 = vld [vmem:[%s39] ss:$8 sm:%s40]
    %42 = vrot.lane.b32.xlu0 %v41, 32
    %v43 = vpop.permute.xlu0 %42
    %vm44 = vcmask 392448
    %45 = vst.msk [vmem:[#allocation0] ss:$8 sm:$0x3] %vm44, %v43
    %s46 = scalar_lea.vmem %s0, 1
    %s47 = smov 3
    %v48 = vld [vmem:[%s46] ss:$8 sm:%s47]
    %49 = vrot.lane.b32.xlu0 %v48, 16
    %v50 = vpop.permute.xlu0 %49
    %vm51 = vcmask 261248
    %52 = vst.msk [vmem:[#allocation0] ss:$8 sm:$0x3] %vm51, %v50
    %s54 = sshllo.u32 0, 1
    %v56 = vld [vmem:[#allocation0] sm:%s54]
    %s57 = sshllo.u32 0, 1
    %58 = vst [vmem:[%s1] sm:%s57] %v56
    %s59 = scalar_lea.vmem [#allocation0], 8
    %v60 = vld [vmem:[%s59] sm:%s54]
    %s61 = sshllo.u32 0, 1
    %s62 = scalar_lea.vmem %s1, 1
    %63 = vst [vmem:[%s62] sm:%s61] %v60

// kernel: tile.28
$region0: #{tile.28}
  #allocation0 [shape = 's32[1]{0}', space=sflag, size = 0x4, scoped, tag = 'scoped memory for tile.28']
  %s0 = inlined_call_operand.vmem [shape: f32[8], index: 0, kind: input, shape index: {}]
  %s1 = inlined_call_operand.vmem [shape: f32[8,8], index: 1, kind: output, shape index: {}]
  // Predicated region
  $region2: #{tile.28} parent=0 // pred_check
    _
  $region3: #{tile.28} parent=0 // pred_check_branch
    %3 = sbr.rel (0) target = $region5
  $region4: #{tile.28} parent=0 // pred_region
    _
  $region5: #{tile.28} parent=0 // pred_fallthru
    _
  %v4 = vld [vmem:[%s0] ss:$0 sm:$0xff]
  %5 = vst [vmem:[%s1] sm:$0xff] %v4

// kernel: tile.29
$region0: #{tile.29}
  %s0 = inlined_call_operand.vmem [shape: f32[8,8], index: 0, kind: input, shape index: {}]
  %s1 = inlined_call_operand.vmem [shape: f32[1,64], index: 1, kind: output, shape index: {}]
  $region1: #{tile.29} parent=0
    #allocation0 [shape = 'u8[4096]{0}', space=vmem, size = 0x1000, scoped, tag = 'scoped mem for output reshape']
    %v2 = vld [vmem:[%s0] sm:$0x1]
    %vm3 = vcmask 64512
    %4 = vst.msk [vmem:[#allocation0] sm:$0x1] %vm3, %v2
    %s5 = scalar_lea.vmem %s0, 7
    %v6 = vld [vmem:[%s5] sm:$0x1]
    %7 = vrot.lane.b32.xlu0 %v6, 56
    %v8 = vpop.permute.xlu0 %7
    %vm9 = vcmask 523712
    %10 = vst.msk [vmem:[#allocation0] sm:$0x1] %vm9, %v8
    %s11 = scalar_lea.vmem %s0, 6
    %v12 = vld [vmem:[%s11] sm:$0x1]
    %13 = vrot.lane.b32.xlu0 %v12, 48
    %v14 = vpop.permute.xlu0 %13
    %vm15 = vcmask 458112
    %16 = vst.msk [vmem:[#allocation0] sm:$0x1] %vm15, %v14
    %s17 = scalar_lea.vmem %s0, 5
    %v18 = vld [vmem:[%s17] sm:$0x1]
    %19 = vrot.lane.b32.xlu0 %v18, 40
    %v20 = vpop.permute.xlu0 %19
    %vm21 = vcmask 392512
    %22 = vst.msk [vmem:[#allocation0] sm:$0x1] %vm21, %v20
    %s23 = scalar_lea.vmem %s0, 4
    %v24 = vld [vmem:[%s23] sm:$0x1]
    %25 = vrot.lane.b32.xlu0 %v24, 32
    %v26 = vpop.permute.xlu0 %25
    %vm27 = vcmask 326912
    %28 = vst.msk [vmem:[#allocation0] sm:$0x1] %vm27, %v26
    %s29 = scalar_lea.vmem %s0, 3
    %v30 = vld [vmem:[%s29] sm:$0x1]
    %31 = vrot.lane.b32.xlu0 %v30, 24
    %v32 = vpop.permute.xlu0 %31
    %vm33 = vcmask 261312
    %34 = vst.msk [vmem:[#allocation0] sm:$0x1] %vm33, %v32
    %s35 = scalar_lea.vmem %s0, 2
    %v36 = vld [vmem:[%s35] sm:$0x1]
    %37 = vrot.lane.b32.xlu0 %v36, 16
    %v38 = vpop.permute.xlu0 %37
    %vm39 = vcmask 195712
    %40 = vst.msk [vmem:[#allocation0] sm:$0x1] %vm39, %v38
    %s41 = scalar_lea.vmem %s0, 1
    %v42 = vld [vmem:[%s41] sm:$0x1]
    %43 = vrot.lane.b32.xlu0 %v42, 8
    %v44 = vpop.permute.xlu0 %43
    %vm45 = vcmask 130112
    %46 = vst.msk [vmem:[#allocation0] sm:$0x1] %vm45, %v44
    %s48 = sshllo.u32 0, 1
    %v50 = vld [vmem:[#allocation0] sm:%s48]
    %s51 = sshllo.u32 0, 1
    %52 = vst [vmem:[%s1] sm:%s51] %v50

// kernel: tile.23
$region0: #{tile.23}
  #allocation0 [shape = 's32[1]{0}', space=sflag, size = 0x4, scoped, tag = 'scoped memory for tile.23']
  %s0 = inlined_call_operand.vmem [shape: f32[8], index: 0, kind: input, shape index: {}]
  %s1 = inlined_call_operand.vmem [shape: f32[4,8], index: 1, kind: output, shape index: {}]
  // Predicated region
  $region2: #{tile.23} parent=0 // pred_check
    _
  $region3: #{tile.23} parent=0 // pred_check_branch
    %3 = sbr.rel (0) target = $region5
  $region4: #{tile.23} parent=0 // pred_region
    _
  $region5: #{tile.23} parent=0 // pred_fallthru
    _
  %v4 = vld [vmem:[%s0] ss:$0 sm:$0xff]
  %5 = vst [vmem:[%s1] sm:$0xf] %v4

// kernel: tile.24
$region0: #{tile.24}
  %s0 = inlined_call_operand.vmem [shape: f32[4,8], index: 0, kind: input, shape index: {}]
  %s1 = inlined_call_operand.vmem [shape: f32[1,32], index: 1, kind: output, shape index: {}]
  $region1: #{tile.24} parent=0
    #allocation0 [shape = 'u8[4096]{0}', space=vmem, size = 0x1000, scoped, tag = 'scoped mem for output reshape']
    #allocation1 [shape = 'u8[4096]{0}', space=vmem, size = 0x1000, scoped, tag = 'scoped mem for input reshape']
    %s3 = sshllo.u32 0, 4
    %v4 = vld [vmem:[%s0] sm:%s3]
    %5 = vst [vmem:[#allocation1] sm:%s3] %v4
    %v6 = vld [vmem:[#allocation1] sm:$0x1]
    %vm7 = vcmask 64512
    %8 = vst.msk [vmem:[#allocation0] sm:$0x1] %vm7, %v6
    %s9 = scalar_lea.vmem [#allocation1], 3
    %v10 = vld [vmem:[%s9] sm:$0x1]
    %11 = vrot.lane.b32.xlu0 %v10, 24
    %v12 = vpop.permute.xlu0 %11
    %vm13 = vcmask 261312
    %14 = vst.msk [vmem:[#allocation0] sm:$0x1] %vm13, %v12
    %s15 = scalar_lea.vmem [#allocation1], 2
    %v16 = vld [vmem:[%s15] sm:$0x1]
    %17 = vrot.lane.b32.xlu0 %v16, 16
    %v18 = vpop.permute.xlu0 %17
    %vm19 = vcmask 195712
    %20 = vst.msk [vmem:[#allocation0] sm:$0x1] %vm19, %v18
    %s21 = scalar_lea.vmem [#allocation1], 1
    %v22 = vld [vmem:[%s21] sm:$0x1]
    %23 = vrot.lane.b32.xlu0 %v22, 8
    %v24 = vpop.permute.xlu0 %23
    %vm25 = vcmask 130112
    %26 = vst.msk [vmem:[#allocation0] sm:$0x1] %vm25, %v24
    %s28 = sshllo.u32 0, 1
    %v30 = vld [vmem:[#allocation0] sm:%s28]
    %s31 = sshllo.u32 0, 1
    %32 = vst [vmem:[%s1] sm:%s31] %v30

// kernel: mnist_decoder_forward.1
$region0: #{mnist_decoder_forward.1}
  #allocation0 [shape = 'u32[]', space=smem, size = 0x4, offset = 0x4, fixed_abs, tag = 'smem constant byte address 0x4 - core index']
  #allocation1 [shape = 'u32[144,128]{1,0:T(1,128)}', space=vmem, size = 0x12000, scoped, tag = 'internal scratch']
  #allocation2 [shape = 'f32[48,32]{1,0:T(8,128)}', space=vmem, size = 0x6000, scoped, tag = 'scratch operand']
  #allocation3 [shape = 'f32[80,32]{1,0:T(8,128)}', space=vmem, size = 0xa000, scoped, tag = 'scratch operand']
  #allocation4 [shape = 'f32[128,64]{1,0:T(8,128)}', space=vmem, size = 0x10000, scoped, tag = 'scratch operand']
  #allocation5 [shape = 'f32[240,224]{1,0:T(8,128)}', space=vmem, size = 0x3c000, scoped, tag = 'scratch operand']
  %s0 = inlined_call_operand.vmem [shape: f32[16,32], index: 0, kind: input, shape index: {}]
  %s1 = inlined_call_operand.vmem [shape: f32[4,32,32], index: 1, kind: input, shape index: {}]
  %s2 = inlined_call_operand.vmem [shape: f32[4,1,32], index: 2, kind: input, shape index: {}]
  %s3 = inlined_call_operand.vmem [shape: f32[4,48,8], index: 3, kind: input, shape index: {}]
  %s4 = inlined_call_operand.vmem [shape: f32[3,32,32], index: 4, kind: input, shape index: {}]
  %s5 = inlined_call_operand.vmem [shape: f32[1,32], index: 5, kind: input, shape index: {}]
  %s6 = inlined_call_operand.vmem [shape: f32[80,46], index: 6, kind: input, shape index: {}]
  %s7 = inlined_call_operand.vmem [shape: f32[3,32,64], index: 7, kind: input, shape index: {}]
  %s8 = inlined_call_operand.vmem [shape: f32[1,64], index: 8, kind: input, shape index: {}]
  %s9 = inlined_call_operand.vmem [shape: f32[128,78], index: 9, kind: input, shape index: {}]
  %s10 = inlined_call_operand.vmem [shape: f32[3,64,224], index: 10, kind: input, shape index: {}]
  %s11 = inlined_call_operand.vmem [shape: f32[1,224], index: 11, kind: input, shape index: {}]
  %s12 = inlined_call_operand.vmem [shape: f32[240,126], index: 12, kind: input, shape index: {}]
  %s13 = inlined_call_operand.vmem [shape: f32[3,224,128], index: 13, kind: input, shape index: {}]
  %s14 = inlined_call_operand.vmem [shape: f32[1,128], index: 14, kind: input, shape index: {}]
  %s15 = inlined_call_operand.vmem [shape: f32[224,238], index: 15, kind: input, shape index: {}]
  %s16 = inlined_call_operand.vmem [shape: f32[448,128], index: 16, kind: output, shape index: {}]
  %s17 = sld [smem:[#allocation0]]
  $region97: #{mnist_decoder_forward.1} parent=0
    _
  %s19 = ssub.s32 1, %s17
  %s20 = scalar_select 0, %s19, %s17
  loop: start=0, step=1, limit=4
  $region2: #{mnist_decoder_forward.1} parent=0 // loop_pre_header
    _
  $region3: #{mnist_decoder_forward.1} parent=0 // loop_header
    %s22 = sphi 0, %s26
    %p23 = scmp.ge.s32.totalorder %s22, 4
    %s32 = sphi 0, %s34
    %s35 = sphi 0, %s32
    %s36 = sphi 0, %s35
    %s52 = sphi 0, %s36
    %s56 = sphi 0, %s56
    %s58 = sphi 0, %s56
    %s59 = sphi 0, %s58
    %s73 = sphi 0, %s59
    %s77 = sphi 0, %s77
    %s79 = sphi 0, %s77
    %s80 = sphi 0, %s79
    %s94 = sphi 0, %s80
    %s98 = sphi 0, %s98
    %s100 = sphi 0, %s98
    %s101 = sphi 0, %s100
    %s115 = sphi 0, %s101
    %s119 = sphi 0, %s119
    %s121 = sphi 0, %s119
    %s122 = sphi 0, %s121
    %s136 = sphi 0, %s122
    %s140 = sphi 0, %s140
    %s142 = sphi 0, %s140
    %s143 = sphi 0, %s142
    %s157 = sphi 0, %s143
    %s161 = sphi 0, %s161
    %s163 = sphi 0, %s161
    %s164 = sphi 0, %s163
    %s178 = sphi 0, %s164
    %s182 = sphi 0, %s182
    %s184 = sphi 0, %s182
    %s185 = sphi 0, %s184
    %s199 = sphi 0, %s185
    %s203 = sphi 0, %s203
    %s205 = sphi 0, %s203
    %s206 = sphi 0, %s205
    %s220 = sphi 0, %s206
    %s224 = sphi 0, %s224
    %s226 = sphi 0, %s224
    %s227 = sphi 0, %s226
    %s241 = sphi 0, %s227
    %s245 = sphi 0, %s245
    %s247 = sphi 0, %s245
    %s248 = sphi 0, %s247
    %s262 = sphi 0, %s248
    %s266 = sphi 0, %s266
    %s268 = sphi 0, %s266
    %s269 = sphi 0, %s268
    %s283 = sphi 0, %s269
    %s287 = sphi 0, %s287
    %s289 = sphi 0, %s287
    %s290 = sphi 0, %s289
    %s304 = sphi 0, %s290
    %s308 = sphi 0, %s308
    %s310 = sphi 0, %s308
    %s311 = sphi 0, %s310
    %s325 = sphi 0, %s311
    %s329 = sphi 0, %s329
    %s331 = sphi 0, %s329
    %s332 = sphi 0, %s331
    %s346 = sphi 0, %s332
    %s350 = sphi 0, %s350
    %s352 = sphi 0, %s350
    %s353 = sphi 0, %s352
    %s367 = sphi 0, %s353
    %s373 = sphi 0, %s375
    %s376 = sphi 0, %s373
    %s377 = sphi 0, %s376
    %s393 = sphi 0, %s377
  $region4: #{mnist_decoder_forward.1} parent=0 // loop_header_branch
    %25 = sbr.rel (%p23) target = $region8
  $region5: #{mnist_decoder_forward.1} parent=0 // loop_body
    %s27 = ssub.s32 %s22, 1
    %s28 = ssub.s32 %s22, 2
    %s29 = sadd.s32 %s22, 1
    %s30 = ssub.s32 %s22, %s29
    %p31 = scmp.eq.s32.totalorder %s30, 0
    %s33 = sadd.s32 %s32, 1
    %s34 = scalar_select %p31, %s32, %s33
    %p37 = pneg %p31
    %p38 = scmp.eq.s32.totalorder %s22, 1
    %p39 = por %p37, %p38
    %p40 = scmp.ne.s32.totalorder %s32, %s35
    %p41 = scmp.eq.s32.totalorder %s22, 0
    %p42 = por %p40, %p41
    %p43 = scmp.ne.s32.totalorder %s32, %s35
    %p44 = scmp.eq.s32.totalorder %s27, 1
    %p45 = por %p43, %p44
    %p46 = scmp.ne.s32.totalorder %s35, %s36
    %p47 = scmp.eq.s32.totalorder %s27, 0
    %p48 = por %p46, %p47
    %p49 = scmp.ne.s32.totalorder %s35, %s36
    %p50 = scmp.eq.s32.totalorder %s28, 1
    %p51 = por %p49, %p50
    %p53 = scmp.ne.s32.totalorder %s36, %s52
    %p54 = scmp.eq.s32.totalorder %s28, 0
    %p55 = por %p53, %p54
    %s57 = sadd.s32 %s56, 1
    %p60 = scmp.eq.s32.totalorder %s22, 1
    %p61 = scmp.ne.s32.totalorder %s56, %s58
    %p62 = scmp.eq.s32.totalorder %s22, 0
    %p63 = por %p61, %p62
    %p64 = scmp.ne.s32.totalorder %s56, %s58
    %p65 = scmp.eq.s32.totalorder %s27, 1
    %p66 = por %p64, %p65
    %p67 = scmp.ne.s32.totalorder %s58, %s59
    %p68 = scmp.eq.s32.totalorder %s27, 0
    %p69 = por %p67, %p68
    %p70 = scmp.ne.s32.totalorder %s58, %s59
    %p71 = scmp.eq.s32.totalorder %s28, 1
    %p72 = por %p70, %p71
    %p74 = scmp.ne.s32.totalorder %s59, %s73
    %p75 = scmp.eq.s32.totalorder %s28, 0
    %p76 = por %p74, %p75
    %s78 = sadd.s32 %s77, 1
    %p81 = scmp.eq.s32.totalorder %s22, 1
    %p82 = scmp.ne.s32.totalorder %s77, %s79
    %p83 = scmp.eq.s32.totalorder %s22, 0
    %p84 = por %p82, %p83
    %p85 = scmp.ne.s32.totalorder %s77, %s79
    %p86 = scmp.eq.s32.totalorder %s27, 1
    %p87 = por %p85, %p86
    %p88 = scmp.ne.s32.totalorder %s79, %s80
    %p89 = scmp.eq.s32.totalorder %s27, 0
    %p90 = por %p88, %p89
    %p91 = scmp.ne.s32.totalorder %s79, %s80
    %p92 = scmp.eq.s32.totalorder %s28, 1
    %p93 = por %p91, %p92
    %p95 = scmp.ne.s32.totalorder %s80, %s94
    %p96 = scmp.eq.s32.totalorder %s28, 0
    %p97 = por %p95, %p96
    %s99 = sadd.s32 %s98, 1
    %p102 = scmp.eq.s32.totalorder %s22, 1
    %p103 = scmp.ne.s32.totalorder %s98, %s100
    %p104 = scmp.eq.s32.totalorder %s22, 0
    %p105 = por %p103, %p104
    %p106 = scmp.ne.s32.totalorder %s98, %s100
    %p107 = scmp.eq.s32.totalorder %s27, 1
    %p108 = por %p106, %p107
    %p109 = scmp.ne.s32.totalorder %s100, %s101
    %p110 = scmp.eq.s32.totalorder %s27, 0
    %p111 = por %p109, %p110
    %p112 = scmp.ne.s32.totalorder %s100, %s101
    %p113 = scmp.eq.s32.totalorder %s28, 1
    %p114 = por %p112, %p113
    %p116 = scmp.ne.s32.totalorder %s101, %s115
    %p117 = scmp.eq.s32.totalorder %s28, 0
    %p118 = por %p116, %p117
    %s120 = sadd.s32 %s119, 1
    %p123 = scmp.eq.s32.totalorder %s22, 1
    %p124 = scmp.ne.s32.totalorder %s119, %s121
    %p125 = scmp.eq.s32.totalorder %s22, 0
    %p126 = por %p124, %p125
    %p127 = scmp.ne.s32.totalorder %s119, %s121
    %p128 = scmp.eq.s32.totalorder %s27, 1
    %p129 = por %p127, %p128
    %p130 = scmp.ne.s32.totalorder %s121, %s122
    %p131 = scmp.eq.s32.totalorder %s27, 0
    %p132 = por %p130, %p131
    %p133 = scmp.ne.s32.totalorder %s121, %s122
    %p134 = scmp.eq.s32.totalorder %s28, 1
    %p135 = por %p133, %p134
    %p137 = scmp.ne.s32.totalorder %s122, %s136
    %p138 = scmp.eq.s32.totalorder %s28, 0
    %p139 = por %p137, %p138
    %s141 = sadd.s32 %s140, 1
    %p144 = scmp.eq.s32.totalorder %s22, 1
    %p145 = scmp.ne.s32.totalorder %s140, %s142
    %p146 = scmp.eq.s32.totalorder %s22, 0
    %p147 = por %p145, %p146
    %p148 = scmp.ne.s32.totalorder %s140, %s142
    %p149 = scmp.eq.s32.totalorder %s27, 1
    %p150 = por %p148, %p149
    %p151 = scmp.ne.s32.totalorder %s142, %s143
    %p152 = scmp.eq.s32.totalorder %s27, 0
    %p153 = por %p151, %p152
    %p154 = scmp.ne.s32.totalorder %s142, %s143
    %p155 = scmp.eq.s32.totalorder %s28, 1
    %p156 = por %p154, %p155
    %p158 = scmp.ne.s32.totalorder %s143, %s157
    %p159 = scmp.eq.s32.totalorder %s28, 0
    %p160 = por %p158, %p159
    %s162 = sadd.s32 %s161, 1
    %p165 = scmp.eq.s32.totalorder %s22, 1
    %p166 = scmp.ne.s32.totalorder %s161, %s163
    %p167 = scmp.eq.s32.totalorder %s22, 0
    %p168 = por %p166, %p167
    %p169 = scmp.ne.s32.totalorder %s161, %s163
    %p170 = scmp.eq.s32.totalorder %s27, 1
    %p171 = por %p169, %p170
    %p172 = scmp.ne.s32.totalorder %s163, %s164
    %p173 = scmp.eq.s32.totalorder %s27, 0
    %p174 = por %p172, %p173
    %p175 = scmp.ne.s32.totalorder %s163, %s164
    %p176 = scmp.eq.s32.totalorder %s28, 1
    %p177 = por %p175, %p176
    %p179 = scmp.ne.s32.totalorder %s164, %s178
    %p180 = scmp.eq.s32.totalorder %s28, 0
    %p181 = por %p179, %p180
    %s183 = sadd.s32 %s182, 1
    %p186 = scmp.eq.s32.totalorder %s22, 1
    %p187 = scmp.ne.s32.totalorder %s182, %s184
    %p188 = scmp.eq.s32.totalorder %s22, 0
    %p189 = por %p187, %p188
    %p190 = scmp.ne.s32.totalorder %s182, %s184
    %p191 = scmp.eq.s32.totalorder %s27, 1
    %p192 = por %p190, %p191
    %p193 = scmp.ne.s32.totalorder %s184, %s185
    %p194 = scmp.eq.s32.totalorder %s27, 0
    %p195 = por %p193, %p194
    %p196 = scmp.ne.s32.totalorder %s184, %s185
    %p197 = scmp.eq.s32.totalorder %s28, 1
    %p198 = por %p196, %p197
    %p200 = scmp.ne.s32.totalorder %s185, %s199
    %p201 = scmp.eq.s32.totalorder %s28, 0
    %p202 = por %p200, %p201
    %s204 = sadd.s32 %s203, 1
    %p207 = scmp.eq.s32.totalorder %s22, 1
    %p208 = scmp.ne.s32.totalorder %s203, %s205
    %p209 = scmp.eq.s32.totalorder %s22, 0
    %p210 = por %p208, %p209
    %p211 = scmp.ne.s32.totalorder %s203, %s205
    %p212 = scmp.eq.s32.totalorder %s27, 1
    %p213 = por %p211, %p212
    %p214 = scmp.ne.s32.totalorder %s205, %s206
    %p215 = scmp.eq.s32.totalorder %s27, 0
    %p216 = por %p214, %p215
    %p217 = scmp.ne.s32.totalorder %s205, %s206
    %p218 = scmp.eq.s32.totalorder %s28, 1
    %p219 = por %p217, %p218
    %p221 = scmp.ne.s32.totalorder %s206, %s220
    %p222 = scmp.eq.s32.totalorder %s28, 0
    %p223 = por %p221, %p222
    %s225 = sadd.s32 %s224, 1
    %p228 = scmp.eq.s32.totalorder %s22, 1
    %p229 = scmp.ne.s32.totalorder %s224, %s226
    %p230 = scmp.eq.s32.totalorder %s22, 0
    %p231 = por %p229, %p230
    %p232 = scmp.ne.s32.totalorder %s224, %s226
    %p233 = scmp.eq.s32.totalorder %s27, 1
    %p234 = por %p232, %p233
    %p235 = scmp.ne.s32.totalorder %s226, %s227
    %p236 = scmp.eq.s32.totalorder %s27, 0
    %p237 = por %p235, %p236
    %p238 = scmp.ne.s32.totalorder %s226, %s227
    %p239 = scmp.eq.s32.totalorder %s28, 1
    %p240 = por %p238, %p239
    %p242 = scmp.ne.s32.totalorder %s227, %s241
    %p243 = scmp.eq.s32.totalorder %s28, 0
    %p244 = por %p242, %p243
    %s246 = sadd.s32 %s245, 1
    %p249 = scmp.eq.s32.totalorder %s22, 1
    %p250 = scmp.ne.s32.totalorder %s245, %s247
    %p251 = scmp.eq.s32.totalorder %s22, 0
    %p252 = por %p250, %p251
    %p253 = scmp.ne.s32.totalorder %s245, %s247
    %p254 = scmp.eq.s32.totalorder %s27, 1
    %p255 = por %p253, %p254
    %p256 = scmp.ne.s32.totalorder %s247, %s248
    %p257 = scmp.eq.s32.totalorder %s27, 0
    %p258 = por %p256, %p257
    %p259 = scmp.ne.s32.totalorder %s247, %s248
    %p260 = scmp.eq.s32.totalorder %s28, 1
    %p261 = por %p259, %p260
    %p263 = scmp.ne.s32.totalorder %s248, %s262
    %p264 = scmp.eq.s32.totalorder %s28, 0
    %p265 = por %p263, %p264
    %s267 = sadd.s32 %s266, 1
    %p270 = scmp.eq.s32.totalorder %s22, 1
    %p271 = scmp.ne.s32.totalorder %s266, %s268
    %p272 = scmp.eq.s32.totalorder %s22, 0
    %p273 = por %p271, %p272
    %p274 = scmp.ne.s32.totalorder %s266, %s268
    %p275 = scmp.eq.s32.totalorder %s27, 1
    %p276 = por %p274, %p275
    %p277 = scmp.ne.s32.totalorder %s268, %s269
    %p278 = scmp.eq.s32.totalorder %s27, 0
    %p279 = por %p277, %p278
    %p280 = scmp.ne.s32.totalorder %s268, %s269
    %p281 = scmp.eq.s32.totalorder %s28, 1
    %p282 = por %p280, %p281
    %p284 = scmp.ne.s32.totalorder %s269, %s283
    %p285 = scmp.eq.s32.totalorder %s28, 0
    %p286 = por %p284, %p285
    %s288 = sadd.s32 %s287, 1
    %p291 = scmp.eq.s32.totalorder %s22, 1
    %p292 = scmp.ne.s32.totalorder %s287, %s289
    %p293 = scmp.eq.s32.totalorder %s22, 0
    %p294 = por %p292, %p293
    %p295 = scmp.ne.s32.totalorder %s287, %s289
    %p296 = scmp.eq.s32.totalorder %s27, 1
    %p297 = por %p295, %p296
    %p298 = scmp.ne.s32.totalorder %s289, %s290
    %p299 = scmp.eq.s32.totalorder %s27, 0
    %p300 = por %p298, %p299
    %p301 = scmp.ne.s32.totalorder %s289, %s290
    %p302 = scmp.eq.s32.totalorder %s28, 1
    %p303 = por %p301, %p302
    %p305 = scmp.ne.s32.totalorder %s290, %s304
    %p306 = scmp.eq.s32.totalorder %s28, 0
    %p307 = por %p305, %p306
    %s309 = sadd.s32 %s308, 1
    %p312 = scmp.eq.s32.totalorder %s22, 1
    %p313 = scmp.ne.s32.totalorder %s308, %s310
    %p314 = scmp.eq.s32.totalorder %s22, 0
    %p315 = por %p313, %p314
    %p316 = scmp.ne.s32.totalorder %s308, %s310
    %p317 = scmp.eq.s32.totalorder %s27, 1
    %p318 = por %p316, %p317
    %p319 = scmp.ne.s32.totalorder %s310, %s311
    %p320 = scmp.eq.s32.totalorder %s27, 0
    %p321 = por %p319, %p320
    %p322 = scmp.ne.s32.totalorder %s310, %s311
    %p323 = scmp.eq.s32.totalorder %s28, 1
    %p324 = por %p322, %p323
    %p326 = scmp.ne.s32.totalorder %s311, %s325
    %p327 = scmp.eq.s32.totalorder %s28, 0
    %p328 = por %p326, %p327
    %s330 = sadd.s32 %s329, 1
    %p333 = scmp.eq.s32.totalorder %s22, 1
    %p334 = scmp.ne.s32.totalorder %s329, %s331
    %p335 = scmp.eq.s32.totalorder %s22, 0
    %p336 = por %p334, %p335
    %p337 = scmp.ne.s32.totalorder %s329, %s331
    %p338 = scmp.eq.s32.totalorder %s27, 1
    %p339 = por %p337, %p338
    %p340 = scmp.ne.s32.totalorder %s331, %s332
    %p341 = scmp.eq.s32.totalorder %s27, 0
    %p342 = por %p340, %p341
    %p343 = scmp.ne.s32.totalorder %s331, %s332
    %p344 = scmp.eq.s32.totalorder %s28, 1
    %p345 = por %p343, %p344
    %p347 = scmp.ne.s32.totalorder %s332, %s346
    %p348 = scmp.eq.s32.totalorder %s28, 0
    %p349 = por %p347, %p348
    %s351 = sadd.s32 %s350, 1
    %p354 = scmp.eq.s32.totalorder %s22, 1
    %p355 = scmp.ne.s32.totalorder %s350, %s352
    %p356 = scmp.eq.s32.totalorder %s22, 0
    %p357 = por %p355, %p356
    %p358 = scmp.ne.s32.totalorder %s350, %s352
    %p359 = scmp.eq.s32.totalorder %s27, 1
    %p360 = por %p358, %p359
    %p361 = scmp.ne.s32.totalorder %s352, %s353
    %p362 = scmp.eq.s32.totalorder %s27, 0
    %p363 = por %p361, %p362
    %p364 = scmp.ne.s32.totalorder %s352, %s353
    %p365 = scmp.eq.s32.totalorder %s28, 1
    %p366 = por %p364, %p365
    %p368 = scmp.ne.s32.totalorder %s353, %s367
    %p369 = scmp.eq.s32.totalorder %s28, 0
    %p370 = por %p368, %p369
    %s371 = ssub.s32 %s22, %s29
    %p372 = scmp.eq.s32.totalorder %s371, 0
    %s374 = sadd.s32 %s373, 1
    %s375 = scalar_select %p372, %s373, %s374
    %p378 = pneg %p372
    %p379 = scmp.eq.s32.totalorder %s22, 1
    %p380 = por %p378, %p379
    %p381 = scmp.ne.s32.totalorder %s373, %s376
    %p382 = scmp.eq.s32.totalorder %s22, 0
    %p383 = por %p381, %p382
    %p384 = scmp.ne.s32.totalorder %s373, %s376
    %p385 = scmp.eq.s32.totalorder %s27, 1
    %p386 = por %p384, %p385
    %p387 = scmp.ne.s32.totalorder %s376, %s377
    %p388 = scmp.eq.s32.totalorder %s27, 0
    %p389 = por %p387, %p388
    %p390 = scmp.ne.s32.totalorder %s376, %s377
    %p391 = scmp.eq.s32.totalorder %s28, 1
    %p392 = por %p390, %p391
    %p394 = scmp.ne.s32.totalorder %s377, %s393
    %p395 = scmp.eq.s32.totalorder %s28, 0
    %p396 = por %p394, %p395
    %p397 = scmp.le.s32.totalorder 1, %s22
    %p398 = scmp.lt.s32.totalorder %s22, 3
    %p399 = pnand %p397, %p398
    %p400 = pneg %p399
    // Predicated region
    $region9: #{mnist_decoder_forward.1} parent=5 // pred_check
      _
    $region10: #{mnist_decoder_forward.1} parent=5 // pred_check_branch
      %402 = sbr.rel (%p399) target = $region12
    $region11: #{mnist_decoder_forward.1} parent=5 // pred_region
      %s403 = ssub.s32 %s22, 1
      // Predicated region
      $region13: #{mnist_decoder_forward.1} parent=11 // pred_check
        %p404 = pneg %p69
      $region14: #{mnist_decoder_forward.1} parent=11 // pred_check_branch
        %406 = sbr.rel (%p404) target = $region16
      $region15: #{mnist_decoder_forward.1} parent=11 // pred_region
        _
      $region16: #{mnist_decoder_forward.1} parent=11 // pred_fallthru
        _
      // Predicated region
      $region17: #{mnist_decoder_forward.1} parent=11 // pred_check
        %p407 = pneg %p90
      $region18: #{mnist_decoder_forward.1} parent=11 // pred_check_branch
        %409 = sbr.rel (%p407) target = $region20
      $region19: #{mnist_decoder_forward.1} parent=11 // pred_region
        _
      $region20: #{mnist_decoder_forward.1} parent=11 // pred_fallthru
        _
      // Predicated region
      $region21: #{mnist_decoder_forward.1} parent=11 // pred_check
        %p410 = pneg %p111
      $region22: #{mnist_decoder_forward.1} parent=11 // pred_check_branch
        %412 = sbr.rel (%p410) target = $region24
      $region23: #{mnist_decoder_forward.1} parent=11 // pred_region
        _
      $region24: #{mnist_decoder_forward.1} parent=11 // pred_fallthru
        _
      // Predicated region
      $region25: #{mnist_decoder_forward.1} parent=11 // pred_check
        %p413 = pneg %p132
      $region26: #{mnist_decoder_forward.1} parent=11 // pred_check_branch
        %415 = sbr.rel (%p413) target = $region28
      $region27: #{mnist_decoder_forward.1} parent=11 // pred_region
        _
      $region28: #{mnist_decoder_forward.1} parent=11 // pred_fallthru
        _
      // Predicated region
      $region29: #{mnist_decoder_forward.1} parent=11 // pred_check
        %p416 = pneg %p153
      $region30: #{mnist_decoder_forward.1} parent=11 // pred_check_branch
        %418 = sbr.rel (%p416) target = $region32
      $region31: #{mnist_decoder_forward.1} parent=11 // pred_region
        _
      $region32: #{mnist_decoder_forward.1} parent=11 // pred_fallthru
        _
      // Predicated region
      $region33: #{mnist_decoder_forward.1} parent=11 // pred_check
        %p419 = pneg %p174
      $region34: #{mnist_decoder_forward.1} parent=11 // pred_check_branch
        %421 = sbr.rel (%p419) target = $region36
      $region35: #{mnist_decoder_forward.1} parent=11 // pred_region
        _
      $region36: #{mnist_decoder_forward.1} parent=11 // pred_fallthru
        _
      // Predicated region
      $region37: #{mnist_decoder_forward.1} parent=11 // pred_check
        %p422 = pneg %p195
      $region38: #{mnist_decoder_forward.1} parent=11 // pred_check_branch
        %424 = sbr.rel (%p422) target = $region40
      $region39: #{mnist_decoder_forward.1} parent=11 // pred_region
        _
      $region40: #{mnist_decoder_forward.1} parent=11 // pred_fallthru
        _
      // Predicated region
      $region41: #{mnist_decoder_forward.1} parent=11 // pred_check
        %p425 = pneg %p216
      $region42: #{mnist_decoder_forward.1} parent=11 // pred_check_branch
        %427 = sbr.rel (%p425) target = $region44
      $region43: #{mnist_decoder_forward.1} parent=11 // pred_region
        _
      $region44: #{mnist_decoder_forward.1} parent=11 // pred_fallthru
        _
      // Predicated region
      $region45: #{mnist_decoder_forward.1} parent=11 // pred_check
        %p428 = pneg %p237
      $region46: #{mnist_decoder_forward.1} parent=11 // pred_check_branch
        %430 = sbr.rel (%p428) target = $region48
      $region47: #{mnist_decoder_forward.1} parent=11 // pred_region
        _
      $region48: #{mnist_decoder_forward.1} parent=11 // pred_fallthru
        _
      // Predicated region
      $region49: #{mnist_decoder_forward.1} parent=11 // pred_check
        %p431 = pneg %p258
      $region50: #{mnist_decoder_forward.1} parent=11 // pred_check_branch
        %433 = sbr.rel (%p431) target = $region52
      $region51: #{mnist_decoder_forward.1} parent=11 // pred_region
        _
      $region52: #{mnist_decoder_forward.1} parent=11 // pred_fallthru
        _
      // Predicated region
      $region53: #{mnist_decoder_forward.1} parent=11 // pred_check
        %p434 = pneg %p279
      $region54: #{mnist_decoder_forward.1} parent=11 // pred_check_branch
        %436 = sbr.rel (%p434) target = $region56
      $region55: #{mnist_decoder_forward.1} parent=11 // pred_region
        _
      $region56: #{mnist_decoder_forward.1} parent=11 // pred_fallthru
        _
      // Predicated region
      $region57: #{mnist_decoder_forward.1} parent=11 // pred_check
        %p437 = pneg %p300
      $region58: #{mnist_decoder_forward.1} parent=11 // pred_check_branch
        %439 = sbr.rel (%p437) target = $region60
      $region59: #{mnist_decoder_forward.1} parent=11 // pred_region
        _
      $region60: #{mnist_decoder_forward.1} parent=11 // pred_fallthru
        _
      // Predicated region
      $region61: #{mnist_decoder_forward.1} parent=11 // pred_check
        %p440 = pneg %p321
      $region62: #{mnist_decoder_forward.1} parent=11 // pred_check_branch
        %442 = sbr.rel (%p440) target = $region64
      $region63: #{mnist_decoder_forward.1} parent=11 // pred_region
        _
      $region64: #{mnist_decoder_forward.1} parent=11 // pred_fallthru
        _
      // Predicated region
      $region65: #{mnist_decoder_forward.1} parent=11 // pred_check
        %p443 = pneg %p342
      $region66: #{mnist_decoder_forward.1} parent=11 // pred_check_branch
        %445 = sbr.rel (%p443) target = $region68
      $region67: #{mnist_decoder_forward.1} parent=11 // pred_region
        _
      $region68: #{mnist_decoder_forward.1} parent=11 // pred_fallthru
        _
      // Predicated region
      $region69: #{mnist_decoder_forward.1} parent=11 // pred_check
        %p446 = pneg %p363
      $region70: #{mnist_decoder_forward.1} parent=11 // pred_check_branch
        %448 = sbr.rel (%p446) target = $region72
      $region71: #{mnist_decoder_forward.1} parent=11 // pred_region
        _
      $region72: #{mnist_decoder_forward.1} parent=11 // pred_fallthru
        _
    $region12: #{mnist_decoder_forward.1} parent=5 // pred_fallthru
      _
    %p449 = scmp.lt.s32.totalorder %s22, 2
    // Predicated region
    $region73: #{mnist_decoder_forward.1} parent=5 // pred_check
      %p450 = pneg %p449
    $region74: #{mnist_decoder_forward.1} parent=5 // pred_check_branch
      %452 = sbr.rel (%p450) target = $region76
    $region75: #{mnist_decoder_forward.1} parent=5 // pred_region
      // Predicated region
      $region77: #{mnist_decoder_forward.1} parent=75 // pred_check
        %p453 = pneg %p42
      $region78: #{mnist_decoder_forward.1} parent=75 // pred_check_branch
        %455 = sbr.rel (%p453) target = $region80
      $region79: #{mnist_decoder_forward.1} parent=75 // pred_region
        %p456 = scmp.lt.s32.totalorder %s22, 1
        %s457 = scalar_select %p456, %s22, 1
        %s458 = smul.addr %s457, 8
        %s459 = scalar_lea.vmem %s0, %s458
      $region80: #{mnist_decoder_forward.1} parent=75 // pred_fallthru
        _
    $region76: #{mnist_decoder_forward.1} parent=5 // pred_fallthru
      _
    %p460 = scmp.le.s32.totalorder 1, %s22
    %p461 = scmp.lt.s32.totalorder %s22, 3
    %p462 = pnand %p460, %p461
    %p463 = pneg %p462
    // Predicated region
    $region81: #{mnist_decoder_forward.1} parent=5 // pred_check
      _
    $region82: #{mnist_decoder_forward.1} parent=5 // pred_check_branch
      %465 = sbr.rel (%p462) target = $region84
    $region83: #{mnist_decoder_forward.1} parent=5 // pred_region
      %s466 = ssub.s32 %s22, 1
      %p467 = scmp.lt.s32.totalorder %s27, 1
      %s468 = scalar_select %p467, %s27, 1
      %s469 = smul.addr %s468, 8
      %s470 = scalar_lea.vmem %s0, %s469
      %p471 = pneg %p48
      %p472 = pneg %p45
      %p473 = pneg %p69
      %p474 = pneg %p66
      %p475 = pneg %p90
      %p476 = pneg %p87
      %p477 = pneg %p111
      %p478 = pneg %p108
      %p479 = pneg %p132
      %p480 = pneg %p129
      %p481 = pneg %p153
      %p482 = pneg %p150
      %p483 = pneg %p174
      %p484 = pneg %p171
      %p485 = pneg %p195
      %p486 = pneg %p192
      %p487 = pneg %p216
      %p488 = pneg %p213
      %p489 = pneg %p237
      %p490 = pneg %p234
      %p491 = pneg %p258
      %p492 = pneg %p255
      %p493 = pneg %p279
      %p494 = pneg %p276
      %p495 = pneg %p300
      %p496 = pneg %p297
      %p497 = pneg %p321
      %p498 = pneg %p318
      %p499 = pneg %p342
      %p500 = pneg %p339
      %p501 = pneg %p363
      %p502 = pneg %p360
      %p503 = pneg %p389
      %p504 = pneg %p386
      %s505 = smul.u32 28, %s27
      %p506 = scmp.lt.s32.totalorder %s505, 55
      %s507 = scalar_select %p506, %s505, 55
      %s508 = smul.addr %s507, 8
      %s509 = scalar_lea.vmem %s16, %s508
      %p510 = scmp.lt.s32.totalorder %s27, 1
      %s511 = scalar_select %p510, %s27, 1
      %s512 = smul.addr %s511, 8
      %s513 = scalar_lea.vmem %s0, %s512
      %s514 = smul.u32 28, %s27
      %p515 = scmp.lt.s32.totalorder %s514, 55
      %s516 = scalar_select %p515, %s514, 55
      %s517 = smul.addr %s516, 8
      %s518 = scalar_lea.vmem %s16, %s517
      %s519 = smul.u32 28, %s27
      %v520 = vld [vmem:[%s513] sm:$0xff]
      %v521 = vld [vmem:[%s3] sm:$0xff]
      %v522 = vld [vmem:[%s3 + $0x8] sm:$0xff]
      %v523 = vld [vmem:[%s3 + $0x10] sm:$0xff]
      %v524 = vld [vmem:[%s3 + $0x18] sm:$0xff]
      %v525 = vld [vmem:[%s3 + $0x20] sm:$0xff]
      %v526 = vld [vmem:[%s3 + $0x28] sm:$0xff]
      %v527 = vld [vmem:[%s1] sm:$0xff]
      %v528 = vld [vmem:[%s1 + $0x8] sm:$0xff]
      %v529 = vld [vmem:[%s1 + $0x10] sm:$0xff]
      %v530 = vld [vmem:[%s1 + $0x18] sm:$0xff]
      %v531 = vld [vmem:[%s2] sm:$0x1]
      %v533 = vlaneseq
      %v534 = vshrl.u32 %v533, 7
      %v535 = vsub.s32 0, %v534
      %v536 = vrot.slane %v531, %v535
      %vm538 = vcmask 261120
      %v540 = vsel %vm538, %v520, 0
      %542 = vmatprep.subr.mxu0 0.0
      %543 = vmatpush1.msra.mxu0 %v527
      %544 = vmatprep.subr.mxu0 0.0
      %545 = vmatpush1.msra.mxu0 %v528
      %546 = vmatprep.subr.mxu0 0.0
      %547 = vmatpush1.msra.mxu0 %v529
      %548 = vmatprep.subr.mxu0 0.0
      %549 = vmatpush1.msra.mxu0 %v530
      %550 = vmatprep.subr.mxu0 0.0
      %551 = vmatpush1.msra.mxu0 0.0
      %552 = vmatprep.subr.mxu0 0.0
      %553 = vmatpush1.msra.mxu0 0.0
      %554 = vmatprep.subr.mxu0 0.0
      %555 = vmatpush1.msra.mxu0 0.0
      %556 = vmatprep.subr.mxu0 0.0
      %557 = vmatpush1.msra.mxu0 0.0
      %558 = vmatprep.subr.mxu0 0.0
      %559 = vmatpush1.msra.mxu0 0.0
      %560 = vmatprep.subr.mxu0 0.0
      %561 = vmatpush1.msra.mxu0 0.0
      %562 = vmatprep.subr.mxu0 0.0
      %563 = vmatpush1.msra.mxu0 0.0
      %564 = vmatprep.subr.mxu0 0.0
      %565 = vmatpush1.msra.mxu0 0.0
      %566 = vmatprep.subr.mxu0 0.0
      %567 = vmatpush1.msra.mxu0 0.0
      %568 = vmatprep.subr.mxu0 0.0
      %569 = vmatpush1.msra.mxu0 0.0
      %570 = vmatprep.subr.mxu0 0.0
      %571 = vmatpush1.msra.mxu0 0.0
      %572 = vmatprep.subr.mxu0 0.0
      %573 = vmatpush1.msra.mxu0 0.0
      %574 = vmatprep.subr.mxu0 0.0
      %575 = vmatpush1.msra.mxu0 0.0
      %576 = vmatprep.subr.mxu0 0.0
      %577 = vmatpush1.msra.mxu0 0.0
      %578 = vmatprep.subr.mxu0 0.0
      %579 = vmatpush1.msra.mxu0 0.0
      %580 = vmatprep.subr.mxu0 0.0
      %581 = vmatpush1.msra.mxu0 0.0
      %582 = vmatprep.subr.mxu0 0.0
      %583 = vmatpush1.msra.mxu0 0.0
      %584 = vmatprep.subr.mxu0 0.0
      %585 = vmatpush1.msra.mxu0 0.0
      %586 = vmatprep.subr.mxu0 0.0
      %587 = vmatpush1.msra.mxu0 0.0
      %588 = vmatprep.subr.mxu0 0.0
      %589 = vmatpush1.msra.mxu0 0.0
      %590 = vmatprep.subr.mxu0 0.0
      %591 = vmatpush1.msra.mxu0 0.0
      %592 = vmatprep.subr.mxu0 0.0
      %593 = vmatpush1.msra.mxu0 0.0
      %594 = vmatprep.subr.mxu0 0.0
      %595 = vmatpush1.msra.mxu0 0.0
      %596 = vmatprep.subr.mxu0 0.0
      %597 = vmatpush1.msra.mxu0 0.0
      %598 = vmatprep.subr.mxu0 0.0
      %599 = vmatpush1.msra.mxu0 0.0
      %600 = vmatprep.subr.mxu0 0.0
      %601 = vmatpush1.msra.mxu0 0.0
      %602 = vmatprep.subr.mxu0 0.0
      %603 = vmatpush1.msra.mxu0 0.0
      %604 = vmatprep.subr.mxu0 0.0
      %605 = vmatpush1.msra.mxu0 0.0
      %606 = vmatprep.mubr.f32.mxu0 0.0
      %607 = vmatmul.mubr.f32.gmra.mrb[0].mxu0 %v540
      %v608 = vpop.f32.mrb[0].mxu0
      %v609 = vadd.f32 %v536, %v608
      %v610 = vpop.f32.mrb[0].mxu0
      %611 = vdwg.mxu0
      %v612 = vmax.f32 %v609, 0.0
      %s613 = scalar_lea.vmem %s3, 48
      %v614 = vld [vmem:[%s613] sm:$0xff]
      %v615 = vld [vmem:[%s613 + $0x8] sm:$0xff]
      %v616 = vld [vmem:[%s613 + $0x10] sm:$0xff]
      %v617 = vld [vmem:[%s613 + $0x18] sm:$0xff]
      %v618 = vld [vmem:[%s613 + $0x20] sm:$0xff]
      %v619 = vld [vmem:[%s613 + $0x28] sm:$0xff]
      %s620 = scalar_lea.vmem %s1, 32
      %v621 = vld [vmem:[%s620] sm:$0xff]
      %v622 = vld [vmem:[%s620 + $0x8] sm:$0xff]
      %v623 = vld [vmem:[%s620 + $0x10] sm:$0xff]
      %v624 = vld [vmem:[%s620 + $0x18] sm:$0xff]
      %s625 = scalar_lea.vmem %s2, 1
      %v626 = vld [vmem:[%s625] sm:$0x1]
      %v628 = vlaneseq
      %v629 = vshrl.u32 %v628, 7
      %v630 = vsub.s32 0, %v629
      %v631 = vrot.slane %v626, %v630
      %633 = vmatprep.subr.mxu0 0.0
      %634 = vmatpush1.msra.mxu0 %v621
      %635 = vmatprep.subr.mxu0 0.0
      %636 = vmatpush1.msra.mxu0 %v622
      %637 = vmatprep.subr.mxu0 0.0
      %638 = vmatpush1.msra.mxu0 %v623
      %639 = vmatprep.subr.mxu0 0.0
      %640 = vmatpush1.msra.mxu0 %v624
      %641 = vmatprep.subr.mxu0 0.0
      %642 = vmatpush1.msra.mxu0 0.0
      %643 = vmatprep.subr.mxu0 0.0
      %644 = vmatpush1.msra.mxu0 0.0
      %645 = vmatprep.subr.mxu0 0.0
      %646 = vmatpush1.msra.mxu0 0.0
      %647 = vmatprep.subr.mxu0 0.0
      %648 = vmatpush1.msra.mxu0 0.0
      %649 = vmatprep.subr.mxu0 0.0
      %650 = vmatpush1.msra.mxu0 0.0
      %651 = vmatprep.subr.mxu0 0.0
      %652 = vmatpush1.msra.mxu0 0.0
      %653 = vmatprep.subr.mxu0 0.0
      %654 = vmatpush1.msra.mxu0 0.0
      %655 = vmatprep.subr.mxu0 0.0
      %656 = vmatpush1.msra.mxu0 0.0
      %657 = vmatprep.subr.mxu0 0.0
      %658 = vmatpush1.msra.mxu0 0.0
      %659 = vmatprep.subr.mxu0 0.0
      %660 = vmatpush1.msra.mxu0 0.0
      %661 = vmatprep.subr.mxu0 0.0
      %662 = vmatpush1.msra.mxu0 0.0
      %663 = vmatprep.subr.mxu0 0.0
      %664 = vmatpush1.msra.mxu0 0.0
      %665 = vmatprep.subr.mxu0 0.0
      %666 = vmatpush1.msra.mxu0 0.0
      %667 = vmatprep.subr.mxu0 0.0
      %668 = vmatpush1.msra.mxu0 0.0
      %669 = vmatprep.subr.mxu0 0.0
      %670 = vmatpush1.msra.mxu0 0.0
      %671 = vmatprep.subr.mxu0 0.0
      %672 = vmatpush1.msra.mxu0 0.0
      %673 = vmatprep.subr.mxu0 0.0
      %674 = vmatpush1.msra.mxu0 0.0
      %675 = vmatprep.subr.mxu0 0.0
      %676 = vmatpush1.msra.mxu0 0.0
      %677 = vmatprep.subr.mxu0 0.0
      %678 = vmatpush1.msra.mxu0 0.0
      %679 = vmatprep.subr.mxu0 0.0
      %680 = vmatpush1.msra.mxu0 0.0
      %681 = vmatprep.subr.mxu0 0.0
      %682 = vmatpush1.msra.mxu0 0.0
      %683 = vmatprep.subr.mxu0 0.0
      %684 = vmatpush1.msra.mxu0 0.0
      %685 = vmatprep.subr.mxu0 0.0
      %686 = vmatpush1.msra.mxu0 0.0
      %687 = vmatprep.subr.mxu0 0.0
      %688 = vmatpush1.msra.mxu0 0.0
      %689 = vmatprep.subr.mxu0 0.0
      %690 = vmatpush1.msra.mxu0 0.0
      %691 = vmatprep.subr.mxu0 0.0
      %692 = vmatpush1.msra.mxu0 0.0
      %693 = vmatprep.subr.mxu0 0.0
      %694 = vmatpush1.msra.mxu0 0.0
      %695 = vmatprep.subr.mxu0 0.0
      %696 = vmatpush1.msra.mxu0 0.0
      %697 = vmatprep.mubr.f32.mxu0 0.0
      %698 = vmatmul.mubr.f32.gmra.mrb[0].mxu0 %v540
      %v699 = vpop.f32.mrb[0].mxu0
      %v700 = vadd.f32 %v631, %v699
      %v701 = vpop.f32.mrb[0].mxu0
      %702 = vdwg.mxu0
      %v703 = vmax.f32 %v700, 0.0
      %vm704 = vcmask 64512
      %v706 = vsel %vm704, %v614, 0
      %v709 = vsel %vm704, %v615, 0
      %v712 = vsel %vm704, %v616, 0
      %v715 = vsel %vm704, %v617, 0
      %v718 = vsel %vm704, %v618, 0
      %v721 = vsel %vm704, %v619, 0
      %723 = vmatprep.subr.mxu0 0.0
      %724 = vmatpush1.msra.mxu0 %v703
      %725 = vmatprep.subr.mxu0 0.0
      %726 = vmatpush1.msra.mxu0 0.0
      %727 = vmatprep.subr.mxu0 0.0
      %728 = vmatpush1.msra.mxu0 0.0
      %729 = vmatprep.subr.mxu0 0.0
      %730 = vmatpush1.msra.mxu0 0.0
      %731 = vmatprep.subr.mxu0 0.0
      %732 = vmatpush1.msra.mxu0 0.0
      %733 = vmatprep.subr.mxu0 0.0
      %734 = vmatpush1.msra.mxu0 0.0
      %735 = vmatprep.subr.mxu0 0.0
      %736 = vmatpush1.msra.mxu0 0.0
      %737 = vmatprep.subr.mxu0 0.0
      %738 = vmatpush1.msra.mxu0 0.0
      %739 = vmatprep.subr.mxu0 0.0
      %740 = vmatpush1.msra.mxu0 0.0
      %741 = vmatprep.subr.mxu0 0.0
      %742 = vmatpush1.msra.mxu0 0.0
      %743 = vmatprep.subr.mxu0 0.0
      %744 = vmatpush1.msra.mxu0 0.0
      %745 = vmatprep.subr.mxu0 0.0
      %746 = vmatpush1.msra.mxu0 0.0
      %747 = vmatprep.subr.mxu0 0.0
      %748 = vmatpush1.msra.mxu0 0.0
      %749 = vmatprep.subr.mxu0 0.0
      %750 = vmatpush1.msra.mxu0 0.0
      %751 = vmatprep.subr.mxu0 0.0
      %752 = vmatpush1.msra.mxu0 0.0
      %753 = vmatprep.subr.mxu0 0.0
      %754 = vmatpush1.msra.mxu0 0.0
      %755 = vmatprep.subr.mxu0 0.0
      %756 = vmatpush1.msra.mxu0 0.0
      %757 = vmatprep.subr.mxu0 0.0
      %758 = vmatpush1.msra.mxu0 0.0
      %759 = vmatprep.subr.mxu0 0.0
      %760 = vmatpush1.msra.mxu0 0.0
      %761 = vmatprep.subr.mxu0 0.0
      %762 = vmatpush1.msra.mxu0 0.0
      %763 = vmatprep.subr.mxu0 0.0
      %764 = vmatpush1.msra.mxu0 0.0
      %765 = vmatprep.subr.mxu0 0.0
      %766 = vmatpush1.msra.mxu0 0.0
      %767 = vmatprep.subr.mxu0 0.0
      %768 = vmatpush1.msra.mxu0 0.0
      %769 = vmatprep.subr.mxu0 0.0
      %770 = vmatpush1.msra.mxu0 0.0
      %771 = vmatprep.subr.mxu0 0.0
      %772 = vmatpush1.msra.mxu0 0.0
      %773 = vmatprep.subr.mxu0 0.0
      %774 = vmatpush1.msra.mxu0 0.0
      %775 = vmatprep.subr.mxu0 0.0
      %776 = vmatpush1.msra.mxu0 0.0
      %777 = vmatprep.subr.mxu0 0.0
      %778 = vmatpush1.msra.mxu0 0.0
      %779 = vmatprep.subr.mxu0 0.0
      %780 = vmatpush1.msra.mxu0 0.0
      %781 = vmatprep.subr.mxu0 0.0
      %782 = vmatpush1.msra.mxu0 0.0
      %783 = vmatprep.subr.mxu0 0.0
      %784 = vmatpush1.msra.mxu0 0.0
      %785 = vmatprep.subr.mxu0 0.0
      %786 = vmatpush1.msra.mxu0 0.0
      %787 = vmatprep.mubr.f32.mxu0 0.0
      %788 = vmatmul.mubr.f32.gmra.mrb[0].mxu0 %v706
      %v789 = vpop.f32.mrb[0].mxu0
      %v790 = vadd.f32 0.0, %v789
      %v791 = vpop.f32.mrb[0].mxu0
      %792 = vmatprep.mubr.f32.mxu0 0.0
      %793 = vmatmul.mubr.f32.gmra.mrb[0].mxu0 %v709
      %v794 = vpop.f32.mrb[0].mxu0
      %v795 = vadd.f32 0.0, %v794
      %v796 = vpop.f32.mrb[0].mxu0
      %797 = vmatprep.mubr.f32.mxu0 0.0
      %798 = vmatmul.mubr.f32.gmra.mrb[0].mxu0 %v712
      %v799 = vpop.f32.mrb[0].mxu0
      %v800 = vadd.f32 0.0, %v799
      %v801 = vpop.f32.mrb[0].mxu0
      %802 = vmatprep.mubr.f32.mxu0 0.0
      %803 = vmatmul.mubr.f32.gmra.mrb[0].mxu0 %v715
      %v804 = vpop.f32.mrb[0].mxu0
      %v805 = vadd.f32 0.0, %v804
      %v806 = vpop.f32.mrb[0].mxu0
      %807 = vmatprep.mubr.f32.mxu0 0.0
      %808 = vmatmul.mubr.f32.gmra.mrb[0].mxu0 %v718
      %v809 = vpop.f32.mrb[0].mxu0
      %v810 = vadd.f32 0.0, %v809
      %v811 = vpop.f32.mrb[0].mxu0
      %812 = vmatprep.mubr.f32.mxu0 0.0
      %813 = vmatmul.mubr.f32.gmra.mrb[0].mxu0 %v721
      %v814 = vpop.f32.mrb[0].mxu0
      %v815 = vadd.f32 0.0, %v814
      %v816 = vpop.f32.mrb[0].mxu0
      %817 = vdwg.mxu0
      %v819 = vsel %vm704, %v521, 0
      %v822 = vsel %vm704, %v522, 0
      %v825 = vsel %vm704, %v523, 0
      %v828 = vsel %vm704, %v524, 0
      %v831 = vsel %vm704, %v525, 0
      %v834 = vsel %vm704, %v526, 0
      %836 = vmatprep.subr.mxu0 0.0
      %837 = vmatpush1.msra.mxu0 %v612
      %838 = vmatprep.subr.mxu0 0.0
      %839 = vmatpush1.msra.mxu0 0.0
      %840 = vmatprep.subr.mxu0 0.0
      %841 = vmatpush1.msra.mxu0 0.0
      %842 = vmatprep.subr.mxu0 0.0
      %843 = vmatpush1.msra.mxu0 0.0
      %844 = vmatprep.subr.mxu0 0.0
      %845 = vmatpush1.msra.mxu0 0.0
      %846 = vmatprep.subr.mxu0 0.0
      %847 = vmatpush1.msra.mxu0 0.0
      %848 = vmatprep.subr.mxu0 0.0
      %849 = vmatpush1.msra.mxu0 0.0
      %850 = vmatprep.subr.mxu0 0.0
      %851 = vmatpush1.msra.mxu0 0.0
      %852 = vmatprep.subr.mxu0 0.0
      %853 = vmatpush1.msra.mxu0 0.0
      %854 = vmatprep.subr.mxu0 0.0
      %855 = vmatpush1.msra.mxu0 0.0
      %856 = vmatprep.subr.mxu0 0.0
      %857 = vmatpush1.msra.mxu0 0.0
      %858 = vmatprep.subr.mxu0 0.0
      %859 = vmatpush1.msra.mxu0 0.0
      %860 = vmatprep.subr.mxu0 0.0
      %861 = vmatpush1.msra.mxu0 0.0
      %862 = vmatprep.subr.mxu0 0.0
      %863 = vmatpush1.msra.mxu0 0.0
      %864 = vmatprep.subr.mxu0 0.0
      %865 = vmatpush1.msra.mxu0 0.0
      %866 = vmatprep.subr.mxu0 0.0
      %867 = vmatpush1.msra.mxu0 0.0
      %868 = vmatprep.subr.mxu0 0.0
      %869 = vmatpush1.msra.mxu0 0.0
      %870 = vmatprep.subr.mxu0 0.0
      %871 = vmatpush1.msra.mxu0 0.0
      %872 = vmatprep.subr.mxu0 0.0
      %873 = vmatpush1.msra.mxu0 0.0
      %874 = vmatprep.subr.mxu0 0.0
      %875 = vmatpush1.msra.mxu0 0.0
      %876 = vmatprep.subr.mxu0 0.0
      %877 = vmatpush1.msra.mxu0 0.0
      %878 = vmatprep.subr.mxu0 0.0
      %879 = vmatpush1.msra.mxu0 0.0
      %880 = vmatprep.subr.mxu0 0.0
      %881 = vmatpush1.msra.mxu0 0.0
      %882 = vmatprep.subr.mxu0 0.0
      %883 = vmatpush1.msra.mxu0 0.0
      %884 = vmatprep.subr.mxu0 0.0
      %885 = vmatpush1.msra.mxu0 0.0
      %886 = vmatprep.subr.mxu0 0.0
      %887 = vmatpush1.msra.mxu0 0.0
      %888 = vmatprep.subr.mxu0 0.0
      %889 = vmatpush1.msra.mxu0 0.0
      %890 = vmatprep.subr.mxu0 0.0
      %891 = vmatpush1.msra.mxu0 0.0
      %892 = vmatprep.subr.mxu0 0.0
      %893 = vmatpush1.msra.mxu0 0.0
      %894 = vmatprep.subr.mxu0 0.0
      %895 = vmatpush1.msra.mxu0 0.0
      %896 = vmatprep.subr.mxu0 0.0
      %897 = vmatpush1.msra.mxu0 0.0
      %898 = vmatprep.subr.mxu0 0.0
      %899 = vmatpush1.msra.mxu0 0.0
      %900 = vmatprep.mubr.f32.mxu0 0.0
      %901 = vmatmul.mubr.f32.gmra.mrb[0].mxu0 %v819
      %v902 = vpop.f32.mrb[0].mxu0
      %v903 = vadd.f32 %v790, %v902
      %v904 = vpop.f32.mrb[0].mxu0
      %905 = vmatprep.mubr.f32.mxu0 0.0
      %906 = vmatmul.mubr.f32.gmra.mrb[0].mxu0 %v822
      %v907 = vpop.f32.mrb[0].mxu0
      %v908 = vadd.f32 %v795, %v907
      %v909 = vpop.f32.mrb[0].mxu0
      %910 = vmatprep.mubr.f32.mxu0 0.0
      %911 = vmatmul.mubr.f32.gmra.mrb[0].mxu0 %v825
      %v912 = vpop.f32.mrb[0].mxu0
      %v913 = vadd.f32 %v800, %v912
      %v914 = vpop.f32.mrb[0].mxu0
      %915 = vmatprep.mubr.f32.mxu0 0.0
      %916 = vmatmul.mubr.f32.gmra.mrb[0].mxu0 %v828
      %v917 = vpop.f32.mrb[0].mxu0
      %v918 = vadd.f32 %v805, %v917
      %v919 = vpop.f32.mrb[0].mxu0
      %920 = vmatprep.mubr.f32.mxu0 0.0
      %921 = vmatmul.mubr.f32.gmra.mrb[0].mxu0 %v831
      %v922 = vpop.f32.mrb[0].mxu0
      %v923 = vadd.f32 %v810, %v922
      %v924 = vpop.f32.mrb[0].mxu0
      %925 = vmatprep.mubr.f32.mxu0 0.0
      %926 = vmatmul.mubr.f32.gmra.mrb[0].mxu0 %v834
      %v927 = vpop.f32.mrb[0].mxu0
      %v928 = vadd.f32 %v815, %v927
      %v929 = vpop.f32.mrb[0].mxu0
      %930 = vdwg.mxu0
      %s931 = scalar_lea.vmem %s3, 96
      %v932 = vld [vmem:[%s931] sm:$0xff]
      %v933 = vld [vmem:[%s931 + $0x8] sm:$0xff]
      %v934 = vld [vmem:[%s931 + $0x10] sm:$0xff]
      %v935 = vld [vmem:[%s931 + $0x18] sm:$0xff]
      %v936 = vld [vmem:[%s931 + $0x20] sm:$0xff]
      %v937 = vld [vmem:[%s931 + $0x28] sm:$0xff]
      %s938 = scalar_lea.vmem %s1, 64
      %v939 = vld [vmem:[%s938] sm:$0xff]
      %v940 = vld [vmem:[%s938 + $0x8] sm:$0xff]
      %v941 = vld [vmem:[%s938 + $0x10] sm:$0xff]
      %v942 = vld [vmem:[%s938 + $0x18] sm:$0xff]
      %s943 = scalar_lea.vmem %s2, 2
      %v944 = vld [vmem:[%s943] sm:$0x1]
      %v946 = vlaneseq
      %v947 = vshrl.u32 %v946, 7
      %v948 = vsub.s32 0, %v947
      %v949 = vrot.slane %v944, %v948
      %951 = vmatprep.subr.mxu0 0.0
      %952 = vmatpush1.msra.mxu0 %v939
      %953 = vmatprep.subr.mxu0 0.0
      %954 = vmatpush1.msra.mxu0 %v940
      %955 = vmatprep.subr.mxu0 0.0
      %956 = vmatpush1.msra.mxu0 %v941
      %957 = vmatprep.subr.mxu0 0.0
      %958 = vmatpush1.msra.mxu0 %v942
      %959 = vmatprep.subr.mxu0 0.0
      %960 = vmatpush1.msra.mxu0 0.0
      %961 = vmatprep.subr.mxu0 0.0
      %962 = vmatpush1.msra.mxu0 0.0
      %963 = vmatprep.subr.mxu0 0.0
      %964 = vmatpush1.msra.mxu0 0.0
      %965 = vmatprep.subr.mxu0 0.0
      %966 = vmatpush1.msra.mxu0 0.0
      %967 = vmatprep.subr.mxu0 0.0
      %968 = vmatpush1.msra.mxu0 0.0
      %969 = vmatprep.subr.mxu0 0.0
      %970 = vmatpush1.msra.mxu0 0.0
      %971 = vmatprep.subr.mxu0 0.0
      %972 = vmatpush1.msra.mxu0 0.0
      %973 = vmatprep.subr.mxu0 0.0
      %974 = vmatpush1.msra.mxu0 0.0
      %975 = vmatprep.subr.mxu0 0.0
      %976 = vmatpush1.msra.mxu0 0.0
      %977 = vmatprep.subr.mxu0 0.0
      %978 = vmatpush1.msra.mxu0 0.0
      %979 = vmatprep.subr.mxu0 0.0
      %980 = vmatpush1.msra.mxu0 0.0
      %981 = vmatprep.subr.mxu0 0.0
      %982 = vmatpush1.msra.mxu0 0.0
      %983 = vmatprep.subr.mxu0 0.0
      %984 = vmatpush1.msra.mxu0 0.0
      %985 = vmatprep.subr.mxu0 0.0
      %986 = vmatpush1.msra.mxu0 0.0
      %987 = vmatprep.subr.mxu0 0.0
      %988 = vmatpush1.msra.mxu0 0.0
      %989 = vmatprep.subr.mxu0 0.0
      %990 = vmatpush1.msra.mxu0 0.0
      %991 = vmatprep.subr.mxu0 0.0
      %992 = vmatpush1.msra.mxu0 0.0
      %993 = vmatprep.subr.mxu0 0.0
      %994 = vmatpush1.msra.mxu0 0.0
      %995 = vmatprep.subr.mxu0 0.0
      %996 = vmatpush1.msra.mxu0 0.0
      %997 = vmatprep.subr.mxu0 0.0
      %998 = vmatpush1.msra.mxu0 0.0
      %999 = vmatprep.subr.mxu0 0.0
      %1000 = vmatpush1.msra.mxu0 0.0
      %1001 = vmatprep.subr.mxu0 0.0
      %1002 = vmatpush1.msra.mxu0 0.0
      %1003 = vmatprep.subr.mxu0 0.0
      %1004 = vmatpush1.msra.mxu0 0.0
      %1005 = vmatprep.subr.mxu0 0.0
      %1006 = vmatpush1.msra.mxu0 0.0
      %1007 = vmatprep.subr.mxu0 0.0
      %1008 = vmatpush1.msra.mxu0 0.0
      %1009 = vmatprep.subr.mxu0 0.0
      %1010 = vmatpush1.msra.mxu0 0.0
      %1011 = vmatprep.subr.mxu0 0.0
      %1012 = vmatpush1.msra.mxu0 0.0
      %1013 = vmatprep.subr.mxu0 0.0
      %1014 = vmatpush1.msra.mxu0 0.0
      %1015 = vmatprep.mubr.f32.mxu0 0.0
      %1016 = vmatmul.mubr.f32.gmra.mrb[0].mxu0 %v540
      %v1017 = vpop.f32.mrb[0].mxu0
      %v1018 = vadd.f32 %v949, %v1017
      %v1019 = vpop.f32.mrb[0].mxu0
      %1020 = vdwg.mxu0
      %v1021 = vmax.f32 %v1018, 0.0
      %v1023 = vsel %vm704, %v932, 0
      %v1026 = vsel %vm704, %v933, 0
      %v1029 = vsel %vm704, %v934, 0
      %v1032 = vsel %vm704, %v935, 0
      %v1035 = vsel %vm704, %v936, 0
      %v1038 = vsel %vm704, %v937, 0
      %1040 = vmatprep.subr.mxu0 0.0
      %1041 = vmatpush1.msra.mxu0 %v1021
      %1042 = vmatprep.subr.mxu0 0.0
      %1043 = vmatpush1.msra.mxu0 0.0
      %1044 = vmatprep.subr.mxu0 0.0
      %1045 = vmatpush1.msra.mxu0 0.0
      %1046 = vmatprep.subr.mxu0 0.0
      %1047 = vmatpush1.msra.mxu0 0.0
      %1048 = vmatprep.subr.mxu0 0.0
      %1049 = vmatpush1.msra.mxu0 0.0
      %1050 = vmatprep.subr.mxu0 0.0
      %1051 = vmatpush1.msra.mxu0 0.0
      %1052 = vmatprep.subr.mxu0 0.0
      %1053 = vmatpush1.msra.mxu0 0.0
      %1054 = vmatprep.subr.mxu0 0.0
      %1055 = vmatpush1.msra.mxu0 0.0
      %1056 = vmatprep.subr.mxu0 0.0
      %1057 = vmatpush1.msra.mxu0 0.0
      %1058 = vmatprep.subr.mxu0 0.0
      %1059 = vmatpush1.msra.mxu0 0.0
      %1060 = vmatprep.subr.mxu0 0.0
      %1061 = vmatpush1.msra.mxu0 0.0
      %1062 = vmatprep.subr.mxu0 0.0
      %1063 = vmatpush1.msra.mxu0 0.0
      %1064 = vmatprep.subr.mxu0 0.0
      %1065 = vmatpush1.msra.mxu0 0.0
      %1066 = vmatprep.subr.mxu0 0.0
      %1067 = vmatpush1.msra.mxu0 0.0
      %1068 = vmatprep.subr.mxu0 0.0
      %1069 = vmatpush1.msra.mxu0 0.0
      %1070 = vmatprep.subr.mxu0 0.0
      %1071 = vmatpush1.msra.mxu0 0.0
      %1072 = vmatprep.subr.mxu0 0.0
      %1073 = vmatpush1.msra.mxu0 0.0
      %1074 = vmatprep.subr.mxu0 0.0
      %1075 = vmatpush1.msra.mxu0 0.0
      %1076 = vmatprep.subr.mxu0 0.0
      %1077 = vmatpush1.msra.mxu0 0.0
      %1078 = vmatprep.subr.mxu0 0.0
      %1079 = vmatpush1.msra.mxu0 0.0
      %1080 = vmatprep.subr.mxu0 0.0
      %1081 = vmatpush1.msra.mxu0 0.0
      %1082 = vmatprep.subr.mxu0 0.0
      %1083 = vmatpush1.msra.mxu0 0.0
      %1084 = vmatprep.subr.mxu0 0.0
      %1085 = vmatpush1.msra.mxu0 0.0
      %1086 = vmatprep.subr.mxu0 0.0
      %1087 = vmatpush1.msra.mxu0 0.0
      %1088 = vmatprep.subr.mxu0 0.0
      %1089 = vmatpush1.msra.mxu0 0.0
      %1090 = vmatprep.subr.mxu0 0.0
      %1091 = vmatpush1.msra.mxu0 0.0
      %1092 = vmatprep.subr.mxu0 0.0
      %1093 = vmatpush1.msra.mxu0 0.0
      %1094 = vmatprep.subr.mxu0 0.0
      %1095 = vmatpush1.msra.mxu0 0.0
      %1096 = vmatprep.subr.mxu0 0.0
      %1097 = vmatpush1.msra.mxu0 0.0
      %1098 = vmatprep.subr.mxu0 0.0
      %1099 = vmatpush1.msra.mxu0 0.0
      %1100 = vmatprep.subr.mxu0 0.0
      %1101 = vmatpush1.msra.mxu0 0.0
      %1102 = vmatprep.subr.mxu0 0.0
      %1103 = vmatpush1.msra.mxu0 0.0
      %1104 = vmatprep.mubr.f32.mxu0 0.0
      %1105 = vmatmul.mubr.f32.gmra.mrb[0].mxu0 %v1023
      %v1106 = vpop.f32.mrb[0].mxu0
      %v1107 = vadd.f32 0.0, %v1106
      %v1108 = vpop.f32.mrb[0].mxu0
      %1109 = vmatprep.mubr.f32.mxu0 0.0
      %1110 = vmatmul.mubr.f32.gmra.mrb[0].mxu0 %v1026
      %v1111 = vpop.f32.mrb[0].mxu0
      %v1112 = vadd.f32 0.0, %v1111
      %v1113 = vpop.f32.mrb[0].mxu0
      %1114 = vmatprep.mubr.f32.mxu0 0.0
      %1115 = vmatmul.mubr.f32.gmra.mrb[0].mxu0 %v1029
      %v1116 = vpop.f32.mrb[0].mxu0
      %v1117 = vadd.f32 0.0, %v1116
      %v1118 = vpop.f32.mrb[0].mxu0
      %1119 = vmatprep.mubr.f32.mxu0 0.0
      %1120 = vmatmul.mubr.f32.gmra.mrb[0].mxu0 %v1032
      %v1121 = vpop.f32.mrb[0].mxu0
      %v1122 = vadd.f32 0.0, %v1121
      %v1123 = vpop.f32.mrb[0].mxu0
      %1124 = vmatprep.mubr.f32.mxu0 0.0
      %1125 = vmatmul.mubr.f32.gmra.mrb[0].mxu0 %v1035
      %v1126 = vpop.f32.mrb[0].mxu0
      %v1127 = vadd.f32 0.0, %v1126
      %v1128 = vpop.f32.mrb[0].mxu0
      %1129 = vmatprep.mubr.f32.mxu0 0.0
      %1130 = vmatmul.mubr.f32.gmra.mrb[0].mxu0 %v1038
      %v1131 = vpop.f32.mrb[0].mxu0
      %v1132 = vadd.f32 0.0, %v1131
      %v1133 = vpop.f32.mrb[0].mxu0
      %1134 = vdwg.mxu0
      %v1135 = vadd.f32 %v903, %v1107
      %v1136 = vadd.f32 %v908, %v1112
      %v1137 = vadd.f32 %v913, %v1117
      %v1138 = vadd.f32 %v918, %v1122
      %v1139 = vadd.f32 %v923, %v1127
      %v1140 = vadd.f32 %v928, %v1132
      %s1141 = scalar_lea.vmem %s3, 144
      %v1142 = vld [vmem:[%s1141] sm:$0xff]
      %v1143 = vld [vmem:[%s1141 + $0x8] sm:$0xff]
      %v1144 = vld [vmem:[%s1141 + $0x10] sm:$0xff]
      %v1145 = vld [vmem:[%s1141 + $0x18] sm:$0xff]
      %v1146 = vld [vmem:[%s1141 + $0x20] sm:$0xff]
      %v1147 = vld [vmem:[%s1141 + $0x28] sm:$0xff]
      %s1148 = scalar_lea.vmem %s1, 96
      %v1149 = vld [vmem:[%s1148] sm:$0xff]
      %v1150 = vld [vmem:[%s1148 + $0x8] sm:$0xff]
      %v1151 = vld [vmem:[%s1148 + $0x10] sm:$0xff]
      %v1152 = vld [vmem:[%s1148 + $0x18] sm:$0xff]
      %s1153 = scalar_lea.vmem %s2, 3
      %v1154 = vld [vmem:[%s1153] sm:$0x1]
      %v1156 = vlaneseq
      %v1157 = vshrl.u32 %v1156, 7
      %v1158 = vsub.s32 0, %v1157
      %v1159 = vrot.slane %v1154, %v1158
      %1161 = vmatprep.subr.mxu0 0.0
      %1162 = vmatpush1.msra.mxu0 %v1149
      %1163 = vmatprep.subr.mxu0 0.0
      %1164 = vmatpush1.msra.mxu0 %v1150
      %1165 = vmatprep.subr.mxu0 0.0
      %1166 = vmatpush1.msra.mxu0 %v1151
      %1167 = vmatprep.subr.mxu0 0.0
      %1168 = vmatpush1.msra.mxu0 %v1152
      %1169 = vmatprep.subr.mxu0 0.0
      %1170 = vmatpush1.msra.mxu0 0.0
      %1171 = vmatprep.subr.mxu0 0.0
      %1172 = vmatpush1.msra.mxu0 0.0
      %1173 = vmatprep.subr.mxu0 0.0
      %1174 = vmatpush1.msra.mxu0 0.0
      %1175 = vmatprep.subr.mxu0 0.0
      %1176 = vmatpush1.msra.mxu0 0.0
      %1177 = vmatprep.subr.mxu0 0.0
      %1178 = vmatpush1.msra.mxu0 0.0
      %1179 = vmatprep.subr.mxu0 0.0
      %1180 = vmatpush1.msra.mxu0 0.0
      %1181 = vmatprep.subr.mxu0 0.0
      %1182 = vmatpush1.msra.mxu0 0.0
      %1183 = vmatprep.subr.mxu0 0.0
      %1184 = vmatpush1.msra.mxu0 0.0
      %1185 = vmatprep.subr.mxu0 0.0
      %1186 = vmatpush1.msra.mxu0 0.0
      %1187 = vmatprep.subr.mxu0 0.0
      %1188 = vmatpush1.msra.mxu0 0.0
      %1189 = vmatprep.subr.mxu0 0.0
      %1190 = vmatpush1.msra.mxu0 0.0
      %1191 = vmatprep.subr.mxu0 0.0
      %1192 = vmatpush1.msra.mxu0 0.0
      %1193 = vmatprep.subr.mxu0 0.0
      %1194 = vmatpush1.msra.mxu0 0.0
      %1195 = vmatprep.subr.mxu0 0.0
      %1196 = vmatpush1.msra.mxu0 0.0
      %1197 = vmatprep.subr.mxu0 0.0
      %1198 = vmatpush1.msra.mxu0 0.0
      %1199 = vmatprep.subr.mxu0 0.0
      %1200 = vmatpush1.msra.mxu0 0.0
      %1201 = vmatprep.subr.mxu0 0.0
      %1202 = vmatpush1.msra.mxu0 0.0
      %1203 = vmatprep.subr.mxu0 0.0
      %1204 = vmatpush1.msra.mxu0 0.0
      %1205 = vmatprep.subr.mxu0 0.0
      %1206 = vmatpush1.msra.mxu0 0.0
      %1207 = vmatprep.subr.mxu0 0.0
      %1208 = vmatpush1.msra.mxu0 0.0
      %1209 = vmatprep.subr.mxu0 0.0
      %1210 = vmatpush1.msra.mxu0 0.0
      %1211 = vmatprep.subr.mxu0 0.0
      %1212 = vmatpush1.msra.mxu0 0.0
      %1213 = vmatprep.subr.mxu0 0.0
      %1214 = vmatpush1.msra.mxu0 0.0
      %1215 = vmatprep.subr.mxu0 0.0
      %1216 = vmatpush1.msra.mxu0 0.0
      %1217 = vmatprep.subr.mxu0 0.0
      %1218 = vmatpush1.msra.mxu0 0.0
      %1219 = vmatprep.subr.mxu0 0.0
      %1220 = vmatpush1.msra.mxu0 0.0
      %1221 = vmatprep.subr.mxu0 0.0
      %1222 = vmatpush1.msra.mxu0 0.0
      %1223 = vmatprep.subr.mxu0 0.0
      %1224 = vmatpush1.msra.mxu0 0.0
      %1225 = vmatprep.mubr.f32.mxu0 0.0
      %1226 = vmatmul.mubr.f32.gmra.mrb[0].mxu0 %v540
      %v1227 = vpop.f32.mrb[0].mxu0
      %v1228 = vadd.f32 %v1159, %v1227
      %v1229 = vpop.f32.mrb[0].mxu0
      %1230 = vdwg.mxu0
      %v1231 = vmax.f32 %v1228, 0.0
      %v1233 = vsel %vm704, %v1142, 0
      %v1236 = vsel %vm704, %v1143, 0
      %v1239 = vsel %vm704, %v1144, 0
      %v1242 = vsel %vm704, %v1145, 0
      %v1245 = vsel %vm704, %v1146, 0
      %v1248 = vsel %vm704, %v1147, 0
      %1250 = vmatprep.subr.mxu0 0.0
      %1251 = vmatpush1.msra.mxu0 %v1231
      %1252 = vmatprep.subr.mxu0 0.0
      %1253 = vmatpush1.msra.mxu0 0.0
      %1254 = vmatprep.subr.mxu0 0.0
      %1255 = vmatpush1.msra.mxu0 0.0
      %1256 = vmatprep.subr.mxu0 0.0
      %1257 = vmatpush1.msra.mxu0 0.0
      %1258 = vmatprep.subr.mxu0 0.0
      %1259 = vmatpush1.msra.mxu0 0.0
      %1260 = vmatprep.subr.mxu0 0.0
      %1261 = vmatpush1.msra.mxu0 0.0
      %1262 = vmatprep.subr.mxu0 0.0
      %1263 = vmatpush1.msra.mxu0 0.0
      %1264 = vmatprep.subr.mxu0 0.0
      %1265 = vmatpush1.msra.mxu0 0.0
      %1266 = vmatprep.subr.mxu0 0.0
      %1267 = vmatpush1.msra.mxu0 0.0
      %1268 = vmatprep.subr.mxu0 0.0
      %1269 = vmatpush1.msra.mxu0 0.0
      %1270 = vmatprep.subr.mxu0 0.0
      %1271 = vmatpush1.msra.mxu0 0.0
      %1272 = vmatprep.subr.mxu0 0.0
      %1273 = vmatpush1.msra.mxu0 0.0
      %1274 = vmatprep.subr.mxu0 0.0
      %1275 = vmatpush1.msra.mxu0 0.0
      %1276 = vmatprep.subr.mxu0 0.0
      %1277 = vmatpush1.msra.mxu0 0.0
      %1278 = vmatprep.subr.mxu0 0.0
      %1279 = vmatpush1.msra.mxu0 0.0
      %1280 = vmatprep.subr.mxu0 0.0
      %1281 = vmatpush1.msra.mxu0 0.0
      %1282 = vmatprep.subr.mxu0 0.0
      %1283 = vmatpush1.msra.mxu0 0.0
      %1284 = vmatprep.subr.mxu0 0.0
      %1285 = vmatpush1.msra.mxu0 0.0
      %1286 = vmatprep.subr.mxu0 0.0
      %1287 = vmatpush1.msra.mxu0 0.0
      %1288 = vmatprep.subr.mxu0 0.0
      %1289 = vmatpush1.msra.mxu0 0.0
      %1290 = vmatprep.subr.mxu0 0.0
      %1291 = vmatpush1.msra.mxu0 0.0
      %1292 = vmatprep.subr.mxu0 0.0
      %1293 = vmatpush1.msra.mxu0 0.0
      %1294 = vmatprep.subr.mxu0 0.0
      %1295 = vmatpush1.msra.mxu0 0.0
      %1296 = vmatprep.subr.mxu0 0.0
      %1297 = vmatpush1.msra.mxu0 0.0
      %1298 = vmatprep.subr.mxu0 0.0
      %1299 = vmatpush1.msra.mxu0 0.0
      %1300 = vmatprep.subr.mxu0 0.0
      %1301 = vmatpush1.msra.mxu0 0.0
      %1302 = vmatprep.subr.mxu0 0.0
      %1303 = vmatpush1.msra.mxu0 0.0
      %1304 = vmatprep.subr.mxu0 0.0
      %1305 = vmatpush1.msra.mxu0 0.0
      %1306 = vmatprep.subr.mxu0 0.0
      %1307 = vmatpush1.msra.mxu0 0.0
      %1308 = vmatprep.subr.mxu0 0.0
      %1309 = vmatpush1.msra.mxu0 0.0
      %1310 = vmatprep.subr.mxu0 0.0
      %1311 = vmatpush1.msra.mxu0 0.0
      %1312 = vmatprep.subr.mxu0 0.0
      %1313 = vmatpush1.msra.mxu0 0.0
      %1314 = vmatprep.mubr.f32.mxu0 0.0
      %1315 = vmatmul.mubr.f32.gmra.mrb[0].mxu0 %v1233
      %v1316 = vpop.f32.mrb[0].mxu0
      %v1317 = vadd.f32 0.0, %v1316
      %v1318 = vpop.f32.mrb[0].mxu0
      %1319 = vmatprep.mubr.f32.mxu0 0.0
      %1320 = vmatmul.mubr.f32.gmra.mrb[0].mxu0 %v1236
      %v1321 = vpop.f32.mrb[0].mxu0
      %v1322 = vadd.f32 0.0, %v1321
      %v1323 = vpop.f32.mrb[0].mxu0
      %1324 = vmatprep.mubr.f32.mxu0 0.0
      %1325 = vmatmul.mubr.f32.gmra.mrb[0].mxu0 %v1239
      %v1326 = vpop.f32.mrb[0].mxu0
      %v1327 = vadd.f32 0.0, %v1326
      %v1328 = vpop.f32.mrb[0].mxu0
      %1329 = vmatprep.mubr.f32.mxu0 0.0
      %1330 = vmatmul.mubr.f32.gmra.mrb[0].mxu0 %v1242
      %v1331 = vpop.f32.mrb[0].mxu0
      %v1332 = vadd.f32 0.0, %v1331
      %v1333 = vpop.f32.mrb[0].mxu0
      %1334 = vmatprep.mubr.f32.mxu0 0.0
      %1335 = vmatmul.mubr.f32.gmra.mrb[0].mxu0 %v1245
      %v1336 = vpop.f32.mrb[0].mxu0
      %v1337 = vadd.f32 0.0, %v1336
      %v1338 = vpop.f32.mrb[0].mxu0
      %1339 = vmatprep.mubr.f32.mxu0 0.0
      %1340 = vmatmul.mubr.f32.gmra.mrb[0].mxu0 %v1248
      %v1341 = vpop.f32.mrb[0].mxu0
      %v1342 = vadd.f32 0.0, %v1341
      %v1343 = vpop.f32.mrb[0].mxu0
      %1344 = vdwg.mxu0
      %v1345 = vadd.f32 %v1135, %v1317
      %v1346 = vadd.f32 %v1136, %v1322
      %v1347 = vadd.f32 %v1137, %v1327
      %v1348 = vadd.f32 %v1138, %v1332
      %v1349 = vadd.f32 %v1139, %v1337
      %v1350 = vadd.f32 %v1140, %v1342
      %1351 = vst.msk [vmem:[#allocation2] sm:$0xff] %vm538, %v1345
      %1352 = vst.msk [vmem:[#allocation2 + $0x8] sm:$0xff] %vm538, %v1346
      %1353 = vst.msk [vmem:[#allocation2 + $0x10] sm:$0xff] %vm538, %v1347
      %1354 = vst.msk [vmem:[#allocation2 + $0x18] sm:$0xff] %vm538, %v1348
      %1355 = vst.msk [vmem:[#allocation2 + $0x20] sm:$0xff] %vm538, %v1349
      %1356 = vst.msk [vmem:[#allocation2 + $0x28] sm:$0xff] %vm538, %v1350
      %v1357 = vld [vmem:[%s6] sm:$0xff]
      %v1358 = vld [vmem:[%s6 + $0x8] sm:$0xff]
      %v1359 = vld [vmem:[%s6 + $0x10] sm:$0xff]
      %v1360 = vld [vmem:[%s6 + $0x18] sm:$0xff]
      %v1361 = vld [vmem:[%s6 + $0x20] sm:$0xff]
      %v1362 = vld [vmem:[%s6 + $0x28] sm:$0xff]
      %v1363 = vld [vmem:[%s6 + $0x30] sm:$0xff]
      %v1364 = vld [vmem:[%s6 + $0x38] sm:$0xff]
      %v1365 = vld [vmem:[%s6 + $0x40] sm:$0xff]
      %v1366 = vld [vmem:[%s6 + $0x48] sm:$0xff]
      %v1367 = vld [vmem:[#allocation2] sm:$0xff]
      %v1368 = vld [vmem:[#allocation2 + $0x8] sm:$0xff]
      %v1369 = vld [vmem:[#allocation2 + $0x10] sm:$0xff]
      %v1370 = vld [vmem:[#allocation2 + $0x18] sm:$0xff]
      %v1371 = vld [vmem:[#allocation2 + $0x20] sm:$0xff]
      %v1372 = vld [vmem:[#allocation2 + $0x28] sm:$0x3f]
      %v1373 = vld [vmem:[%s4] sm:$0xff]
      %v1374 = vld [vmem:[%s4 + $0x8] sm:$0xff]
      %v1375 = vld [vmem:[%s4 + $0x10] sm:$0xff]
      %v1376 = vld [vmem:[%s4 + $0x18] sm:$0xff]
      %v1377 = vld [vmem:[#allocation2 + $0x1] sm:$0xff]
      %v1378 = vld [vmem:[#allocation2 + $0x9] sm:$0xff]
      %v1379 = vld [vmem:[#allocation2 + $0x11] sm:$0xff]
      %v1380 = vld [vmem:[#allocation2 + $0x19] sm:$0xff]
      %v1381 = vld [vmem:[#allocation2 + $0x21] sm:$0xff]
      %v1382 = vld [vmem:[#allocation2 + $0x29] sm:$0x3f]
      %s1383 = scalar_lea.vmem %s4, 32
      %v1384 = vld [vmem:[%s1383] sm:$0xff]
      %v1385 = vld [vmem:[%s1383 + $0x8] sm:$0xff]
      %v1386 = vld [vmem:[%s1383 + $0x10] sm:$0xff]
      %v1387 = vld [vmem:[%s1383 + $0x18] sm:$0xff]
      %v1389 = vsel %vm538, %v1377, 0
      %v1392 = vsel %vm538, %v1378, 0
      %v1395 = vsel %vm538, %v1379, 0
      %v1398 = vsel %vm538, %v1380, 0
      %v1401 = vsel %vm538, %v1381, 0
      %v1404 = vsel %vm538, %v1382, 0
      %1406 = vmatprep.subr.mxu0 0.0
      %1407 = vmatpush1.msra.mxu0 %v1384
      %1408 = vmatprep.subr.mxu0 0.0
      %1409 = vmatpush1.msra.mxu0 %v1385
      %1410 = vmatprep.subr.mxu0 0.0
      %1411 = vmatpush1.msra.mxu0 %v1386
      %1412 = vmatprep.subr.mxu0 0.0
      %1413 = vmatpush1.msra.mxu0 %v1387
      %1414 = vmatprep.subr.mxu0 0.0
      %1415 = vmatpush1.msra.mxu0 0.0
      %1416 = vmatprep.subr.mxu0 0.0
      %1417 = vmatpush1.msra.mxu0 0.0
      %1418 = vmatprep.subr.mxu0 0.0
      %1419 = vmatpush1.msra.mxu0 0.0
      %1420 = vmatprep.subr.mxu0 0.0
      %1421 = vmatpush1.msra.mxu0 0.0
      %1422 = vmatprep.subr.mxu0 0.0
      %1423 = vmatpush1.msra.mxu0 0.0
      %1424 = vmatprep.subr.mxu0 0.0
      %1425 = vmatpush1.msra.mxu0 0.0
      %1426 = vmatprep.subr.mxu0 0.0
      %1427 = vmatpush1.msra.mxu0 0.0
      %1428 = vmatprep.subr.mxu0 0.0
      %1429 = vmatpush1.msra.mxu0 0.0
      %1430 = vmatprep.subr.mxu0 0.0
      %1431 = vmatpush1.msra.mxu0 0.0
      %1432 = vmatprep.subr.mxu0 0.0
      %1433 = vmatpush1.msra.mxu0 0.0
      %1434 = vmatprep.subr.mxu0 0.0
      %1435 = vmatpush1.msra.mxu0 0.0
      %1436 = vmatprep.subr.mxu0 0.0
      %1437 = vmatpush1.msra.mxu0 0.0
      %1438 = vmatprep.subr.mxu0 0.0
      %1439 = vmatpush1.msra.mxu0 0.0
      %1440 = vmatprep.subr.mxu0 0.0
      %1441 = vmatpush1.msra.mxu0 0.0
      %1442 = vmatprep.subr.mxu0 0.0
      %1443 = vmatpush1.msra.mxu0 0.0
      %1444 = vmatprep.subr.mxu0 0.0
      %1445 = vmatpush1.msra.mxu0 0.0
      %1446 = vmatprep.subr.mxu0 0.0
      %1447 = vmatpush1.msra.mxu0 0.0
      %1448 = vmatprep.subr.mxu0 0.0
      %1449 = vmatpush1.msra.mxu0 0.0
      %1450 = vmatprep.subr.mxu0 0.0
      %1451 = vmatpush1.msra.mxu0 0.0
      %1452 = vmatprep.subr.mxu0 0.0
      %1453 = vmatpush1.msra.mxu0 0.0
      %1454 = vmatprep.subr.mxu0 0.0
      %1455 = vmatpush1.msra.mxu0 0.0
      %1456 = vmatprep.subr.mxu0 0.0
      %1457 = vmatpush1.msra.mxu0 0.0
      %1458 = vmatprep.subr.mxu0 0.0
      %1459 = vmatpush1.msra.mxu0 0.0
      %1460 = vmatprep.subr.mxu0 0.0
      %1461 = vmatpush1.msra.mxu0 0.0
      %1462 = vmatprep.subr.mxu0 0.0
      %1463 = vmatpush1.msra.mxu0 0.0
      %1464 = vmatprep.subr.mxu0 0.0
      %1465 = vmatpush1.msra.mxu0 0.0
      %1466 = vmatprep.subr.mxu0 0.0
      %1467 = vmatpush1.msra.mxu0 0.0
      %1468 = vmatprep.subr.mxu0 0.0
      %1469 = vmatpush1.msra.mxu0 0.0
      %1470 = vmatprep.mubr.f32.mxu0 0.0
      %1471 = vmatmul.mubr.f32.gmra.mrb[0].mxu0 %v1389
      %v1472 = vpop.f32.mrb[0].mxu0
      %v1473 = vadd.f32 0.0, %v1472
      %v1474 = vpop.f32.mrb[0].mxu0
      %1475 = vmatprep.mubr.f32.mxu0 0.0
      %1476 = vmatmul.mubr.f32.gmra.mrb[0].mxu0 %v1392
      %v1477 = vpop.f32.mrb[0].mxu0
      %v1478 = vadd.f32 0.0, %v1477
      %v1479 = vpop.f32.mrb[0].mxu0
      %1480 = vmatprep.mubr.f32.mxu0 0.0
      %1481 = vmatmul.mubr.f32.gmra.mrb[0].mxu0 %v1395
      %v1482 = vpop.f32.mrb[0].mxu0
      %v1483 = vadd.f32 0.0, %v1482
      %v1484 = vpop.f32.mrb[0].mxu0
      %1485 = vmatprep.mubr.f32.mxu0 0.0
      %1486 = vmatmul.mubr.f32.gmra.mrb[0].mxu0 %v1398
      %v1487 = vpop.f32.mrb[0].mxu0
      %v1488 = vadd.f32 0.0, %v1487
      %v1489 = vpop.f32.mrb[0].mxu0
      %1490 = vmatprep.mubr.f32.mxu0 0.0
      %1491 = vmatmul.mubr.f32.gmra.mrb[0].mxu0 %v1401
      %v1492 = vpop.f32.mrb[0].mxu0
      %v1493 = vadd.f32 0.0, %v1492
      %v1494 = vpop.f32.mrb[0].mxu0
      %1495 = vmatprep.mubr.f32.mxu0 0.0
      %1496 = vmatmul.mubr.f32.gmra.mrb[0].mxu0 %v1404
      %v1497 = vpop.f32.mrb[0].mxu0
      %v1498 = vadd.f32 0.0, %v1497
      %v1499 = vpop.f32.mrb[0].mxu0
      %1500 = vdwg.mxu0
      %v1502 = vsel %vm538, %v1367, 0
      %v1505 = vsel %vm538, %v1368, 0
      %v1508 = vsel %vm538, %v1369, 0
      %v1511 = vsel %vm538, %v1370, 0
      %v1514 = vsel %vm538, %v1371, 0
      %v1517 = vsel %vm538, %v1372, 0
      %1519 = vmatprep.subr.mxu0 0.0
      %1520 = vmatpush1.msra.mxu0 %v1373
      %1521 = vmatprep.subr.mxu0 0.0
      %1522 = vmatpush1.msra.mxu0 %v1374
      %1523 = vmatprep.subr.mxu0 0.0
      %1524 = vmatpush1.msra.mxu0 %v1375
      %1525 = vmatprep.subr.mxu0 0.0
      %1526 = vmatpush1.msra.mxu0 %v1376
      %1527 = vmatprep.subr.mxu0 0.0
      %1528 = vmatpush1.msra.mxu0 0.0
      %1529 = vmatprep.subr.mxu0 0.0
      %1530 = vmatpush1.msra.mxu0 0.0
      %1531 = vmatprep.subr.mxu0 0.0
      %1532 = vmatpush1.msra.mxu0 0.0
      %1533 = vmatprep.subr.mxu0 0.0
      %1534 = vmatpush1.msra.mxu0 0.0
      %1535 = vmatprep.subr.mxu0 0.0
      %1536 = vmatpush1.msra.mxu0 0.0
      %1537 = vmatprep.subr.mxu0 0.0
      %1538 = vmatpush1.msra.mxu0 0.0
      %1539 = vmatprep.subr.mxu0 0.0
      %1540 = vmatpush1.msra.mxu0 0.0
      %1541 = vmatprep.subr.mxu0 0.0
      %1542 = vmatpush1.msra.mxu0 0.0
      %1543 = vmatprep.subr.mxu0 0.0
      %1544 = vmatpush1.msra.mxu0 0.0
      %1545 = vmatprep.subr.mxu0 0.0
      %1546 = vmatpush1.msra.mxu0 0.0
      %1547 = vmatprep.subr.mxu0 0.0
      %1548 = vmatpush1.msra.mxu0 0.0
      %1549 = vmatprep.subr.mxu0 0.0
      %1550 = vmatpush1.msra.mxu0 0.0
      %1551 = vmatprep.subr.mxu0 0.0
      %1552 = vmatpush1.msra.mxu0 0.0
      %1553 = vmatprep.subr.mxu0 0.0
      %1554 = vmatpush1.msra.mxu0 0.0
      %1555 = vmatprep.subr.mxu0 0.0
      %1556 = vmatpush1.msra.mxu0 0.0
      %1557 = vmatprep.subr.mxu0 0.0
      %1558 = vmatpush1.msra.mxu0 0.0
      %1559 = vmatprep.subr.mxu0 0.0
      %1560 = vmatpush1.msra.mxu0 0.0
      %1561 = vmatprep.subr.mxu0 0.0
      %1562 = vmatpush1.msra.mxu0 0.0
      %1563 = vmatprep.subr.mxu0 0.0
      %1564 = vmatpush1.msra.mxu0 0.0
      %1565 = vmatprep.subr.mxu0 0.0
      %1566 = vmatpush1.msra.mxu0 0.0
      %1567 = vmatprep.subr.mxu0 0.0
      %1568 = vmatpush1.msra.mxu0 0.0
      %1569 = vmatprep.subr.mxu0 0.0
      %1570 = vmatpush1.msra.mxu0 0.0
      %1571 = vmatprep.subr.mxu0 0.0
      %1572 = vmatpush1.msra.mxu0 0.0
      %1573 = vmatprep.subr.mxu0 0.0
      %1574 = vmatpush1.msra.mxu0 0.0
      %1575 = vmatprep.subr.mxu0 0.0
      %1576 = vmatpush1.msra.mxu0 0.0
      %1577 = vmatprep.subr.mxu0 0.0
      %1578 = vmatpush1.msra.mxu0 0.0
      %1579 = vmatprep.subr.mxu0 0.0
      %1580 = vmatpush1.msra.mxu0 0.0
      %1581 = vmatprep.subr.mxu0 0.0
      %1582 = vmatpush1.msra.mxu0 0.0
      %1583 = vmatprep.mubr.f32.mxu0 0.0
      %1584 = vmatmul.mubr.f32.gmra.mrb[0].mxu0 %v1502
      %v1585 = vpop.f32.mrb[0].mxu0
      %v1586 = vadd.f32 %v1473, %v1585
      %v1587 = vpop.f32.mrb[0].mxu0
      %1588 = vmatprep.mubr.f32.mxu0 0.0
      %1589 = vmatmul.mubr.f32.gmra.mrb[0].mxu0 %v1505
      %v1590 = vpop.f32.mrb[0].mxu0
      %v1591 = vadd.f32 %v1478, %v1590
      %v1592 = vpop.f32.mrb[0].mxu0
      %1593 = vmatprep.mubr.f32.mxu0 0.0
      %1594 = vmatmul.mubr.f32.gmra.mrb[0].mxu0 %v1508
      %v1595 = vpop.f32.mrb[0].mxu0
      %v1596 = vadd.f32 %v1483, %v1595
      %v1597 = vpop.f32.mrb[0].mxu0
      %1598 = vmatprep.mubr.f32.mxu0 0.0
      %1599 = vmatmul.mubr.f32.gmra.mrb[0].mxu0 %v1511
      %v1600 = vpop.f32.mrb[0].mxu0
      %v1601 = vadd.f32 %v1488, %v1600
      %v1602 = vpop.f32.mrb[0].mxu0
      %1603 = vmatprep.mubr.f32.mxu0 0.0
      %1604 = vmatmul.mubr.f32.gmra.mrb[0].mxu0 %v1514
      %v1605 = vpop.f32.mrb[0].mxu0
      %v1606 = vadd.f32 %v1493, %v1605
      %v1607 = vpop.f32.mrb[0].mxu0
      %1608 = vmatprep.mubr.f32.mxu0 0.0
      %1609 = vmatmul.mubr.f32.gmra.mrb[0].mxu0 %v1517
      %v1610 = vpop.f32.mrb[0].mxu0
      %v1611 = vadd.f32 %v1498, %v1610
      %v1612 = vpop.f32.mrb[0].mxu0
      %1613 = vdwg.mxu0
      %v1614 = vld [vmem:[#allocation2 + $0x2] sm:$0xff]
      %v1615 = vld [vmem:[#allocation2 + $0xa] sm:$0xff]
      %v1616 = vld [vmem:[#allocation2 + $0x12] sm:$0xff]
      %v1617 = vld [vmem:[#allocation2 + $0x1a] sm:$0xff]
      %v1618 = vld [vmem:[#allocation2 + $0x22] sm:$0xff]
      %v1619 = vld [vmem:[#allocation2 + $0x2a] sm:$0x3f]
      %s1620 = scalar_lea.vmem %s4, 64
      %v1621 = vld [vmem:[%s1620] sm:$0xff]
      %v1622 = vld [vmem:[%s1620 + $0x8] sm:$0xff]
      %v1623 = vld [vmem:[%s1620 + $0x10] sm:$0xff]
      %v1624 = vld [vmem:[%s1620 + $0x18] sm:$0xff]
      %v1626 = vsel %vm538, %v1614, 0
      %v1629 = vsel %vm538, %v1615, 0
      %v1632 = vsel %vm538, %v1616, 0
      %v1635 = vsel %vm538, %v1617, 0
      %v1638 = vsel %vm538, %v1618, 0
      %v1641 = vsel %vm538, %v1619, 0
      %1643 = vmatprep.subr.mxu0 0.0
      %1644 = vmatpush1.msra.mxu0 %v1621
      %1645 = vmatprep.subr.mxu0 0.0
      %1646 = vmatpush1.msra.mxu0 %v1622
      %1647 = vmatprep.subr.mxu0 0.0
      %1648 = vmatpush1.msra.mxu0 %v1623
      %1649 = vmatprep.subr.mxu0 0.0
      %1650 = vmatpush1.msra.mxu0 %v1624
      %1651 = vmatprep.subr.mxu0 0.0
      %1652 = vmatpush1.msra.mxu0 0.0
      %1653 = vmatprep.subr.mxu0 0.0
      %1654 = vmatpush1.msra.mxu0 0.0
      %1655 = vmatprep.subr.mxu0 0.0
      %1656 = vmatpush1.msra.mxu0 0.0
      %1657 = vmatprep.subr.mxu0 0.0
      %1658 = vmatpush1.msra.mxu0 0.0
      %1659 = vmatprep.subr.mxu0 0.0
      %1660 = vmatpush1.msra.mxu0 0.0
      %1661 = vmatprep.subr.mxu0 0.0
      %1662 = vmatpush1.msra.mxu0 0.0
      %1663 = vmatprep.subr.mxu0 0.0
      %1664 = vmatpush1.msra.mxu0 0.0
      %1665 = vmatprep.subr.mxu0 0.0
      %1666 = vmatpush1.msra.mxu0 0.0
      %1667 = vmatprep.subr.mxu0 0.0
      %1668 = vmatpush1.msra.mxu0 0.0
      %1669 = vmatprep.subr.mxu0 0.0
      %1670 = vmatpush1.msra.mxu0 0.0
      %1671 = vmatprep.subr.mxu0 0.0
      %1672 = vmatpush1.msra.mxu0 0.0
      %1673 = vmatprep.subr.mxu0 0.0
      %1674 = vmatpush1.msra.mxu0 0.0
      %1675 = vmatprep.subr.mxu0 0.0
      %1676 = vmatpush1.msra.mxu0 0.0
      %1677 = vmatprep.subr.mxu0 0.0
      %1678 = vmatpush1.msra.mxu0 0.0
      %1679 = vmatprep.subr.mxu0 0.0
      %1680 = vmatpush1.msra.mxu0 0.0
      %1681 = vmatprep.subr.mxu0 0.0
      %1682 = vmatpush1.msra.mxu0 0.0
      %1683 = vmatprep.subr.mxu0 0.0
      %1684 = vmatpush1.msra.mxu0 0.0
      %1685 = vmatprep.subr.mxu0 0.0
      %1686 = vmatpush1.msra.mxu0 0.0
      %1687 = vmatprep.subr.mxu0 0.0
      %1688 = vmatpush1.msra.mxu0 0.0
      %1689 = vmatprep.subr.mxu0 0.0
      %1690 = vmatpush1.msra.mxu0 0.0
      %1691 = vmatprep.subr.mxu0 0.0
      %1692 = vmatpush1.msra.mxu0 0.0
      %1693 = vmatprep.subr.mxu0 0.0
      %1694 = vmatpush1.msra.mxu0 0.0
      %1695 = vmatprep.subr.mxu0 0.0
      %1696 = vmatpush1.msra.mxu0 0.0
      %1697 = vmatprep.subr.mxu0 0.0
      %1698 = vmatpush1.msra.mxu0 0.0
      %1699 = vmatprep.subr.mxu0 0.0
      %1700 = vmatpush1.msra.mxu0 0.0
      %1701 = vmatprep.subr.mxu0 0.0
      %1702 = vmatpush1.msra.mxu0 0.0
      %1703 = vmatprep.subr.mxu0 0.0
      %1704 = vmatpush1.msra.mxu0 0.0
      %1705 = vmatprep.subr.mxu0 0.0
      %1706 = vmatpush1.msra.mxu0 0.0
      %1707 = vmatprep.mubr.f32.mxu0 0.0
      %1708 = vmatmul.mubr.f32.gmra.mrb[0].mxu0 %v1626
      %v1709 = vpop.f32.mrb[0].mxu0
      %v1710 = vadd.f32 0.0, %v1709
      %v1711 = vpop.f32.mrb[0].mxu0
      %1712 = vmatprep.mubr.f32.mxu0 0.0
      %1713 = vmatmul.mubr.f32.gmra.mrb[0].mxu0 %v1629
      %v1714 = vpop.f32.mrb[0].mxu0
      %v1715 = vadd.f32 0.0, %v1714
      %v1716 = vpop.f32.mrb[0].mxu0
      %1717 = vmatprep.mubr.f32.mxu0 0.0
      %1718 = vmatmul.mubr.f32.gmra.mrb[0].mxu0 %v1632
      %v1719 = vpop.f32.mrb[0].mxu0
      %v1720 = vadd.f32 0.0, %v1719
      %v1721 = vpop.f32.mrb[0].mxu0
      %1722 = vmatprep.mubr.f32.mxu0 0.0
      %1723 = vmatmul.mubr.f32.gmra.mrb[0].mxu0 %v1635
      %v1724 = vpop.f32.mrb[0].mxu0
      %v1725 = vadd.f32 0.0, %v1724
      %v1726 = vpop.f32.mrb[0].mxu0
      %1727 = vmatprep.mubr.f32.mxu0 0.0
      %1728 = vmatmul.mubr.f32.gmra.mrb[0].mxu0 %v1638
      %v1729 = vpop.f32.mrb[0].mxu0
      %v1730 = vadd.f32 0.0, %v1729
      %v1731 = vpop.f32.mrb[0].mxu0
      %1732 = vmatprep.mubr.f32.mxu0 0.0
      %1733 = vmatmul.mubr.f32.gmra.mrb[0].mxu0 %v1641
      %v1734 = vpop.f32.mrb[0].mxu0
      %v1735 = vadd.f32 0.0, %v1734
      %v1736 = vpop.f32.mrb[0].mxu0
      %1737 = vdwg.mxu0
      %v1738 = vadd.f32 %v1586, %v1710
      %v1739 = vadd.f32 %v1591, %v1715
      %v1740 = vadd.f32 %v1596, %v1720
      %v1741 = vadd.f32 %v1601, %v1725
      %v1742 = vadd.f32 %v1606, %v1730
      %v1743 = vadd.f32 %v1611, %v1735
      %v1744 = vld [vmem:[%s5] sm:$0x1]
      %v1746 = vlaneseq
      %v1747 = vshrl.u32 %v1746, 7
      %v1748 = vsub.s32 0, %v1747
      %v1749 = vrot.slane %v1744, %v1748
      %v1751 = vadd.f32 %v1738, %v1749
      %v1752 = vadd.f32 %v1739, %v1749
      %v1753 = vadd.f32 %v1740, %v1749
      %v1754 = vadd.f32 %v1741, %v1749
      %v1755 = vadd.f32 %v1742, %v1749
      %v1756 = vadd.f32 %v1743, %v1749
      %v1757 = vmax.f32 %v1751, 0.0
      %v1758 = vmax.f32 %v1752, 0.0
      %v1759 = vmax.f32 %v1753, 0.0
      %v1760 = vmax.f32 %v1754, 0.0
      %v1761 = vmax.f32 %v1755, 0.0
      %v1762 = vmax.f32 %v1756, 0.0
      %vm1763 = vcmask 375808
      %v1765 = vsel %vm1763, %v1357, 0
      %v1768 = vsel %vm1763, %v1358, 0
      %v1771 = vsel %vm1763, %v1359, 0
      %v1774 = vsel %vm1763, %v1360, 0
      %v1777 = vsel %vm1763, %v1361, 0
      %v1780 = vsel %vm1763, %v1362, 0
      %v1783 = vsel %vm1763, %v1363, 0
      %v1786 = vsel %vm1763, %v1364, 0
      %v1789 = vsel %vm1763, %v1365, 0
      %v1792 = vsel %vm1763, %v1366, 0
      %vm1794 = vcmask 1045504
      %v1796 = vsel %vm1794, %v1762, 0
      %1798 = vmatprep.subr.mxu0 0.0
      %1799 = vmatpush1.msra.mxu0 %v1757
      %1800 = vmatprep.subr.mxu0 0.0
      %1801 = vmatpush1.msra.mxu0 %v1758
      %1802 = vmatprep.subr.mxu0 0.0
      %1803 = vmatpush1.msra.mxu0 %v1759
      %1804 = vmatprep.subr.mxu0 0.0
      %1805 = vmatpush1.msra.mxu0 %v1760
      %1806 = vmatprep.subr.mxu0 0.0
      %1807 = vmatpush1.msra.mxu0 %v1761
      %1808 = vmatprep.subr.mxu0 0.0
      %1809 = vmatpush1.msra.mxu0 %v1796
      %1810 = vmatprep.subr.mxu0 0.0
      %1811 = vmatpush1.msra.mxu0 0.0
      %1812 = vmatprep.subr.mxu0 0.0
      %1813 = vmatpush1.msra.mxu0 0.0
      %1814 = vmatprep.subr.mxu0 0.0
      %1815 = vmatpush1.msra.mxu0 0.0
      %1816 = vmatprep.subr.mxu0 0.0
      %1817 = vmatpush1.msra.mxu0 0.0
      %1818 = vmatprep.subr.mxu0 0.0
      %1819 = vmatpush1.msra.mxu0 0.0
      %1820 = vmatprep.subr.mxu0 0.0
      %1821 = vmatpush1.msra.mxu0 0.0
      %1822 = vmatprep.subr.mxu0 0.0
      %1823 = vmatpush1.msra.mxu0 0.0
      %1824 = vmatprep.subr.mxu0 0.0
      %1825 = vmatpush1.msra.mxu0 0.0
      %1826 = vmatprep.subr.mxu0 0.0
      %1827 = vmatpush1.msra.mxu0 0.0
      %1828 = vmatprep.subr.mxu0 0.0
      %1829 = vmatpush1.msra.mxu0 0.0
      %1830 = vmatprep.subr.mxu0 0.0
      %1831 = vmatpush1.msra.mxu0 0.0
      %1832 = vmatprep.subr.mxu0 0.0
      %1833 = vmatpush1.msra.mxu0 0.0
      %1834 = vmatprep.subr.mxu0 0.0
      %1835 = vmatpush1.msra.mxu0 0.0
      %1836 = vmatprep.subr.mxu0 0.0
      %1837 = vmatpush1.msra.mxu0 0.0
      %1838 = vmatprep.subr.mxu0 0.0
      %1839 = vmatpush1.msra.mxu0 0.0
      %1840 = vmatprep.subr.mxu0 0.0
      %1841 = vmatpush1.msra.mxu0 0.0
      %1842 = vmatprep.subr.mxu0 0.0
      %1843 = vmatpush1.msra.mxu0 0.0
      %1844 = vmatprep.subr.mxu0 0.0
      %1845 = vmatpush1.msra.mxu0 0.0
      %1846 = vmatprep.subr.mxu0 0.0
      %1847 = vmatpush1.msra.mxu0 0.0
      %1848 = vmatprep.subr.mxu0 0.0
      %1849 = vmatpush1.msra.mxu0 0.0
      %1850 = vmatprep.subr.mxu0 0.0
      %1851 = vmatpush1.msra.mxu0 0.0
      %1852 = vmatprep.subr.mxu0 0.0
      %1853 = vmatpush1.msra.mxu0 0.0
      %1854 = vmatprep.subr.mxu0 0.0
      %1855 = vmatpush1.msra.mxu0 0.0
      %1856 = vmatprep.subr.mxu0 0.0
      %1857 = vmatpush1.msra.mxu0 0.0
      %1858 = vmatprep.subr.mxu0 0.0
      %1859 = vmatpush1.msra.mxu0 0.0
      %1860 = vmatprep.subr.mxu0 0.0
      %1861 = vmatpush1.msra.mxu0 0.0
      %1862 = vmatprep.mubr.f32.mxu0 0.0
      %1863 = vmatmul.mubr.f32.gmra.mrb[0].mxu0 %v1765
      %v1864 = vpop.f32.mrb[0].mxu0
      %v1865 = vadd.f32 0.0, %v1864
      %v1866 = vpop.f32.mrb[0].mxu0
      %1867 = vmatprep.mubr.f32.mxu0 0.0
      %1868 = vmatmul.mubr.f32.gmra.mrb[0].mxu0 %v1768
      %v1869 = vpop.f32.mrb[0].mxu0
      %v1870 = vadd.f32 0.0, %v1869
      %v1871 = vpop.f32.mrb[0].mxu0
      %1872 = vmatprep.mubr.f32.mxu0 0.0
      %1873 = vmatmul.mubr.f32.gmra.mrb[0].mxu0 %v1771
      %v1874 = vpop.f32.mrb[0].mxu0
      %v1875 = vadd.f32 0.0, %v1874
      %v1876 = vpop.f32.mrb[0].mxu0
      %1877 = vmatprep.mubr.f32.mxu0 0.0
      %1878 = vmatmul.mubr.f32.gmra.mrb[0].mxu0 %v1774
      %v1879 = vpop.f32.mrb[0].mxu0
      %v1880 = vadd.f32 0.0, %v1879
      %v1881 = vpop.f32.mrb[0].mxu0
      %1882 = vmatprep.mubr.f32.mxu0 0.0
      %1883 = vmatmul.mubr.f32.gmra.mrb[0].mxu0 %v1777
      %v1884 = vpop.f32.mrb[0].mxu0
      %v1885 = vadd.f32 0.0, %v1884
      %v1886 = vpop.f32.mrb[0].mxu0
      %1887 = vmatprep.mubr.f32.mxu0 0.0
      %1888 = vmatmul.mubr.f32.gmra.mrb[0].mxu0 %v1780
      %v1889 = vpop.f32.mrb[0].mxu0
      %v1890 = vadd.f32 0.0, %v1889
      %v1891 = vpop.f32.mrb[0].mxu0
      %1892 = vmatprep.mubr.f32.mxu0 0.0
      %1893 = vmatmul.mubr.f32.gmra.mrb[0].mxu0 %v1783
      %v1894 = vpop.f32.mrb[0].mxu0
      %v1895 = vadd.f32 0.0, %v1894
      %v1896 = vpop.f32.mrb[0].mxu0
      %1897 = vmatprep.mubr.f32.mxu0 0.0
      %1898 = vmatmul.mubr.f32.gmra.mrb[0].mxu0 %v1786
      %v1899 = vpop.f32.mrb[0].mxu0
      %v1900 = vadd.f32 0.0, %v1899
      %v1901 = vpop.f32.mrb[0].mxu0
      %1902 = vmatprep.mubr.f32.mxu0 0.0
      %1903 = vmatmul.mubr.f32.gmra.mrb[0].mxu0 %v1789
      %v1904 = vpop.f32.mrb[0].mxu0
      %v1905 = vadd.f32 0.0, %v1904
      %v1906 = vpop.f32.mrb[0].mxu0
      %1907 = vmatprep.mubr.f32.mxu0 0.0
      %1908 = vmatmul.mubr.f32.gmra.mrb[0].mxu0 %v1792
      %v1909 = vpop.f32.mrb[0].mxu0
      %v1910 = vadd.f32 0.0, %v1909
      %v1911 = vpop.f32.mrb[0].mxu0
      %1912 = vdwg.mxu0
      %1913 = vst.msk [vmem:[#allocation3] sm:$0xff] %vm538, %v1865
      %1914 = vst.msk [vmem:[#allocation3 + $0x8] sm:$0xff] %vm538, %v1870
      %1915 = vst.msk [vmem:[#allocation3 + $0x10] sm:$0xff] %vm538, %v1875
      %1916 = vst.msk [vmem:[#allocation3 + $0x18] sm:$0xff] %vm538, %v1880
      %1917 = vst.msk [vmem:[#allocation3 + $0x20] sm:$0xff] %vm538, %v1885
      %1918 = vst.msk [vmem:[#allocation3 + $0x28] sm:$0xff] %vm538, %v1890
      %1919 = vst.msk [vmem:[#allocation3 + $0x30] sm:$0xff] %vm538, %v1895
      %1920 = vst.msk [vmem:[#allocation3 + $0x38] sm:$0xff] %vm538, %v1900
      %1921 = vst.msk [vmem:[#allocation3 + $0x40] sm:$0xff] %vm538, %v1905
      %1922 = vst.msk [vmem:[#allocation3 + $0x48] sm:$0xff] %vm538, %v1910
      %v1923 = vld [vmem:[%s9] sm:$0xff]
      %v1924 = vld [vmem:[%s9 + $0x8] sm:$0xff]
      %v1925 = vld [vmem:[%s9 + $0x10] sm:$0xff]
      %v1926 = vld [vmem:[%s9 + $0x18] sm:$0xff]
      %v1927 = vld [vmem:[%s9 + $0x20] sm:$0xff]
      %v1928 = vld [vmem:[%s9 + $0x28] sm:$0xff]
      %v1929 = vld [vmem:[%s9 + $0x30] sm:$0xff]
      %v1930 = vld [vmem:[%s9 + $0x38] sm:$0xff]
      %v1931 = vld [vmem:[%s9 + $0x40] sm:$0xff]
      %v1932 = vld [vmem:[%s9 + $0x48] sm:$0xff]
      %v1933 = vld [vmem:[%s9 + $0x50] sm:$0xff]
      %v1934 = vld [vmem:[%s9 + $0x58] sm:$0xff]
      %v1935 = vld [vmem:[%s9 + $0x60] sm:$0xff]
      %v1936 = vld [vmem:[%s9 + $0x68] sm:$0xff]
      %v1937 = vld [vmem:[%s9 + $0x70] sm:$0xff]
      %v1938 = vld [vmem:[%s9 + $0x78] sm:$0xff]
      %v1939 = vld [vmem:[#allocation3] sm:$0xff]
      %v1940 = vld [vmem:[#allocation3 + $0x8] sm:$0xff]
      %v1941 = vld [vmem:[#allocation3 + $0x10] sm:$0xff]
      %v1942 = vld [vmem:[#allocation3 + $0x18] sm:$0xff]
      %v1943 = vld [vmem:[#allocation3 + $0x20] sm:$0xff]
      %v1944 = vld [vmem:[#allocation3 + $0x28] sm:$0xff]
      %v1945 = vld [vmem:[#allocation3 + $0x30] sm:$0xff]
      %v1946 = vld [vmem:[#allocation3 + $0x38] sm:$0xff]
      %v1947 = vld [vmem:[#allocation3 + $0x40] sm:$0xff]
      %v1948 = vld [vmem:[#allocation3 + $0x48] sm:$0x3f]
      %v1949 = vld [vmem:[%s7] sm:$0xff]
      %v1950 = vld [vmem:[%s7 + $0x8] sm:$0xff]
      %v1951 = vld [vmem:[%s7 + $0x10] sm:$0xff]
      %v1952 = vld [vmem:[%s7 + $0x18] sm:$0xff]
      %v1953 = vld [vmem:[#allocation3 + $0x1] sm:$0xff]
      %v1954 = vld [vmem:[#allocation3 + $0x9] sm:$0xff]
      %v1955 = vld [vmem:[#allocation3 + $0x11] sm:$0xff]
      %v1956 = vld [vmem:[#allocation3 + $0x19] sm:$0xff]
      %v1957 = vld [vmem:[#allocation3 + $0x21] sm:$0xff]
      %v1958 = vld [vmem:[#allocation3 + $0x29] sm:$0xff]
      %v1959 = vld [vmem:[#allocation3 + $0x31] sm:$0xff]
      %v1960 = vld [vmem:[#allocation3 + $0x39] sm:$0xff]
      %v1961 = vld [vmem:[#allocation3 + $0x41] sm:$0xff]
      %v1962 = vld [vmem:[#allocation3 + $0x49] sm:$0x3f]
      %s1963 = scalar_lea.vmem %s7, 32
      %v1964 = vld [vmem:[%s1963] sm:$0xff]
      %v1965 = vld [vmem:[%s1963 + $0x8] sm:$0xff]
      %v1966 = vld [vmem:[%s1963 + $0x10] sm:$0xff]
      %v1967 = vld [vmem:[%s1963 + $0x18] sm:$0xff]
      %v1969 = vsel %vm538, %v1953, 0
      %v1972 = vsel %vm538, %v1954, 0
      %v1975 = vsel %vm538, %v1955, 0
      %v1978 = vsel %vm538, %v1956, 0
      %v1981 = vsel %vm538, %v1957, 0
      %v1984 = vsel %vm538, %v1958, 0
      %v1987 = vsel %vm538, %v1959, 0
      %v1990 = vsel %vm538, %v1960, 0
      %v1993 = vsel %vm538, %v1961, 0
      %v1996 = vsel %vm538, %v1962, 0
      %1998 = vmatprep.subr.mxu0 0.0
      %1999 = vmatpush1.msra.mxu0 %v1964
      %2000 = vmatprep.subr.mxu0 0.0
      %2001 = vmatpush1.msra.mxu0 %v1965
      %2002 = vmatprep.subr.mxu0 0.0
      %2003 = vmatpush1.msra.mxu0 %v1966
      %2004 = vmatprep.subr.mxu0 0.0
      %2005 = vmatpush1.msra.mxu0 %v1967
      %2006 = vmatprep.subr.mxu0 0.0
      %2007 = vmatpush1.msra.mxu0 0.0
      %2008 = vmatprep.subr.mxu0 0.0
      %2009 = vmatpush1.msra.mxu0 0.0
      %2010 = vmatprep.subr.mxu0 0.0
      %2011 = vmatpush1.msra.mxu0 0.0
      %2012 = vmatprep.subr.mxu0 0.0
      %2013 = vmatpush1.msra.mxu0 0.0
      %2014 = vmatprep.subr.mxu0 0.0
      %2015 = vmatpush1.msra.mxu0 0.0
      %2016 = vmatprep.subr.mxu0 0.0
      %2017 = vmatpush1.msra.mxu0 0.0
      %2018 = vmatprep.subr.mxu0 0.0
      %2019 = vmatpush1.msra.mxu0 0.0
      %2020 = vmatprep.subr.mxu0 0.0
      %2021 = vmatpush1.msra.mxu0 0.0
      %2022 = vmatprep.subr.mxu0 0.0
      %2023 = vmatpush1.msra.mxu0 0.0
      %2024 = vmatprep.subr.mxu0 0.0
      %2025 = vmatpush1.msra.mxu0 0.0
      %2026 = vmatprep.subr.mxu0 0.0
      %2027 = vmatpush1.msra.mxu0 0.0
      %2028 = vmatprep.subr.mxu0 0.0
      %2029 = vmatpush1.msra.mxu0 0.0
      %2030 = vmatprep.subr.mxu0 0.0
      %2031 = vmatpush1.msra.mxu0 0.0
      %2032 = vmatprep.subr.mxu0 0.0
      %2033 = vmatpush1.msra.mxu0 0.0
      %2034 = vmatprep.subr.mxu0 0.0
      %2035 = vmatpush1.msra.mxu0 0.0
      %2036 = vmatprep.subr.mxu0 0.0
      %2037 = vmatpush1.msra.mxu0 0.0
      %2038 = vmatprep.subr.mxu0 0.0
      %2039 = vmatpush1.msra.mxu0 0.0
      %2040 = vmatprep.subr.mxu0 0.0
      %2041 = vmatpush1.msra.mxu0 0.0
      %2042 = vmatprep.subr.mxu0 0.0
      %2043 = vmatpush1.msra.mxu0 0.0
      %2044 = vmatprep.subr.mxu0 0.0
      %2045 = vmatpush1.msra.mxu0 0.0
      %2046 = vmatprep.subr.mxu0 0.0
      %2047 = vmatpush1.msra.mxu0 0.0
      %2048 = vmatprep.subr.mxu0 0.0
      %2049 = vmatpush1.msra.mxu0 0.0
      %2050 = vmatprep.subr.mxu0 0.0
      %2051 = vmatpush1.msra.mxu0 0.0
      %2052 = vmatprep.subr.mxu0 0.0
      %2053 = vmatpush1.msra.mxu0 0.0
      %2054 = vmatprep.subr.mxu0 0.0
      %2055 = vmatpush1.msra.mxu0 0.0
      %2056 = vmatprep.subr.mxu0 0.0
      %2057 = vmatpush1.msra.mxu0 0.0
      %2058 = vmatprep.subr.mxu0 0.0
      %2059 = vmatpush1.msra.mxu0 0.0
      %2060 = vmatprep.subr.mxu0 0.0
      %2061 = vmatpush1.msra.mxu0 0.0
      %2062 = vmatprep.mubr.f32.mxu0 0.0
      %2063 = vmatmul.mubr.f32.gmra.mrb[0].mxu0 %v1969
      %v2064 = vpop.f32.mrb[0].mxu0
      %v2065 = vadd.f32 0.0, %v2064
      %v2066 = vpop.f32.mrb[0].mxu0
      %2067 = vmatprep.mubr.f32.mxu0 0.0
      %2068 = vmatmul.mubr.f32.gmra.mrb[0].mxu0 %v1972
      %v2069 = vpop.f32.mrb[0].mxu0
      %v2070 = vadd.f32 0.0, %v2069
      %v2071 = vpop.f32.mrb[0].mxu0
      %2072 = vmatprep.mubr.f32.mxu0 0.0
      %2073 = vmatmul.mubr.f32.gmra.mrb[0].mxu0 %v1975
      %v2074 = vpop.f32.mrb[0].mxu0
      %v2075 = vadd.f32 0.0, %v2074
      %v2076 = vpop.f32.mrb[0].mxu0
      %2077 = vmatprep.mubr.f32.mxu0 0.0
      %2078 = vmatmul.mubr.f32.gmra.mrb[0].mxu0 %v1978
      %v2079 = vpop.f32.mrb[0].mxu0
      %v2080 = vadd.f32 0.0, %v2079
      %v2081 = vpop.f32.mrb[0].mxu0
      %2082 = vmatprep.mubr.f32.mxu0 0.0
      %2083 = vmatmul.mubr.f32.gmra.mrb[0].mxu0 %v1981
      %v2084 = vpop.f32.mrb[0].mxu0
      %v2085 = vadd.f32 0.0, %v2084
      %v2086 = vpop.f32.mrb[0].mxu0
      %2087 = vmatprep.mubr.f32.mxu0 0.0
      %2088 = vmatmul.mubr.f32.gmra.mrb[0].mxu0 %v1984
      %v2089 = vpop.f32.mrb[0].mxu0
      %v2090 = vadd.f32 0.0, %v2089
      %v2091 = vpop.f32.mrb[0].mxu0
      %2092 = vmatprep.mubr.f32.mxu0 0.0
      %2093 = vmatmul.mubr.f32.gmra.mrb[0].mxu0 %v1987
      %v2094 = vpop.f32.mrb[0].mxu0
      %v2095 = vadd.f32 0.0, %v2094
      %v2096 = vpop.f32.mrb[0].mxu0
      %2097 = vmatprep.mubr.f32.mxu0 0.0
      %2098 = vmatmul.mubr.f32.gmra.mrb[0].mxu0 %v1990
      %v2099 = vpop.f32.mrb[0].mxu0
      %v2100 = vadd.f32 0.0, %v2099
      %v2101 = vpop.f32.mrb[0].mxu0
      %2102 = vmatprep.mubr.f32.mxu0 0.0
      %2103 = vmatmul.mubr.f32.gmra.mrb[0].mxu0 %v1993
      %v2104 = vpop.f32.mrb[0].mxu0
      %v2105 = vadd.f32 0.0, %v2104
      %v2106 = vpop.f32.mrb[0].mxu0
      %2107 = vmatprep.mubr.f32.mxu0 0.0
      %2108 = vmatmul.mubr.f32.gmra.mrb[0].mxu0 %v1996
      %v2109 = vpop.f32.mrb[0].mxu0
      %v2110 = vadd.f32 0.0, %v2109
      %v2111 = vpop.f32.mrb[0].mxu0
      %2112 = vdwg.mxu0
      %v2114 = vsel %vm538, %v1939, 0
      %v2117 = vsel %vm538, %v1940, 0
      %v2120 = vsel %vm538, %v1941, 0
      %v2123 = vsel %vm538, %v1942, 0
      %v2126 = vsel %vm538, %v1943, 0
      %v2129 = vsel %vm538, %v1944, 0
      %v2132 = vsel %vm538, %v1945, 0
      %v2135 = vsel %vm538, %v1946, 0
      %v2138 = vsel %vm538, %v1947, 0
      %v2141 = vsel %vm538, %v1948, 0
      %2143 = vmatprep.subr.mxu0 0.0
      %2144 = vmatpush1.msra.mxu0 %v1949
      %2145 = vmatprep.subr.mxu0 0.0
      %2146 = vmatpush1.msra.mxu0 %v1950
      %2147 = vmatprep.subr.mxu0 0.0
      %2148 = vmatpush1.msra.mxu0 %v1951
      %2149 = vmatprep.subr.mxu0 0.0
      %2150 = vmatpush1.msra.mxu0 %v1952
      %2151 = vmatprep.subr.mxu0 0.0
      %2152 = vmatpush1.msra.mxu0 0.0
      %2153 = vmatprep.subr.mxu0 0.0
      %2154 = vmatpush1.msra.mxu0 0.0
      %2155 = vmatprep.subr.mxu0 0.0
      %2156 = vmatpush1.msra.mxu0 0.0
      %2157 = vmatprep.subr.mxu0 0.0
      %2158 = vmatpush1.msra.mxu0 0.0
      %2159 = vmatprep.subr.mxu0 0.0
      %2160 = vmatpush1.msra.mxu0 0.0
      %2161 = vmatprep.subr.mxu0 0.0
      %2162 = vmatpush1.msra.mxu0 0.0
      %2163 = vmatprep.subr.mxu0 0.0
      %2164 = vmatpush1.msra.mxu0 0.0
      %2165 = vmatprep.subr.mxu0 0.0
      %2166 = vmatpush1.msra.mxu0 0.0
      %2167 = vmatprep.subr.mxu0 0.0
      %2168 = vmatpush1.msra.mxu0 0.0
      %2169 = vmatprep.subr.mxu0 0.0
      %2170 = vmatpush1.msra.mxu0 0.0
      %2171 = vmatprep.subr.mxu0 0.0
      %2172 = vmatpush1.msra.mxu0 0.0
      %2173 = vmatprep.subr.mxu0 0.0
      %2174 = vmatpush1.msra.mxu0 0.0
      %2175 = vmatprep.subr.mxu0 0.0
      %2176 = vmatpush1.msra.mxu0 0.0
      %2177 = vmatprep.subr.mxu0 0.0
      %2178 = vmatpush1.msra.mxu0 0.0
      %2179 = vmatprep.subr.mxu0 0.0
      %2180 = vmatpush1.msra.mxu0 0.0
      %2181 = vmatprep.subr.mxu0 0.0
      %2182 = vmatpush1.msra.mxu0 0.0
      %2183 = vmatprep.subr.mxu0 0.0
      %2184 = vmatpush1.msra.mxu0 0.0
      %2185 = vmatprep.subr.mxu0 0.0
      %2186 = vmatpush1.msra.mxu0 0.0
      %2187 = vmatprep.subr.mxu0 0.0
      %2188 = vmatpush1.msra.mxu0 0.0
      %2189 = vmatprep.subr.mxu0 0.0
      %2190 = vmatpush1.msra.mxu0 0.0
      %2191 = vmatprep.subr.mxu0 0.0
      %2192 = vmatpush1.msra.mxu0 0.0
      %2193 = vmatprep.subr.mxu0 0.0
      %2194 = vmatpush1.msra.mxu0 0.0
      %2195 = vmatprep.subr.mxu0 0.0
      %2196 = vmatpush1.msra.mxu0 0.0
      %2197 = vmatprep.subr.mxu0 0.0
      %2198 = vmatpush1.msra.mxu0 0.0
      %2199 = vmatprep.subr.mxu0 0.0
      %2200 = vmatpush1.msra.mxu0 0.0
      %2201 = vmatprep.subr.mxu0 0.0
      %2202 = vmatpush1.msra.mxu0 0.0
      %2203 = vmatprep.subr.mxu0 0.0
      %2204 = vmatpush1.msra.mxu0 0.0
      %2205 = vmatprep.subr.mxu0 0.0
      %2206 = vmatpush1.msra.mxu0 0.0
      %2207 = vmatprep.mubr.f32.mxu0 0.0
      %2208 = vmatmul.mubr.f32.gmra.mrb[0].mxu0 %v2114
      %v2209 = vpop.f32.mrb[0].mxu0
      %v2210 = vadd.f32 %v2065, %v2209
      %v2211 = vpop.f32.mrb[0].mxu0
      %2212 = vmatprep.mubr.f32.mxu0 0.0
      %2213 = vmatmul.mubr.f32.gmra.mrb[0].mxu0 %v2117
      %v2214 = vpop.f32.mrb[0].mxu0
      %v2215 = vadd.f32 %v2070, %v2214
      %v2216 = vpop.f32.mrb[0].mxu0
      %2217 = vmatprep.mubr.f32.mxu0 0.0
      %2218 = vmatmul.mubr.f32.gmra.mrb[0].mxu0 %v2120
      %v2219 = vpop.f32.mrb[0].mxu0
      %v2220 = vadd.f32 %v2075, %v2219
      %v2221 = vpop.f32.mrb[0].mxu0
      %2222 = vmatprep.mubr.f32.mxu0 0.0
      %2223 = vmatmul.mubr.f32.gmra.mrb[0].mxu0 %v2123
      %v2224 = vpop.f32.mrb[0].mxu0
      %v2225 = vadd.f32 %v2080, %v2224
      %v2226 = vpop.f32.mrb[0].mxu0
      %2227 = vmatprep.mubr.f32.mxu0 0.0
      %2228 = vmatmul.mubr.f32.gmra.mrb[0].mxu0 %v2126
      %v2229 = vpop.f32.mrb[0].mxu0
      %v2230 = vadd.f32 %v2085, %v2229
      %v2231 = vpop.f32.mrb[0].mxu0
      %2232 = vmatprep.mubr.f32.mxu0 0.0
      %2233 = vmatmul.mubr.f32.gmra.mrb[0].mxu0 %v2129
      %v2234 = vpop.f32.mrb[0].mxu0
      %v2235 = vadd.f32 %v2090, %v2234
      %v2236 = vpop.f32.mrb[0].mxu0
      %2237 = vmatprep.mubr.f32.mxu0 0.0
      %2238 = vmatmul.mubr.f32.gmra.mrb[0].mxu0 %v2132
      %v2239 = vpop.f32.mrb[0].mxu0
      %v2240 = vadd.f32 %v2095, %v2239
      %v2241 = vpop.f32.mrb[0].mxu0
      %2242 = vmatprep.mubr.f32.mxu0 0.0
      %2243 = vmatmul.mubr.f32.gmra.mrb[0].mxu0 %v2135
      %v2244 = vpop.f32.mrb[0].mxu0
      %v2245 = vadd.f32 %v2100, %v2244
      %v2246 = vpop.f32.mrb[0].mxu0
      %2247 = vmatprep.mubr.f32.mxu0 0.0
      %2248 = vmatmul.mubr.f32.gmra.mrb[0].mxu0 %v2138
      %v2249 = vpop.f32.mrb[0].mxu0
      %v2250 = vadd.f32 %v2105, %v2249
      %v2251 = vpop.f32.mrb[0].mxu0
      %2252 = vmatprep.mubr.f32.mxu0 0.0
      %2253 = vmatmul.mubr.f32.gmra.mrb[0].mxu0 %v2141
      %v2254 = vpop.f32.mrb[0].mxu0
      %v2255 = vadd.f32 %v2110, %v2254
      %v2256 = vpop.f32.mrb[0].mxu0
      %2257 = vdwg.mxu0
      %v2258 = vld [vmem:[#allocation3 + $0x2] sm:$0xff]
      %v2259 = vld [vmem:[#allocation3 + $0xa] sm:$0xff]
      %v2260 = vld [vmem:[#allocation3 + $0x12] sm:$0xff]
      %v2261 = vld [vmem:[#allocation3 + $0x1a] sm:$0xff]
      %v2262 = vld [vmem:[#allocation3 + $0x22] sm:$0xff]
      %v2263 = vld [vmem:[#allocation3 + $0x2a] sm:$0xff]
      %v2264 = vld [vmem:[#allocation3 + $0x32] sm:$0xff]
      %v2265 = vld [vmem:[#allocation3 + $0x3a] sm:$0xff]
      %v2266 = vld [vmem:[#allocation3 + $0x42] sm:$0xff]
      %v2267 = vld [vmem:[#allocation3 + $0x4a] sm:$0x3f]
      %s2268 = scalar_lea.vmem %s7, 64
      %v2269 = vld [vmem:[%s2268] sm:$0xff]
      %v2270 = vld [vmem:[%s2268 + $0x8] sm:$0xff]
      %v2271 = vld [vmem:[%s2268 + $0x10] sm:$0xff]
      %v2272 = vld [vmem:[%s2268 + $0x18] sm:$0xff]
      %v2274 = vsel %vm538, %v2258, 0
      %v2277 = vsel %vm538, %v2259, 0
      %v2280 = vsel %vm538, %v2260, 0
      %v2283 = vsel %vm538, %v2261, 0
      %v2286 = vsel %vm538, %v2262, 0
      %v2289 = vsel %vm538, %v2263, 0
      %v2292 = vsel %vm538, %v2264, 0
      %v2295 = vsel %vm538, %v2265, 0
      %v2298 = vsel %vm538, %v2266, 0
      %v2301 = vsel %vm538, %v2267, 0
      %2303 = vmatprep.subr.mxu0 0.0
      %2304 = vmatpush1.msra.mxu0 %v2269
      %2305 = vmatprep.subr.mxu0 0.0
      %2306 = vmatpush1.msra.mxu0 %v2270
      %2307 = vmatprep.subr.mxu0 0.0
      %2308 = vmatpush1.msra.mxu0 %v2271
      %2309 = vmatprep.subr.mxu0 0.0
      %2310 = vmatpush1.msra.mxu0 %v2272
      %2311 = vmatprep.subr.mxu0 0.0
      %2312 = vmatpush1.msra.mxu0 0.0
      %2313 = vmatprep.subr.mxu0 0.0
      %2314 = vmatpush1.msra.mxu0 0.0
      %2315 = vmatprep.subr.mxu0 0.0
      %2316 = vmatpush1.msra.mxu0 0.0
      %2317 = vmatprep.subr.mxu0 0.0
      %2318 = vmatpush1.msra.mxu0 0.0
      %2319 = vmatprep.subr.mxu0 0.0
      %2320 = vmatpush1.msra.mxu0 0.0
      %2321 = vmatprep.subr.mxu0 0.0
      %2322 = vmatpush1.msra.mxu0 0.0
      %2323 = vmatprep.subr.mxu0 0.0
      %2324 = vmatpush1.msra.mxu0 0.0
      %2325 = vmatprep.subr.mxu0 0.0
      %2326 = vmatpush1.msra.mxu0 0.0
      %2327 = vmatprep.subr.mxu0 0.0
      %2328 = vmatpush1.msra.mxu0 0.0
      %2329 = vmatprep.subr.mxu0 0.0
      %2330 = vmatpush1.msra.mxu0 0.0
      %2331 = vmatprep.subr.mxu0 0.0
      %2332 = vmatpush1.msra.mxu0 0.0
      %2333 = vmatprep.subr.mxu0 0.0
      %2334 = vmatpush1.msra.mxu0 0.0
      %2335 = vmatprep.subr.mxu0 0.0
      %2336 = vmatpush1.msra.mxu0 0.0
      %2337 = vmatprep.subr.mxu0 0.0
      %2338 = vmatpush1.msra.mxu0 0.0
      %2339 = vmatprep.subr.mxu0 0.0
      %2340 = vmatpush1.msra.mxu0 0.0
      %2341 = vmatprep.subr.mxu0 0.0
      %2342 = vmatpush1.msra.mxu0 0.0
      %2343 = vmatprep.subr.mxu0 0.0
      %2344 = vmatpush1.msra.mxu0 0.0
      %2345 = vmatprep.subr.mxu0 0.0
      %2346 = vmatpush1.msra.mxu0 0.0
      %2347 = vmatprep.subr.mxu0 0.0
      %2348 = vmatpush1.msra.mxu0 0.0
      %2349 = vmatprep.subr.mxu0 0.0
      %2350 = vmatpush1.msra.mxu0 0.0
      %2351 = vmatprep.subr.mxu0 0.0
      %2352 = vmatpush1.msra.mxu0 0.0
      %2353 = vmatprep.subr.mxu0 0.0
      %2354 = vmatpush1.msra.mxu0 0.0
      %2355 = vmatprep.subr.mxu0 0.0
      %2356 = vmatpush1.msra.mxu0 0.0
      %2357 = vmatprep.subr.mxu0 0.0
      %2358 = vmatpush1.msra.mxu0 0.0
      %2359 = vmatprep.subr.mxu0 0.0
      %2360 = vmatpush1.msra.mxu0 0.0
      %2361 = vmatprep.subr.mxu0 0.0
      %2362 = vmatpush1.msra.mxu0 0.0
      %2363 = vmatprep.subr.mxu0 0.0
      %2364 = vmatpush1.msra.mxu0 0.0
      %2365 = vmatprep.subr.mxu0 0.0
      %2366 = vmatpush1.msra.mxu0 0.0
      %2367 = vmatprep.mubr.f32.mxu0 0.0
      %2368 = vmatmul.mubr.f32.gmra.mrb[0].mxu0 %v2274
      %v2369 = vpop.f32.mrb[0].mxu0
      %v2370 = vadd.f32 0.0, %v2369
      %v2371 = vpop.f32.mrb[0].mxu0
      %2372 = vmatprep.mubr.f32.mxu0 0.0
      %2373 = vmatmul.mubr.f32.gmra.mrb[0].mxu0 %v2277
      %v2374 = vpop.f32.mrb[0].mxu0
      %v2375 = vadd.f32 0.0, %v2374
      %v2376 = vpop.f32.mrb[0].mxu0
      %2377 = vmatprep.mubr.f32.mxu0 0.0
      %2378 = vmatmul.mubr.f32.gmra.mrb[0].mxu0 %v2280
      %v2379 = vpop.f32.mrb[0].mxu0
      %v2380 = vadd.f32 0.0, %v2379
      %v2381 = vpop.f32.mrb[0].mxu0
      %2382 = vmatprep.mubr.f32.mxu0 0.0
      %2383 = vmatmul.mubr.f32.gmra.mrb[0].mxu0 %v2283
      %v2384 = vpop.f32.mrb[0].mxu0
      %v2385 = vadd.f32 0.0, %v2384
      %v2386 = vpop.f32.mrb[0].mxu0
      %2387 = vmatprep.mubr.f32.mxu0 0.0
      %2388 = vmatmul.mubr.f32.gmra.mrb[0].mxu0 %v2286
      %v2389 = vpop.f32.mrb[0].mxu0
      %v2390 = vadd.f32 0.0, %v2389
      %v2391 = vpop.f32.mrb[0].mxu0
      %2392 = vmatprep.mubr.f32.mxu0 0.0
      %2393 = vmatmul.mubr.f32.gmra.mrb[0].mxu0 %v2289
      %v2394 = vpop.f32.mrb[0].mxu0
      %v2395 = vadd.f32 0.0, %v2394
      %v2396 = vpop.f32.mrb[0].mxu0
      %2397 = vmatprep.mubr.f32.mxu0 0.0
      %2398 = vmatmul.mubr.f32.gmra.mrb[0].mxu0 %v2292
      %v2399 = vpop.f32.mrb[0].mxu0
      %v2400 = vadd.f32 0.0, %v2399
      %v2401 = vpop.f32.mrb[0].mxu0
      %2402 = vmatprep.mubr.f32.mxu0 0.0
      %2403 = vmatmul.mubr.f32.gmra.mrb[0].mxu0 %v2295
      %v2404 = vpop.f32.mrb[0].mxu0
      %v2405 = vadd.f32 0.0, %v2404
      %v2406 = vpop.f32.mrb[0].mxu0
      %2407 = vmatprep.mubr.f32.mxu0 0.0
      %2408 = vmatmul.mubr.f32.gmra.mrb[0].mxu0 %v2298
      %v2409 = vpop.f32.mrb[0].mxu0
      %v2410 = vadd.f32 0.0, %v2409
      %v2411 = vpop.f32.mrb[0].mxu0
      %2412 = vmatprep.mubr.f32.mxu0 0.0
      %2413 = vmatmul.mubr.f32.gmra.mrb[0].mxu0 %v2301
      %v2414 = vpop.f32.mrb[0].mxu0
      %v2415 = vadd.f32 0.0, %v2414
      %v2416 = vpop.f32.mrb[0].mxu0
      %2417 = vdwg.mxu0
      %v2418 = vadd.f32 %v2210, %v2370
      %v2419 = vadd.f32 %v2215, %v2375
      %v2420 = vadd.f32 %v2220, %v2380
      %v2421 = vadd.f32 %v2225, %v2385
      %v2422 = vadd.f32 %v2230, %v2390
      %v2423 = vadd.f32 %v2235, %v2395
      %v2424 = vadd.f32 %v2240, %v2400
      %v2425 = vadd.f32 %v2245, %v2405
      %v2426 = vadd.f32 %v2250, %v2410
      %v2427 = vadd.f32 %v2255, %v2415
      %v2428 = vld [vmem:[%s8] sm:$0x1]
      %v2430 = vlaneseq
      %v2431 = vshrl.u32 %v2430, 7
      %v2432 = vsub.s32 0, %v2431
      %v2433 = vrot.slane %v2428, %v2432
      %v2435 = vadd.f32 %v2418, %v2433
      %v2436 = vadd.f32 %v2419, %v2433
      %v2437 = vadd.f32 %v2420, %v2433
      %v2438 = vadd.f32 %v2421, %v2433
      %v2439 = vadd.f32 %v2422, %v2433
      %v2440 = vadd.f32 %v2423, %v2433
      %v2441 = vadd.f32 %v2424, %v2433
      %v2442 = vadd.f32 %v2425, %v2433
      %v2443 = vadd.f32 %v2426, %v2433
      %v2444 = vadd.f32 %v2427, %v2433
      %v2445 = vmax.f32 %v2435, 0.0
      %v2446 = vmax.f32 %v2436, 0.0
      %v2447 = vmax.f32 %v2437, 0.0
      %v2448 = vmax.f32 %v2438, 0.0
      %v2449 = vmax.f32 %v2439, 0.0
      %v2450 = vmax.f32 %v2440, 0.0
      %v2451 = vmax.f32 %v2441, 0.0
      %v2452 = vmax.f32 %v2442, 0.0
      %v2453 = vmax.f32 %v2443, 0.0
      %v2454 = vmax.f32 %v2444, 0.0
      %vm2455 = vcmask 637952
      %v2457 = vsel %vm2455, %v1923, 0
      %v2460 = vsel %vm2455, %v1924, 0
      %v2463 = vsel %vm2455, %v1925, 0
      %v2466 = vsel %vm2455, %v1926, 0
      %v2469 = vsel %vm2455, %v1927, 0
      %v2472 = vsel %vm2455, %v1928, 0
      %v2475 = vsel %vm2455, %v1929, 0
      %v2478 = vsel %vm2455, %v1930, 0
      %v2481 = vsel %vm2455, %v1931, 0
      %v2484 = vsel %vm2455, %v1932, 0
      %v2487 = vsel %vm2455, %v1933, 0
      %v2490 = vsel %vm2455, %v1934, 0
      %v2493 = vsel %vm2455, %v1935, 0
      %v2496 = vsel %vm2455, %v1936, 0
      %v2499 = vsel %vm2455, %v1937, 0
      %v2502 = vsel %vm2455, %v1938, 0
      %v2505 = vsel %vm1794, %v2454, 0
      %2507 = vmatprep.subr.mxu0 0.0
      %2508 = vmatpush1.msra.mxu0 %v2445
      %2509 = vmatprep.subr.mxu0 0.0
      %2510 = vmatpush1.msra.mxu0 %v2446
      %2511 = vmatprep.subr.mxu0 0.0
      %2512 = vmatpush1.msra.mxu0 %v2447
      %2513 = vmatprep.subr.mxu0 0.0
      %2514 = vmatpush1.msra.mxu0 %v2448
      %2515 = vmatprep.subr.mxu0 0.0
      %2516 = vmatpush1.msra.mxu0 %v2449
      %2517 = vmatprep.subr.mxu0 0.0
      %2518 = vmatpush1.msra.mxu0 %v2450
      %2519 = vmatprep.subr.mxu0 0.0
      %2520 = vmatpush1.msra.mxu0 %v2451
      %2521 = vmatprep.subr.mxu0 0.0
      %2522 = vmatpush1.msra.mxu0 %v2452
      %2523 = vmatprep.subr.mxu0 0.0
      %2524 = vmatpush1.msra.mxu0 %v2453
      %2525 = vmatprep.subr.mxu0 0.0
      %2526 = vmatpush1.msra.mxu0 %v2505
      %2527 = vmatprep.subr.mxu0 0.0
      %2528 = vmatpush1.msra.mxu0 0.0
      %2529 = vmatprep.subr.mxu0 0.0
      %2530 = vmatpush1.msra.mxu0 0.0
      %2531 = vmatprep.subr.mxu0 0.0
      %2532 = vmatpush1.msra.mxu0 0.0
      %2533 = vmatprep.subr.mxu0 0.0
      %2534 = vmatpush1.msra.mxu0 0.0
      %2535 = vmatprep.subr.mxu0 0.0
      %2536 = vmatpush1.msra.mxu0 0.0
      %2537 = vmatprep.subr.mxu0 0.0
      %2538 = vmatpush1.msra.mxu0 0.0
      %2539 = vmatprep.subr.mxu0 0.0
      %2540 = vmatpush1.msra.mxu0 0.0
      %2541 = vmatprep.subr.mxu0 0.0
      %2542 = vmatpush1.msra.mxu0 0.0
      %2543 = vmatprep.subr.mxu0 0.0
      %2544 = vmatpush1.msra.mxu0 0.0
      %2545 = vmatprep.subr.mxu0 0.0
      %2546 = vmatpush1.msra.mxu0 0.0
      %2547 = vmatprep.subr.mxu0 0.0
      %2548 = vmatpush1.msra.mxu0 0.0
      %2549 = vmatprep.subr.mxu0 0.0
      %2550 = vmatpush1.msra.mxu0 0.0
      %2551 = vmatprep.subr.mxu0 0.0
      %2552 = vmatpush1.msra.mxu0 0.0
      %2553 = vmatprep.subr.mxu0 0.0
      %2554 = vmatpush1.msra.mxu0 0.0
      %2555 = vmatprep.subr.mxu0 0.0
      %2556 = vmatpush1.msra.mxu0 0.0
      %2557 = vmatprep.subr.mxu0 0.0
      %2558 = vmatpush1.msra.mxu0 0.0
      %2559 = vmatprep.subr.mxu0 0.0
      %2560 = vmatpush1.msra.mxu0 0.0
      %2561 = vmatprep.subr.mxu0 0.0
      %2562 = vmatpush1.msra.mxu0 0.0
      %2563 = vmatprep.subr.mxu0 0.0
      %2564 = vmatpush1.msra.mxu0 0.0
      %2565 = vmatprep.subr.mxu0 0.0
      %2566 = vmatpush1.msra.mxu0 0.0
      %2567 = vmatprep.subr.mxu0 0.0
      %2568 = vmatpush1.msra.mxu0 0.0
      %2569 = vmatprep.subr.mxu0 0.0
      %2570 = vmatpush1.msra.mxu0 0.0
      %2571 = vmatprep.mubr.f32.mxu0 0.0
      %2572 = vmatmul.mubr.f32.gmra.mrb[0].mxu0 %v2457
      %v2573 = vpop.f32.mrb[0].mxu0
      %v2574 = vadd.f32 0.0, %v2573
      %v2575 = vpop.f32.mrb[0].mxu0
      %2576 = vmatprep.mubr.f32.mxu0 0.0
      %2577 = vmatmul.mubr.f32.gmra.mrb[0].mxu0 %v2460
      %v2578 = vpop.f32.mrb[0].mxu0
      %v2579 = vadd.f32 0.0, %v2578
      %v2580 = vpop.f32.mrb[0].mxu0
      %2581 = vmatprep.mubr.f32.mxu0 0.0
      %2582 = vmatmul.mubr.f32.gmra.mrb[0].mxu0 %v2463
      %v2583 = vpop.f32.mrb[0].mxu0
      %v2584 = vadd.f32 0.0, %v2583
      %v2585 = vpop.f32.mrb[0].mxu0
      %2586 = vmatprep.mubr.f32.mxu0 0.0
      %2587 = vmatmul.mubr.f32.gmra.mrb[0].mxu0 %v2466
      %v2588 = vpop.f32.mrb[0].mxu0
      %v2589 = vadd.f32 0.0, %v2588
      %v2590 = vpop.f32.mrb[0].mxu0
      %2591 = vmatprep.mubr.f32.mxu0 0.0
      %2592 = vmatmul.mubr.f32.gmra.mrb[0].mxu0 %v2469
      %v2593 = vpop.f32.mrb[0].mxu0
      %v2594 = vadd.f32 0.0, %v2593
      %v2595 = vpop.f32.mrb[0].mxu0
      %2596 = vmatprep.mubr.f32.mxu0 0.0
      %2597 = vmatmul.mubr.f32.gmra.mrb[0].mxu0 %v2472
      %v2598 = vpop.f32.mrb[0].mxu0
      %v2599 = vadd.f32 0.0, %v2598
      %v2600 = vpop.f32.mrb[0].mxu0
      %2601 = vmatprep.mubr.f32.mxu0 0.0
      %2602 = vmatmul.mubr.f32.gmra.mrb[0].mxu0 %v2475
      %v2603 = vpop.f32.mrb[0].mxu0
      %v2604 = vadd.f32 0.0, %v2603
      %v2605 = vpop.f32.mrb[0].mxu0
      %2606 = vmatprep.mubr.f32.mxu0 0.0
      %2607 = vmatmul.mubr.f32.gmra.mrb[0].mxu0 %v2478
      %v2608 = vpop.f32.mrb[0].mxu0
      %v2609 = vadd.f32 0.0, %v2608
      %v2610 = vpop.f32.mrb[0].mxu0
      %2611 = vmatprep.mubr.f32.mxu0 0.0
      %2612 = vmatmul.mubr.f32.gmra.mrb[0].mxu0 %v2481
      %v2613 = vpop.f32.mrb[0].mxu0
      %v2614 = vadd.f32 0.0, %v2613
      %v2615 = vpop.f32.mrb[0].mxu0
      %2616 = vmatprep.mubr.f32.mxu0 0.0
      %2617 = vmatmul.mubr.f32.gmra.mrb[0].mxu0 %v2484
      %v2618 = vpop.f32.mrb[0].mxu0
      %v2619 = vadd.f32 0.0, %v2618
      %v2620 = vpop.f32.mrb[0].mxu0
      %2621 = vmatprep.mubr.f32.mxu0 0.0
      %2622 = vmatmul.mubr.f32.gmra.mrb[0].mxu0 %v2487
      %v2623 = vpop.f32.mrb[0].mxu0
      %v2624 = vadd.f32 0.0, %v2623
      %v2625 = vpop.f32.mrb[0].mxu0
      %2626 = vmatprep.mubr.f32.mxu0 0.0
      %2627 = vmatmul.mubr.f32.gmra.mrb[0].mxu0 %v2490
      %v2628 = vpop.f32.mrb[0].mxu0
      %v2629 = vadd.f32 0.0, %v2628
      %v2630 = vpop.f32.mrb[0].mxu0
      %2631 = vmatprep.mubr.f32.mxu0 0.0
      %2632 = vmatmul.mubr.f32.gmra.mrb[0].mxu0 %v2493
      %v2633 = vpop.f32.mrb[0].mxu0
      %v2634 = vadd.f32 0.0, %v2633
      %v2635 = vpop.f32.mrb[0].mxu0
      %2636 = vmatprep.mubr.f32.mxu0 0.0
      %2637 = vmatmul.mubr.f32.gmra.mrb[0].mxu0 %v2496
      %v2638 = vpop.f32.mrb[0].mxu0
      %v2639 = vadd.f32 0.0, %v2638
      %v2640 = vpop.f32.mrb[0].mxu0
      %2641 = vmatprep.mubr.f32.mxu0 0.0
      %2642 = vmatmul.mubr.f32.gmra.mrb[0].mxu0 %v2499
      %v2643 = vpop.f32.mrb[0].mxu0
      %v2644 = vadd.f32 0.0, %v2643
      %v2645 = vpop.f32.mrb[0].mxu0
      %2646 = vmatprep.mubr.f32.mxu0 0.0
      %2647 = vmatmul.mubr.f32.gmra.mrb[0].mxu0 %v2502
      %v2648 = vpop.f32.mrb[0].mxu0
      %v2649 = vadd.f32 0.0, %v2648
      %v2650 = vpop.f32.mrb[0].mxu0
      %2651 = vdwg.mxu0
      %vm2652 = vcmask 523264
      %2653 = vst.msk [vmem:[#allocation4] sm:$0xff] %vm2652, %v2574
      %2654 = vst.msk [vmem:[#allocation4 + $0x8] sm:$0xff] %vm2652, %v2579
      %2655 = vst.msk [vmem:[#allocation4 + $0x10] sm:$0xff] %vm2652, %v2584
      %2656 = vst.msk [vmem:[#allocation4 + $0x18] sm:$0xff] %vm2652, %v2589
      %2657 = vst.msk [vmem:[#allocation4 + $0x20] sm:$0xff] %vm2652, %v2594
      %2658 = vst.msk [vmem:[#allocation4 + $0x28] sm:$0xff] %vm2652, %v2599
      %2659 = vst.msk [vmem:[#allocation4 + $0x30] sm:$0xff] %vm2652, %v2604
      %2660 = vst.msk [vmem:[#allocation4 + $0x38] sm:$0xff] %vm2652, %v2609
      %2661 = vst.msk [vmem:[#allocation4 + $0x40] sm:$0xff] %vm2652, %v2614
      %2662 = vst.msk [vmem:[#allocation4 + $0x48] sm:$0xff] %vm2652, %v2619
      %2663 = vst.msk [vmem:[#allocation4 + $0x50] sm:$0xff] %vm2652, %v2624
      %2664 = vst.msk [vmem:[#allocation4 + $0x58] sm:$0xff] %vm2652, %v2629
      %2665 = vst.msk [vmem:[#allocation4 + $0x60] sm:$0xff] %vm2652, %v2634
      %2666 = vst.msk [vmem:[#allocation4 + $0x68] sm:$0xff] %vm2652, %v2639
      %2667 = vst.msk [vmem:[#allocation4 + $0x70] sm:$0xff] %vm2652, %v2644
      %2668 = vst.msk [vmem:[#allocation4 + $0x78] sm:$0xff] %vm2652, %v2649
      %v2669 = vld [vmem:[%s12] sm:$0xff]
      %v2670 = vld [vmem:[%s12 + $0x8] sm:$0xff]
      %v2671 = vld [vmem:[%s12 + $0x10] sm:$0xff]
      %v2672 = vld [vmem:[%s12 + $0x18] sm:$0xff]
      %v2673 = vld [vmem:[%s12 + $0x20] sm:$0xff]
      %v2674 = vld [vmem:[%s12 + $0x28] sm:$0xff]
      %v2675 = vld [vmem:[%s12 + $0x30] sm:$0xff]
      %v2676 = vld [vmem:[%s12 + $0x38] sm:$0xff]
      %v2677 = vld [vmem:[%s12 + $0x40] sm:$0xff]
      %v2678 = vld [vmem:[%s12 + $0x48] sm:$0xff]
      %v2679 = vld [vmem:[%s12 + $0x50] sm:$0xff]
      %v2680 = vld [vmem:[%s12 + $0x58] sm:$0xff]
      %v2681 = vld [vmem:[%s12 + $0x60] sm:$0xff]
      %v2682 = vld [vmem:[%s12 + $0x68] sm:$0xff]
      %v2683 = vld [vmem:[%s12 + $0x70] sm:$0xff]
      %v2684 = vld [vmem:[%s12 + $0x78] sm:$0xff]
      %v2685 = vld [vmem:[%s12 + $0x80] sm:$0xff]
      %v2686 = vld [vmem:[%s12 + $0x88] sm:$0xff]
      %v2687 = vld [vmem:[%s12 + $0x90] sm:$0xff]
      %v2688 = vld [vmem:[%s12 + $0x98] sm:$0xff]
      %v2689 = vld [vmem:[%s12 + $0xa0] sm:$0xff]
      %v2690 = vld [vmem:[%s12 + $0xa8] sm:$0xff]
      %v2691 = vld [vmem:[%s12 + $0xb0] sm:$0xff]
      %v2692 = vld [vmem:[%s12 + $0xb8] sm:$0xff]
      %v2693 = vld [vmem:[%s12 + $0xc0] sm:$0xff]
      %v2694 = vld [vmem:[%s12 + $0xc8] sm:$0xff]
      %v2695 = vld [vmem:[%s12 + $0xd0] sm:$0xff]
      %v2696 = vld [vmem:[%s12 + $0xd8] sm:$0xff]
      %v2697 = vld [vmem:[%s12 + $0xe0] sm:$0xff]
      %v2698 = vld [vmem:[%s12 + $0xe8] sm:$0xff]
      %v2699 = vld [vmem:[#allocation4] sm:$0xff]
      %v2700 = vld [vmem:[#allocation4 + $0x8] sm:$0xff]
      %v2701 = vld [vmem:[#allocation4 + $0x10] sm:$0xff]
      %v2702 = vld [vmem:[#allocation4 + $0x18] sm:$0xff]
      %v2703 = vld [vmem:[#allocation4 + $0x20] sm:$0xff]
      %v2704 = vld [vmem:[#allocation4 + $0x28] sm:$0xff]
      %v2705 = vld [vmem:[#allocation4 + $0x30] sm:$0xff]
      %v2706 = vld [vmem:[#allocation4 + $0x38] sm:$0xff]
      %v2707 = vld [vmem:[#allocation4 + $0x40] sm:$0xff]
      %v2708 = vld [vmem:[#allocation4 + $0x48] sm:$0xff]
      %v2709 = vld [vmem:[#allocation4 + $0x50] sm:$0xff]
      %v2710 = vld [vmem:[#allocation4 + $0x58] sm:$0xff]
      %v2711 = vld [vmem:[#allocation4 + $0x60] sm:$0xff]
      %v2712 = vld [vmem:[#allocation4 + $0x68] sm:$0xff]
      %v2713 = vld [vmem:[#allocation4 + $0x70] sm:$0xff]
      %v2714 = vld [vmem:[#allocation4 + $0x78] sm:$0x3f]
      %v2715 = vld [vmem:[%s10] sm:$0xff]
      %v2716 = vld [vmem:[%s10 + $0x8] sm:$0xff]
      %v2717 = vld [vmem:[%s10 + $0x10] sm:$0xff]
      %v2718 = vld [vmem:[%s10 + $0x18] sm:$0xff]
      %v2719 = vld [vmem:[%s10 + $0x20] sm:$0xff]
      %v2720 = vld [vmem:[%s10 + $0x28] sm:$0xff]
      %v2721 = vld [vmem:[%s10 + $0x30] sm:$0xff]
      %v2722 = vld [vmem:[%s10 + $0x38] sm:$0xff]
      %v2723 = vld [vmem:[%s10 + $0x40] sm:$0xff]
      %v2724 = vld [vmem:[%s10 + $0x48] sm:$0xff]
      %v2725 = vld [vmem:[%s10 + $0x50] sm:$0xff]
      %v2726 = vld [vmem:[%s10 + $0x58] sm:$0xff]
      %v2727 = vld [vmem:[%s10 + $0x60] sm:$0xff]
      %v2728 = vld [vmem:[%s10 + $0x68] sm:$0xff]
      %v2729 = vld [vmem:[%s10 + $0x70] sm:$0xff]
      %v2730 = vld [vmem:[%s10 + $0x78] sm:$0xff]
      %v2731 = vld [vmem:[#allocation4 + $0x1] sm:$0xff]
      %v2732 = vld [vmem:[#allocation4 + $0x9] sm:$0xff]
      %v2733 = vld [vmem:[#allocation4 + $0x11] sm:$0xff]
      %v2734 = vld [vmem:[#allocation4 + $0x19] sm:$0xff]
      %v2735 = vld [vmem:[#allocation4 + $0x21] sm:$0xff]
      %v2736 = vld [vmem:[#allocation4 + $0x29] sm:$0xff]
      %v2737 = vld [vmem:[#allocation4 + $0x31] sm:$0xff]
      %v2738 = vld [vmem:[#allocation4 + $0x39] sm:$0xff]
      %v2739 = vld [vmem:[#allocation4 + $0x41] sm:$0xff]
      %v2740 = vld [vmem:[#allocation4 + $0x49] sm:$0xff]
      %v2741 = vld [vmem:[#allocation4 + $0x51] sm:$0xff]
      %v2742 = vld [vmem:[#allocation4 + $0x59] sm:$0xff]
      %v2743 = vld [vmem:[#allocation4 + $0x61] sm:$0xff]
      %v2744 = vld [vmem:[#allocation4 + $0x69] sm:$0xff]
      %v2745 = vld [vmem:[#allocation4 + $0x71] sm:$0xff]
      %v2746 = vld [vmem:[#allocation4 + $0x79] sm:$0x3f]
      %s2747 = scalar_lea.vmem %s10, 128
      %v2748 = vld [vmem:[%s2747] sm:$0xff]
      %v2749 = vld [vmem:[%s2747 + $0x8] sm:$0xff]
      %v2750 = vld [vmem:[%s2747 + $0x10] sm:$0xff]
      %v2751 = vld [vmem:[%s2747 + $0x18] sm:$0xff]
      %v2752 = vld [vmem:[%s2747 + $0x20] sm:$0xff]
      %v2753 = vld [vmem:[%s2747 + $0x28] sm:$0xff]
      %v2754 = vld [vmem:[%s2747 + $0x30] sm:$0xff]
      %v2755 = vld [vmem:[%s2747 + $0x38] sm:$0xff]
      %v2756 = vld [vmem:[%s2747 + $0x40] sm:$0xff]
      %v2757 = vld [vmem:[%s2747 + $0x48] sm:$0xff]
      %v2758 = vld [vmem:[%s2747 + $0x50] sm:$0xff]
      %v2759 = vld [vmem:[%s2747 + $0x58] sm:$0xff]
      %v2760 = vld [vmem:[%s2747 + $0x60] sm:$0xff]
      %v2761 = vld [vmem:[%s2747 + $0x68] sm:$0xff]
      %v2762 = vld [vmem:[%s2747 + $0x70] sm:$0xff]
      %v2763 = vld [vmem:[%s2747 + $0x78] sm:$0xff]
      %v2765 = vsel %vm2652, %v2731, 0
      %v2768 = vsel %vm2652, %v2732, 0
      %v2771 = vsel %vm2652, %v2733, 0
      %v2774 = vsel %vm2652, %v2734, 0
      %v2777 = vsel %vm2652, %v2735, 0
      %v2780 = vsel %vm2652, %v2736, 0
      %v2783 = vsel %vm2652, %v2737, 0
      %v2786 = vsel %vm2652, %v2738, 0
      %v2789 = vsel %vm2652, %v2739, 0
      %v2792 = vsel %vm2652, %v2740, 0
      %v2795 = vsel %vm2652, %v2741, 0
      %v2798 = vsel %vm2652, %v2742, 0
      %v2801 = vsel %vm2652, %v2743, 0
      %v2804 = vsel %vm2652, %v2744, 0
      %v2807 = vsel %vm2652, %v2745, 0
      %v2810 = vsel %vm2652, %v2746, 0
      %2812 = vmatprep.subr.mxu0 %v2749
      %2813 = vmatpush1.msra.mxu0 %v2748
      %2814 = vmatprep.subr.mxu0 %v2751
      %2815 = vmatpush1.msra.mxu0 %v2750
      %2816 = vmatprep.subr.mxu0 %v2753
      %2817 = vmatpush1.msra.mxu0 %v2752
      %2818 = vmatprep.subr.mxu0 %v2755
      %2819 = vmatpush1.msra.mxu0 %v2754
      %2820 = vmatprep.subr.mxu0 %v2757
      %2821 = vmatpush1.msra.mxu0 %v2756
      %2822 = vmatprep.subr.mxu0 %v2759
      %2823 = vmatpush1.msra.mxu0 %v2758
      %2824 = vmatprep.subr.mxu0 %v2761
      %2825 = vmatpush1.msra.mxu0 %v2760
      %2826 = vmatprep.subr.mxu0 %v2763
      %2827 = vmatpush1.msra.mxu0 %v2762
      %2828 = vmatprep.subr.mxu0 0.0
      %2829 = vmatpush1.msra.mxu0 0.0
      %2830 = vmatprep.subr.mxu0 0.0
      %2831 = vmatpush1.msra.mxu0 0.0
      %2832 = vmatprep.subr.mxu0 0.0
      %2833 = vmatpush1.msra.mxu0 0.0
      %2834 = vmatprep.subr.mxu0 0.0
      %2835 = vmatpush1.msra.mxu0 0.0
      %2836 = vmatprep.subr.mxu0 0.0
      %2837 = vmatpush1.msra.mxu0 0.0
      %2838 = vmatprep.subr.mxu0 0.0
      %2839 = vmatpush1.msra.mxu0 0.0
      %2840 = vmatprep.subr.mxu0 0.0
      %2841 = vmatpush1.msra.mxu0 0.0
      %2842 = vmatprep.subr.mxu0 0.0
      %2843 = vmatpush1.msra.mxu0 0.0
      %2844 = vmatprep.subr.mxu0 0.0
      %2845 = vmatpush1.msra.mxu0 0.0
      %2846 = vmatprep.subr.mxu0 0.0
      %2847 = vmatpush1.msra.mxu0 0.0
      %2848 = vmatprep.subr.mxu0 0.0
      %2849 = vmatpush1.msra.mxu0 0.0
      %2850 = vmatprep.subr.mxu0 0.0
      %2851 = vmatpush1.msra.mxu0 0.0
      %2852 = vmatprep.subr.mxu0 0.0
      %2853 = vmatpush1.msra.mxu0 0.0
      %2854 = vmatprep.subr.mxu0 0.0
      %2855 = vmatpush1.msra.mxu0 0.0
      %2856 = vmatprep.subr.mxu0 0.0
      %2857 = vmatpush1.msra.mxu0 0.0
      %2858 = vmatprep.subr.mxu0 0.0
      %2859 = vmatpush1.msra.mxu0 0.0
      %2860 = vmatprep.subr.mxu0 0.0
      %2861 = vmatpush1.msra.mxu0 0.0
      %2862 = vmatprep.subr.mxu0 0.0
      %2863 = vmatpush1.msra.mxu0 0.0
      %2864 = vmatprep.subr.mxu0 0.0
      %2865 = vmatpush1.msra.mxu0 0.0
      %2866 = vmatprep.subr.mxu0 0.0
      %2867 = vmatpush1.msra.mxu0 0.0
      %2868 = vmatprep.subr.mxu0 0.0
      %2869 = vmatpush1.msra.mxu0 0.0
      %2870 = vmatprep.subr.mxu0 0.0
      %2871 = vmatpush1.msra.mxu0 0.0
      %2872 = vmatprep.subr.mxu0 0.0
      %2873 = vmatpush1.msra.mxu0 0.0
      %2874 = vmatprep.subr.mxu0 0.0
      %2875 = vmatpush1.msra.mxu0 0.0
      %2876 = vmatprep.mubr.f32.mxu0 0.0
      %2877 = vmatmul.mubr.f32.gmra.mrb[0].mxu0 %v2765
      %v2878 = vpop.f32.mrb[0].mxu0
      %v2879 = vadd.f32 0.0, %v2878
      %v2880 = vpop.f32.mrb[0].mxu0
      %v2881 = vadd.f32 0.0, %v2880
      %2882 = vmatprep.mubr.f32.mxu0 0.0
      %2883 = vmatmul.mubr.f32.gmra.mrb[0].mxu0 %v2768
      %v2884 = vpop.f32.mrb[0].mxu0
      %v2885 = vadd.f32 0.0, %v2884
      %v2886 = vpop.f32.mrb[0].mxu0
      %v2887 = vadd.f32 0.0, %v2886
      %2888 = vmatprep.mubr.f32.mxu0 0.0
      %2889 = vmatmul.mubr.f32.gmra.mrb[0].mxu0 %v2771
      %v2890 = vpop.f32.mrb[0].mxu0
      %v2891 = vadd.f32 0.0, %v2890
      %v2892 = vpop.f32.mrb[0].mxu0
      %v2893 = vadd.f32 0.0, %v2892
      %2894 = vmatprep.mubr.f32.mxu0 0.0
      %2895 = vmatmul.mubr.f32.gmra.mrb[0].mxu0 %v2774
      %v2896 = vpop.f32.mrb[0].mxu0
      %v2897 = vadd.f32 0.0, %v2896
      %v2898 = vpop.f32.mrb[0].mxu0
      %v2899 = vadd.f32 0.0, %v2898
      %2900 = vmatprep.mubr.f32.mxu0 0.0
      %2901 = vmatmul.mubr.f32.gmra.mrb[0].mxu0 %v2777
      %v2902 = vpop.f32.mrb[0].mxu0
      %v2903 = vadd.f32 0.0, %v2902
      %v2904 = vpop.f32.mrb[0].mxu0
      %v2905 = vadd.f32 0.0, %v2904
      %2906 = vmatprep.mubr.f32.mxu0 0.0
      %2907 = vmatmul.mubr.f32.gmra.mrb[0].mxu0 %v2780
      %v2908 = vpop.f32.mrb[0].mxu0
      %v2909 = vadd.f32 0.0, %v2908
      %v2910 = vpop.f32.mrb[0].mxu0
      %v2911 = vadd.f32 0.0, %v2910
      %2912 = vmatprep.mubr.f32.mxu0 0.0
      %2913 = vmatmul.mubr.f32.gmra.mrb[0].mxu0 %v2783
      %v2914 = vpop.f32.mrb[0].mxu0
      %v2915 = vadd.f32 0.0, %v2914
      %v2916 = vpop.f32.mrb[0].mxu0
      %v2917 = vadd.f32 0.0, %v2916
      %2918 = vmatprep.mubr.f32.mxu0 0.0
      %2919 = vmatmul.mubr.f32.gmra.mrb[0].mxu0 %v2786
      %v2920 = vpop.f32.mrb[0].mxu0
      %v2921 = vadd.f32 0.0, %v2920
      %v2922 = vpop.f32.mrb[0].mxu0
      %v2923 = vadd.f32 0.0, %v2922
      %2924 = vmatprep.mubr.f32.mxu0 0.0
      %2925 = vmatmul.mubr.f32.gmra.mrb[0].mxu0 %v2789
      %v2926 = vpop.f32.mrb[0].mxu0
      %v2927 = vadd.f32 0.0, %v2926
      %v2928 = vpop.f32.mrb[0].mxu0
      %v2929 = vadd.f32 0.0, %v2928
      %2930 = vmatprep.mubr.f32.mxu0 0.0
      %2931 = vmatmul.mubr.f32.gmra.mrb[0].mxu0 %v2792
      %v2932 = vpop.f32.mrb[0].mxu0
      %v2933 = vadd.f32 0.0, %v2932
      %v2934 = vpop.f32.mrb[0].mxu0
      %v2935 = vadd.f32 0.0, %v2934
      %2936 = vmatprep.mubr.f32.mxu0 0.0
      %2937 = vmatmul.mubr.f32.gmra.mrb[0].mxu0 %v2795
      %v2938 = vpop.f32.mrb[0].mxu0
      %v2939 = vadd.f32 0.0, %v2938
      %v2940 = vpop.f32.mrb[0].mxu0
      %v2941 = vadd.f32 0.0, %v2940
      %2942 = vmatprep.mubr.f32.mxu0 0.0
      %2943 = vmatmul.mubr.f32.gmra.mrb[0].mxu0 %v2798
      %v2944 = vpop.f32.mrb[0].mxu0
      %v2945 = vadd.f32 0.0, %v2944
      %v2946 = vpop.f32.mrb[0].mxu0
      %v2947 = vadd.f32 0.0, %v2946
      %2948 = vmatprep.mubr.f32.mxu0 0.0
      %2949 = vmatmul.mubr.f32.gmra.mrb[0].mxu0 %v2801
      %v2950 = vpop.f32.mrb[0].mxu0
      %v2951 = vadd.f32 0.0, %v2950
      %v2952 = vpop.f32.mrb[0].mxu0
      %v2953 = vadd.f32 0.0, %v2952
      %2954 = vmatprep.mubr.f32.mxu0 0.0
      %2955 = vmatmul.mubr.f32.gmra.mrb[0].mxu0 %v2804
      %v2956 = vpop.f32.mrb[0].mxu0
      %v2957 = vadd.f32 0.0, %v2956
      %v2958 = vpop.f32.mrb[0].mxu0
      %v2959 = vadd.f32 0.0, %v2958
      %2960 = vmatprep.mubr.f32.mxu0 0.0
      %2961 = vmatmul.mubr.f32.gmra.mrb[0].mxu0 %v2807
      %v2962 = vpop.f32.mrb[0].mxu0
      %v2963 = vadd.f32 0.0, %v2962
      %v2964 = vpop.f32.mrb[0].mxu0
      %v2965 = vadd.f32 0.0, %v2964
      %2966 = vmatprep.mubr.f32.mxu0 0.0
      %2967 = vmatmul.mubr.f32.gmra.mrb[0].mxu0 %v2810
      %v2968 = vpop.f32.mrb[0].mxu0
      %v2969 = vadd.f32 0.0, %v2968
      %v2970 = vpop.f32.mrb[0].mxu0
      %v2971 = vadd.f32 0.0, %v2970
      %2972 = vdwg.mxu0
      %v2974 = vsel %vm2652, %v2699, 0
      %v2977 = vsel %vm2652, %v2700, 0
      %v2980 = vsel %vm2652, %v2701, 0
      %v2983 = vsel %vm2652, %v2702, 0
      %v2986 = vsel %vm2652, %v2703, 0
      %v2989 = vsel %vm2652, %v2704, 0
      %v2992 = vsel %vm2652, %v2705, 0
      %v2995 = vsel %vm2652, %v2706, 0
      %v2998 = vsel %vm2652, %v2707, 0
      %v3001 = vsel %vm2652, %v2708, 0
      %v3004 = vsel %vm2652, %v2709, 0
      %v3007 = vsel %vm2652, %v2710, 0
      %v3010 = vsel %vm2652, %v2711, 0
      %v3013 = vsel %vm2652, %v2712, 0
      %v3016 = vsel %vm2652, %v2713, 0
      %v3019 = vsel %vm2652, %v2714, 0
      %3021 = vmatprep.subr.mxu0 %v2716
      %3022 = vmatpush1.msra.mxu0 %v2715
      %3023 = vmatprep.subr.mxu0 %v2718
      %3024 = vmatpush1.msra.mxu0 %v2717
      %3025 = vmatprep.subr.mxu0 %v2720
      %3026 = vmatpush1.msra.mxu0 %v2719
      %3027 = vmatprep.subr.mxu0 %v2722
      %3028 = vmatpush1.msra.mxu0 %v2721
      %3029 = vmatprep.subr.mxu0 %v2724
      %3030 = vmatpush1.msra.mxu0 %v2723
      %3031 = vmatprep.subr.mxu0 %v2726
      %3032 = vmatpush1.msra.mxu0 %v2725
      %3033 = vmatprep.subr.mxu0 %v2728
      %3034 = vmatpush1.msra.mxu0 %v2727
      %3035 = vmatprep.subr.mxu0 %v2730
      %3036 = vmatpush1.msra.mxu0 %v2729
      %3037 = vmatprep.subr.mxu0 0.0
      %3038 = vmatpush1.msra.mxu0 0.0
      %3039 = vmatprep.subr.mxu0 0.0
      %3040 = vmatpush1.msra.mxu0 0.0
      %3041 = vmatprep.subr.mxu0 0.0
      %3042 = vmatpush1.msra.mxu0 0.0
      %3043 = vmatprep.subr.mxu0 0.0
      %3044 = vmatpush1.msra.mxu0 0.0
      %3045 = vmatprep.subr.mxu0 0.0
      %3046 = vmatpush1.msra.mxu0 0.0
      %3047 = vmatprep.subr.mxu0 0.0
      %3048 = vmatpush1.msra.mxu0 0.0
      %3049 = vmatprep.subr.mxu0 0.0
      %3050 = vmatpush1.msra.mxu0 0.0
      %3051 = vmatprep.subr.mxu0 0.0
      %3052 = vmatpush1.msra.mxu0 0.0
      %3053 = vmatprep.subr.mxu0 0.0
      %3054 = vmatpush1.msra.mxu0 0.0
      %3055 = vmatprep.subr.mxu0 0.0
      %3056 = vmatpush1.msra.mxu0 0.0
      %3057 = vmatprep.subr.mxu0 0.0
      %3058 = vmatpush1.msra.mxu0 0.0
      %3059 = vmatprep.subr.mxu0 0.0
      %3060 = vmatpush1.msra.mxu0 0.0
      %3061 = vmatprep.subr.mxu0 0.0
      %3062 = vmatpush1.msra.mxu0 0.0
      %3063 = vmatprep.subr.mxu0 0.0
      %3064 = vmatpush1.msra.mxu0 0.0
      %3065 = vmatprep.subr.mxu0 0.0
      %3066 = vmatpush1.msra.mxu0 0.0
      %3067 = vmatprep.subr.mxu0 0.0
      %3068 = vmatpush1.msra.mxu0 0.0
      %3069 = vmatprep.subr.mxu0 0.0
      %3070 = vmatpush1.msra.mxu0 0.0
      %3071 = vmatprep.subr.mxu0 0.0
      %3072 = vmatpush1.msra.mxu0 0.0
      %3073 = vmatprep.subr.mxu0 0.0
      %3074 = vmatpush1.msra.mxu0 0.0
      %3075 = vmatprep.subr.mxu0 0.0
      %3076 = vmatpush1.msra.mxu0 0.0
      %3077 = vmatprep.subr.mxu0 0.0
      %3078 = vmatpush1.msra.mxu0 0.0
      %3079 = vmatprep.subr.mxu0 0.0
      %3080 = vmatpush1.msra.mxu0 0.0
      %3081 = vmatprep.subr.mxu0 0.0
      %3082 = vmatpush1.msra.mxu0 0.0
      %3083 = vmatprep.subr.mxu0 0.0
      %3084 = vmatpush1.msra.mxu0 0.0
      %3085 = vmatprep.mubr.f32.mxu0 0.0
      %3086 = vmatmul.mubr.f32.gmra.mrb[0].mxu0 %v2974
      %v3087 = vpop.f32.mrb[0].mxu0
      %v3088 = vadd.f32 %v2879, %v3087
      %v3089 = vpop.f32.mrb[0].mxu0
      %v3090 = vadd.f32 %v2881, %v3089
      %3091 = vmatprep.mubr.f32.mxu0 0.0
      %3092 = vmatmul.mubr.f32.gmra.mrb[0].mxu0 %v2977
      %v3093 = vpop.f32.mrb[0].mxu0
      %v3094 = vadd.f32 %v2885, %v3093
      %v3095 = vpop.f32.mrb[0].mxu0
      %v3096 = vadd.f32 %v2887, %v3095
      %3097 = vmatprep.mubr.f32.mxu0 0.0
      %3098 = vmatmul.mubr.f32.gmra.mrb[0].mxu0 %v2980
      %v3099 = vpop.f32.mrb[0].mxu0
      %v3100 = vadd.f32 %v2891, %v3099
      %v3101 = vpop.f32.mrb[0].mxu0
      %v3102 = vadd.f32 %v2893, %v3101
      %3103 = vmatprep.mubr.f32.mxu0 0.0
      %3104 = vmatmul.mubr.f32.gmra.mrb[0].mxu0 %v2983
      %v3105 = vpop.f32.mrb[0].mxu0
      %v3106 = vadd.f32 %v2897, %v3105
      %v3107 = vpop.f32.mrb[0].mxu0
      %v3108 = vadd.f32 %v2899, %v3107
      %3109 = vmatprep.mubr.f32.mxu0 0.0
      %3110 = vmatmul.mubr.f32.gmra.mrb[0].mxu0 %v2986
      %v3111 = vpop.f32.mrb[0].mxu0
      %v3112 = vadd.f32 %v2903, %v3111
      %v3113 = vpop.f32.mrb[0].mxu0
      %v3114 = vadd.f32 %v2905, %v3113
      %3115 = vmatprep.mubr.f32.mxu0 0.0
      %3116 = vmatmul.mubr.f32.gmra.mrb[0].mxu0 %v2989
      %v3117 = vpop.f32.mrb[0].mxu0
      %v3118 = vadd.f32 %v2909, %v3117
      %v3119 = vpop.f32.mrb[0].mxu0
      %v3120 = vadd.f32 %v2911, %v3119
      %3121 = vmatprep.mubr.f32.mxu0 0.0
      %3122 = vmatmul.mubr.f32.gmra.mrb[0].mxu0 %v2992
      %v3123 = vpop.f32.mrb[0].mxu0
      %v3124 = vadd.f32 %v2915, %v3123
      %v3125 = vpop.f32.mrb[0].mxu0
      %v3126 = vadd.f32 %v2917, %v3125
      %3127 = vmatprep.mubr.f32.mxu0 0.0
      %3128 = vmatmul.mubr.f32.gmra.mrb[0].mxu0 %v2995
      %v3129 = vpop.f32.mrb[0].mxu0
      %v3130 = vadd.f32 %v2921, %v3129
      %v3131 = vpop.f32.mrb[0].mxu0
      %v3132 = vadd.f32 %v2923, %v3131
      %3133 = vmatprep.mubr.f32.mxu0 0.0
      %3134 = vmatmul.mubr.f32.gmra.mrb[0].mxu0 %v2998
      %v3135 = vpop.f32.mrb[0].mxu0
      %v3136 = vadd.f32 %v2927, %v3135
      %v3137 = vpop.f32.mrb[0].mxu0
      %v3138 = vadd.f32 %v2929, %v3137
      %3139 = vmatprep.mubr.f32.mxu0 0.0
      %3140 = vmatmul.mubr.f32.gmra.mrb[0].mxu0 %v3001
      %v3141 = vpop.f32.mrb[0].mxu0
      %v3142 = vadd.f32 %v2933, %v3141
      %v3143 = vpop.f32.mrb[0].mxu0
      %v3144 = vadd.f32 %v2935, %v3143
      %3145 = vmatprep.mubr.f32.mxu0 0.0
      %3146 = vmatmul.mubr.f32.gmra.mrb[0].mxu0 %v3004
      %v3147 = vpop.f32.mrb[0].mxu0
      %v3148 = vadd.f32 %v2939, %v3147
      %v3149 = vpop.f32.mrb[0].mxu0
      %v3150 = vadd.f32 %v2941, %v3149
      %3151 = vmatprep.mubr.f32.mxu0 0.0
      %3152 = vmatmul.mubr.f32.gmra.mrb[0].mxu0 %v3007
      %v3153 = vpop.f32.mrb[0].mxu0
      %v3154 = vadd.f32 %v2945, %v3153
      %v3155 = vpop.f32.mrb[0].mxu0
      %v3156 = vadd.f32 %v2947, %v3155
      %3157 = vmatprep.mubr.f32.mxu0 0.0
      %3158 = vmatmul.mubr.f32.gmra.mrb[0].mxu0 %v3010
      %v3159 = vpop.f32.mrb[0].mxu0
      %v3160 = vadd.f32 %v2951, %v3159
      %v3161 = vpop.f32.mrb[0].mxu0
      %v3162 = vadd.f32 %v2953, %v3161
      %3163 = vmatprep.mubr.f32.mxu0 0.0
      %3164 = vmatmul.mubr.f32.gmra.mrb[0].mxu0 %v3013
      %v3165 = vpop.f32.mrb[0].mxu0
      %v3166 = vadd.f32 %v2957, %v3165
      %v3167 = vpop.f32.mrb[0].mxu0
      %v3168 = vadd.f32 %v2959, %v3167
      %3169 = vmatprep.mubr.f32.mxu0 0.0
      %3170 = vmatmul.mubr.f32.gmra.mrb[0].mxu0 %v3016
      %v3171 = vpop.f32.mrb[0].mxu0
      %v3172 = vadd.f32 %v2963, %v3171
      %v3173 = vpop.f32.mrb[0].mxu0
      %v3174 = vadd.f32 %v2965, %v3173
      %3175 = vmatprep.mubr.f32.mxu0 0.0
      %3176 = vmatmul.mubr.f32.gmra.mrb[0].mxu0 %v3019
      %v3177 = vpop.f32.mrb[0].mxu0
      %v3178 = vadd.f32 %v2969, %v3177
      %v3179 = vpop.f32.mrb[0].mxu0
      %v3180 = vadd.f32 %v2971, %v3179
      %3181 = vdwg.mxu0
      %v3182 = vld [vmem:[#allocation4 + $0x2] sm:$0xff]
      %v3183 = vld [vmem:[#allocation4 + $0xa] sm:$0xff]
      %v3184 = vld [vmem:[#allocation4 + $0x12] sm:$0xff]
      %v3185 = vld [vmem:[#allocation4 + $0x1a] sm:$0xff]
      %v3186 = vld [vmem:[#allocation4 + $0x22] sm:$0xff]
      %v3187 = vld [vmem:[#allocation4 + $0x2a] sm:$0xff]
      %v3188 = vld [vmem:[#allocation4 + $0x32] sm:$0xff]
      %v3189 = vld [vmem:[#allocation4 + $0x3a] sm:$0xff]
      %v3190 = vld [vmem:[#allocation4 + $0x42] sm:$0xff]
      %v3191 = vld [vmem:[#allocation4 + $0x4a] sm:$0xff]
      %v3192 = vld [vmem:[#allocation4 + $0x52] sm:$0xff]
      %v3193 = vld [vmem:[#allocation4 + $0x5a] sm:$0xff]
      %v3194 = vld [vmem:[#allocation4 + $0x62] sm:$0xff]
      %v3195 = vld [vmem:[#allocation4 + $0x6a] sm:$0xff]
      %v3196 = vld [vmem:[#allocation4 + $0x72] sm:$0xff]
      %v3197 = vld [vmem:[#allocation4 + $0x7a] sm:$0x3f]
      %s3198 = scalar_lea.vmem %s10, 256
      %v3199 = vld [vmem:[%s3198] sm:$0xff]
      %v3200 = vld [vmem:[%s3198 + $0x8] sm:$0xff]
      %v3201 = vld [vmem:[%s3198 + $0x10] sm:$0xff]
      %v3202 = vld [vmem:[%s3198 + $0x18] sm:$0xff]
      %v3203 = vld [vmem:[%s3198 + $0x20] sm:$0xff]
      %v3204 = vld [vmem:[%s3198 + $0x28] sm:$0xff]
      %v3205 = vld [vmem:[%s3198 + $0x30] sm:$0xff]
      %v3206 = vld [vmem:[%s3198 + $0x38] sm:$0xff]
      %v3207 = vld [vmem:[%s3198 + $0x40] sm:$0xff]
      %v3208 = vld [vmem:[%s3198 + $0x48] sm:$0xff]
      %v3209 = vld [vmem:[%s3198 + $0x50] sm:$0xff]
      %v3210 = vld [vmem:[%s3198 + $0x58] sm:$0xff]
      %v3211 = vld [vmem:[%s3198 + $0x60] sm:$0xff]
      %v3212 = vld [vmem:[%s3198 + $0x68] sm:$0xff]
      %v3213 = vld [vmem:[%s3198 + $0x70] sm:$0xff]
      %v3214 = vld [vmem:[%s3198 + $0x78] sm:$0xff]
      %v3216 = vsel %vm2652, %v3182, 0
      %v3219 = vsel %vm2652, %v3183, 0
      %v3222 = vsel %vm2652, %v3184, 0
      %v3225 = vsel %vm2652, %v3185, 0
      %v3228 = vsel %vm2652, %v3186, 0
      %v3231 = vsel %vm2652, %v3187, 0
      %v3234 = vsel %vm2652, %v3188, 0
      %v3237 = vsel %vm2652, %v3189, 0
      %v3240 = vsel %vm2652, %v3190, 0
      %v3243 = vsel %vm2652, %v3191, 0
      %v3246 = vsel %vm2652, %v3192, 0
      %v3249 = vsel %vm2652, %v3193, 0
      %v3252 = vsel %vm2652, %v3194, 0
      %v3255 = vsel %vm2652, %v3195, 0
      %v3258 = vsel %vm2652, %v3196, 0
      %v3261 = vsel %vm2652, %v3197, 0
      %3263 = vmatprep.subr.mxu0 %v3200
      %3264 = vmatpush1.msra.mxu0 %v3199
      %3265 = vmatprep.subr.mxu0 %v3202
      %3266 = vmatpush1.msra.mxu0 %v3201
      %3267 = vmatprep.subr.mxu0 %v3204
      %3268 = vmatpush1.msra.mxu0 %v3203
      %3269 = vmatprep.subr.mxu0 %v3206
      %3270 = vmatpush1.msra.mxu0 %v3205
      %3271 = vmatprep.subr.mxu0 %v3208
      %3272 = vmatpush1.msra.mxu0 %v3207
      %3273 = vmatprep.subr.mxu0 %v3210
      %3274 = vmatpush1.msra.mxu0 %v3209
      %3275 = vmatprep.subr.mxu0 %v3212
      %3276 = vmatpush1.msra.mxu0 %v3211
      %3277 = vmatprep.subr.mxu0 %v3214
      %3278 = vmatpush1.msra.mxu0 %v3213
      %3279 = vmatprep.subr.mxu0 0.0
      %3280 = vmatpush1.msra.mxu0 0.0
      %3281 = vmatprep.subr.mxu0 0.0
      %3282 = vmatpush1.msra.mxu0 0.0
      %3283 = vmatprep.subr.mxu0 0.0
      %3284 = vmatpush1.msra.mxu0 0.0
      %3285 = vmatprep.subr.mxu0 0.0
      %3286 = vmatpush1.msra.mxu0 0.0
      %3287 = vmatprep.subr.mxu0 0.0
      %3288 = vmatpush1.msra.mxu0 0.0
      %3289 = vmatprep.subr.mxu0 0.0
      %3290 = vmatpush1.msra.mxu0 0.0
      %3291 = vmatprep.subr.mxu0 0.0
      %3292 = vmatpush1.msra.mxu0 0.0
      %3293 = vmatprep.subr.mxu0 0.0
      %3294 = vmatpush1.msra.mxu0 0.0
      %3295 = vmatprep.subr.mxu0 0.0
      %3296 = vmatpush1.msra.mxu0 0.0
      %3297 = vmatprep.subr.mxu0 0.0
      %3298 = vmatpush1.msra.mxu0 0.0
      %3299 = vmatprep.subr.mxu0 0.0
      %3300 = vmatpush1.msra.mxu0 0.0
      %3301 = vmatprep.subr.mxu0 0.0
      %3302 = vmatpush1.msra.mxu0 0.0
      %3303 = vmatprep.subr.mxu0 0.0
      %3304 = vmatpush1.msra.mxu0 0.0
      %3305 = vmatprep.subr.mxu0 0.0
      %3306 = vmatpush1.msra.mxu0 0.0
      %3307 = vmatprep.subr.mxu0 0.0
      %3308 = vmatpush1.msra.mxu0 0.0
      %3309 = vmatprep.subr.mxu0 0.0
      %3310 = vmatpush1.msra.mxu0 0.0
      %3311 = vmatprep.subr.mxu0 0.0
      %3312 = vmatpush1.msra.mxu0 0.0
      %3313 = vmatprep.subr.mxu0 0.0
      %3314 = vmatpush1.msra.mxu0 0.0
      %3315 = vmatprep.subr.mxu0 0.0
      %3316 = vmatpush1.msra.mxu0 0.0
      %3317 = vmatprep.subr.mxu0 0.0
      %3318 = vmatpush1.msra.mxu0 0.0
      %3319 = vmatprep.subr.mxu0 0.0
      %3320 = vmatpush1.msra.mxu0 0.0
      %3321 = vmatprep.subr.mxu0 0.0
      %3322 = vmatpush1.msra.mxu0 0.0
      %3323 = vmatprep.subr.mxu0 0.0
      %3324 = vmatpush1.msra.mxu0 0.0
      %3325 = vmatprep.subr.mxu0 0.0
      %3326 = vmatpush1.msra.mxu0 0.0
      %3327 = vmatprep.mubr.f32.mxu0 0.0
      %3328 = vmatmul.mubr.f32.gmra.mrb[0].mxu0 %v3216
      %v3329 = vpop.f32.mrb[0].mxu0
      %v3330 = vadd.f32 0.0, %v3329
      %v3331 = vpop.f32.mrb[0].mxu0
      %v3332 = vadd.f32 0.0, %v3331
      %3333 = vmatprep.mubr.f32.mxu0 0.0
      %3334 = vmatmul.mubr.f32.gmra.mrb[0].mxu0 %v3219
      %v3335 = vpop.f32.mrb[0].mxu0
      %v3336 = vadd.f32 0.0, %v3335
      %v3337 = vpop.f32.mrb[0].mxu0
      %v3338 = vadd.f32 0.0, %v3337
      %3339 = vmatprep.mubr.f32.mxu0 0.0
      %3340 = vmatmul.mubr.f32.gmra.mrb[0].mxu0 %v3222
      %v3341 = vpop.f32.mrb[0].mxu0
      %v3342 = vadd.f32 0.0, %v3341
      %v3343 = vpop.f32.mrb[0].mxu0
      %v3344 = vadd.f32 0.0, %v3343
      %3345 = vmatprep.mubr.f32.mxu0 0.0
      %3346 = vmatmul.mubr.f32.gmra.mrb[0].mxu0 %v3225
      %v3347 = vpop.f32.mrb[0].mxu0
      %v3348 = vadd.f32 0.0, %v3347
      %v3349 = vpop.f32.mrb[0].mxu0
      %v3350 = vadd.f32 0.0, %v3349
      %3351 = vmatprep.mubr.f32.mxu0 0.0
      %3352 = vmatmul.mubr.f32.gmra.mrb[0].mxu0 %v3228
      %v3353 = vpop.f32.mrb[0].mxu0
      %v3354 = vadd.f32 0.0, %v3353
      %v3355 = vpop.f32.mrb[0].mxu0
      %v3356 = vadd.f32 0.0, %v3355
      %3357 = vmatprep.mubr.f32.mxu0 0.0
      %3358 = vmatmul.mubr.f32.gmra.mrb[0].mxu0 %v3231
      %v3359 = vpop.f32.mrb[0].mxu0
      %v3360 = vadd.f32 0.0, %v3359
      %v3361 = vpop.f32.mrb[0].mxu0
      %v3362 = vadd.f32 0.0, %v3361
      %3363 = vmatprep.mubr.f32.mxu0 0.0
      %3364 = vmatmul.mubr.f32.gmra.mrb[0].mxu0 %v3234
      %v3365 = vpop.f32.mrb[0].mxu0
      %v3366 = vadd.f32 0.0, %v3365
      %v3367 = vpop.f32.mrb[0].mxu0
      %v3368 = vadd.f32 0.0, %v3367
      %3369 = vmatprep.mubr.f32.mxu0 0.0
      %3370 = vmatmul.mubr.f32.gmra.mrb[0].mxu0 %v3237
      %v3371 = vpop.f32.mrb[0].mxu0
      %v3372 = vadd.f32 0.0, %v3371
      %v3373 = vpop.f32.mrb[0].mxu0
      %v3374 = vadd.f32 0.0, %v3373
      %3375 = vmatprep.mubr.f32.mxu0 0.0
      %3376 = vmatmul.mubr.f32.gmra.mrb[0].mxu0 %v3240
      %v3377 = vpop.f32.mrb[0].mxu0
      %v3378 = vadd.f32 0.0, %v3377
      %v3379 = vpop.f32.mrb[0].mxu0
      %v3380 = vadd.f32 0.0, %v3379
      %3381 = vmatprep.mubr.f32.mxu0 0.0
      %3382 = vmatmul.mubr.f32.gmra.mrb[0].mxu0 %v3243
      %v3383 = vpop.f32.mrb[0].mxu0
      %v3384 = vadd.f32 0.0, %v3383
      %v3385 = vpop.f32.mrb[0].mxu0
      %v3386 = vadd.f32 0.0, %v3385
      %3387 = vmatprep.mubr.f32.mxu0 0.0
      %3388 = vmatmul.mubr.f32.gmra.mrb[0].mxu0 %v3246
      %v3389 = vpop.f32.mrb[0].mxu0
      %v3390 = vadd.f32 0.0, %v3389
      %v3391 = vpop.f32.mrb[0].mxu0
      %v3392 = vadd.f32 0.0, %v3391
      %3393 = vmatprep.mubr.f32.mxu0 0.0
      %3394 = vmatmul.mubr.f32.gmra.mrb[0].mxu0 %v3249
      %v3395 = vpop.f32.mrb[0].mxu0
      %v3396 = vadd.f32 0.0, %v3395
      %v3397 = vpop.f32.mrb[0].mxu0
      %v3398 = vadd.f32 0.0, %v3397
      %3399 = vmatprep.mubr.f32.mxu0 0.0
      %3400 = vmatmul.mubr.f32.gmra.mrb[0].mxu0 %v3252
      %v3401 = vpop.f32.mrb[0].mxu0
      %v3402 = vadd.f32 0.0, %v3401
      %v3403 = vpop.f32.mrb[0].mxu0
      %v3404 = vadd.f32 0.0, %v3403
      %3405 = vmatprep.mubr.f32.mxu0 0.0
      %3406 = vmatmul.mubr.f32.gmra.mrb[0].mxu0 %v3255
      %v3407 = vpop.f32.mrb[0].mxu0
      %v3408 = vadd.f32 0.0, %v3407
      %v3409 = vpop.f32.mrb[0].mxu0
      %v3410 = vadd.f32 0.0, %v3409
      %3411 = vmatprep.mubr.f32.mxu0 0.0
      %3412 = vmatmul.mubr.f32.gmra.mrb[0].mxu0 %v3258
      %v3413 = vpop.f32.mrb[0].mxu0
      %v3414 = vadd.f32 0.0, %v3413
      %v3415 = vpop.f32.mrb[0].mxu0
      %v3416 = vadd.f32 0.0, %v3415
      %3417 = vmatprep.mubr.f32.mxu0 0.0
      %3418 = vmatmul.mubr.f32.gmra.mrb[0].mxu0 %v3261
      %v3419 = vpop.f32.mrb[0].mxu0
      %v3420 = vadd.f32 0.0, %v3419
      %v3421 = vpop.f32.mrb[0].mxu0
      %v3422 = vadd.f32 0.0, %v3421
      %3423 = vdwg.mxu0
      %v3424 = vadd.f32 %v3088, %v3330
      %v3425 = vadd.f32 %v3090, %v3332
      %v3426 = vadd.f32 %v3094, %v3336
      %v3427 = vadd.f32 %v3096, %v3338
      %v3428 = vadd.f32 %v3100, %v3342
      %v3429 = vadd.f32 %v3102, %v3344
      %v3430 = vadd.f32 %v3106, %v3348
      %v3431 = vadd.f32 %v3108, %v3350
      %v3432 = vadd.f32 %v3112, %v3354
      %v3433 = vadd.f32 %v3114, %v3356
      %v3434 = vadd.f32 %v3118, %v3360
      %v3435 = vadd.f32 %v3120, %v3362
      %v3436 = vadd.f32 %v3124, %v3366
      %v3437 = vadd.f32 %v3126, %v3368
      %v3438 = vadd.f32 %v3130, %v3372
      %v3439 = vadd.f32 %v3132, %v3374
      %v3440 = vadd.f32 %v3136, %v3378
      %v3441 = vadd.f32 %v3138, %v3380
      %v3442 = vadd.f32 %v3142, %v3384
      %v3443 = vadd.f32 %v3144, %v3386
      %v3444 = vadd.f32 %v3148, %v3390
      %v3445 = vadd.f32 %v3150, %v3392
      %v3446 = vadd.f32 %v3154, %v3396
      %v3447 = vadd.f32 %v3156, %v3398
      %v3448 = vadd.f32 %v3160, %v3402
      %v3449 = vadd.f32 %v3162, %v3404
      %v3450 = vadd.f32 %v3166, %v3408
      %v3451 = vadd.f32 %v3168, %v3410
      %v3452 = vadd.f32 %v3172, %v3414
      %v3453 = vadd.f32 %v3174, %v3416
      %v3454 = vadd.f32 %v3178, %v3420
      %v3455 = vadd.f32 %v3180, %v3422
      %v3456 = vld [vmem:[%s11] sm:$0x3]
      %v3458 = vlaneseq
      %v3459 = vshrl.u32 %v3458, 7
      %v3460 = vsub.s32 0, %v3459
      %v3461 = vrot.slane %v3456, %v3460
      %v3462 = vlaneseq
      %v3463 = vshrl.u32 %v3462, 7
      %v3464 = vsub.s32 1, %v3463
      %v3465 = vrot.slane %v3456, %v3464
      %v3468 = vadd.f32 %v3424, %v3461
      %v3469 = vadd.f32 %v3425, %v3465
      %v3470 = vadd.f32 %v3426, %v3461
      %v3471 = vadd.f32 %v3427, %v3465
      %v3472 = vadd.f32 %v3428, %v3461
      %v3473 = vadd.f32 %v3429, %v3465
      %v3474 = vadd.f32 %v3430, %v3461
      %v3475 = vadd.f32 %v3431, %v3465
      %v3476 = vadd.f32 %v3432, %v3461
      %v3477 = vadd.f32 %v3433, %v3465
      %v3478 = vadd.f32 %v3434, %v3461
      %v3479 = vadd.f32 %v3435, %v3465
      %v3480 = vadd.f32 %v3436, %v3461
      %v3481 = vadd.f32 %v3437, %v3465
      %v3482 = vadd.f32 %v3438, %v3461
      %v3483 = vadd.f32 %v3439, %v3465
      %v3484 = vadd.f32 %v3440, %v3461
      %v3485 = vadd.f32 %v3441, %v3465
      %v3486 = vadd.f32 %v3442, %v3461
      %v3487 = vadd.f32 %v3443, %v3465
      %v3488 = vadd.f32 %v3444, %v3461
      %v3489 = vadd.f32 %v3445, %v3465
      %v3490 = vadd.f32 %v3446, %v3461
      %v3491 = vadd.f32 %v3447, %v3465
      %v3492 = vadd.f32 %v3448, %v3461
      %v3493 = vadd.f32 %v3449, %v3465
      %v3494 = vadd.f32 %v3450, %v3461
      %v3495 = vadd.f32 %v3451, %v3465
      %v3496 = vadd.f32 %v3452, %v3461
      %v3497 = vadd.f32 %v3453, %v3465
      %v3498 = vadd.f32 %v3454, %v3461
      %v3499 = vadd.f32 %v3455, %v3465
      %v3500 = vmax.f32 %v3468, 0.0
      %v3501 = vmax.f32 %v3469, 0.0
      %v3502 = vmax.f32 %v3470, 0.0
      %v3503 = vmax.f32 %v3471, 0.0
      %v3504 = vmax.f32 %v3472, 0.0
      %v3505 = vmax.f32 %v3473, 0.0
      %v3506 = vmax.f32 %v3474, 0.0
      %v3507 = vmax.f32 %v3475, 0.0
      %v3508 = vmax.f32 %v3476, 0.0
      %v3509 = vmax.f32 %v3477, 0.0
      %v3510 = vmax.f32 %v3478, 0.0
      %v3511 = vmax.f32 %v3479, 0.0
      %v3512 = vmax.f32 %v3480, 0.0
      %v3513 = vmax.f32 %v3481, 0.0
      %v3514 = vmax.f32 %v3482, 0.0
      %v3515 = vmax.f32 %v3483, 0.0
      %v3516 = vmax.f32 %v3484, 0.0
      %v3517 = vmax.f32 %v3485, 0.0
      %v3518 = vmax.f32 %v3486, 0.0
      %v3519 = vmax.f32 %v3487, 0.0
      %v3520 = vmax.f32 %v3488, 0.0
      %v3521 = vmax.f32 %v3489, 0.0
      %v3522 = vmax.f32 %v3490, 0.0
      %v3523 = vmax.f32 %v3491, 0.0
      %v3524 = vmax.f32 %v3492, 0.0
      %v3525 = vmax.f32 %v3493, 0.0
      %v3526 = vmax.f32 %v3494, 0.0
      %v3527 = vmax.f32 %v3495, 0.0
      %v3528 = vmax.f32 %v3496, 0.0
      %v3529 = vmax.f32 %v3497, 0.0
      %v3530 = vmax.f32 %v3498, 0.0
      %v3531 = vmax.f32 %v3499, 0.0
      %vm3532 = vcmask 1031168
      %v3534 = vsel %vm3532, %v2669, 0
      %v3537 = vsel %vm3532, %v2670, 0
      %v3540 = vsel %vm3532, %v2671, 0
      %v3543 = vsel %vm3532, %v2672, 0
      %v3546 = vsel %vm3532, %v2673, 0
      %v3549 = vsel %vm3532, %v2674, 0
      %v3552 = vsel %vm3532, %v2675, 0
      %v3555 = vsel %vm3532, %v2676, 0
      %v3558 = vsel %vm3532, %v2677, 0
      %v3561 = vsel %vm3532, %v2678, 0
      %v3564 = vsel %vm3532, %v2679, 0
      %v3567 = vsel %vm3532, %v2680, 0
      %v3570 = vsel %vm3532, %v2681, 0
      %v3573 = vsel %vm3532, %v2682, 0
      %v3576 = vsel %vm3532, %v2683, 0
      %v3579 = vsel %vm3532, %v2684, 0
      %v3582 = vsel %vm3532, %v2685, 0
      %v3585 = vsel %vm3532, %v2686, 0
      %v3588 = vsel %vm3532, %v2687, 0
      %v3591 = vsel %vm3532, %v2688, 0
      %v3594 = vsel %vm3532, %v2689, 0
      %v3597 = vsel %vm3532, %v2690, 0
      %v3600 = vsel %vm3532, %v2691, 0
      %v3603 = vsel %vm3532, %v2692, 0
      %v3606 = vsel %vm3532, %v2693, 0
      %v3609 = vsel %vm3532, %v2694, 0
      %v3612 = vsel %vm3532, %v2695, 0
      %v3615 = vsel %vm3532, %v2696, 0
      %v3618 = vsel %vm3532, %v2697, 0
      %v3621 = vsel %vm3532, %v2698, 0
      %v3624 = vsel %vm1794, %v3530, 0
      %v3627 = vsel %vm1794, %v3531, 0
      %3629 = vmatprep.subr.mxu0 %v3501
      %3630 = vmatpush1.msra.mxu0 %v3500
      %3631 = vmatprep.subr.mxu0 %v3503
      %3632 = vmatpush1.msra.mxu0 %v3502
      %3633 = vmatprep.subr.mxu0 %v3505
      %3634 = vmatpush1.msra.mxu0 %v3504
      %3635 = vmatprep.subr.mxu0 %v3507
      %3636 = vmatpush1.msra.mxu0 %v3506
      %3637 = vmatprep.subr.mxu0 %v3509
      %3638 = vmatpush1.msra.mxu0 %v3508
      %3639 = vmatprep.subr.mxu0 %v3511
      %3640 = vmatpush1.msra.mxu0 %v3510
      %3641 = vmatprep.subr.mxu0 %v3513
      %3642 = vmatpush1.msra.mxu0 %v3512
      %3643 = vmatprep.subr.mxu0 %v3515
      %3644 = vmatpush1.msra.mxu0 %v3514
      %3645 = vmatprep.subr.mxu0 %v3517
      %3646 = vmatpush1.msra.mxu0 %v3516
      %3647 = vmatprep.subr.mxu0 %v3519
      %3648 = vmatpush1.msra.mxu0 %v3518
      %3649 = vmatprep.subr.mxu0 %v3521
      %3650 = vmatpush1.msra.mxu0 %v3520
      %3651 = vmatprep.subr.mxu0 %v3523
      %3652 = vmatpush1.msra.mxu0 %v3522
      %3653 = vmatprep.subr.mxu0 %v3525
      %3654 = vmatpush1.msra.mxu0 %v3524
      %3655 = vmatprep.subr.mxu0 %v3527
      %3656 = vmatpush1.msra.mxu0 %v3526
      %3657 = vmatprep.subr.mxu0 %v3529
      %3658 = vmatpush1.msra.mxu0 %v3528
      %3659 = vmatprep.subr.mxu0 %v3627
      %3660 = vmatpush1.msra.mxu0 %v3624
      %3661 = vmatprep.subr.mxu0 0.0
      %3662 = vmatpush1.msra.mxu0 0.0
      %3663 = vmatprep.subr.mxu0 0.0
      %3664 = vmatpush1.msra.mxu0 0.0
      %3665 = vmatprep.subr.mxu0 0.0
      %3666 = vmatpush1.msra.mxu0 0.0
      %3667 = vmatprep.subr.mxu0 0.0
      %3668 = vmatpush1.msra.mxu0 0.0
      %3669 = vmatprep.subr.mxu0 0.0
      %3670 = vmatpush1.msra.mxu0 0.0
      %3671 = vmatprep.subr.mxu0 0.0
      %3672 = vmatpush1.msra.mxu0 0.0
      %3673 = vmatprep.subr.mxu0 0.0
      %3674 = vmatpush1.msra.mxu0 0.0
      %3675 = vmatprep.subr.mxu0 0.0
      %3676 = vmatpush1.msra.mxu0 0.0
      %3677 = vmatprep.subr.mxu0 0.0
      %3678 = vmatpush1.msra.mxu0 0.0
      %3679 = vmatprep.subr.mxu0 0.0
      %3680 = vmatpush1.msra.mxu0 0.0
      %3681 = vmatprep.subr.mxu0 0.0
      %3682 = vmatpush1.msra.mxu0 0.0
      %3683 = vmatprep.subr.mxu0 0.0
      %3684 = vmatpush1.msra.mxu0 0.0
      %3685 = vmatprep.subr.mxu0 0.0
      %3686 = vmatpush1.msra.mxu0 0.0
      %3687 = vmatprep.subr.mxu0 0.0
      %3688 = vmatpush1.msra.mxu0 0.0
      %3689 = vmatprep.subr.mxu0 0.0
      %3690 = vmatpush1.msra.mxu0 0.0
      %3691 = vmatprep.subr.mxu0 0.0
      %3692 = vmatpush1.msra.mxu0 0.0
      %3693 = vmatprep.mubr.f32.mxu0 0.0
      %3694 = vmatmul.mubr.f32.gmra.mrb[0].mxu0 %v3534
      %v3695 = vpop.f32.mrb[0].mxu0
      %v3696 = vadd.f32 0.0, %v3695
      %v3697 = vpop.f32.mrb[0].mxu0
      %v3698 = vadd.f32 0.0, %v3697
      %3699 = vmatprep.mubr.f32.mxu0 0.0
      %3700 = vmatmul.mubr.f32.gmra.mrb[0].mxu0 %v3537
      %v3701 = vpop.f32.mrb[0].mxu0
      %v3702 = vadd.f32 0.0, %v3701
      %v3703 = vpop.f32.mrb[0].mxu0
      %v3704 = vadd.f32 0.0, %v3703
      %3705 = vmatprep.mubr.f32.mxu0 0.0
      %3706 = vmatmul.mubr.f32.gmra.mrb[0].mxu0 %v3540
      %v3707 = vpop.f32.mrb[0].mxu0
      %v3708 = vadd.f32 0.0, %v3707
      %v3709 = vpop.f32.mrb[0].mxu0
      %v3710 = vadd.f32 0.0, %v3709
      %3711 = vmatprep.mubr.f32.mxu0 0.0
      %3712 = vmatmul.mubr.f32.gmra.mrb[0].mxu0 %v3543
      %v3713 = vpop.f32.mrb[0].mxu0
      %v3714 = vadd.f32 0.0, %v3713
      %v3715 = vpop.f32.mrb[0].mxu0
      %v3716 = vadd.f32 0.0, %v3715
      %3717 = vmatprep.mubr.f32.mxu0 0.0
      %3718 = vmatmul.mubr.f32.gmra.mrb[0].mxu0 %v3546
      %v3719 = vpop.f32.mrb[0].mxu0
      %v3720 = vadd.f32 0.0, %v3719
      %v3721 = vpop.f32.mrb[0].mxu0
      %v3722 = vadd.f32 0.0, %v3721
      %3723 = vmatprep.mubr.f32.mxu0 0.0
      %3724 = vmatmul.mubr.f32.gmra.mrb[0].mxu0 %v3549
      %v3725 = vpop.f32.mrb[0].mxu0
      %v3726 = vadd.f32 0.0, %v3725
      %v3727 = vpop.f32.mrb[0].mxu0
      %v3728 = vadd.f32 0.0, %v3727
      %3729 = vmatprep.mubr.f32.mxu0 0.0
      %3730 = vmatmul.mubr.f32.gmra.mrb[0].mxu0 %v3552
      %v3731 = vpop.f32.mrb[0].mxu0
      %v3732 = vadd.f32 0.0, %v3731
      %v3733 = vpop.f32.mrb[0].mxu0
      %v3734 = vadd.f32 0.0, %v3733
      %3735 = vmatprep.mubr.f32.mxu0 0.0
      %3736 = vmatmul.mubr.f32.gmra.mrb[0].mxu0 %v3555
      %v3737 = vpop.f32.mrb[0].mxu0
      %v3738 = vadd.f32 0.0, %v3737
      %v3739 = vpop.f32.mrb[0].mxu0
      %v3740 = vadd.f32 0.0, %v3739
      %3741 = vmatprep.mubr.f32.mxu0 0.0
      %3742 = vmatmul.mubr.f32.gmra.mrb[0].mxu0 %v3558
      %v3743 = vpop.f32.mrb[0].mxu0
      %v3744 = vadd.f32 0.0, %v3743
      %v3745 = vpop.f32.mrb[0].mxu0
      %v3746 = vadd.f32 0.0, %v3745
      %3747 = vmatprep.mubr.f32.mxu0 0.0
      %3748 = vmatmul.mubr.f32.gmra.mrb[0].mxu0 %v3561
      %v3749 = vpop.f32.mrb[0].mxu0
      %v3750 = vadd.f32 0.0, %v3749
      %v3751 = vpop.f32.mrb[0].mxu0
      %v3752 = vadd.f32 0.0, %v3751
      %3753 = vmatprep.mubr.f32.mxu0 0.0
      %3754 = vmatmul.mubr.f32.gmra.mrb[0].mxu0 %v3564
      %v3755 = vpop.f32.mrb[0].mxu0
      %v3756 = vadd.f32 0.0, %v3755
      %v3757 = vpop.f32.mrb[0].mxu0
      %v3758 = vadd.f32 0.0, %v3757
      %3759 = vmatprep.mubr.f32.mxu0 0.0
      %3760 = vmatmul.mubr.f32.gmra.mrb[0].mxu0 %v3567
      %v3761 = vpop.f32.mrb[0].mxu0
      %v3762 = vadd.f32 0.0, %v3761
      %v3763 = vpop.f32.mrb[0].mxu0
      %v3764 = vadd.f32 0.0, %v3763
      %3765 = vmatprep.mubr.f32.mxu0 0.0
      %3766 = vmatmul.mubr.f32.gmra.mrb[0].mxu0 %v3570
      %v3767 = vpop.f32.mrb[0].mxu0
      %v3768 = vadd.f32 0.0, %v3767
      %v3769 = vpop.f32.mrb[0].mxu0
      %v3770 = vadd.f32 0.0, %v3769
      %3771 = vmatprep.mubr.f32.mxu0 0.0
      %3772 = vmatmul.mubr.f32.gmra.mrb[0].mxu0 %v3573
      %v3773 = vpop.f32.mrb[0].mxu0
      %v3774 = vadd.f32 0.0, %v3773
      %v3775 = vpop.f32.mrb[0].mxu0
      %v3776 = vadd.f32 0.0, %v3775
      %3777 = vmatprep.mubr.f32.mxu0 0.0
      %3778 = vmatmul.mubr.f32.gmra.mrb[0].mxu0 %v3576
      %v3779 = vpop.f32.mrb[0].mxu0
      %v3780 = vadd.f32 0.0, %v3779
      %v3781 = vpop.f32.mrb[0].mxu0
      %v3782 = vadd.f32 0.0, %v3781
      %3783 = vmatprep.mubr.f32.mxu0 0.0
      %3784 = vmatmul.mubr.f32.gmra.mrb[0].mxu0 %v3579
      %v3785 = vpop.f32.mrb[0].mxu0
      %v3786 = vadd.f32 0.0, %v3785
      %v3787 = vpop.f32.mrb[0].mxu0
      %v3788 = vadd.f32 0.0, %v3787
      %3789 = vmatprep.mubr.f32.mxu0 0.0
      %3790 = vmatmul.mubr.f32.gmra.mrb[0].mxu0 %v3582
      %v3791 = vpop.f32.mrb[0].mxu0
      %v3792 = vadd.f32 0.0, %v3791
      %v3793 = vpop.f32.mrb[0].mxu0
      %v3794 = vadd.f32 0.0, %v3793
      %3795 = vmatprep.mubr.f32.mxu0 0.0
      %3796 = vmatmul.mubr.f32.gmra.mrb[0].mxu0 %v3585
      %v3797 = vpop.f32.mrb[0].mxu0
      %v3798 = vadd.f32 0.0, %v3797
      %v3799 = vpop.f32.mrb[0].mxu0
      %v3800 = vadd.f32 0.0, %v3799
      %3801 = vmatprep.mubr.f32.mxu0 0.0
      %3802 = vmatmul.mubr.f32.gmra.mrb[0].mxu0 %v3588
      %v3803 = vpop.f32.mrb[0].mxu0
      %v3804 = vadd.f32 0.0, %v3803
      %v3805 = vpop.f32.mrb[0].mxu0
      %v3806 = vadd.f32 0.0, %v3805
      %3807 = vmatprep.mubr.f32.mxu0 0.0
      %3808 = vmatmul.mubr.f32.gmra.mrb[0].mxu0 %v3591
      %v3809 = vpop.f32.mrb[0].mxu0
      %v3810 = vadd.f32 0.0, %v3809
      %v3811 = vpop.f32.mrb[0].mxu0
      %v3812 = vadd.f32 0.0, %v3811
      %3813 = vmatprep.mubr.f32.mxu0 0.0
      %3814 = vmatmul.mubr.f32.gmra.mrb[0].mxu0 %v3594
      %v3815 = vpop.f32.mrb[0].mxu0
      %v3816 = vadd.f32 0.0, %v3815
      %v3817 = vpop.f32.mrb[0].mxu0
      %v3818 = vadd.f32 0.0, %v3817
      %3819 = vmatprep.mubr.f32.mxu0 0.0
      %3820 = vmatmul.mubr.f32.gmra.mrb[0].mxu0 %v3597
      %v3821 = vpop.f32.mrb[0].mxu0
      %v3822 = vadd.f32 0.0, %v3821
      %v3823 = vpop.f32.mrb[0].mxu0
      %v3824 = vadd.f32 0.0, %v3823
      %3825 = vmatprep.mubr.f32.mxu0 0.0
      %3826 = vmatmul.mubr.f32.gmra.mrb[0].mxu0 %v3600
      %v3827 = vpop.f32.mrb[0].mxu0
      %v3828 = vadd.f32 0.0, %v3827
      %v3829 = vpop.f32.mrb[0].mxu0
      %v3830 = vadd.f32 0.0, %v3829
      %3831 = vmatprep.mubr.f32.mxu0 0.0
      %3832 = vmatmul.mubr.f32.gmra.mrb[0].mxu0 %v3603
      %v3833 = vpop.f32.mrb[0].mxu0
      %v3834 = vadd.f32 0.0, %v3833
      %v3835 = vpop.f32.mrb[0].mxu0
      %v3836 = vadd.f32 0.0, %v3835
      %3837 = vmatprep.mubr.f32.mxu0 0.0
      %3838 = vmatmul.mubr.f32.gmra.mrb[0].mxu0 %v3606
      %v3839 = vpop.f32.mrb[0].mxu0
      %v3840 = vadd.f32 0.0, %v3839
      %v3841 = vpop.f32.mrb[0].mxu0
      %v3842 = vadd.f32 0.0, %v3841
      %3843 = vmatprep.mubr.f32.mxu0 0.0
      %3844 = vmatmul.mubr.f32.gmra.mrb[0].mxu0 %v3609
      %v3845 = vpop.f32.mrb[0].mxu0
      %v3846 = vadd.f32 0.0, %v3845
      %v3847 = vpop.f32.mrb[0].mxu0
      %v3848 = vadd.f32 0.0, %v3847
      %3849 = vmatprep.mubr.f32.mxu0 0.0
      %3850 = vmatmul.mubr.f32.gmra.mrb[0].mxu0 %v3612
      %v3851 = vpop.f32.mrb[0].mxu0
      %v3852 = vadd.f32 0.0, %v3851
      %v3853 = vpop.f32.mrb[0].mxu0
      %v3854 = vadd.f32 0.0, %v3853
      %3855 = vmatprep.mubr.f32.mxu0 0.0
      %3856 = vmatmul.mubr.f32.gmra.mrb[0].mxu0 %v3615
      %v3857 = vpop.f32.mrb[0].mxu0
      %v3858 = vadd.f32 0.0, %v3857
      %v3859 = vpop.f32.mrb[0].mxu0
      %v3860 = vadd.f32 0.0, %v3859
      %3861 = vmatprep.mubr.f32.mxu0 0.0
      %3862 = vmatmul.mubr.f32.gmra.mrb[0].mxu0 %v3618
      %v3863 = vpop.f32.mrb[0].mxu0
      %v3864 = vadd.f32 0.0, %v3863
      %v3865 = vpop.f32.mrb[0].mxu0
      %v3866 = vadd.f32 0.0, %v3865
      %3867 = vmatprep.mubr.f32.mxu0 0.0
      %3868 = vmatmul.mubr.f32.gmra.mrb[0].mxu0 %v3621
      %v3869 = vpop.f32.mrb[0].mxu0
      %v3870 = vadd.f32 0.0, %v3869
      %v3871 = vpop.f32.mrb[0].mxu0
      %v3872 = vadd.f32 0.0, %v3871
      %3873 = vdwg.mxu0
      %3874 = vst [vmem:[#allocation5] sm:$0xff] %v3696
      %vm3875 = vcmask 785408
      %3876 = vst.msk [vmem:[#allocation5 + $0x8] sm:$0xff] %vm3875, %v3698
      %3877 = vst [vmem:[#allocation5 + $0x10] sm:$0xff] %v3702
      %3878 = vst.msk [vmem:[#allocation5 + $0x18] sm:$0xff] %vm3875, %v3704
      %3879 = vst [vmem:[#allocation5 + $0x20] sm:$0xff] %v3708
      %3880 = vst.msk [vmem:[#allocation5 + $0x28] sm:$0xff] %vm3875, %v3710
      %3881 = vst [vmem:[#allocation5 + $0x30] sm:$0xff] %v3714
      %3882 = vst.msk [vmem:[#allocation5 + $0x38] sm:$0xff] %vm3875, %v3716
      %3883 = vst [vmem:[#allocation5 + $0x40] sm:$0xff] %v3720
      %3884 = vst.msk [vmem:[#allocation5 + $0x48] sm:$0xff] %vm3875, %v3722
      %3885 = vst [vmem:[#allocation5 + $0x50] sm:$0xff] %v3726
      %3886 = vst.msk [vmem:[#allocation5 + $0x58] sm:$0xff] %vm3875, %v3728
      %3887 = vst [vmem:[#allocation5 + $0x60] sm:$0xff] %v3732
      %3888 = vst.msk [vmem:[#allocation5 + $0x68] sm:$0xff] %vm3875, %v3734
      %3889 = vst [vmem:[#allocation5 + $0x70] sm:$0xff] %v3738
      %3890 = vst.msk [vmem:[#allocation5 + $0x78] sm:$0xff] %vm3875, %v3740
      %3891 = vst [vmem:[#allocation5 + $0x80] sm:$0xff] %v3744
      %3892 = vst.msk [vmem:[#allocation5 + $0x88] sm:$0xff] %vm3875, %v3746
      %3893 = vst [vmem:[#allocation5 + $0x90] sm:$0xff] %v3750
      %3894 = vst.msk [vmem:[#allocation5 + $0x98] sm:$0xff] %vm3875, %v3752
      %3895 = vst [vmem:[#allocation5 + $0xa0] sm:$0xff] %v3756
      %3896 = vst.msk [vmem:[#allocation5 + $0xa8] sm:$0xff] %vm3875, %v3758
      %3897 = vst [vmem:[#allocation5 + $0xb0] sm:$0xff] %v3762
      %3898 = vst.msk [vmem:[#allocation5 + $0xb8] sm:$0xff] %vm3875, %v3764
      %3899 = vst [vmem:[#allocation5 + $0xc0] sm:$0xff] %v3768
      %3900 = vst.msk [vmem:[#allocation5 + $0xc8] sm:$0xff] %vm3875, %v3770
      %3901 = vst [vmem:[#allocation5 + $0xd0] sm:$0xff] %v3774
      %3902 = vst.msk [vmem:[#allocation5 + $0xd8] sm:$0xff] %vm3875, %v3776
      %3903 = vst [vmem:[#allocation5 + $0xe0] sm:$0xff] %v3780
      %3904 = vst.msk [vmem:[#allocation5 + $0xe8] sm:$0xff] %vm3875, %v3782
      %3905 = vst [vmem:[#allocation5 + $0xf0] sm:$0xff] %v3786
      %3906 = vst.msk [vmem:[#allocation5 + $0xf8] sm:$0xff] %vm3875, %v3788
      %3907 = vst [vmem:[#allocation5 + $0x100] sm:$0xff] %v3792
      %3908 = vst.msk [vmem:[#allocation5 + $0x108] sm:$0xff] %vm3875, %v3794
      %3909 = vst [vmem:[#allocation5 + $0x110] sm:$0xff] %v3798
      %3910 = vst.msk [vmem:[#allocation5 + $0x118] sm:$0xff] %vm3875, %v3800
      %3911 = vst [vmem:[#allocation5 + $0x120] sm:$0xff] %v3804
      %3912 = vst.msk [vmem:[#allocation5 + $0x128] sm:$0xff] %vm3875, %v3806
      %3913 = vst [vmem:[#allocation5 + $0x130] sm:$0xff] %v3810
      %3914 = vst.msk [vmem:[#allocation5 + $0x138] sm:$0xff] %vm3875, %v3812
      %3915 = vst [vmem:[#allocation5 + $0x140] sm:$0xff] %v3816
      %3916 = vst.msk [vmem:[#allocation5 + $0x148] sm:$0xff] %vm3875, %v3818
      %3917 = vst [vmem:[#allocation5 + $0x150] sm:$0xff] %v3822
      %3918 = vst.msk [vmem:[#allocation5 + $0x158] sm:$0xff] %vm3875, %v3824
      %3919 = vst [vmem:[#allocation5 + $0x160] sm:$0xff] %v3828
      %3920 = vst.msk [vmem:[#allocation5 + $0x168] sm:$0xff] %vm3875, %v3830
      %3921 = vst [vmem:[#allocation5 + $0x170] sm:$0xff] %v3834
      %3922 = vst.msk [vmem:[#allocation5 + $0x178] sm:$0xff] %vm3875, %v3836
      %3923 = vst [vmem:[#allocation5 + $0x180] sm:$0xff] %v3840
      %3924 = vst.msk [vmem:[#allocation5 + $0x188] sm:$0xff] %vm3875, %v3842
      %3925 = vst [vmem:[#allocation5 + $0x190] sm:$0xff] %v3846
      %3926 = vst.msk [vmem:[#allocation5 + $0x198] sm:$0xff] %vm3875, %v3848
      %3927 = vst [vmem:[#allocation5 + $0x1a0] sm:$0xff] %v3852
      %3928 = vst.msk [vmem:[#allocation5 + $0x1a8] sm:$0xff] %vm3875, %v3854
      %3929 = vst [vmem:[#allocation5 + $0x1b0] sm:$0xff] %v3858
      %3930 = vst.msk [vmem:[#allocation5 + $0x1b8] sm:$0xff] %vm3875, %v3860
      %3931 = vst [vmem:[#allocation5 + $0x1c0] sm:$0xff] %v3864
      %3932 = vst.msk [vmem:[#allocation5 + $0x1c8] sm:$0xff] %vm3875, %v3866
      %3933 = vst [vmem:[#allocation5 + $0x1d0] sm:$0xff] %v3870
      %3934 = vst.msk [vmem:[#allocation5 + $0x1d8] sm:$0xff] %vm3875, %v3872
      %v3935 = vld [vmem:[%s15] sm:$0xff]
      %v3936 = vld [vmem:[%s15 + $0x8] sm:$0xff]
      %v3937 = vld [vmem:[%s15 + $0x10] sm:$0xff]
      %v3938 = vld [vmem:[%s15 + $0x18] sm:$0xff]
      %v3939 = vld [vmem:[%s15 + $0x20] sm:$0xff]
      %v3940 = vld [vmem:[%s15 + $0x28] sm:$0xff]
      %v3941 = vld [vmem:[%s15 + $0x30] sm:$0xff]
      %v3942 = vld [vmem:[%s15 + $0x38] sm:$0xff]
      %v3943 = vld [vmem:[%s15 + $0x40] sm:$0xff]
      %v3944 = vld [vmem:[%s15 + $0x48] sm:$0xff]
      %v3945 = vld [vmem:[%s15 + $0x50] sm:$0xff]
      %v3946 = vld [vmem:[%s15 + $0x58] sm:$0xff]
      %v3947 = vld [vmem:[%s15 + $0x60] sm:$0xff]
      %v3948 = vld [vmem:[%s15 + $0x68] sm:$0xff]
      %v3949 = vld [vmem:[%s15 + $0x70] sm:$0xff]
      %v3950 = vld [vmem:[%s15 + $0x78] sm:$0xff]
      %v3951 = vld [vmem:[%s15 + $0x80] sm:$0xff]
      %v3952 = vld [vmem:[%s15 + $0x88] sm:$0xff]
      %v3953 = vld [vmem:[%s15 + $0x90] sm:$0xff]
      %v3954 = vld [vmem:[%s15 + $0x98] sm:$0xff]
      %v3955 = vld [vmem:[%s15 + $0xa0] sm:$0xff]
      %v3956 = vld [vmem:[%s15 + $0xa8] sm:$0xff]
      %v3957 = vld [vmem:[%s15 + $0xb0] sm:$0xff]
      %v3958 = vld [vmem:[%s15 + $0xb8] sm:$0xff]
      %v3959 = vld [vmem:[%s15 + $0xc0] sm:$0xff]
      %v3960 = vld [vmem:[%s15 + $0xc8] sm:$0xff]
      %v3961 = vld [vmem:[%s15 + $0xd0] sm:$0xff]
      %v3962 = vld [vmem:[%s15 + $0xd8] sm:$0xff]
      %v3963 = vld [vmem:[%s15 + $0xe0] sm:$0xff]
      %v3964 = vld [vmem:[%s15 + $0xe8] sm:$0xff]
      %v3965 = vld [vmem:[%s15 + $0xf0] sm:$0xff]
      %v3966 = vld [vmem:[%s15 + $0xf8] sm:$0xff]
      %v3967 = vld [vmem:[%s15 + $0x100] sm:$0xff]
      %v3968 = vld [vmem:[%s15 + $0x108] sm:$0xff]
      %v3969 = vld [vmem:[%s15 + $0x110] sm:$0xff]
      %v3970 = vld [vmem:[%s15 + $0x118] sm:$0xff]
      %v3971 = vld [vmem:[%s15 + $0x120] sm:$0xff]
      %v3972 = vld [vmem:[%s15 + $0x128] sm:$0xff]
      %v3973 = vld [vmem:[%s15 + $0x130] sm:$0xff]
      %v3974 = vld [vmem:[%s15 + $0x138] sm:$0xff]
      %v3975 = vld [vmem:[%s15 + $0x140] sm:$0xff]
      %v3976 = vld [vmem:[%s15 + $0x148] sm:$0xff]
      %v3977 = vld [vmem:[%s15 + $0x150] sm:$0xff]
      %v3978 = vld [vmem:[%s15 + $0x158] sm:$0xff]
      %v3979 = vld [vmem:[%s15 + $0x160] sm:$0xff]
      %v3980 = vld [vmem:[%s15 + $0x168] sm:$0xff]
      %v3981 = vld [vmem:[%s15 + $0x170] sm:$0xff]
      %v3982 = vld [vmem:[%s15 + $0x178] sm:$0xff]
      %v3983 = vld [vmem:[%s15 + $0x180] sm:$0xff]
      %v3984 = vld [vmem:[%s15 + $0x188] sm:$0xff]
      %v3985 = vld [vmem:[%s15 + $0x190] sm:$0xff]
      %v3986 = vld [vmem:[%s15 + $0x198] sm:$0xff]
      %v3987 = vld [vmem:[%s15 + $0x1a0] sm:$0xff]
      %v3988 = vld [vmem:[%s15 + $0x1a8] sm:$0xff]
      %v3989 = vld [vmem:[%s15 + $0x1b0] sm:$0xff]
      %v3990 = vld [vmem:[%s15 + $0x1b8] sm:$0xff]
      %v3991 = vld [vmem:[#allocation5] sm:$0xff]
      %v3992 = vld [vmem:[#allocation5 + $0x8] sm:$0xff]
      %v3993 = vld [vmem:[#allocation5 + $0x10] sm:$0xff]
      %v3994 = vld [vmem:[#allocation5 + $0x18] sm:$0xff]
      %v3995 = vld [vmem:[#allocation5 + $0x20] sm:$0xff]
      %v3996 = vld [vmem:[#allocation5 + $0x28] sm:$0xff]
      %v3997 = vld [vmem:[#allocation5 + $0x30] sm:$0xff]
      %v3998 = vld [vmem:[#allocation5 + $0x38] sm:$0xff]
      %v3999 = vld [vmem:[#allocation5 + $0x40] sm:$0xff]
      %v4000 = vld [vmem:[#allocation5 + $0x48] sm:$0xff]
      %v4001 = vld [vmem:[#allocation5 + $0x50] sm:$0xff]
      %v4002 = vld [vmem:[#allocation5 + $0x58] sm:$0xff]
      %v4003 = vld [vmem:[#allocation5 + $0x60] sm:$0xff]
      %v4004 = vld [vmem:[#allocation5 + $0x68] sm:$0xff]
      %v4005 = vld [vmem:[#allocation5 + $0x70] sm:$0xff]
      %v4006 = vld [vmem:[#allocation5 + $0x78] sm:$0xff]
      %v4007 = vld [vmem:[#allocation5 + $0x80] sm:$0xff]
      %v4008 = vld [vmem:[#allocation5 + $0x88] sm:$0xff]
      %v4009 = vld [vmem:[#allocation5 + $0x90] sm:$0xff]
      %v4010 = vld [vmem:[#allocation5 + $0x98] sm:$0xff]
      %v4011 = vld [vmem:[#allocation5 + $0xa0] sm:$0xff]
      %v4012 = vld [vmem:[#allocation5 + $0xa8] sm:$0xff]
      %v4013 = vld [vmem:[#allocation5 + $0xb0] sm:$0xff]
      %v4014 = vld [vmem:[#allocation5 + $0xb8] sm:$0xff]
      %v4015 = vld [vmem:[#allocation5 + $0xc0] sm:$0xff]
      %v4016 = vld [vmem:[#allocation5 + $0xc8] sm:$0xff]
      %v4017 = vld [vmem:[#allocation5 + $0xd0] sm:$0xff]
      %v4018 = vld [vmem:[#allocation5 + $0xd8] sm:$0xff]
      %v4019 = vld [vmem:[#allocation5 + $0xe0] sm:$0xff]
      %v4020 = vld [vmem:[#allocation5 + $0xe8] sm:$0xff]
      %v4021 = vld [vmem:[#allocation5 + $0xf0] sm:$0xff]
      %v4022 = vld [vmem:[#allocation5 + $0xf8] sm:$0xff]
      %v4023 = vld [vmem:[#allocation5 + $0x100] sm:$0xff]
      %v4024 = vld [vmem:[#allocation5 + $0x108] sm:$0xff]
      %v4025 = vld [vmem:[#allocation5 + $0x110] sm:$0xff]
      %v4026 = vld [vmem:[#allocation5 + $0x118] sm:$0xff]
      %v4027 = vld [vmem:[#allocation5 + $0x120] sm:$0xff]
      %v4028 = vld [vmem:[#allocation5 + $0x128] sm:$0xff]
      %v4029 = vld [vmem:[#allocation5 + $0x130] sm:$0xff]
      %v4030 = vld [vmem:[#allocation5 + $0x138] sm:$0xff]
      %v4031 = vld [vmem:[#allocation5 + $0x140] sm:$0xff]
      %v4032 = vld [vmem:[#allocation5 + $0x148] sm:$0xff]
      %v4033 = vld [vmem:[#allocation5 + $0x150] sm:$0xff]
      %v4034 = vld [vmem:[#allocation5 + $0x158] sm:$0xff]
      %v4035 = vld [vmem:[#allocation5 + $0x160] sm:$0xff]
      %v4036 = vld [vmem:[#allocation5 + $0x168] sm:$0xff]
      %v4037 = vld [vmem:[#allocation5 + $0x170] sm:$0xff]
      %v4038 = vld [vmem:[#allocation5 + $0x178] sm:$0xff]
      %v4039 = vld [vmem:[#allocation5 + $0x180] sm:$0xff]
      %v4040 = vld [vmem:[#allocation5 + $0x188] sm:$0xff]
      %v4041 = vld [vmem:[#allocation5 + $0x190] sm:$0xff]
      %v4042 = vld [vmem:[#allocation5 + $0x198] sm:$0xff]
      %v4043 = vld [vmem:[#allocation5 + $0x1a0] sm:$0xff]
      %v4044 = vld [vmem:[#allocation5 + $0x1a8] sm:$0xff]
      %v4045 = vld [vmem:[#allocation5 + $0x1b0] sm:$0xff]
      %v4046 = vld [vmem:[#allocation5 + $0x1b8] sm:$0xff]
      %v4047 = vld [vmem:[#allocation5 + $0x1c0] sm:$0xff]
      %v4048 = vld [vmem:[#allocation5 + $0x1c8] sm:$0xff]
      %v4049 = vld [vmem:[#allocation5 + $0x1d0] sm:$0x3f]
      %v4050 = vld [vmem:[#allocation5 + $0x1d8] sm:$0x3f]
      %v4051 = vld [vmem:[%s13] sm:$0xff]
      %v4052 = vld [vmem:[%s13 + $0x8] sm:$0xff]
      %v4053 = vld [vmem:[%s13 + $0x10] sm:$0xff]
      %v4054 = vld [vmem:[%s13 + $0x18] sm:$0xff]
      %v4055 = vld [vmem:[%s13 + $0x20] sm:$0xff]
      %v4056 = vld [vmem:[%s13 + $0x28] sm:$0xff]
      %v4057 = vld [vmem:[%s13 + $0x30] sm:$0xff]
      %v4058 = vld [vmem:[%s13 + $0x38] sm:$0xff]
      %v4059 = vld [vmem:[%s13 + $0x40] sm:$0xff]
      %v4060 = vld [vmem:[%s13 + $0x48] sm:$0xff]
      %v4061 = vld [vmem:[%s13 + $0x50] sm:$0xff]
      %v4062 = vld [vmem:[%s13 + $0x58] sm:$0xff]
      %v4063 = vld [vmem:[%s13 + $0x60] sm:$0xff]
      %v4064 = vld [vmem:[%s13 + $0x68] sm:$0xff]
      %v4065 = vld [vmem:[%s13 + $0x70] sm:$0xff]
      %v4066 = vld [vmem:[%s13 + $0x78] sm:$0xff]
      %v4067 = vld [vmem:[%s13 + $0x80] sm:$0xff]
      %v4068 = vld [vmem:[%s13 + $0x88] sm:$0xff]
      %v4069 = vld [vmem:[%s13 + $0x90] sm:$0xff]
      %v4070 = vld [vmem:[%s13 + $0x98] sm:$0xff]
      %v4071 = vld [vmem:[%s13 + $0xa0] sm:$0xff]
      %v4072 = vld [vmem:[%s13 + $0xa8] sm:$0xff]
      %v4073 = vld [vmem:[%s13 + $0xb0] sm:$0xff]
      %v4074 = vld [vmem:[%s13 + $0xb8] sm:$0xff]
      %v4075 = vld [vmem:[%s13 + $0xc0] sm:$0xff]
      %v4076 = vld [vmem:[%s13 + $0xc8] sm:$0xff]
      %v4077 = vld [vmem:[%s13 + $0xd0] sm:$0xff]
      %v4078 = vld [vmem:[%s13 + $0xd8] sm:$0xff]
      %v4079 = vld [vmem:[#allocation5] sm:$0xfe]
      %v4080 = vld [vmem:[#allocation5 + $0x8] sm:$0xfe]
      %v4081 = vld [vmem:[#allocation5 + $0x1d0] sm:$0x7f]
      %v4082 = vld [vmem:[#allocation5 + $0x1d8] sm:$0x7f]
      %s4083 = scalar_lea.vmem %s13, 224
      %v4084 = vld [vmem:[%s4083] sm:$0xff]
      %v4085 = vld [vmem:[%s4083 + $0x8] sm:$0xff]
      %v4086 = vld [vmem:[%s4083 + $0x10] sm:$0xff]
      %v4087 = vld [vmem:[%s4083 + $0x18] sm:$0xff]
      %v4088 = vld [vmem:[%s4083 + $0x20] sm:$0xff]
      %v4089 = vld [vmem:[%s4083 + $0x28] sm:$0xff]
      %v4090 = vld [vmem:[%s4083 + $0x30] sm:$0xff]
      %v4091 = vld [vmem:[%s4083 + $0x38] sm:$0xff]
      %v4092 = vld [vmem:[%s4083 + $0x40] sm:$0xff]
      %v4093 = vld [vmem:[%s4083 + $0x48] sm:$0xff]
      %v4094 = vld [vmem:[%s4083 + $0x50] sm:$0xff]
      %v4095 = vld [vmem:[%s4083 + $0x58] sm:$0xff]
      %v4096 = vld [vmem:[%s4083 + $0x60] sm:$0xff]
      %v4097 = vld [vmem:[%s4083 + $0x68] sm:$0xff]
      %v4098 = vld [vmem:[%s4083 + $0x70] sm:$0xff]
      %v4099 = vld [vmem:[%s4083 + $0x78] sm:$0xff]
      %v4100 = vld [vmem:[%s4083 + $0x80] sm:$0xff]
      %v4101 = vld [vmem:[%s4083 + $0x88] sm:$0xff]
      %v4102 = vld [vmem:[%s4083 + $0x90] sm:$0xff]
      %v4103 = vld [vmem:[%s4083 + $0x98] sm:$0xff]
      %v4104 = vld [vmem:[%s4083 + $0xa0] sm:$0xff]
      %v4105 = vld [vmem:[%s4083 + $0xa8] sm:$0xff]
      %v4106 = vld [vmem:[%s4083 + $0xb0] sm:$0xff]
      %v4107 = vld [vmem:[%s4083 + $0xb8] sm:$0xff]
      %v4108 = vld [vmem:[%s4083 + $0xc0] sm:$0xff]
      %v4109 = vld [vmem:[%s4083 + $0xc8] sm:$0xff]
      %v4110 = vld [vmem:[%s4083 + $0xd0] sm:$0xff]
      %v4111 = vld [vmem:[%s4083 + $0xd8] sm:$0xff]
      %vm4172 = vcmask 1046528
      %v4173 = vrot.slane %v4079, 1
      %v4174 = vrot.slane %v3993, 1
      %v4175 = vsel %vm4172, %v4173, %v4174
      %v4176 = vrot.slane %v4080, 1
      %v4177 = vrot.slane %v3994, 1
      %v4178 = vsel %vm4172, %v4176, %v4177
      %v4179 = vrot.slane %v3995, 1
      %v4180 = vsel %vm4172, %v4174, %v4179
      %v4181 = vrot.slane %v3996, 1
      %v4182 = vsel %vm4172, %v4177, %v4181
      %v4183 = vrot.slane %v3997, 1
      %v4184 = vsel %vm4172, %v4179, %v4183
      %v4185 = vrot.slane %v3998, 1
      %v4186 = vsel %vm4172, %v4181, %v4185
      %v4187 = vrot.slane %v3999, 1
      %v4188 = vsel %vm4172, %v4183, %v4187
      %v4189 = vrot.slane %v4000, 1
      %v4190 = vsel %vm4172, %v4185, %v4189
      %v4191 = vrot.slane %v4001, 1
      %v4192 = vsel %vm4172, %v4187, %v4191
      %v4193 = vrot.slane %v4002, 1
      %v4194 = vsel %vm4172, %v4189, %v4193
      %v4195 = vrot.slane %v4003, 1
      %v4196 = vsel %vm4172, %v4191, %v4195
      %v4197 = vrot.slane %v4004, 1
      %v4198 = vsel %vm4172, %v4193, %v4197
      %v4199 = vrot.slane %v4005, 1
      %v4200 = vsel %vm4172, %v4195, %v4199
      %v4201 = vrot.slane %v4006, 1
      %v4202 = vsel %vm4172, %v4197, %v4201
      %v4203 = vrot.slane %v4007, 1
      %v4204 = vsel %vm4172, %v4199, %v4203
      %v4205 = vrot.slane %v4008, 1
      %v4206 = vsel %vm4172, %v4201, %v4205
      %v4207 = vrot.slane %v4009, 1
      %v4208 = vsel %vm4172, %v4203, %v4207
      %v4209 = vrot.slane %v4010, 1
      %v4210 = vsel %vm4172, %v4205, %v4209
      %v4211 = vrot.slane %v4011, 1
      %v4212 = vsel %vm4172, %v4207, %v4211
      %v4213 = vrot.slane %v4012, 1
      %v4214 = vsel %vm4172, %v4209, %v4213
      %v4215 = vrot.slane %v4013, 1
      %v4216 = vsel %vm4172, %v4211, %v4215
      %v4217 = vrot.slane %v4014, 1
      %v4218 = vsel %vm4172, %v4213, %v4217
      %v4219 = vrot.slane %v4015, 1
      %v4220 = vsel %vm4172, %v4215, %v4219
      %v4221 = vrot.slane %v4016, 1
      %v4222 = vsel %vm4172, %v4217, %v4221
      %v4223 = vrot.slane %v4017, 1
      %v4224 = vsel %vm4172, %v4219, %v4223
      %v4225 = vrot.slane %v4018, 1
      %v4226 = vsel %vm4172, %v4221, %v4225
      %v4227 = vrot.slane %v4019, 1
      %v4228 = vsel %vm4172, %v4223, %v4227
      %v4229 = vrot.slane %v4020, 1
      %v4230 = vsel %vm4172, %v4225, %v4229
      %v4231 = vrot.slane %v4021, 1
      %v4232 = vsel %vm4172, %v4227, %v4231
      %v4233 = vrot.slane %v4022, 1
      %v4234 = vsel %vm4172, %v4229, %v4233
      %v4235 = vrot.slane %v4023, 1
      %v4236 = vsel %vm4172, %v4231, %v4235
      %v4237 = vrot.slane %v4024, 1
      %v4238 = vsel %vm4172, %v4233, %v4237
      %v4239 = vrot.slane %v4025, 1
      %v4240 = vsel %vm4172, %v4235, %v4239
      %v4241 = vrot.slane %v4026, 1
      %v4242 = vsel %vm4172, %v4237, %v4241
      %v4243 = vrot.slane %v4027, 1
      %v4244 = vsel %vm4172, %v4239, %v4243
      %v4245 = vrot.slane %v4028, 1
      %v4246 = vsel %vm4172, %v4241, %v4245
      %v4247 = vrot.slane %v4029, 1
      %v4248 = vsel %vm4172, %v4243, %v4247
      %v4249 = vrot.slane %v4030, 1
      %v4250 = vsel %vm4172, %v4245, %v4249
      %v4251 = vrot.slane %v4031, 1
      %v4252 = vsel %vm4172, %v4247, %v4251
      %v4253 = vrot.slane %v4032, 1
      %v4254 = vsel %vm4172, %v4249, %v4253
      %v4255 = vrot.slane %v4033, 1
      %v4256 = vsel %vm4172, %v4251, %v4255
      %v4257 = vrot.slane %v4034, 1
      %v4258 = vsel %vm4172, %v4253, %v4257
      %v4259 = vrot.slane %v4035, 1
      %v4260 = vsel %vm4172, %v4255, %v4259
      %v4261 = vrot.slane %v4036, 1
      %v4262 = vsel %vm4172, %v4257, %v4261
      %v4263 = vrot.slane %v4037, 1
      %v4264 = vsel %vm4172, %v4259, %v4263
      %v4265 = vrot.slane %v4038, 1
      %v4266 = vsel %vm4172, %v4261, %v4265
      %v4267 = vrot.slane %v4039, 1
      %v4268 = vsel %vm4172, %v4263, %v4267
      %v4269 = vrot.slane %v4040, 1
      %v4270 = vsel %vm4172, %v4265, %v4269
      %v4271 = vrot.slane %v4041, 1
      %v4272 = vsel %vm4172, %v4267, %v4271
      %v4273 = vrot.slane %v4042, 1
      %v4274 = vsel %vm4172, %v4269, %v4273
      %v4275 = vrot.slane %v4043, 1
      %v4276 = vsel %vm4172, %v4271, %v4275
      %v4277 = vrot.slane %v4044, 1
      %v4278 = vsel %vm4172, %v4273, %v4277
      %v4279 = vrot.slane %v4045, 1
      %v4280 = vsel %vm4172, %v4275, %v4279
      %v4281 = vrot.slane %v4046, 1
      %v4282 = vsel %vm4172, %v4277, %v4281
      %v4283 = vrot.slane %v4047, 1
      %v4284 = vsel %vm4172, %v4279, %v4283
      %v4285 = vrot.slane %v4048, 1
      %v4286 = vsel %vm4172, %v4281, %v4285
      %v4287 = vrot.slane %v4081, 1
      %v4288 = vsel %vm4172, %v4283, %v4287
      %v4289 = vrot.slane %v4082, 1
      %v4290 = vsel %vm4172, %v4285, %v4289
      %v4321 = vsel %vm3875, %v4178, 0
      %v4323 = vsel %vm3875, %v4182, 0
      %v4325 = vsel %vm3875, %v4186, 0
      %v4327 = vsel %vm3875, %v4190, 0
      %v4329 = vsel %vm3875, %v4194, 0
      %v4331 = vsel %vm3875, %v4198, 0
      %v4333 = vsel %vm3875, %v4202, 0
      %v4335 = vsel %vm3875, %v4206, 0
      %v4337 = vsel %vm3875, %v4210, 0
      %v4339 = vsel %vm3875, %v4214, 0
      %v4341 = vsel %vm3875, %v4218, 0
      %v4343 = vsel %vm3875, %v4222, 0
      %v4345 = vsel %vm3875, %v4226, 0
      %v4347 = vsel %vm3875, %v4230, 0
      %v4349 = vsel %vm3875, %v4234, 0
      %v4351 = vsel %vm3875, %v4238, 0
      %v4353 = vsel %vm3875, %v4242, 0
      %v4355 = vsel %vm3875, %v4246, 0
      %v4357 = vsel %vm3875, %v4250, 0
      %v4359 = vsel %vm3875, %v4254, 0
      %v4361 = vsel %vm3875, %v4258, 0
      %v4363 = vsel %vm3875, %v4262, 0
      %v4365 = vsel %vm3875, %v4266, 0
      %v4367 = vsel %vm3875, %v4270, 0
      %v4369 = vsel %vm3875, %v4274, 0
      %v4371 = vsel %vm3875, %v4278, 0
      %v4373 = vsel %vm3875, %v4282, 0
      %v4375 = vsel %vm3875, %v4286, 0
      %v4377 = vsel %vm3875, %v4290, 0
      %v4379 = vsel %vm3875, %v4289, 0
      %4381 = vmatprep.subr.mxu0 0.0
      %4382 = vmatpush1.msra.mxu0 %v4084
      %4383 = vmatprep.subr.mxu0 0.0
      %4384 = vmatpush1.msra.mxu0 %v4085
      %4385 = vmatprep.subr.mxu0 0.0
      %4386 = vmatpush1.msra.mxu0 %v4086
      %4387 = vmatprep.subr.mxu0 0.0
      %4388 = vmatpush1.msra.mxu0 %v4087
      %4389 = vmatprep.subr.mxu0 0.0
      %4390 = vmatpush1.msra.mxu0 %v4088
      %4391 = vmatprep.subr.mxu0 0.0
      %4392 = vmatpush1.msra.mxu0 %v4089
      %4393 = vmatprep.subr.mxu0 0.0
      %4394 = vmatpush1.msra.mxu0 %v4090
      %4395 = vmatprep.subr.mxu0 0.0
      %4396 = vmatpush1.msra.mxu0 %v4091
      %4397 = vmatprep.subr.mxu0 0.0
      %4398 = vmatpush1.msra.mxu0 %v4092
      %4399 = vmatprep.subr.mxu0 0.0
      %4400 = vmatpush1.msra.mxu0 %v4093
      %4401 = vmatprep.subr.mxu0 0.0
      %4402 = vmatpush1.msra.mxu0 %v4094
      %4403 = vmatprep.subr.mxu0 0.0
      %4404 = vmatpush1.msra.mxu0 %v4095
      %4405 = vmatprep.subr.mxu0 0.0
      %4406 = vmatpush1.msra.mxu0 %v4096
      %4407 = vmatprep.subr.mxu0 0.0
      %4408 = vmatpush1.msra.mxu0 %v4097
      %4409 = vmatprep.subr.mxu0 0.0
      %4410 = vmatpush1.msra.mxu0 %v4098
      %4411 = vmatprep.subr.mxu0 0.0
      %4412 = vmatpush1.msra.mxu0 %v4099
      %4413 = vmatprep.subr.mxu0 0.0
      %4414 = vmatpush1.msra.mxu0 %v4100
      %4415 = vmatprep.subr.mxu0 0.0
      %4416 = vmatpush1.msra.mxu0 %v4101
      %4417 = vmatprep.subr.mxu0 0.0
      %4418 = vmatpush1.msra.mxu0 %v4102
      %4419 = vmatprep.subr.mxu0 0.0
      %4420 = vmatpush1.msra.mxu0 %v4103
      %4421 = vmatprep.subr.mxu0 0.0
      %4422 = vmatpush1.msra.mxu0 %v4104
      %4423 = vmatprep.subr.mxu0 0.0
      %4424 = vmatpush1.msra.mxu0 %v4105
      %4425 = vmatprep.subr.mxu0 0.0
      %4426 = vmatpush1.msra.mxu0 %v4106
      %4427 = vmatprep.subr.mxu0 0.0
      %4428 = vmatpush1.msra.mxu0 %v4107
      %4429 = vmatprep.subr.mxu0 0.0
      %4430 = vmatpush1.msra.mxu0 %v4108
      %4431 = vmatprep.subr.mxu0 0.0
      %4432 = vmatpush1.msra.mxu0 %v4109
      %4433 = vmatprep.subr.mxu0 0.0
      %4434 = vmatpush1.msra.mxu0 %v4110
      %4435 = vmatprep.subr.mxu0 0.0
      %4436 = vmatpush1.msra.mxu0 %v4111
      %4437 = vmatprep.subr.mxu0 0.0
      %4438 = vmatpush1.msra.mxu0 0.0
      %4439 = vmatprep.subr.mxu0 0.0
      %4440 = vmatpush1.msra.mxu0 0.0
      %4441 = vmatprep.subr.mxu0 0.0
      %4442 = vmatpush1.msra.mxu0 0.0
      %4443 = vmatprep.subr.mxu0 0.0
      %4444 = vmatpush1.msra.mxu0 0.0
      %4445 = vmatprep.mubr.f32.mxu0 %v4321
      %4446 = vmatmul.mubr.f32.gmra.mrb[0].mxu0 %v4175
      %v4447 = vpop.f32.mrb[0].mxu0
      %v4448 = vadd.f32 0.0, %v4447
      %v4449 = vpop.f32.mrb[0].mxu0
      %4450 = vmatprep.mubr.f32.mxu0 %v4323
      %4451 = vmatmul.mubr.f32.gmra.mrb[0].mxu0 %v4180
      %v4452 = vpop.f32.mrb[0].mxu0
      %v4453 = vadd.f32 0.0, %v4452
      %v4454 = vpop.f32.mrb[0].mxu0
      %4455 = vmatprep.mubr.f32.mxu0 %v4325
      %4456 = vmatmul.mubr.f32.gmra.mrb[0].mxu0 %v4184
      %v4457 = vpop.f32.mrb[0].mxu0
      %v4458 = vadd.f32 0.0, %v4457
      %v4459 = vpop.f32.mrb[0].mxu0
      %4460 = vmatprep.mubr.f32.mxu0 %v4327
      %4461 = vmatmul.mubr.f32.gmra.mrb[0].mxu0 %v4188
      %v4462 = vpop.f32.mrb[0].mxu0
      %v4463 = vadd.f32 0.0, %v4462
      %v4464 = vpop.f32.mrb[0].mxu0
      %4465 = vmatprep.mubr.f32.mxu0 %v4329
      %4466 = vmatmul.mubr.f32.gmra.mrb[0].mxu0 %v4192
      %v4467 = vpop.f32.mrb[0].mxu0
      %v4468 = vadd.f32 0.0, %v4467
      %v4469 = vpop.f32.mrb[0].mxu0
      %4470 = vmatprep.mubr.f32.mxu0 %v4331
      %4471 = vmatmul.mubr.f32.gmra.mrb[0].mxu0 %v4196
      %v4472 = vpop.f32.mrb[0].mxu0
      %v4473 = vadd.f32 0.0, %v4472
      %v4474 = vpop.f32.mrb[0].mxu0
      %4475 = vmatprep.mubr.f32.mxu0 %v4333
      %4476 = vmatmul.mubr.f32.gmra.mrb[0].mxu0 %v4200
      %v4477 = vpop.f32.mrb[0].mxu0
      %v4478 = vadd.f32 0.0, %v4477
      %v4479 = vpop.f32.mrb[0].mxu0
      %4480 = vmatprep.mubr.f32.mxu0 %v4335
      %4481 = vmatmul.mubr.f32.gmra.mrb[0].mxu0 %v4204
      %v4482 = vpop.f32.mrb[0].mxu0
      %v4483 = vadd.f32 0.0, %v4482
      %v4484 = vpop.f32.mrb[0].mxu0
      %4485 = vmatprep.mubr.f32.mxu0 %v4337
      %4486 = vmatmul.mubr.f32.gmra.mrb[0].mxu0 %v4208
      %v4487 = vpop.f32.mrb[0].mxu0
      %v4488 = vadd.f32 0.0, %v4487
      %v4489 = vpop.f32.mrb[0].mxu0
      %4490 = vmatprep.mubr.f32.mxu0 %v4339
      %4491 = vmatmul.mubr.f32.gmra.mrb[0].mxu0 %v4212
      %v4492 = vpop.f32.mrb[0].mxu0
      %v4493 = vadd.f32 0.0, %v4492
      %v4494 = vpop.f32.mrb[0].mxu0
      %4495 = vmatprep.mubr.f32.mxu0 %v4341
      %4496 = vmatmul.mubr.f32.gmra.mrb[0].mxu0 %v4216
      %v4497 = vpop.f32.mrb[0].mxu0
      %v4498 = vadd.f32 0.0, %v4497
      %v4499 = vpop.f32.mrb[0].mxu0
      %4500 = vmatprep.mubr.f32.mxu0 %v4343
      %4501 = vmatmul.mubr.f32.gmra.mrb[0].mxu0 %v4220
      %v4502 = vpop.f32.mrb[0].mxu0
      %v4503 = vadd.f32 0.0, %v4502
      %v4504 = vpop.f32.mrb[0].mxu0
      %4505 = vmatprep.mubr.f32.mxu0 %v4345
      %4506 = vmatmul.mubr.f32.gmra.mrb[0].mxu0 %v4224
      %v4507 = vpop.f32.mrb[0].mxu0
      %v4508 = vadd.f32 0.0, %v4507
      %v4509 = vpop.f32.mrb[0].mxu0
      %4510 = vmatprep.mubr.f32.mxu0 %v4347
      %4511 = vmatmul.mubr.f32.gmra.mrb[0].mxu0 %v4228
      %v4512 = vpop.f32.mrb[0].mxu0
      %v4513 = vadd.f32 0.0, %v4512
      %v4514 = vpop.f32.mrb[0].mxu0
      %4515 = vmatprep.mubr.f32.mxu0 %v4349
      %4516 = vmatmul.mubr.f32.gmra.mrb[0].mxu0 %v4232
      %v4517 = vpop.f32.mrb[0].mxu0
      %v4518 = vadd.f32 0.0, %v4517
      %v4519 = vpop.f32.mrb[0].mxu0
      %4520 = vmatprep.mubr.f32.mxu0 %v4351
      %4521 = vmatmul.mubr.f32.gmra.mrb[0].mxu0 %v4236
      %v4522 = vpop.f32.mrb[0].mxu0
      %v4523 = vadd.f32 0.0, %v4522
      %v4524 = vpop.f32.mrb[0].mxu0
      %4525 = vmatprep.mubr.f32.mxu0 %v4353
      %4526 = vmatmul.mubr.f32.gmra.mrb[0].mxu0 %v4240
      %v4527 = vpop.f32.mrb[0].mxu0
      %v4528 = vadd.f32 0.0, %v4527
      %v4529 = vpop.f32.mrb[0].mxu0
      %4530 = vmatprep.mubr.f32.mxu0 %v4355
      %4531 = vmatmul.mubr.f32.gmra.mrb[0].mxu0 %v4244
      %v4532 = vpop.f32.mrb[0].mxu0
      %v4533 = vadd.f32 0.0, %v4532
      %v4534 = vpop.f32.mrb[0].mxu0
      %4535 = vmatprep.mubr.f32.mxu0 %v4357
      %4536 = vmatmul.mubr.f32.gmra.mrb[0].mxu0 %v4248
      %v4537 = vpop.f32.mrb[0].mxu0
      %v4538 = vadd.f32 0.0, %v4537
      %v4539 = vpop.f32.mrb[0].mxu0
      %4540 = vmatprep.mubr.f32.mxu0 %v4359
      %4541 = vmatmul.mubr.f32.gmra.mrb[0].mxu0 %v4252
      %v4542 = vpop.f32.mrb[0].mxu0
      %v4543 = vadd.f32 0.0, %v4542
      %v4544 = vpop.f32.mrb[0].mxu0
      %4545 = vmatprep.mubr.f32.mxu0 %v4361
      %4546 = vmatmul.mubr.f32.gmra.mrb[0].mxu0 %v4256
      %v4547 = vpop.f32.mrb[0].mxu0
      %v4548 = vadd.f32 0.0, %v4547
      %v4549 = vpop.f32.mrb[0].mxu0
      %4550 = vmatprep.mubr.f32.mxu0 %v4363
      %4551 = vmatmul.mubr.f32.gmra.mrb[0].mxu0 %v4260
      %v4552 = vpop.f32.mrb[0].mxu0
      %v4553 = vadd.f32 0.0, %v4552
      %v4554 = vpop.f32.mrb[0].mxu0
      %4555 = vmatprep.mubr.f32.mxu0 %v4365
      %4556 = vmatmul.mubr.f32.gmra.mrb[0].mxu0 %v4264
      %v4557 = vpop.f32.mrb[0].mxu0
      %v4558 = vadd.f32 0.0, %v4557
      %v4559 = vpop.f32.mrb[0].mxu0
      %4560 = vmatprep.mubr.f32.mxu0 %v4367
      %4561 = vmatmul.mubr.f32.gmra.mrb[0].mxu0 %v4268
      %v4562 = vpop.f32.mrb[0].mxu0
      %v4563 = vadd.f32 0.0, %v4562
      %v4564 = vpop.f32.mrb[0].mxu0
      %4565 = vmatprep.mubr.f32.mxu0 %v4369
      %4566 = vmatmul.mubr.f32.gmra.mrb[0].mxu0 %v4272
      %v4567 = vpop.f32.mrb[0].mxu0
      %v4568 = vadd.f32 0.0, %v4567
      %v4569 = vpop.f32.mrb[0].mxu0
      %4570 = vmatprep.mubr.f32.mxu0 %v4371
      %4571 = vmatmul.mubr.f32.gmra.mrb[0].mxu0 %v4276
      %v4572 = vpop.f32.mrb[0].mxu0
      %v4573 = vadd.f32 0.0, %v4572
      %v4574 = vpop.f32.mrb[0].mxu0
      %4575 = vmatprep.mubr.f32.mxu0 %v4373
      %4576 = vmatmul.mubr.f32.gmra.mrb[0].mxu0 %v4280
      %v4577 = vpop.f32.mrb[0].mxu0
      %v4578 = vadd.f32 0.0, %v4577
      %v4579 = vpop.f32.mrb[0].mxu0
      %4580 = vmatprep.mubr.f32.mxu0 %v4375
      %4581 = vmatmul.mubr.f32.gmra.mrb[0].mxu0 %v4284
      %v4582 = vpop.f32.mrb[0].mxu0
      %v4583 = vadd.f32 0.0, %v4582
      %v4584 = vpop.f32.mrb[0].mxu0
      %4585 = vmatprep.mubr.f32.mxu0 %v4377
      %4586 = vmatmul.mubr.f32.gmra.mrb[0].mxu0 %v4288
      %v4587 = vpop.f32.mrb[0].mxu0
      %v4588 = vadd.f32 0.0, %v4587
      %v4589 = vpop.f32.mrb[0].mxu0
      %4590 = vmatprep.mubr.f32.mxu0 %v4379
      %4591 = vmatmul.mubr.f32.gmra.mrb[0].mxu0 %v4287
      %v4592 = vpop.f32.mrb[0].mxu0
      %v4593 = vadd.f32 0.0, %v4592
      %v4594 = vpop.f32.mrb[0].mxu0
      %4595 = vdwg.mxu0
      %v4597 = vsel %vm3875, %v3992, 0
      %v4599 = vsel %vm3875, %v3994, 0
      %v4601 = vsel %vm3875, %v3996, 0
      %v4603 = vsel %vm3875, %v3998, 0
      %v4605 = vsel %vm3875, %v4000, 0
      %v4607 = vsel %vm3875, %v4002, 0
      %v4609 = vsel %vm3875, %v4004, 0
      %v4611 = vsel %vm3875, %v4006, 0
      %v4613 = vsel %vm3875, %v4008, 0
      %v4615 = vsel %vm3875, %v4010, 0
      %v4617 = vsel %vm3875, %v4012, 0
      %v4619 = vsel %vm3875, %v4014, 0
      %v4621 = vsel %vm3875, %v4016, 0
      %v4623 = vsel %vm3875, %v4018, 0
      %v4625 = vsel %vm3875, %v4020, 0
      %v4627 = vsel %vm3875, %v4022, 0
      %v4629 = vsel %vm3875, %v4024, 0
      %v4631 = vsel %vm3875, %v4026, 0
      %v4633 = vsel %vm3875, %v4028, 0
      %v4635 = vsel %vm3875, %v4030, 0
      %v4637 = vsel %vm3875, %v4032, 0
      %v4639 = vsel %vm3875, %v4034, 0
      %v4641 = vsel %vm3875, %v4036, 0
      %v4643 = vsel %vm3875, %v4038, 0
      %v4645 = vsel %vm3875, %v4040, 0
      %v4647 = vsel %vm3875, %v4042, 0
      %v4649 = vsel %vm3875, %v4044, 0
      %v4651 = vsel %vm3875, %v4046, 0
      %v4653 = vsel %vm3875, %v4048, 0
      %v4656 = vsel %vm3875, %v4050, 0
      %4658 = vmatprep.subr.mxu0 0.0
      %4659 = vmatpush1.msra.mxu0 %v4051
      %4660 = vmatprep.subr.mxu0 0.0
      %4661 = vmatpush1.msra.mxu0 %v4052
      %4662 = vmatprep.subr.mxu0 0.0
      %4663 = vmatpush1.msra.mxu0 %v4053
      %4664 = vmatprep.subr.mxu0 0.0
      %4665 = vmatpush1.msra.mxu0 %v4054
      %4666 = vmatprep.subr.mxu0 0.0
      %4667 = vmatpush1.msra.mxu0 %v4055
      %4668 = vmatprep.subr.mxu0 0.0
      %4669 = vmatpush1.msra.mxu0 %v4056
      %4670 = vmatprep.subr.mxu0 0.0
      %4671 = vmatpush1.msra.mxu0 %v4057
      %4672 = vmatprep.subr.mxu0 0.0
      %4673 = vmatpush1.msra.mxu0 %v4058
      %4674 = vmatprep.subr.mxu0 0.0
      %4675 = vmatpush1.msra.mxu0 %v4059
      %4676 = vmatprep.subr.mxu0 0.0
      %4677 = vmatpush1.msra.mxu0 %v4060
      %4678 = vmatprep.subr.mxu0 0.0
      %4679 = vmatpush1.msra.mxu0 %v4061
      %4680 = vmatprep.subr.mxu0 0.0
      %4681 = vmatpush1.msra.mxu0 %v4062
      %4682 = vmatprep.subr.mxu0 0.0
      %4683 = vmatpush1.msra.mxu0 %v4063
      %4684 = vmatprep.subr.mxu0 0.0
      %4685 = vmatpush1.msra.mxu0 %v4064
      %4686 = vmatprep.subr.mxu0 0.0
      %4687 = vmatpush1.msra.mxu0 %v4065
      %4688 = vmatprep.subr.mxu0 0.0
      %4689 = vmatpush1.msra.mxu0 %v4066
      %4690 = vmatprep.subr.mxu0 0.0
      %4691 = vmatpush1.msra.mxu0 %v4067
      %4692 = vmatprep.subr.mxu0 0.0
      %4693 = vmatpush1.msra.mxu0 %v4068
      %4694 = vmatprep.subr.mxu0 0.0
      %4695 = vmatpush1.msra.mxu0 %v4069
      %4696 = vmatprep.subr.mxu0 0.0
      %4697 = vmatpush1.msra.mxu0 %v4070
      %4698 = vmatprep.subr.mxu0 0.0
      %4699 = vmatpush1.msra.mxu0 %v4071
      %4700 = vmatprep.subr.mxu0 0.0
      %4701 = vmatpush1.msra.mxu0 %v4072
      %4702 = vmatprep.subr.mxu0 0.0
      %4703 = vmatpush1.msra.mxu0 %v4073
      %4704 = vmatprep.subr.mxu0 0.0
      %4705 = vmatpush1.msra.mxu0 %v4074
      %4706 = vmatprep.subr.mxu0 0.0
      %4707 = vmatpush1.msra.mxu0 %v4075
      %4708 = vmatprep.subr.mxu0 0.0
      %4709 = vmatpush1.msra.mxu0 %v4076
      %4710 = vmatprep.subr.mxu0 0.0
      %4711 = vmatpush1.msra.mxu0 %v4077
      %4712 = vmatprep.subr.mxu0 0.0
      %4713 = vmatpush1.msra.mxu0 %v4078
      %4714 = vmatprep.subr.mxu0 0.0
      %4715 = vmatpush1.msra.mxu0 0.0
      %4716 = vmatprep.subr.mxu0 0.0
      %4717 = vmatpush1.msra.mxu0 0.0
      %4718 = vmatprep.subr.mxu0 0.0
      %4719 = vmatpush1.msra.mxu0 0.0
      %4720 = vmatprep.subr.mxu0 0.0
      %4721 = vmatpush1.msra.mxu0 0.0
      %4722 = vmatprep.mubr.f32.mxu0 %v4597
      %4723 = vmatmul.mubr.f32.gmra.mrb[0].mxu0 %v3991
      %v4724 = vpop.f32.mrb[0].mxu0
      %v4725 = vadd.f32 %v4448, %v4724
      %v4726 = vpop.f32.mrb[0].mxu0
      %4727 = vmatprep.mubr.f32.mxu0 %v4599
      %4728 = vmatmul.mubr.f32.gmra.mrb[0].mxu0 %v3993
      %v4729 = vpop.f32.mrb[0].mxu0
      %v4730 = vadd.f32 %v4453, %v4729
      %v4731 = vpop.f32.mrb[0].mxu0
      %4732 = vmatprep.mubr.f32.mxu0 %v4601
      %4733 = vmatmul.mubr.f32.gmra.mrb[0].mxu0 %v3995
      %v4734 = vpop.f32.mrb[0].mxu0
      %v4735 = vadd.f32 %v4458, %v4734
      %v4736 = vpop.f32.mrb[0].mxu0
      %4737 = vmatprep.mubr.f32.mxu0 %v4603
      %4738 = vmatmul.mubr.f32.gmra.mrb[0].mxu0 %v3997
      %v4739 = vpop.f32.mrb[0].mxu0
      %v4740 = vadd.f32 %v4463, %v4739
      %v4741 = vpop.f32.mrb[0].mxu0
      %4742 = vmatprep.mubr.f32.mxu0 %v4605
      %4743 = vmatmul.mubr.f32.gmra.mrb[0].mxu0 %v3999
      %v4744 = vpop.f32.mrb[0].mxu0
      %v4745 = vadd.f32 %v4468, %v4744
      %v4746 = vpop.f32.mrb[0].mxu0
      %4747 = vmatprep.mubr.f32.mxu0 %v4607
      %4748 = vmatmul.mubr.f32.gmra.mrb[0].mxu0 %v4001
      %v4749 = vpop.f32.mrb[0].mxu0
      %v4750 = vadd.f32 %v4473, %v4749
      %v4751 = vpop.f32.mrb[0].mxu0
      %4752 = vmatprep.mubr.f32.mxu0 %v4609
      %4753 = vmatmul.mubr.f32.gmra.mrb[0].mxu0 %v4003
      %v4754 = vpop.f32.mrb[0].mxu0
      %v4755 = vadd.f32 %v4478, %v4754
      %v4756 = vpop.f32.mrb[0].mxu0
      %4757 = vmatprep.mubr.f32.mxu0 %v4611
      %4758 = vmatmul.mubr.f32.gmra.mrb[0].mxu0 %v4005
      %v4759 = vpop.f32.mrb[0].mxu0
      %v4760 = vadd.f32 %v4483, %v4759
      %v4761 = vpop.f32.mrb[0].mxu0
      %4762 = vmatprep.mubr.f32.mxu0 %v4613
      %4763 = vmatmul.mubr.f32.gmra.mrb[0].mxu0 %v4007
      %v4764 = vpop.f32.mrb[0].mxu0
      %v4765 = vadd.f32 %v4488, %v4764
      %v4766 = vpop.f32.mrb[0].mxu0
      %4767 = vmatprep.mubr.f32.mxu0 %v4615
      %4768 = vmatmul.mubr.f32.gmra.mrb[0].mxu0 %v4009
      %v4769 = vpop.f32.mrb[0].mxu0
      %v4770 = vadd.f32 %v4493, %v4769
      %v4771 = vpop.f32.mrb[0].mxu0
      %4772 = vmatprep.mubr.f32.mxu0 %v4617
      %4773 = vmatmul.mubr.f32.gmra.mrb[0].mxu0 %v4011
      %v4774 = vpop.f32.mrb[0].mxu0
      %v4775 = vadd.f32 %v4498, %v4774
      %v4776 = vpop.f32.mrb[0].mxu0
      %4777 = vmatprep.mubr.f32.mxu0 %v4619
      %4778 = vmatmul.mubr.f32.gmra.mrb[0].mxu0 %v4013
      %v4779 = vpop.f32.mrb[0].mxu0
      %v4780 = vadd.f32 %v4503, %v4779
      %v4781 = vpop.f32.mrb[0].mxu0
      %4782 = vmatprep.mubr.f32.mxu0 %v4621
      %4783 = vmatmul.mubr.f32.gmra.mrb[0].mxu0 %v4015
      %v4784 = vpop.f32.mrb[0].mxu0
      %v4785 = vadd.f32 %v4508, %v4784
      %v4786 = vpop.f32.mrb[0].mxu0
      %4787 = vmatprep.mubr.f32.mxu0 %v4623
      %4788 = vmatmul.mubr.f32.gmra.mrb[0].mxu0 %v4017
      %v4789 = vpop.f32.mrb[0].mxu0
      %v4790 = vadd.f32 %v4513, %v4789
      %v4791 = vpop.f32.mrb[0].mxu0
      %4792 = vmatprep.mubr.f32.mxu0 %v4625
      %4793 = vmatmul.mubr.f32.gmra.mrb[0].mxu0 %v4019
      %v4794 = vpop.f32.mrb[0].mxu0
      %v4795 = vadd.f32 %v4518, %v4794
      %v4796 = vpop.f32.mrb[0].mxu0
      %4797 = vmatprep.mubr.f32.mxu0 %v4627
      %4798 = vmatmul.mubr.f32.gmra.mrb[0].mxu0 %v4021
      %v4799 = vpop.f32.mrb[0].mxu0
      %v4800 = vadd.f32 %v4523, %v4799
      %v4801 = vpop.f32.mrb[0].mxu0
      %4802 = vmatprep.mubr.f32.mxu0 %v4629
      %4803 = vmatmul.mubr.f32.gmra.mrb[0].mxu0 %v4023
      %v4804 = vpop.f32.mrb[0].mxu0
      %v4805 = vadd.f32 %v4528, %v4804
      %v4806 = vpop.f32.mrb[0].mxu0
      %4807 = vmatprep.mubr.f32.mxu0 %v4631
      %4808 = vmatmul.mubr.f32.gmra.mrb[0].mxu0 %v4025
      %v4809 = vpop.f32.mrb[0].mxu0
      %v4810 = vadd.f32 %v4533, %v4809
      %v4811 = vpop.f32.mrb[0].mxu0
      %4812 = vmatprep.mubr.f32.mxu0 %v4633
      %4813 = vmatmul.mubr.f32.gmra.mrb[0].mxu0 %v4027
      %v4814 = vpop.f32.mrb[0].mxu0
      %v4815 = vadd.f32 %v4538, %v4814
      %v4816 = vpop.f32.mrb[0].mxu0
      %4817 = vmatprep.mubr.f32.mxu0 %v4635
      %4818 = vmatmul.mubr.f32.gmra.mrb[0].mxu0 %v4029
      %v4819 = vpop.f32.mrb[0].mxu0
      %v4820 = vadd.f32 %v4543, %v4819
      %v4821 = vpop.f32.mrb[0].mxu0
      %4822 = vmatprep.mubr.f32.mxu0 %v4637
      %4823 = vmatmul.mubr.f32.gmra.mrb[0].mxu0 %v4031
      %v4824 = vpop.f32.mrb[0].mxu0
      %v4825 = vadd.f32 %v4548, %v4824
      %v4826 = vpop.f32.mrb[0].mxu0
      %4827 = vmatprep.mubr.f32.mxu0 %v4639
      %4828 = vmatmul.mubr.f32.gmra.mrb[0].mxu0 %v4033
      %v4829 = vpop.f32.mrb[0].mxu0
      %v4830 = vadd.f32 %v4553, %v4829
      %v4831 = vpop.f32.mrb[0].mxu0
      %4832 = vmatprep.mubr.f32.mxu0 %v4641
      %4833 = vmatmul.mubr.f32.gmra.mrb[0].mxu0 %v4035
      %v4834 = vpop.f32.mrb[0].mxu0
      %v4835 = vadd.f32 %v4558, %v4834
      %v4836 = vpop.f32.mrb[0].mxu0
      %4837 = vmatprep.mubr.f32.mxu0 %v4643
      %4838 = vmatmul.mubr.f32.gmra.mrb[0].mxu0 %v4037
      %v4839 = vpop.f32.mrb[0].mxu0
      %v4840 = vadd.f32 %v4563, %v4839
      %v4841 = vpop.f32.mrb[0].mxu0
      %4842 = vmatprep.mubr.f32.mxu0 %v4645
      %4843 = vmatmul.mubr.f32.gmra.mrb[0].mxu0 %v4039
      %v4844 = vpop.f32.mrb[0].mxu0
      %v4845 = vadd.f32 %v4568, %v4844
      %v4846 = vpop.f32.mrb[0].mxu0
      %4847 = vmatprep.mubr.f32.mxu0 %v4647
      %4848 = vmatmul.mubr.f32.gmra.mrb[0].mxu0 %v4041
      %v4849 = vpop.f32.mrb[0].mxu0
      %v4850 = vadd.f32 %v4573, %v4849
      %v4851 = vpop.f32.mrb[0].mxu0
      %4852 = vmatprep.mubr.f32.mxu0 %v4649
      %4853 = vmatmul.mubr.f32.gmra.mrb[0].mxu0 %v4043
      %v4854 = vpop.f32.mrb[0].mxu0
      %v4855 = vadd.f32 %v4578, %v4854
      %v4856 = vpop.f32.mrb[0].mxu0
      %4857 = vmatprep.mubr.f32.mxu0 %v4651
      %4858 = vmatmul.mubr.f32.gmra.mrb[0].mxu0 %v4045
      %v4859 = vpop.f32.mrb[0].mxu0
      %v4860 = vadd.f32 %v4583, %v4859
      %v4861 = vpop.f32.mrb[0].mxu0
      %4862 = vmatprep.mubr.f32.mxu0 %v4653
      %4863 = vmatmul.mubr.f32.gmra.mrb[0].mxu0 %v4047
      %v4864 = vpop.f32.mrb[0].mxu0
      %v4865 = vadd.f32 %v4588, %v4864
      %v4866 = vpop.f32.mrb[0].mxu0
      %4867 = vmatprep.mubr.f32.mxu0 %v4656
      %4868 = vmatmul.mubr.f32.gmra.mrb[0].mxu0 %v4049
      %v4869 = vpop.f32.mrb[0].mxu0
      %v4870 = vadd.f32 %v4593, %v4869
      %v4871 = vpop.f32.mrb[0].mxu0
      %4872 = vdwg.mxu0
      %v4873 = vld [vmem:[#allocation5] sm:$0xfc]
      %v4874 = vld [vmem:[#allocation5 + $0x8] sm:$0xfc]
      %v4875 = vld [vmem:[#allocation5 + $0x1d0] sm:$0xff]
      %v4876 = vld [vmem:[#allocation5 + $0x1d8] sm:$0xff]
      %s4877 = scalar_lea.vmem %s13, 448
      %v4878 = vld [vmem:[%s4877] sm:$0xff]
      %v4879 = vld [vmem:[%s4877 + $0x8] sm:$0xff]
      %v4880 = vld [vmem:[%s4877 + $0x10] sm:$0xff]
      %v4881 = vld [vmem:[%s4877 + $0x18] sm:$0xff]
      %v4882 = vld [vmem:[%s4877 + $0x20] sm:$0xff]
      %v4883 = vld [vmem:[%s4877 + $0x28] sm:$0xff]
      %v4884 = vld [vmem:[%s4877 + $0x30] sm:$0xff]
      %v4885 = vld [vmem:[%s4877 + $0x38] sm:$0xff]
      %v4886 = vld [vmem:[%s4877 + $0x40] sm:$0xff]
      %v4887 = vld [vmem:[%s4877 + $0x48] sm:$0xff]
      %v4888 = vld [vmem:[%s4877 + $0x50] sm:$0xff]
      %v4889 = vld [vmem:[%s4877 + $0x58] sm:$0xff]
      %v4890 = vld [vmem:[%s4877 + $0x60] sm:$0xff]
      %v4891 = vld [vmem:[%s4877 + $0x68] sm:$0xff]
      %v4892 = vld [vmem:[%s4877 + $0x70] sm:$0xff]
      %v4893 = vld [vmem:[%s4877 + $0x78] sm:$0xff]
      %v4894 = vld [vmem:[%s4877 + $0x80] sm:$0xff]
      %v4895 = vld [vmem:[%s4877 + $0x88] sm:$0xff]
      %v4896 = vld [vmem:[%s4877 + $0x90] sm:$0xff]
      %v4897 = vld [vmem:[%s4877 + $0x98] sm:$0xff]
      %v4898 = vld [vmem:[%s4877 + $0xa0] sm:$0xff]
      %v4899 = vld [vmem:[%s4877 + $0xa8] sm:$0xff]
      %v4900 = vld [vmem:[%s4877 + $0xb0] sm:$0xff]
      %v4901 = vld [vmem:[%s4877 + $0xb8] sm:$0xff]
      %v4902 = vld [vmem:[%s4877 + $0xc0] sm:$0xff]
      %v4903 = vld [vmem:[%s4877 + $0xc8] sm:$0xff]
      %v4904 = vld [vmem:[%s4877 + $0xd0] sm:$0xff]
      %v4905 = vld [vmem:[%s4877 + $0xd8] sm:$0xff]
      %v4910 = vrot.slane %v4873, 2
      %v4911 = vrot.slane %v3993, 2
      %v4912 = vsel %vm1794, %v4910, %v4911
      %v4913 = vrot.slane %v4874, 2
      %v4914 = vrot.slane %v3994, 2
      %v4915 = vsel %vm1794, %v4913, %v4914
      %v4916 = vrot.slane %v3995, 2
      %v4917 = vsel %vm1794, %v4911, %v4916
      %v4918 = vrot.slane %v3996, 2
      %v4919 = vsel %vm1794, %v4914, %v4918
      %v4920 = vrot.slane %v3997, 2
      %v4921 = vsel %vm1794, %v4916, %v4920
      %v4922 = vrot.slane %v3998, 2
      %v4923 = vsel %vm1794, %v4918, %v4922
      %v4924 = vrot.slane %v3999, 2
      %v4925 = vsel %vm1794, %v4920, %v4924
      %v4926 = vrot.slane %v4000, 2
      %v4927 = vsel %vm1794, %v4922, %v4926
      %v4928 = vrot.slane %v4001, 2
      %v4929 = vsel %vm1794, %v4924, %v4928
      %v4930 = vrot.slane %v4002, 2
      %v4931 = vsel %vm1794, %v4926, %v4930
      %v4932 = vrot.slane %v4003, 2
      %v4933 = vsel %vm1794, %v4928, %v4932
      %v4934 = vrot.slane %v4004, 2
      %v4935 = vsel %vm1794, %v4930, %v4934
      %v4936 = vrot.slane %v4005, 2
      %v4937 = vsel %vm1794, %v4932, %v4936
      %v4938 = vrot.slane %v4006, 2
      %v4939 = vsel %vm1794, %v4934, %v4938
      %v4940 = vrot.slane %v4007, 2
      %v4941 = vsel %vm1794, %v4936, %v4940
      %v4942 = vrot.slane %v4008, 2
      %v4943 = vsel %vm1794, %v4938, %v4942
      %v4944 = vrot.slane %v4009, 2
      %v4945 = vsel %vm1794, %v4940, %v4944
      %v4946 = vrot.slane %v4010, 2
      %v4947 = vsel %vm1794, %v4942, %v4946
      %v4948 = vrot.slane %v4011, 2
      %v4949 = vsel %vm1794, %v4944, %v4948
      %v4950 = vrot.slane %v4012, 2
      %v4951 = vsel %vm1794, %v4946, %v4950
      %v4952 = vrot.slane %v4013, 2
      %v4953 = vsel %vm1794, %v4948, %v4952
      %v4954 = vrot.slane %v4014, 2
      %v4955 = vsel %vm1794, %v4950, %v4954
      %v4956 = vrot.slane %v4015, 2
      %v4957 = vsel %vm1794, %v4952, %v4956
      %v4958 = vrot.slane %v4016, 2
      %v4959 = vsel %vm1794, %v4954, %v4958
      %v4960 = vrot.slane %v4017, 2
      %v4961 = vsel %vm1794, %v4956, %v4960
      %v4962 = vrot.slane %v4018, 2
      %v4963 = vsel %vm1794, %v4958, %v4962
      %v4964 = vrot.slane %v4019, 2
      %v4965 = vsel %vm1794, %v4960, %v4964
      %v4966 = vrot.slane %v4020, 2
      %v4967 = vsel %vm1794, %v4962, %v4966
      %v4968 = vrot.slane %v4021, 2
      %v4969 = vsel %vm1794, %v4964, %v4968
      %v4970 = vrot.slane %v4022, 2
      %v4971 = vsel %vm1794, %v4966, %v4970
      %v4972 = vrot.slane %v4023, 2
      %v4973 = vsel %vm1794, %v4968, %v4972
      %v4974 = vrot.slane %v4024, 2
      %v4975 = vsel %vm1794, %v4970, %v4974
      %v4976 = vrot.slane %v4025, 2
      %v4977 = vsel %vm1794, %v4972, %v4976
      %v4978 = vrot.slane %v4026, 2
      %v4979 = vsel %vm1794, %v4974, %v4978
      %v4980 = vrot.slane %v4027, 2
      %v4981 = vsel %vm1794, %v4976, %v4980
      %v4982 = vrot.slane %v4028, 2
      %v4983 = vsel %vm1794, %v4978, %v4982
      %v4984 = vrot.slane %v4029, 2
      %v4985 = vsel %vm1794, %v4980, %v4984
      %v4986 = vrot.slane %v4030, 2
      %v4987 = vsel %vm1794, %v4982, %v4986
      %v4988 = vrot.slane %v4031, 2
      %v4989 = vsel %vm1794, %v4984, %v4988
      %v4990 = vrot.slane %v4032, 2
      %v4991 = vsel %vm1794, %v4986, %v4990
      %v4992 = vrot.slane %v4033, 2
      %v4993 = vsel %vm1794, %v4988, %v4992
      %v4994 = vrot.slane %v4034, 2
      %v4995 = vsel %vm1794, %v4990, %v4994
      %v4996 = vrot.slane %v4035, 2
      %v4997 = vsel %vm1794, %v4992, %v4996
      %v4998 = vrot.slane %v4036, 2
      %v4999 = vsel %vm1794, %v4994, %v4998
      %v5000 = vrot.slane %v4037, 2
      %v5001 = vsel %vm1794, %v4996, %v5000
      %v5002 = vrot.slane %v4038, 2
      %v5003 = vsel %vm1794, %v4998, %v5002
      %v5004 = vrot.slane %v4039, 2
      %v5005 = vsel %vm1794, %v5000, %v5004
      %v5006 = vrot.slane %v4040, 2
      %v5007 = vsel %vm1794, %v5002, %v5006
      %v5008 = vrot.slane %v4041, 2
      %v5009 = vsel %vm1794, %v5004, %v5008
      %v5010 = vrot.slane %v4042, 2
      %v5011 = vsel %vm1794, %v5006, %v5010
      %v5012 = vrot.slane %v4043, 2
      %v5013 = vsel %vm1794, %v5008, %v5012
      %v5014 = vrot.slane %v4044, 2
      %v5015 = vsel %vm1794, %v5010, %v5014
      %v5016 = vrot.slane %v4045, 2
      %v5017 = vsel %vm1794, %v5012, %v5016
      %v5018 = vrot.slane %v4046, 2
      %v5019 = vsel %vm1794, %v5014, %v5018
      %v5020 = vrot.slane %v4047, 2
      %v5021 = vsel %vm1794, %v5016, %v5020
      %v5022 = vrot.slane %v4048, 2
      %v5023 = vsel %vm1794, %v5018, %v5022
      %v5024 = vrot.slane %v4875, 2
      %v5025 = vsel %vm1794, %v5020, %v5024
      %v5026 = vrot.slane %v4876, 2
      %v5027 = vsel %vm1794, %v5022, %v5026
      %v5058 = vsel %vm3875, %v4915, 0
      %v5060 = vsel %vm3875, %v4919, 0
      %v5062 = vsel %vm3875, %v4923, 0
      %v5064 = vsel %vm3875, %v4927, 0
      %v5066 = vsel %vm3875, %v4931, 0
      %v5068 = vsel %vm3875, %v4935, 0
      %v5070 = vsel %vm3875, %v4939, 0
      %v5072 = vsel %vm3875, %v4943, 0
      %v5074 = vsel %vm3875, %v4947, 0
      %v5076 = vsel %vm3875, %v4951, 0
      %v5078 = vsel %vm3875, %v4955, 0
      %v5080 = vsel %vm3875, %v4959, 0
      %v5082 = vsel %vm3875, %v4963, 0
      %v5084 = vsel %vm3875, %v4967, 0
      %v5086 = vsel %vm3875, %v4971, 0
      %v5088 = vsel %vm3875, %v4975, 0
      %v5090 = vsel %vm3875, %v4979, 0
      %v5092 = vsel %vm3875, %v4983, 0
      %v5094 = vsel %vm3875, %v4987, 0
      %v5096 = vsel %vm3875, %v4991, 0
      %v5098 = vsel %vm3875, %v4995, 0
      %v5100 = vsel %vm3875, %v4999, 0
      %v5102 = vsel %vm3875, %v5003, 0
      %v5104 = vsel %vm3875, %v5007, 0
      %v5106 = vsel %vm3875, %v5011, 0
      %v5108 = vsel %vm3875, %v5015, 0
      %v5110 = vsel %vm3875, %v5019, 0
      %v5112 = vsel %vm3875, %v5023, 0
      %v5114 = vsel %vm3875, %v5027, 0
      %v5116 = vsel %vm3875, %v5026, 0
      %5118 = vmatprep.subr.mxu0 0.0
      %5119 = vmatpush1.msra.mxu0 %v4878
      %5120 = vmatprep.subr.mxu0 0.0
      %5121 = vmatpush1.msra.mxu0 %v4879
      %5122 = vmatprep.subr.mxu0 0.0
      %5123 = vmatpush1.msra.mxu0 %v4880
      %5124 = vmatprep.subr.mxu0 0.0
      %5125 = vmatpush1.msra.mxu0 %v4881
      %5126 = vmatprep.subr.mxu0 0.0
      %5127 = vmatpush1.msra.mxu0 %v4882
      %5128 = vmatprep.subr.mxu0 0.0
      %5129 = vmatpush1.msra.mxu0 %v4883
      %5130 = vmatprep.subr.mxu0 0.0
      %5131 = vmatpush1.msra.mxu0 %v4884
      %5132 = vmatprep.subr.mxu0 0.0
      %5133 = vmatpush1.msra.mxu0 %v4885
      %5134 = vmatprep.subr.mxu0 0.0
      %5135 = vmatpush1.msra.mxu0 %v4886
      %5136 = vmatprep.subr.mxu0 0.0
      %5137 = vmatpush1.msra.mxu0 %v4887
      %5138 = vmatprep.subr.mxu0 0.0
      %5139 = vmatpush1.msra.mxu0 %v4888
      %5140 = vmatprep.subr.mxu0 0.0
      %5141 = vmatpush1.msra.mxu0 %v4889
      %5142 = vmatprep.subr.mxu0 0.0
      %5143 = vmatpush1.msra.mxu0 %v4890
      %5144 = vmatprep.subr.mxu0 0.0
      %5145 = vmatpush1.msra.mxu0 %v4891
      %5146 = vmatprep.subr.mxu0 0.0
      %5147 = vmatpush1.msra.mxu0 %v4892
      %5148 = vmatprep.subr.mxu0 0.0
      %5149 = vmatpush1.msra.mxu0 %v4893
      %5150 = vmatprep.subr.mxu0 0.0
      %5151 = vmatpush1.msra.mxu0 %v4894
      %5152 = vmatprep.subr.mxu0 0.0
      %5153 = vmatpush1.msra.mxu0 %v4895
      %5154 = vmatprep.subr.mxu0 0.0
      %5155 = vmatpush1.msra.mxu0 %v4896
      %5156 = vmatprep.subr.mxu0 0.0
      %5157 = vmatpush1.msra.mxu0 %v4897
      %5158 = vmatprep.subr.mxu0 0.0
      %5159 = vmatpush1.msra.mxu0 %v4898
      %5160 = vmatprep.subr.mxu0 0.0
      %5161 = vmatpush1.msra.mxu0 %v4899
      %5162 = vmatprep.subr.mxu0 0.0
      %5163 = vmatpush1.msra.mxu0 %v4900
      %5164 = vmatprep.subr.mxu0 0.0
      %5165 = vmatpush1.msra.mxu0 %v4901
      %5166 = vmatprep.subr.mxu0 0.0
      %5167 = vmatpush1.msra.mxu0 %v4902
      %5168 = vmatprep.subr.mxu0 0.0
      %5169 = vmatpush1.msra.mxu0 %v4903
      %5170 = vmatprep.subr.mxu0 0.0
      %5171 = vmatpush1.msra.mxu0 %v4904
      %5172 = vmatprep.subr.mxu0 0.0
      %5173 = vmatpush1.msra.mxu0 %v4905
      %5174 = vmatprep.subr.mxu0 0.0
      %5175 = vmatpush1.msra.mxu0 0.0
      %5176 = vmatprep.subr.mxu0 0.0
      %5177 = vmatpush1.msra.mxu0 0.0
      %5178 = vmatprep.subr.mxu0 0.0
      %5179 = vmatpush1.msra.mxu0 0.0
      %5180 = vmatprep.subr.mxu0 0.0
      %5181 = vmatpush1.msra.mxu0 0.0
      %5182 = vmatprep.mubr.f32.mxu0 %v5058
      %5183 = vmatmul.mubr.f32.gmra.mrb[0].mxu0 %v4912
      %v5184 = vpop.f32.mrb[0].mxu0
      %v5185 = vadd.f32 0.0, %v5184
      %v5186 = vpop.f32.mrb[0].mxu0
      %5187 = vmatprep.mubr.f32.mxu0 %v5060
      %5188 = vmatmul.mubr.f32.gmra.mrb[0].mxu0 %v4917
      %v5189 = vpop.f32.mrb[0].mxu0
      %v5190 = vadd.f32 0.0, %v5189
      %v5191 = vpop.f32.mrb[0].mxu0
      %5192 = vmatprep.mubr.f32.mxu0 %v5062
      %5193 = vmatmul.mubr.f32.gmra.mrb[0].mxu0 %v4921
      %v5194 = vpop.f32.mrb[0].mxu0
      %v5195 = vadd.f32 0.0, %v5194
      %v5196 = vpop.f32.mrb[0].mxu0
      %5197 = vmatprep.mubr.f32.mxu0 %v5064
      %5198 = vmatmul.mubr.f32.gmra.mrb[0].mxu0 %v4925
      %v5199 = vpop.f32.mrb[0].mxu0
      %v5200 = vadd.f32 0.0, %v5199
      %v5201 = vpop.f32.mrb[0].mxu0
      %5202 = vmatprep.mubr.f32.mxu0 %v5066
      %5203 = vmatmul.mubr.f32.gmra.mrb[0].mxu0 %v4929
      %v5204 = vpop.f32.mrb[0].mxu0
      %v5205 = vadd.f32 0.0, %v5204
      %v5206 = vpop.f32.mrb[0].mxu0
      %5207 = vmatprep.mubr.f32.mxu0 %v5068
      %5208 = vmatmul.mubr.f32.gmra.mrb[0].mxu0 %v4933
      %v5209 = vpop.f32.mrb[0].mxu0
      %v5210 = vadd.f32 0.0, %v5209
      %v5211 = vpop.f32.mrb[0].mxu0
      %5212 = vmatprep.mubr.f32.mxu0 %v5070
      %5213 = vmatmul.mubr.f32.gmra.mrb[0].mxu0 %v4937
      %v5214 = vpop.f32.mrb[0].mxu0
      %v5215 = vadd.f32 0.0, %v5214
      %v5216 = vpop.f32.mrb[0].mxu0
      %5217 = vmatprep.mubr.f32.mxu0 %v5072
      %5218 = vmatmul.mubr.f32.gmra.mrb[0].mxu0 %v4941
      %v5219 = vpop.f32.mrb[0].mxu0
      %v5220 = vadd.f32 0.0, %v5219
      %v5221 = vpop.f32.mrb[0].mxu0
      %5222 = vmatprep.mubr.f32.mxu0 %v5074
      %5223 = vmatmul.mubr.f32.gmra.mrb[0].mxu0 %v4945
      %v5224 = vpop.f32.mrb[0].mxu0
      %v5225 = vadd.f32 0.0, %v5224
      %v5226 = vpop.f32.mrb[0].mxu0
      %5227 = vmatprep.mubr.f32.mxu0 %v5076
      %5228 = vmatmul.mubr.f32.gmra.mrb[0].mxu0 %v4949
      %v5229 = vpop.f32.mrb[0].mxu0
      %v5230 = vadd.f32 0.0, %v5229
      %v5231 = vpop.f32.mrb[0].mxu0
      %5232 = vmatprep.mubr.f32.mxu0 %v5078
      %5233 = vmatmul.mubr.f32.gmra.mrb[0].mxu0 %v4953
      %v5234 = vpop.f32.mrb[0].mxu0
      %v5235 = vadd.f32 0.0, %v5234
      %v5236 = vpop.f32.mrb[0].mxu0
      %5237 = vmatprep.mubr.f32.mxu0 %v5080
      %5238 = vmatmul.mubr.f32.gmra.mrb[0].mxu0 %v4957
      %v5239 = vpop.f32.mrb[0].mxu0
      %v5240 = vadd.f32 0.0, %v5239
      %v5241 = vpop.f32.mrb[0].mxu0
      %5242 = vmatprep.mubr.f32.mxu0 %v5082
      %5243 = vmatmul.mubr.f32.gmra.mrb[0].mxu0 %v4961
      %v5244 = vpop.f32.mrb[0].mxu0
      %v5245 = vadd.f32 0.0, %v5244
      %v5246 = vpop.f32.mrb[0].mxu0
      %5247 = vmatprep.mubr.f32.mxu0 %v5084
      %5248 = vmatmul.mubr.f32.gmra.mrb[0].mxu0 %v4965
      %v5249 = vpop.f32.mrb[0].mxu0
      %v5250 = vadd.f32 0.0, %v5249
      %v5251 = vpop.f32.mrb[0].mxu0
      %5252 = vmatprep.mubr.f32.mxu0 %v5086
      %5253 = vmatmul.mubr.f32.gmra.mrb[0].mxu0 %v4969
      %v5254 = vpop.f32.mrb[0].mxu0
      %v5255 = vadd.f32 0.0, %v5254
      %v5256 = vpop.f32.mrb[0].mxu0
      %5257 = vmatprep.mubr.f32.mxu0 %v5088
      %5258 = vmatmul.mubr.f32.gmra.mrb[0].mxu0 %v4973
      %v5259 = vpop.f32.mrb[0].mxu0
      %v5260 = vadd.f32 0.0, %v5259
      %v5261 = vpop.f32.mrb[0].mxu0
      %5262 = vmatprep.mubr.f32.mxu0 %v5090
      %5263 = vmatmul.mubr.f32.gmra.mrb[0].mxu0 %v4977
      %v5264 = vpop.f32.mrb[0].mxu0
      %v5265 = vadd.f32 0.0, %v5264
      %v5266 = vpop.f32.mrb[0].mxu0
      %5267 = vmatprep.mubr.f32.mxu0 %v5092
      %5268 = vmatmul.mubr.f32.gmra.mrb[0].mxu0 %v4981
      %v5269 = vpop.f32.mrb[0].mxu0
      %v5270 = vadd.f32 0.0, %v5269
      %v5271 = vpop.f32.mrb[0].mxu0
      %5272 = vmatprep.mubr.f32.mxu0 %v5094
      %5273 = vmatmul.mubr.f32.gmra.mrb[0].mxu0 %v4985
      %v5274 = vpop.f32.mrb[0].mxu0
      %v5275 = vadd.f32 0.0, %v5274
      %v5276 = vpop.f32.mrb[0].mxu0
      %5277 = vmatprep.mubr.f32.mxu0 %v5096
      %5278 = vmatmul.mubr.f32.gmra.mrb[0].mxu0 %v4989
      %v5279 = vpop.f32.mrb[0].mxu0
      %v5280 = vadd.f32 0.0, %v5279
      %v5281 = vpop.f32.mrb[0].mxu0
      %5282 = vmatprep.mubr.f32.mxu0 %v5098
      %5283 = vmatmul.mubr.f32.gmra.mrb[0].mxu0 %v4993
      %v5284 = vpop.f32.mrb[0].mxu0
      %v5285 = vadd.f32 0.0, %v5284
      %v5286 = vpop.f32.mrb[0].mxu0
      %5287 = vmatprep.mubr.f32.mxu0 %v5100
      %5288 = vmatmul.mubr.f32.gmra.mrb[0].mxu0 %v4997
      %v5289 = vpop.f32.mrb[0].mxu0
      %v5290 = vadd.f32 0.0, %v5289
      %v5291 = vpop.f32.mrb[0].mxu0
      %5292 = vmatprep.mubr.f32.mxu0 %v5102
      %5293 = vmatmul.mubr.f32.gmra.mrb[0].mxu0 %v5001
      %v5294 = vpop.f32.mrb[0].mxu0
      %v5295 = vadd.f32 0.0, %v5294
      %v5296 = vpop.f32.mrb[0].mxu0
      %5297 = vmatprep.mubr.f32.mxu0 %v5104
      %5298 = vmatmul.mubr.f32.gmra.mrb[0].mxu0 %v5005
      %v5299 = vpop.f32.mrb[0].mxu0
      %v5300 = vadd.f32 0.0, %v5299
      %v5301 = vpop.f32.mrb[0].mxu0
      %5302 = vmatprep.mubr.f32.mxu0 %v5106
      %5303 = vmatmul.mubr.f32.gmra.mrb[0].mxu0 %v5009
      %v5304 = vpop.f32.mrb[0].mxu0
      %v5305 = vadd.f32 0.0, %v5304
      %v5306 = vpop.f32.mrb[0].mxu0
      %5307 = vmatprep.mubr.f32.mxu0 %v5108
      %5308 = vmatmul.mubr.f32.gmra.mrb[0].mxu0 %v5013
      %v5309 = vpop.f32.mrb[0].mxu0
      %v5310 = vadd.f32 0.0, %v5309
      %v5311 = vpop.f32.mrb[0].mxu0
      %5312 = vmatprep.mubr.f32.mxu0 %v5110
      %5313 = vmatmul.mubr.f32.gmra.mrb[0].mxu0 %v5017
      %v5314 = vpop.f32.mrb[0].mxu0
      %v5315 = vadd.f32 0.0, %v5314
      %v5316 = vpop.f32.mrb[0].mxu0
      %5317 = vmatprep.mubr.f32.mxu0 %v5112
      %5318 = vmatmul.mubr.f32.gmra.mrb[0].mxu0 %v5021
      %v5319 = vpop.f32.mrb[0].mxu0
      %v5320 = vadd.f32 0.0, %v5319
      %v5321 = vpop.f32.mrb[0].mxu0
      %5322 = vmatprep.mubr.f32.mxu0 %v5114
      %5323 = vmatmul.mubr.f32.gmra.mrb[0].mxu0 %v5025
      %v5324 = vpop.f32.mrb[0].mxu0
      %v5325 = vadd.f32 0.0, %v5324
      %v5326 = vpop.f32.mrb[0].mxu0
      %5327 = vmatprep.mubr.f32.mxu0 %v5116
      %5328 = vmatmul.mubr.f32.gmra.mrb[0].mxu0 %v5024
      %v5329 = vpop.f32.mrb[0].mxu0
      %v5330 = vadd.f32 0.0, %v5329
      %v5331 = vpop.f32.mrb[0].mxu0
      %5332 = vdwg.mxu0
      %v5333 = vadd.f32 %v4725, %v5185
      %v5334 = vadd.f32 %v4730, %v5190
      %v5335 = vadd.f32 %v4735, %v5195
      %v5336 = vadd.f32 %v4740, %v5200
      %v5337 = vadd.f32 %v4745, %v5205
      %v5338 = vadd.f32 %v4750, %v5210
      %v5339 = vadd.f32 %v4755, %v5215
      %v5340 = vadd.f32 %v4760, %v5220
      %v5341 = vadd.f32 %v4765, %v5225
      %v5342 = vadd.f32 %v4770, %v5230
      %v5343 = vadd.f32 %v4775, %v5235
      %v5344 = vadd.f32 %v4780, %v5240
      %v5345 = vadd.f32 %v4785, %v5245
      %v5346 = vadd.f32 %v4790, %v5250
      %v5347 = vadd.f32 %v4795, %v5255
      %v5348 = vadd.f32 %v4800, %v5260
      %v5349 = vadd.f32 %v4805, %v5265
      %v5350 = vadd.f32 %v4810, %v5270
      %v5351 = vadd.f32 %v4815, %v5275
      %v5352 = vadd.f32 %v4820, %v5280
      %v5353 = vadd.f32 %v4825, %v5285
      %v5354 = vadd.f32 %v4830, %v5290
      %v5355 = vadd.f32 %v4835, %v5295
      %v5356 = vadd.f32 %v4840, %v5300
      %v5357 = vadd.f32 %v4845, %v5305
      %v5358 = vadd.f32 %v4850, %v5310
      %v5359 = vadd.f32 %v4855, %v5315
      %v5360 = vadd.f32 %v4860, %v5320
      %v5361 = vadd.f32 %v4865, %v5325
      %v5362 = vadd.f32 %v4870, %v5330
      %v5363 = vld [vmem:[%s14] sm:$0x1]
      %v5365 = vlaneseq
      %v5366 = vshrl.u32 %v5365, 7
      %v5367 = vsub.s32 0, %v5366
      %v5368 = vrot.slane %v5363, %v5367
      %v5370 = vadd.f32 %v5333, %v5368
      %v5371 = vadd.f32 %v5334, %v5368
      %v5372 = vadd.f32 %v5335, %v5368
      %v5373 = vadd.f32 %v5336, %v5368
      %v5374 = vadd.f32 %v5337, %v5368
      %v5375 = vadd.f32 %v5338, %v5368
      %v5376 = vadd.f32 %v5339, %v5368
      %v5377 = vadd.f32 %v5340, %v5368
      %v5378 = vadd.f32 %v5341, %v5368
      %v5379 = vadd.f32 %v5342, %v5368
      %v5380 = vadd.f32 %v5343, %v5368
      %v5381 = vadd.f32 %v5344, %v5368
      %v5382 = vadd.f32 %v5345, %v5368
      %v5383 = vadd.f32 %v5346, %v5368
      %v5384 = vadd.f32 %v5347, %v5368
      %v5385 = vadd.f32 %v5348, %v5368
      %v5386 = vadd.f32 %v5349, %v5368
      %v5387 = vadd.f32 %v5350, %v5368
      %v5388 = vadd.f32 %v5351, %v5368
      %v5389 = vadd.f32 %v5352, %v5368
      %v5390 = vadd.f32 %v5353, %v5368
      %v5391 = vadd.f32 %v5354, %v5368
      %v5392 = vadd.f32 %v5355, %v5368
      %v5393 = vadd.f32 %v5356, %v5368
      %v5394 = vadd.f32 %v5357, %v5368
      %v5395 = vadd.f32 %v5358, %v5368
      %v5396 = vadd.f32 %v5359, %v5368
      %v5397 = vadd.f32 %v5360, %v5368
      %v5398 = vadd.f32 %v5361, %v5368
      %v5399 = vadd.f32 %v5362, %v5368
      %vm5400 = vcmask 900096
      %v5402 = vsel %vm5400, %v3936, 0
      %v5405 = vsel %vm5400, %v3938, 0
      %v5408 = vsel %vm5400, %v3940, 0
      %v5411 = vsel %vm5400, %v3942, 0
      %v5414 = vsel %vm5400, %v3944, 0
      %v5417 = vsel %vm5400, %v3946, 0
      %v5420 = vsel %vm5400, %v3948, 0
      %v5423 = vsel %vm5400, %v3950, 0
      %v5426 = vsel %vm5400, %v3952, 0
      %v5429 = vsel %vm5400, %v3954, 0
      %v5432 = vsel %vm5400, %v3956, 0
      %v5435 = vsel %vm5400, %v3958, 0
      %v5438 = vsel %vm5400, %v3960, 0
      %v5441 = vsel %vm5400, %v3962, 0
      %v5444 = vsel %vm5400, %v3964, 0
      %v5447 = vsel %vm5400, %v3966, 0
      %v5450 = vsel %vm5400, %v3968, 0
      %v5453 = vsel %vm5400, %v3970, 0
      %v5456 = vsel %vm5400, %v3972, 0
      %v5459 = vsel %vm5400, %v3974, 0
      %v5462 = vsel %vm5400, %v3976, 0
      %v5465 = vsel %vm5400, %v3978, 0
      %v5468 = vsel %vm5400, %v3980, 0
      %v5471 = vsel %vm5400, %v3982, 0
      %v5474 = vsel %vm5400, %v3984, 0
      %v5477 = vsel %vm5400, %v3986, 0
      %v5480 = vsel %vm5400, %v3988, 0
      %v5483 = vsel %vm5400, %v3990, 0
      %v5486 = vsel %vm1794, %v5399, 0
      %5488 = vmatprep.subr.mxu0 0.0
      %5489 = vmatpush1.msra.mxu0 %v5370
      %5490 = vmatprep.subr.mxu0 0.0
      %5491 = vmatpush1.msra.mxu0 %v5371
      %5492 = vmatprep.subr.mxu0 0.0
      %5493 = vmatpush1.msra.mxu0 %v5372
      %5494 = vmatprep.subr.mxu0 0.0
      %5495 = vmatpush1.msra.mxu0 %v5373
      %5496 = vmatprep.subr.mxu0 0.0
      %5497 = vmatpush1.msra.mxu0 %v5374
      %5498 = vmatprep.subr.mxu0 0.0
      %5499 = vmatpush1.msra.mxu0 %v5375
      %5500 = vmatprep.subr.mxu0 0.0
      %5501 = vmatpush1.msra.mxu0 %v5376
      %5502 = vmatprep.subr.mxu0 0.0
      %5503 = vmatpush1.msra.mxu0 %v5377
      %5504 = vmatprep.subr.mxu0 0.0
      %5505 = vmatpush1.msra.mxu0 %v5378
      %5506 = vmatprep.subr.mxu0 0.0
      %5507 = vmatpush1.msra.mxu0 %v5379
      %5508 = vmatprep.subr.mxu0 0.0
      %5509 = vmatpush1.msra.mxu0 %v5380
      %5510 = vmatprep.subr.mxu0 0.0
      %5511 = vmatpush1.msra.mxu0 %v5381
      %5512 = vmatprep.subr.mxu0 0.0
      %5513 = vmatpush1.msra.mxu0 %v5382
      %5514 = vmatprep.subr.mxu0 0.0
      %5515 = vmatpush1.msra.mxu0 %v5383
      %5516 = vmatprep.subr.mxu0 0.0
      %5517 = vmatpush1.msra.mxu0 %v5384
      %5518 = vmatprep.subr.mxu0 0.0
      %5519 = vmatpush1.msra.mxu0 %v5385
      %5520 = vmatprep.subr.mxu0 0.0
      %5521 = vmatpush1.msra.mxu0 %v5386
      %5522 = vmatprep.subr.mxu0 0.0
      %5523 = vmatpush1.msra.mxu0 %v5387
      %5524 = vmatprep.subr.mxu0 0.0
      %5525 = vmatpush1.msra.mxu0 %v5388
      %5526 = vmatprep.subr.mxu0 0.0
      %5527 = vmatpush1.msra.mxu0 %v5389
      %5528 = vmatprep.subr.mxu0 0.0
      %5529 = vmatpush1.msra.mxu0 %v5390
      %5530 = vmatprep.subr.mxu0 0.0
      %5531 = vmatpush1.msra.mxu0 %v5391
      %5532 = vmatprep.subr.mxu0 0.0
      %5533 = vmatpush1.msra.mxu0 %v5392
      %5534 = vmatprep.subr.mxu0 0.0
      %5535 = vmatpush1.msra.mxu0 %v5393
      %5536 = vmatprep.subr.mxu0 0.0
      %5537 = vmatpush1.msra.mxu0 %v5394
      %5538 = vmatprep.subr.mxu0 0.0
      %5539 = vmatpush1.msra.mxu0 %v5395
      %5540 = vmatprep.subr.mxu0 0.0
      %5541 = vmatpush1.msra.mxu0 %v5396
      %5542 = vmatprep.subr.mxu0 0.0
      %5543 = vmatpush1.msra.mxu0 %v5397
      %5544 = vmatprep.subr.mxu0 0.0
      %5545 = vmatpush1.msra.mxu0 %v5398
      %5546 = vmatprep.subr.mxu0 0.0
      %5547 = vmatpush1.msra.mxu0 %v5486
      %5548 = vmatprep.subr.mxu0 0.0
      %5549 = vmatpush1.msra.mxu0 0.0
      %5550 = vmatprep.subr.mxu0 0.0
      %5551 = vmatpush1.msra.mxu0 0.0
      %5552 = vmatprep.mubr.f32.mxu0 %v5402
      %5553 = vmatmul.mubr.f32.gmra.mrb[0].mxu0 %v3935
      %v5554 = vpop.f32.mrb[0].mxu0
      %v5555 = vadd.f32 0.0, %v5554
      %v5556 = vpop.f32.mrb[0].mxu0
      %5557 = vmatprep.mubr.f32.mxu0 %v5405
      %5558 = vmatmul.mubr.f32.gmra.mrb[0].mxu0 %v3937
      %v5559 = vpop.f32.mrb[0].mxu0
      %v5560 = vadd.f32 0.0, %v5559
      %v5561 = vpop.f32.mrb[0].mxu0
      %5562 = vmatprep.mubr.f32.mxu0 %v5408
      %5563 = vmatmul.mubr.f32.gmra.mrb[0].mxu0 %v3939
      %v5564 = vpop.f32.mrb[0].mxu0
      %v5565 = vadd.f32 0.0, %v5564
      %v5566 = vpop.f32.mrb[0].mxu0
      %5567 = vmatprep.mubr.f32.mxu0 %v5411
      %5568 = vmatmul.mubr.f32.gmra.mrb[0].mxu0 %v3941
      %v5569 = vpop.f32.mrb[0].mxu0
      %v5570 = vadd.f32 0.0, %v5569
      %v5571 = vpop.f32.mrb[0].mxu0
      %5572 = vmatprep.mubr.f32.mxu0 %v5414
      %5573 = vmatmul.mubr.f32.gmra.mrb[0].mxu0 %v3943
      %v5574 = vpop.f32.mrb[0].mxu0
      %v5575 = vadd.f32 0.0, %v5574
      %v5576 = vpop.f32.mrb[0].mxu0
      %5577 = vmatprep.mubr.f32.mxu0 %v5417
      %5578 = vmatmul.mubr.f32.gmra.mrb[0].mxu0 %v3945
      %v5579 = vpop.f32.mrb[0].mxu0
      %v5580 = vadd.f32 0.0, %v5579
      %v5581 = vpop.f32.mrb[0].mxu0
      %5582 = vmatprep.mubr.f32.mxu0 %v5420
      %5583 = vmatmul.mubr.f32.gmra.mrb[0].mxu0 %v3947
      %v5584 = vpop.f32.mrb[0].mxu0
      %v5585 = vadd.f32 0.0, %v5584
      %v5586 = vpop.f32.mrb[0].mxu0
      %5587 = vmatprep.mubr.f32.mxu0 %v5423
      %5588 = vmatmul.mubr.f32.gmra.mrb[0].mxu0 %v3949
      %v5589 = vpop.f32.mrb[0].mxu0
      %v5590 = vadd.f32 0.0, %v5589
      %v5591 = vpop.f32.mrb[0].mxu0
      %5592 = vmatprep.mubr.f32.mxu0 %v5426
      %5593 = vmatmul.mubr.f32.gmra.mrb[0].mxu0 %v3951
      %v5594 = vpop.f32.mrb[0].mxu0
      %v5595 = vadd.f32 0.0, %v5594
      %v5596 = vpop.f32.mrb[0].mxu0
      %5597 = vmatprep.mubr.f32.mxu0 %v5429
      %5598 = vmatmul.mubr.f32.gmra.mrb[0].mxu0 %v3953
      %v5599 = vpop.f32.mrb[0].mxu0
      %v5600 = vadd.f32 0.0, %v5599
      %v5601 = vpop.f32.mrb[0].mxu0
      %5602 = vmatprep.mubr.f32.mxu0 %v5432
      %5603 = vmatmul.mubr.f32.gmra.mrb[0].mxu0 %v3955
      %v5604 = vpop.f32.mrb[0].mxu0
      %v5605 = vadd.f32 0.0, %v5604
      %v5606 = vpop.f32.mrb[0].mxu0
      %5607 = vmatprep.mubr.f32.mxu0 %v5435
      %5608 = vmatmul.mubr.f32.gmra.mrb[0].mxu0 %v3957
      %v5609 = vpop.f32.mrb[0].mxu0
      %v5610 = vadd.f32 0.0, %v5609
      %v5611 = vpop.f32.mrb[0].mxu0
      %5612 = vmatprep.mubr.f32.mxu0 %v5438
      %5613 = vmatmul.mubr.f32.gmra.mrb[0].mxu0 %v3959
      %v5614 = vpop.f32.mrb[0].mxu0
      %v5615 = vadd.f32 0.0, %v5614
      %v5616 = vpop.f32.mrb[0].mxu0
      %5617 = vmatprep.mubr.f32.mxu0 %v5441
      %5618 = vmatmul.mubr.f32.gmra.mrb[0].mxu0 %v3961
      %v5619 = vpop.f32.mrb[0].mxu0
      %v5620 = vadd.f32 0.0, %v5619
      %v5621 = vpop.f32.mrb[0].mxu0
      %5622 = vmatprep.mubr.f32.mxu0 %v5444
      %5623 = vmatmul.mubr.f32.gmra.mrb[0].mxu0 %v3963
      %v5624 = vpop.f32.mrb[0].mxu0
      %v5625 = vadd.f32 0.0, %v5624
      %v5626 = vpop.f32.mrb[0].mxu0
      %5627 = vmatprep.mubr.f32.mxu0 %v5447
      %5628 = vmatmul.mubr.f32.gmra.mrb[0].mxu0 %v3965
      %v5629 = vpop.f32.mrb[0].mxu0
      %v5630 = vadd.f32 0.0, %v5629
      %v5631 = vpop.f32.mrb[0].mxu0
      %5632 = vmatprep.mubr.f32.mxu0 %v5450
      %5633 = vmatmul.mubr.f32.gmra.mrb[0].mxu0 %v3967
      %v5634 = vpop.f32.mrb[0].mxu0
      %v5635 = vadd.f32 0.0, %v5634
      %v5636 = vpop.f32.mrb[0].mxu0
      %5637 = vmatprep.mubr.f32.mxu0 %v5453
      %5638 = vmatmul.mubr.f32.gmra.mrb[0].mxu0 %v3969
      %v5639 = vpop.f32.mrb[0].mxu0
      %v5640 = vadd.f32 0.0, %v5639
      %v5641 = vpop.f32.mrb[0].mxu0
      %5642 = vmatprep.mubr.f32.mxu0 %v5456
      %5643 = vmatmul.mubr.f32.gmra.mrb[0].mxu0 %v3971
      %v5644 = vpop.f32.mrb[0].mxu0
      %v5645 = vadd.f32 0.0, %v5644
      %v5646 = vpop.f32.mrb[0].mxu0
      %5647 = vmatprep.mubr.f32.mxu0 %v5459
      %5648 = vmatmul.mubr.f32.gmra.mrb[0].mxu0 %v3973
      %v5649 = vpop.f32.mrb[0].mxu0
      %v5650 = vadd.f32 0.0, %v5649
      %v5651 = vpop.f32.mrb[0].mxu0
      %5652 = vmatprep.mubr.f32.mxu0 %v5462
      %5653 = vmatmul.mubr.f32.gmra.mrb[0].mxu0 %v3975
      %v5654 = vpop.f32.mrb[0].mxu0
      %v5655 = vadd.f32 0.0, %v5654
      %v5656 = vpop.f32.mrb[0].mxu0
      %5657 = vmatprep.mubr.f32.mxu0 %v5465
      %5658 = vmatmul.mubr.f32.gmra.mrb[0].mxu0 %v3977
      %v5659 = vpop.f32.mrb[0].mxu0
      %v5660 = vadd.f32 0.0, %v5659
      %v5661 = vpop.f32.mrb[0].mxu0
      %5662 = vmatprep.mubr.f32.mxu0 %v5468
      %5663 = vmatmul.mubr.f32.gmra.mrb[0].mxu0 %v3979
      %v5664 = vpop.f32.mrb[0].mxu0
      %v5665 = vadd.f32 0.0, %v5664
      %v5666 = vpop.f32.mrb[0].mxu0
      %5667 = vmatprep.mubr.f32.mxu0 %v5471
      %5668 = vmatmul.mubr.f32.gmra.mrb[0].mxu0 %v3981
      %v5669 = vpop.f32.mrb[0].mxu0
      %v5670 = vadd.f32 0.0, %v5669
      %v5671 = vpop.f32.mrb[0].mxu0
      %5672 = vmatprep.mubr.f32.mxu0 %v5474
      %5673 = vmatmul.mubr.f32.gmra.mrb[0].mxu0 %v3983
      %v5674 = vpop.f32.mrb[0].mxu0
      %v5675 = vadd.f32 0.0, %v5674
      %v5676 = vpop.f32.mrb[0].mxu0
      %5677 = vmatprep.mubr.f32.mxu0 %v5477
      %5678 = vmatmul.mubr.f32.gmra.mrb[0].mxu0 %v3985
      %v5679 = vpop.f32.mrb[0].mxu0
      %v5680 = vadd.f32 0.0, %v5679
      %v5681 = vpop.f32.mrb[0].mxu0
      %5682 = vmatprep.mubr.f32.mxu0 %v5480
      %5683 = vmatmul.mubr.f32.gmra.mrb[0].mxu0 %v3987
      %v5684 = vpop.f32.mrb[0].mxu0
      %v5685 = vadd.f32 0.0, %v5684
      %v5686 = vpop.f32.mrb[0].mxu0
      %5687 = vmatprep.mubr.f32.mxu0 %v5483
      %5688 = vmatmul.mubr.f32.gmra.mrb[0].mxu0 %v3989
      %v5689 = vpop.f32.mrb[0].mxu0
      %v5690 = vadd.f32 0.0, %v5689
      %v5691 = vpop.f32.mrb[0].mxu0
      %5692 = vdwg.mxu0
      %vm5693 = vcmp.lt.f32.partialorder %v5555, 0.0
      %vm5694 = vcmp.lt.f32.partialorder %v5560, 0.0
      %vm5695 = vcmp.lt.f32.partialorder %v5565, 0.0
      %vm5696 = vcmp.lt.f32.partialorder %v5570, 0.0
      %vm5697 = vcmp.lt.f32.partialorder %v5575, 0.0
      %vm5698 = vcmp.lt.f32.partialorder %v5580, 0.0
      %vm5699 = vcmp.lt.f32.partialorder %v5585, 0.0
      %vm5700 = vcmp.lt.f32.partialorder %v5590, 0.0
      %vm5701 = vcmp.lt.f32.partialorder %v5595, 0.0
      %vm5702 = vcmp.lt.f32.partialorder %v5600, 0.0
      %vm5703 = vcmp.lt.f32.partialorder %v5605, 0.0
      %vm5704 = vcmp.lt.f32.partialorder %v5610, 0.0
      %vm5705 = vcmp.lt.f32.partialorder %v5615, 0.0
      %vm5706 = vcmp.lt.f32.partialorder %v5620, 0.0
      %vm5707 = vcmp.lt.f32.partialorder %v5625, 0.0
      %vm5708 = vcmp.lt.f32.partialorder %v5630, 0.0
      %vm5709 = vcmp.lt.f32.partialorder %v5635, 0.0
      %vm5710 = vcmp.lt.f32.partialorder %v5640, 0.0
      %vm5711 = vcmp.lt.f32.partialorder %v5645, 0.0
      %vm5712 = vcmp.lt.f32.partialorder %v5650, 0.0
      %vm5713 = vcmp.lt.f32.partialorder %v5655, 0.0
      %vm5714 = vcmp.lt.f32.partialorder %v5660, 0.0
      %vm5715 = vcmp.lt.f32.partialorder %v5665, 0.0
      %vm5716 = vcmp.lt.f32.partialorder %v5670, 0.0
      %vm5717 = vcmp.lt.f32.partialorder %v5675, 0.0
      %vm5718 = vcmp.lt.f32.partialorder %v5680, 0.0
      %vm5719 = vcmp.lt.f32.partialorder %v5685, 0.0
      %vm5720 = vcmp.lt.f32.partialorder %v5690, 0.0
      %v5721 = vsub.f32 0.0, %v5555
      %v5722 = vsub.f32 0.0, %v5560
      %v5723 = vsub.f32 0.0, %v5565
      %v5724 = vsub.f32 0.0, %v5570
      %v5725 = vsub.f32 0.0, %v5575
      %v5726 = vsub.f32 0.0, %v5580
      %v5727 = vsub.f32 0.0, %v5585
      %v5728 = vsub.f32 0.0, %v5590
      %v5729 = vsub.f32 0.0, %v5595
      %v5730 = vsub.f32 0.0, %v5600
      %v5731 = vsub.f32 0.0, %v5605
      %v5732 = vsub.f32 0.0, %v5610
      %v5733 = vsub.f32 0.0, %v5615
      %v5734 = vsub.f32 0.0, %v5620
      %v5735 = vsub.f32 0.0, %v5625
      %v5736 = vsub.f32 0.0, %v5630
      %v5737 = vsub.f32 0.0, %v5635
      %v5738 = vsub.f32 0.0, %v5640
      %v5739 = vsub.f32 0.0, %v5645
      %v5740 = vsub.f32 0.0, %v5650
      %v5741 = vsub.f32 0.0, %v5655
      %v5742 = vsub.f32 0.0, %v5660
      %v5743 = vsub.f32 0.0, %v5665
      %v5744 = vsub.f32 0.0, %v5670
      %v5745 = vsub.f32 0.0, %v5675
      %v5746 = vsub.f32 0.0, %v5680
      %v5747 = vsub.f32 0.0, %v5685
      %v5748 = vsub.f32 0.0, %v5690
      %v5749 = vsel %vm5693, %v5555, %v5721
      %v5750 = vsel %vm5694, %v5560, %v5722
      %v5751 = vsel %vm5695, %v5565, %v5723
      %v5752 = vsel %vm5696, %v5570, %v5724
      %v5753 = vsel %vm5697, %v5575, %v5725
      %v5754 = vsel %vm5698, %v5580, %v5726
      %v5755 = vsel %vm5699, %v5585, %v5727
      %v5756 = vsel %vm5700, %v5590, %v5728
      %v5757 = vsel %vm5701, %v5595, %v5729
      %v5758 = vsel %vm5702, %v5600, %v5730
      %v5759 = vsel %vm5703, %v5605, %v5731
      %v5760 = vsel %vm5704, %v5610, %v5732
      %v5761 = vsel %vm5705, %v5615, %v5733
      %v5762 = vsel %vm5706, %v5620, %v5734
      %v5763 = vsel %vm5707, %v5625, %v5735
      %v5764 = vsel %vm5708, %v5630, %v5736
      %v5765 = vsel %vm5709, %v5635, %v5737
      %v5766 = vsel %vm5710, %v5640, %v5738
      %v5767 = vsel %vm5711, %v5645, %v5739
      %v5768 = vsel %vm5712, %v5650, %v5740
      %v5769 = vsel %vm5713, %v5655, %v5741
      %v5770 = vsel %vm5714, %v5660, %v5742
      %v5771 = vsel %vm5715, %v5665, %v5743
      %v5772 = vsel %vm5716, %v5670, %v5744
      %v5773 = vsel %vm5717, %v5675, %v5745
      %v5774 = vsel %vm5718, %v5680, %v5746
      %v5775 = vsel %vm5719, %v5685, %v5747
      %v5776 = vsel %vm5720, %v5690, %v5748
      %v5777 = vmul.f32 %v5749, 1.442695
      %v5778 = vpow.pop %v5777
      %v5779 = vmul.f32 %v5750, 1.442695
      %v5780 = vpow.pop %v5779
      %v5781 = vmul.f32 %v5751, 1.442695
      %v5782 = vpow.pop %v5781
      %v5783 = vmul.f32 %v5752, 1.442695
      %v5784 = vpow.pop %v5783
      %v5785 = vmul.f32 %v5753, 1.442695
      %v5786 = vpow.pop %v5785
      %v5787 = vmul.f32 %v5754, 1.442695
      %v5788 = vpow.pop %v5787
      %v5789 = vmul.f32 %v5755, 1.442695
      %v5790 = vpow.pop %v5789
      %v5791 = vmul.f32 %v5756, 1.442695
      %v5792 = vpow.pop %v5791
      %v5793 = vmul.f32 %v5757, 1.442695
      %v5794 = vpow.pop %v5793
      %v5795 = vmul.f32 %v5758, 1.442695
      %v5796 = vpow.pop %v5795
      %v5797 = vmul.f32 %v5759, 1.442695
      %v5798 = vpow.pop %v5797
      %v5799 = vmul.f32 %v5760, 1.442695
      %v5800 = vpow.pop %v5799
      %v5801 = vmul.f32 %v5761, 1.442695
      %v5802 = vpow.pop %v5801
      %v5803 = vmul.f32 %v5762, 1.442695
      %v5804 = vpow.pop %v5803
      %v5805 = vmul.f32 %v5763, 1.442695
      %v5806 = vpow.pop %v5805
      %v5807 = vmul.f32 %v5764, 1.442695
      %v5808 = vpow.pop %v5807
      %v5809 = vmul.f32 %v5765, 1.442695
      %v5810 = vpow.pop %v5809
      %v5811 = vmul.f32 %v5766, 1.442695
      %v5812 = vpow.pop %v5811
      %v5813 = vmul.f32 %v5767, 1.442695
      %v5814 = vpow.pop %v5813
      %v5815 = vmul.f32 %v5768, 1.442695
      %v5816 = vpow.pop %v5815
      %v5817 = vmul.f32 %v5769, 1.442695
      %v5818 = vpow.pop %v5817
      %v5819 = vmul.f32 %v5770, 1.442695
      %v5820 = vpow.pop %v5819
      %v5821 = vmul.f32 %v5771, 1.442695
      %v5822 = vpow.pop %v5821
      %v5823 = vmul.f32 %v5772, 1.442695
      %v5824 = vpow.pop %v5823
      %v5825 = vmul.f32 %v5773, 1.442695
      %v5826 = vpow.pop %v5825
      %v5827 = vmul.f32 %v5774, 1.442695
      %v5828 = vpow.pop %v5827
      %v5829 = vmul.f32 %v5775, 1.442695
      %v5830 = vpow.pop %v5829
      %v5831 = vmul.f32 %v5776, 1.442695
      %v5832 = vpow.pop %v5831
      %v5833 = vadd.f32 %v5778, 1.0
      %v5834 = vadd.f32 %v5780, 1.0
      %v5835 = vadd.f32 %v5782, 1.0
      %v5836 = vadd.f32 %v5784, 1.0
      %v5837 = vadd.f32 %v5786, 1.0
      %v5838 = vadd.f32 %v5788, 1.0
      %v5839 = vadd.f32 %v5790, 1.0
      %v5840 = vadd.f32 %v5792, 1.0
      %v5841 = vadd.f32 %v5794, 1.0
      %v5842 = vadd.f32 %v5796, 1.0
      %v5843 = vadd.f32 %v5798, 1.0
      %v5844 = vadd.f32 %v5800, 1.0
      %v5845 = vadd.f32 %v5802, 1.0
      %v5846 = vadd.f32 %v5804, 1.0
      %v5847 = vadd.f32 %v5806, 1.0
      %v5848 = vadd.f32 %v5808, 1.0
      %v5849 = vadd.f32 %v5810, 1.0
      %v5850 = vadd.f32 %v5812, 1.0
      %v5851 = vadd.f32 %v5814, 1.0
      %v5852 = vadd.f32 %v5816, 1.0
      %v5853 = vadd.f32 %v5818, 1.0
      %v5854 = vadd.f32 %v5820, 1.0
      %v5855 = vadd.f32 %v5822, 1.0
      %v5856 = vadd.f32 %v5824, 1.0
      %v5857 = vadd.f32 %v5826, 1.0
      %v5858 = vadd.f32 %v5828, 1.0
      %v5859 = vadd.f32 %v5830, 1.0
      %v5860 = vadd.f32 %v5832, 1.0
      %v5861 = vrcp.pop %v5833
      %v5862 = vmul.f32 %v5778, %v5861
      %v5863 = vrcp.pop %v5834
      %v5864 = vmul.f32 %v5780, %v5863
      %v5865 = vrcp.pop %v5835
      %v5866 = vmul.f32 %v5782, %v5865
      %v5867 = vrcp.pop %v5836
      %v5868 = vmul.f32 %v5784, %v5867
      %v5869 = vrcp.pop %v5837
      %v5870 = vmul.f32 %v5786, %v5869
      %v5871 = vrcp.pop %v5838
      %v5872 = vmul.f32 %v5788, %v5871
      %v5873 = vrcp.pop %v5839
      %v5874 = vmul.f32 %v5790, %v5873
      %v5875 = vrcp.pop %v5840
      %v5876 = vmul.f32 %v5792, %v5875
      %v5877 = vrcp.pop %v5841
      %v5878 = vmul.f32 %v5794, %v5877
      %v5879 = vrcp.pop %v5842
      %v5880 = vmul.f32 %v5796, %v5879
      %v5881 = vrcp.pop %v5843
      %v5882 = vmul.f32 %v5798, %v5881
      %v5883 = vrcp.pop %v5844
      %v5884 = vmul.f32 %v5800, %v5883
      %v5885 = vrcp.pop %v5845
      %v5886 = vmul.f32 %v5802, %v5885
      %v5887 = vrcp.pop %v5846
      %v5888 = vmul.f32 %v5804, %v5887
      %v5889 = vrcp.pop %v5847
      %v5890 = vmul.f32 %v5806, %v5889
      %v5891 = vrcp.pop %v5848
      %v5892 = vmul.f32 %v5808, %v5891
      %v5893 = vrcp.pop %v5849
      %v5894 = vmul.f32 %v5810, %v5893
      %v5895 = vrcp.pop %v5850
      %v5896 = vmul.f32 %v5812, %v5895
      %v5897 = vrcp.pop %v5851
      %v5898 = vmul.f32 %v5814, %v5897
      %v5899 = vrcp.pop %v5852
      %v5900 = vmul.f32 %v5816, %v5899
      %v5901 = vrcp.pop %v5853
      %v5902 = vmul.f32 %v5818, %v5901
      %v5903 = vrcp.pop %v5854
      %v5904 = vmul.f32 %v5820, %v5903
      %v5905 = vrcp.pop %v5855
      %v5906 = vmul.f32 %v5822, %v5905
      %v5907 = vrcp.pop %v5856
      %v5908 = vmul.f32 %v5824, %v5907
      %v5909 = vrcp.pop %v5857
      %v5910 = vmul.f32 %v5826, %v5909
      %v5911 = vrcp.pop %v5858
      %v5912 = vmul.f32 %v5828, %v5911
      %v5913 = vrcp.pop %v5859
      %v5914 = vmul.f32 %v5830, %v5913
      %v5915 = vrcp.pop %v5860
      %v5916 = vmul.f32 %v5832, %v5915
      %v5917 = vmul.f32 1.0, %v5861
      %v5918 = vmul.f32 1.0, %v5863
      %v5919 = vmul.f32 1.0, %v5865
      %v5920 = vmul.f32 1.0, %v5867
      %v5921 = vmul.f32 1.0, %v5869
      %v5922 = vmul.f32 1.0, %v5871
      %v5923 = vmul.f32 1.0, %v5873
      %v5924 = vmul.f32 1.0, %v5875
      %v5925 = vmul.f32 1.0, %v5877
      %v5926 = vmul.f32 1.0, %v5879
      %v5927 = vmul.f32 1.0, %v5881
      %v5928 = vmul.f32 1.0, %v5883
      %v5929 = vmul.f32 1.0, %v5885
      %v5930 = vmul.f32 1.0, %v5887
      %v5931 = vmul.f32 1.0, %v5889
      %v5932 = vmul.f32 1.0, %v5891
      %v5933 = vmul.f32 1.0, %v5893
      %v5934 = vmul.f32 1.0, %v5895
      %v5935 = vmul.f32 1.0, %v5897
      %v5936 = vmul.f32 1.0, %v5899
      %v5937 = vmul.f32 1.0, %v5901
      %v5938 = vmul.f32 1.0, %v5903
      %v5939 = vmul.f32 1.0, %v5905
      %v5940 = vmul.f32 1.0, %v5907
      %v5941 = vmul.f32 1.0, %v5909
      %v5942 = vmul.f32 1.0, %v5911
      %v5943 = vmul.f32 1.0, %v5913
      %v5944 = vmul.f32 1.0, %v5915
      %v5945 = vsel %vm5693, %v5862, %v5917
      %v5946 = vsel %vm5694, %v5864, %v5918
      %v5947 = vsel %vm5695, %v5866, %v5919
      %v5948 = vsel %vm5696, %v5868, %v5920
      %v5949 = vsel %vm5697, %v5870, %v5921
      %v5950 = vsel %vm5698, %v5872, %v5922
      %v5951 = vsel %vm5699, %v5874, %v5923
      %v5952 = vsel %vm5700, %v5876, %v5924
      %v5953 = vsel %vm5701, %v5878, %v5925
      %v5954 = vsel %vm5702, %v5880, %v5926
      %v5955 = vsel %vm5703, %v5882, %v5927
      %v5956 = vsel %vm5704, %v5884, %v5928
      %v5957 = vsel %vm5705, %v5886, %v5929
      %v5958 = vsel %vm5706, %v5888, %v5930
      %v5959 = vsel %vm5707, %v5890, %v5931
      %v5960 = vsel %vm5708, %v5892, %v5932
      %v5961 = vsel %vm5709, %v5894, %v5933
      %v5962 = vsel %vm5710, %v5896, %v5934
      %v5963 = vsel %vm5711, %v5898, %v5935
      %v5964 = vsel %vm5712, %v5900, %v5936
      %v5965 = vsel %vm5713, %v5902, %v5937
      %v5966 = vsel %vm5714, %v5904, %v5938
      %v5967 = vsel %vm5715, %v5906, %v5939
      %v5968 = vsel %vm5716, %v5908, %v5940
      %v5969 = vsel %vm5717, %v5910, %v5941
      %v5970 = vsel %vm5718, %v5912, %v5942
      %v5971 = vsel %vm5719, %v5914, %v5943
      %v5972 = vsel %vm5720, %v5916, %v5944
      %5973 = vst [vmem:[%s518] sm:$0xff] %v5945
      %5974 = vst [vmem:[%s518 + $0x8] sm:$0xff] %v5946
      %5975 = vst [vmem:[%s518 + $0x10] sm:$0xff] %v5947
      %5976 = vst [vmem:[%s518 + $0x18] sm:$0xff] %v5948
      %5977 = vst [vmem:[%s518 + $0x20] sm:$0xff] %v5949
      %5978 = vst [vmem:[%s518 + $0x28] sm:$0xff] %v5950
      %5979 = vst [vmem:[%s518 + $0x30] sm:$0xff] %v5951
      %5980 = vst [vmem:[%s518 + $0x38] sm:$0xff] %v5952
      %5981 = vst [vmem:[%s518 + $0x40] sm:$0xff] %v5953
      %5982 = vst [vmem:[%s518 + $0x48] sm:$0xff] %v5954
      %5983 = vst [vmem:[%s518 + $0x50] sm:$0xff] %v5955
      %5984 = vst [vmem:[%s518 + $0x58] sm:$0xff] %v5956
      %5985 = vst [vmem:[%s518 + $0x60] sm:$0xff] %v5957
      %5986 = vst [vmem:[%s518 + $0x68] sm:$0xff] %v5958
      %5987 = vst [vmem:[%s518 + $0x70] sm:$0xff] %v5959
      %5988 = vst [vmem:[%s518 + $0x78] sm:$0xff] %v5960
      %5989 = vst [vmem:[%s518 + $0x80] sm:$0xff] %v5961
      %5990 = vst [vmem:[%s518 + $0x88] sm:$0xff] %v5962
      %5991 = vst [vmem:[%s518 + $0x90] sm:$0xff] %v5963
      %5992 = vst [vmem:[%s518 + $0x98] sm:$0xff] %v5964
      %5993 = vst [vmem:[%s518 + $0xa0] sm:$0xff] %v5965
      %5994 = vst [vmem:[%s518 + $0xa8] sm:$0xff] %v5966
      %5995 = vst [vmem:[%s518 + $0xb0] sm:$0xff] %v5967
      %5996 = vst [vmem:[%s518 + $0xb8] sm:$0xff] %v5968
      %5997 = vst [vmem:[%s518 + $0xc0] sm:$0xff] %v5969
      %5998 = vst [vmem:[%s518 + $0xc8] sm:$0xff] %v5970
      %5999 = vst [vmem:[%s518 + $0xd0] sm:$0xff] %v5971
      %6000 = vst [vmem:[%s518 + $0xd8] sm:$0xff] %v5972
      %s6001 = smul.u32 28, %s27
      %p6002 = scmp.lt.s32.totalorder %s6001, 55
      %s6003 = scalar_select %p6002, %s6001, 55
      %s6004 = smul.addr %s6003, 8
      %s6005 = scalar_lea.vmem %s16, %s6004
      // Predicated region
      $region85: #{mnist_decoder_forward.1} parent=83 // pred_check
        %p6006 = pneg %p386
      $region86: #{mnist_decoder_forward.1} parent=83 // pred_check_branch
        %6008 = sbr.rel (%p6006) target = $region88
      $region87: #{mnist_decoder_forward.1} parent=83 // pred_region
        %s6009 = smul.u32 28, %s27
      $region88: #{mnist_decoder_forward.1} parent=83 // pred_fallthru
        _
    $region84: #{mnist_decoder_forward.1} parent=5 // pred_fallthru
      _
    %p6010 = scmp.le.s32.totalorder 2, %s22
    // Predicated region
    $region89: #{mnist_decoder_forward.1} parent=5 // pred_check
      %p6011 = pneg %p6010
    $region90: #{mnist_decoder_forward.1} parent=5 // pred_check_branch
      %6013 = sbr.rel (%p6011) target = $region92
    $region91: #{mnist_decoder_forward.1} parent=5 // pred_region
      %s6014 = ssub.s32 %s22, 2
      // Predicated region
      $region93: #{mnist_decoder_forward.1} parent=91 // pred_check
        %p6015 = pneg %p392
      $region94: #{mnist_decoder_forward.1} parent=91 // pred_check_branch
        %6017 = sbr.rel (%p6015) target = $region96
      $region95: #{mnist_decoder_forward.1} parent=91 // pred_region
        %s6018 = smul.u32 28, %s28
        %p6019 = scmp.lt.s32.totalorder %s6018, 55
        %s6020 = scalar_select %p6019, %s6018, 55
        %s6021 = smul.addr %s6020, 8
        %s6022 = scalar_lea.vmem %s16, %s6021
      $region96: #{mnist_decoder_forward.1} parent=91 // pred_fallthru
        _
    $region92: #{mnist_decoder_forward.1} parent=5 // pred_fallthru
      _
  $region6: #{mnist_decoder_forward.1} parent=0 // loop_footer
    %s26 = sadd.s32 1, %s22
  $region7: #{mnist_decoder_forward.1} parent=0 // loop_footer_branch
    %21 = sbr.rel target = $region3
  $region8: #{mnist_decoder_forward.1} parent=0 // loop_exit
    _

</llo_original>
